<compile_context>
chip_gen: v7x
topology: tpu7x:2x2x1
jax: 0.10.0
libtpu: 0.0.40
codegen_flags: <defaults>
</compile_context>

<pallas_src>
import functools
import math

import jax
import jax.numpy as jnp
from jax import lax
from jax.experimental import pallas as pl
from jax.experimental.pallas import tpu as pltpu

_HI = jax.lax.Precision.HIGHEST
# jax >= 0.4.34 calls it CompilerParams; older releases used TPUCompilerParams.
_CompilerParams = getattr(pltpu, "CompilerParams", None) or getattr(
    pltpu, "TPUCompilerParams")


# ---------------------------------------------------------------------------
# Stage 1 kernel: f_pc = LeakyReLU(0.2)(feature @ W1 + b1)   (global, tiled)
# ---------------------------------------------------------------------------
def _conv1_kernel(feat_ref, w1_ref, b1_ref, o_ref):
    z = jnp.dot(feat_ref[...].astype(w1_ref.dtype), w1_ref[...],
                preferred_element_type=jnp.float32) + b1_ref[...]
    o_ref[...] = jnp.where(z > 0.0, z, 0.2 * z).astype(o_ref.dtype)


# ---------------------------------------------------------------------------
# Stage 2 kernel: gather + Building_block + att_pooling_2 + conv2d_2/shortcut
# ---------------------------------------------------------------------------
def _drb_main_kernel(nbr_ref,                 # SMEM (N*K,) int32 (scalar prefetch)
                     fpc_ref,                 # (N, dh) f32, global, VMEM-resident
                     fgeo_ref,                # (TILE_N*K, G) tile
                     feat_ref,                # (TILE_N, d_in) tile
                     wg_ref, bg_ref,          # BB conv2d_1 (BN folded, ReLU)
                     wfc_top_ref, wfc_bot_ref,          # att fc, split by concat half
                     wmlp_t_ref, wmlp_b_ref, bmlp_ref,  # att mlp (BN folded, ReLU)
                     w2_ref, ws_ref, btail_ref,         # conv2d_2 + BN-folded shortcut
                     o_ref,                   # (TILE_N, d_out) tile
                     fnb_ref,                 # VMEM scratch (TILE_N*K, dh) f32
                     *, n_neigh, approx_recip):
    tile_n, d_out = o_ref.shape
    rows, dh = fnb_ref.shape
    k = n_neigh
    base = pl.program_id(0) * rows            # first flat (row, k) index of this tile
    cdt = wg_ref.dtype                        # matmul-operand dtype (bf16 or f32)

    # ---- gather_neighbour(f_pc, neigh_idx): per-row copy from the GLOBAL f_pc
    #      (neighbour indices refer to global rows, not tile-local rows).
    def gather_row(r, carry):
        for kk in range(k):                   # K is small & static -> unrolled
            dst = r * k + kk
            src = nbr_ref[base + dst]
            fnb_ref[pl.ds(dst, 1), :] = fpc_ref[pl.ds(src, 1), :]
        return carry
    lax.fori_loop(0, tile_n, gather_row, 0)

    # ---- Building_block.conv2d_1 (BN folded) + ReLU on geometry features
    fg = jnp.dot(fgeo_ref[...].astype(cdt), wg_ref[...],
                 preferred_element_type=jnp.float32) + bg_ref[...]
    fg = jnp.maximum(fg, 0.0)                 # (rows, dh) f32

    f_nb = fnb_ref[...]                       # (rows, dh) f32

    # ---- attentive_pooling_2 fc over the virtual concat [f_nb | fg]
    #      (two full-width matmuls == f_cat @ fc.T, concat never built)
    att = (jnp.dot(f_nb.astype(cdt), wfc_top_ref[...],
                   preferred_element_type=jnp.float32) +
           jnp.dot(fg.astype(cdt), wfc_bot_ref[...],
                   preferred_element_type=jnp.float32))
    att = att.reshape(tile_n, k, d_out)
    m = jnp.max(att, axis=1, keepdims=True)
    e = jnp.exp(att - m)
    s = jnp.sum(e, axis=1, keepdims=True)
    if approx_recip:
        sm = e * pl.reciprocal(s, approx=True)
    else:
        sm = e / s

    f_nb3 = f_nb.reshape(tile_n, k, dh)
    fg3 = fg.reshape(tile_n, k, dh)
    agg_t = jnp.sum(f_nb3 * sm[:, :, :dh], axis=1)      # (tile_n, dh)
    agg_b = jnp.sum(fg3 * sm[:, :, dh:], axis=1)        # (tile_n, dh)

    # ---- att-pool mlp (BN folded) + ReLU, split over the concat halves
    y = (jnp.dot(agg_t.astype(cdt), wmlp_t_ref[...],
                 preferred_element_type=jnp.float32) +
         jnp.dot(agg_b.astype(cdt), wmlp_b_ref[...],
                 preferred_element_type=jnp.float32) + bmlp_ref[...])
    f_bb = jnp.maximum(y, 0.0)                           # (tile_n, d_out)

    # ---- conv2d_2 + BN-folded shortcut + LeakyReLU(0.2), lane-exact output
    z = (jnp.dot(f_bb.astype(cdt), w2_ref[...],
                 preferred_element_type=jnp.float32) +
         jnp.dot(feat_ref[...].astype(cdt), ws_ref[...],
                 preferred_element_type=jnp.float32) + btail_ref[...])
    o_ref[...] = jnp.where(z > 0.0, z, 0.2 * z).astype(o_ref.dtype)


# ---------------------------------------------------------------------------
# Host-side parameter folding + pallas_call wrapper.
# ---------------------------------------------------------------------------
def _fold_bn(w, b, bn):
    """Fold eval-mode BatchNorm into a conv weight (torch layout (out, in)).

    Returns the weight in matmul layout (in, out) and the bias as (1, out)."""
    scale = bn['gamma'] / jnp.sqrt(bn['var'] + bn['eps'])
    shift = bn['beta'] - bn['mean'] * scale
    return (w * scale[:, None]).T, (b * scale + shift)[None, :]


def _pick_tile_n(n, target=128):
    if n % 8:
        return n                              # fall back to a single full tile
    t = min(n, max(8, (target // 8) * 8))
    while n % t:
        t -= 8
    return t


def dilated_res_block(f_geo, feature, neigh_idx, params, *,
                      use_bf16=True, approx_softmax=True, tile_n=None):
    """Fused Pallas forward of dilated_res_block (eval mode)."""
    n, k, g = f_geo.shape
    d_in = feature.shape[1]
    d_out = params['conv2']['w'].shape[0]
    dh = d_out // 2
    cdt = jnp.bfloat16 if use_bf16 else jnp.float32

    if tile_n is None:
        tile_n = _pick_tile_n(n)
    assert n % tile_n == 0
    gn = n // tile_n
    rows = tile_n * k

    # ---- fold parameters (eval-mode BN) into matmul weights / biases -------
    w1, b1 = params['conv1']['w'].T, params['conv1']['b'][None, :]
    wg, bg = _fold_bn(params['bb_conv1']['w'], params['bb_conv1']['b'],
                      params['bb_conv1']['bn'])
    wfcT = params['ap_fc'].T                  # (d_out[in], d_out[out])
    wfc_top, wfc_bot = wfcT[:dh, :], wfcT[dh:, :]
    wmlp, bmlp = _fold_bn(params['ap_mlp']['w'], params['ap_mlp']['b'],
                          params['ap_mlp']['bn'])
    wmlp_t, wmlp_b = wmlp[:dh, :], wmlp[dh:, :]
    w2, b2 = params['conv2']['w'].T, params['conv2']['b'][None, :]
    ws, bs = _fold_bn(params['shortcut']['w'], params['shortcut']['b'],
                      params['shortcut']['bn'])
    btail = b2 + bs

    # Matmul operands in bf16 (MXU-native on v6e/v7x); biases stay f32.
    w1, wg, wfc_top, wfc_bot, wmlp_t, wmlp_b, w2, ws = (
        x.astype(cdt) for x in (w1, wg, wfc_top, wfc_bot, wmlp_t, wmlp_b, w2, ws))

    cparams = _CompilerParams(
        dimension_semantics=("parallel",),          # v7x megacore over row tiles
        vmem_limit_bytes=32 * 1024 * 1024)          # raises v5e's 16 MiB default

    # ---- stage 1: f_pc for ALL rows (every tile gathers from global rows) --
    f_pc = pl.pallas_call(
        _conv1_kernel,
        grid=(gn,),
        in_specs=[pl.BlockSpec((tile_n, d_in), lambda i: (i, 0)),
                  pl.BlockSpec((d_in, dh), lambda i: (0, 0)),
                  pl.BlockSpec((1, dh), lambda i: (0, 0))],
        out_specs=pl.BlockSpec((tile_n, dh), lambda i: (i, 0)),
        out_shape=jax.ShapeDtypeStruct((n, dh), jnp.float32),
        compiler_params=cparams,
    )(feature, w1, b1)

    # ---- stage 2: row-tiled, pipelined remainder of the block --------------
    fgeo_flat = f_geo.reshape(n * k, g)             # host-side flatten (review #11)
    nbr_flat = neigh_idx.reshape(n * k).astype(jnp.int32)

    kernel = functools.partial(_drb_main_kernel, n_neigh=k,
                               approx_recip=approx_softmax)

    grid_spec = pltpu.PrefetchScalarGridSpec(
        num_scalar_prefetch=1,                      # neigh_idx -> SMEM
        grid=(gn,),
        in_specs=[
            pl.BlockSpec((n, dh), lambda i, nbr: (0, 0)),         # f_pc (resident)
            pl.BlockSpec((rows, g), lambda i, nbr: (i, 0)),       # f_geo tile
            pl.BlockSpec((tile_n, d_in), lambda i, nbr: (i, 0)),  # feature tile
            pl.BlockSpec((g, dh), lambda i, nbr: (0, 0)),         # wg
            pl.BlockSpec((1, dh), lambda i, nbr: (0, 0)),         # bg
            pl.BlockSpec((dh, d_out), lambda i, nbr: (0, 0)),     # wfc_top
            pl.BlockSpec((dh, d_out), lambda i, nbr: (0, 0)),     # wfc_bot
            pl.BlockSpec((dh, d_out), lambda i, nbr: (0, 0)),     # wmlp_t
            pl.BlockSpec((dh, d_out), lambda i, nbr: (0, 0)),     # wmlp_b
            pl.BlockSpec((1, d_out), lambda i, nbr: (0, 0)),      # bmlp
            pl.BlockSpec((d_out, d_out), lambda i, nbr: (0, 0)),  # w2
            pl.BlockSpec((d_in, d_out), lambda i, nbr: (0, 0)),   # ws
            pl.BlockSpec((1, d_out), lambda i, nbr: (0, 0)),      # btail
        ],
        out_specs=pl.BlockSpec((tile_n, d_out), lambda i, nbr: (i, 0)),
        scratch_shapes=[pltpu.VMEM((rows, dh), jnp.float32)],     # gathered f_nb
    )

    return pl.pallas_call(
        kernel,
        grid_spec=grid_spec,
        out_shape=jax.ShapeDtypeStruct((n, d_out), jnp.float32),
        compiler_params=cparams,
    )(nbr_flat, f_pc, fgeo_flat, feature,
      wg, bg, wfc_top, wfc_bot, wmlp_t, wmlp_b, bmlp, w2, ws, btail)


# ---------------------------------------------------------------------------
# Pure-JAX reference (mirrors the PyTorch module directly, unfolded BN).
# ---------------------------------------------------------------------------
def _ref_shared_mlp(x, p, act=None):
    y = jnp.matmul(x, p['w'].T, precision=_HI) + p['b']
    if 'bn' in p:
        bn = p['bn']
        scale = bn['gamma'] / jnp.sqrt(bn['var'] + bn['eps'])
        y = (y - bn['mean']) * scale + bn['beta']
    if act == 'relu':
        y = jnp.maximum(y, 0.0)
    elif act == 'leaky':
        y = jnp.where(y > 0.0, y, 0.2 * y)
    return y


def dilated_res_block_ref(f_geo, feature, neigh_idx, params):
    f_pc = _ref_shared_mlp(feature, params['conv1'], act='leaky')      # (N, dh)
    fg = _ref_shared_mlp(f_geo, params['bb_conv1'], act='relu')        # (N, K, dh)
    f_nb = f_pc[neigh_idx]                                             # gather_neighbour
    f_cat = jnp.concatenate([f_nb, fg], axis=2)                        # (N, K, d_out)
    att = jnp.matmul(f_cat, params['ap_fc'].T, precision=_HI)
    sm = jax.nn.softmax(att, axis=1)
    agg = jnp.sum(f_cat * sm, axis=1)                                  # (N, d_out)
    f_bb = _ref_shared_mlp(agg, params['ap_mlp'], act='relu')
    y2 = _ref_shared_mlp(f_bb, params['conv2'])
    sc = _ref_shared_mlp(feature, params['shortcut'])
    z = y2 + sc
    return jnp.where(z > 0.0, z, 0.2 * z)


# ---------------------------------------------------------------------------
# Parameter construction (torch layouts: conv weight (out, in), bias (out,)).
# ---------------------------------------------------------------------------
def init_drb_params(key, geo_in, d_in, d_out):
    dh = d_out // 2
    ks = iter(jax.random.split(key, 24))

    def conv(cin, cout):
        w = jax.random.normal(next(ks), (cout, cin), jnp.float32) / math.sqrt(cin)
        b = 0.05 * jax.random.normal(next(ks), (cout,), jnp.float32)
        return dict(w=w, b=b)

    def bn(c):
        return dict(gamma=1.0 + 0.1 * jax.random.normal(next(ks), (c,), jnp.float32),
                    beta=0.1 * jax.random.normal(next(ks), (c,), jnp.float32),
                    mean=0.1 * jax.random.normal(next(ks), (c,), jnp.float32),
                    var=1.0 + 0.2 * jax.random.uniform(next(ks), (c,), jnp.float32),
                    eps=1e-6)

    return dict(
        conv1=conv(d_in, dh),                               # LeakyReLU(0.2), no BN
        bb_conv1=dict(**conv(geo_in, dh), bn=bn(dh)),       # BN + ReLU
        ap_fc=jax.random.normal(next(ks), (d_out, d_out), jnp.float32) / math.sqrt(d_out),
        ap_mlp=dict(**conv(d_out, d_out), bn=bn(d_out)),    # BN + ReLU
        conv2=conv(d_out, d_out),                           # no BN, no act
        shortcut=dict(**conv(d_in, d_out), bn=bn(d_out)),   # BN, no act
    )


if __name__ == "__main__":
    key = jax.random.PRNGKey(0)
    n, k, geo_in = 256, 8, 6          # 2 row-tiles of 128 -> exercises the grid
    configs = [(8, 32), (32, 64), (64, 128)]   # the R_GCN encoder stages

    fwd = jax.jit(dilated_res_block,
                  static_argnames=("use_bf16", "approx_softmax", "tile_n"))

    for d_in, d_out in configs:
        kp, kf, kx, kn, key = jax.random.split(key, 5)
        params = init_drb_params(kp, geo_in, d_in, d_out)
        f_geo = jax.random.normal(kf, (n, k, geo_in), jnp.float32)
        feature = jax.random.normal(kx, (n, d_in), jnp.float32)
        neigh_idx = jax.random.randint(kn, (n, k), 0, n, dtype=jnp.int32)

        ref = dilated_res_block_ref(f_geo, feature, neigh_idx, params)

        # f32 path with exact softmax: the real correctness check.
        out32 = jax.block_until_ready(
            fwd(f_geo, feature, neigh_idx, params,
                use_bf16=False, approx_softmax=False))
        assert out32.shape == (n, d_out)
        assert bool(jnp.all(jnp.isfinite(out32)))
        assert bool(jnp.allclose(out32, ref, rtol=1e-2, atol=1e-2)), (
            f"f32 mismatch (d_in={d_in}, d_out={d_out}): "
            f"max|err|={float(jnp.max(jnp.abs(out32 - ref)))}")

        # bf16 MXU path (default) with approx softmax: sanity bound only.
        out16 = jax.block_until_ready(
            fwd(f_geo, feature, neigh_idx, params,
                use_bf16=True, approx_softmax=True))
        assert out16.shape == (n, d_out)
        assert bool(jnp.all(jnp.isfinite(out16)))
        assert bool(jnp.allclose(out16, ref, rtol=1e-1, atol=1e-1)), (
            f"bf16 mismatch (d_in={d_in}, d_out={d_out}): "
            f"max|err|={float(jnp.max(jnp.abs(out16 - ref)))}")

    print("KERNEL_OK")
</pallas_src>

<mosaic_0001>
module attributes {stable_mosaic.version = 11 : i64} {
  func.func @_conv1_kernel(%arg0: i32, %arg1: memref<128x8xf32, #tpu.memory_space<vmem>>, %arg2: memref<8x16xf32, #tpu.memory_space<vmem>>, %arg3: memref<1x16xf32, #tpu.memory_space<vmem>>, %arg4: memref<128x16xf32, #tpu.memory_space<vmem>>) attributes {dimension_semantics = [#tpu.dimension_semantics<parallel>], iteration_bounds = array<i64: 2>, scalar_prefetch = 0 : i64, scratch_operands = 0 : i64, tpu.core_type = #tpu.core_type<tc>, window_params = [{transform_indices = @transform_0, window_bounds = array<i64: 128, 8>}, {pipeline_mode = #tpu.pipeline_mode<synchronous>, transform_indices = @transform_1, window_bounds = array<i64: 8, 16>}, {pipeline_mode = #tpu.pipeline_mode<synchronous>, transform_indices = @transform_2, window_bounds = array<i64: 1, 16>}, {transform_indices = @transform_3, window_bounds = array<i64: 128, 16>}]} {
    %c0 = arith.constant 0 : index
    %c0_0 = arith.constant 0 : index
    %0 = vector.load %arg1[%c0, %c0_0] : memref<128x8xf32, #tpu.memory_space<vmem>>, vector<128x8xf32>
    %c0_1 = arith.constant 0 : index
    %c0_2 = arith.constant 0 : index
    %1 = vector.load %arg2[%c0_1, %c0_2] : memref<8x16xf32, #tpu.memory_space<vmem>>, vector<8x16xf32>
    %cst = arith.constant dense<0.000000e+00> : vector<128x16xf32>
    %2 = tpu.matmul %0, %1, %cst {dimension_numbers = #tpu.dot_dimension_numbers<[1], [0], [0], [1], [0, 0, 1, 1], [], []>} : vector<128x8xf32>, vector<8x16xf32>, vector<128x16xf32> -> vector<128x16xf32>
    %c0_3 = arith.constant 0 : index
    %c0_4 = arith.constant 0 : index
    %3 = vector.load %arg3[%c0_3, %c0_4] : memref<1x16xf32, #tpu.memory_space<vmem>>, vector<1x16xf32>
    %4 = vector.broadcast %3 : vector<1x16xf32> to vector<128x16xf32>
    %5 = arith.addf %2, %4 : vector<128x16xf32>
    %cst_5 = arith.constant 0.000000e+00 : f32
    %6 = vector.broadcast %cst_5 : f32 to vector<128x16xf32>
    %7 = arith.cmpf ogt, %5, %6 : vector<128x16xf32>
    %cst_6 = arith.constant 2.000000e-01 : f32
    %8 = vector.broadcast %cst_6 : f32 to vector<128x16xf32>
    %9 = arith.mulf %8, %5 : vector<128x16xf32>
    %10 = arith.select %7, %5, %9 : vector<128x16xi1>, vector<128x16xf32>
    %c0_7 = arith.constant 0 : index
    %c0_8 = arith.constant 0 : index
    %11 = vector.load %arg4[%c0_7, %c0_8] : memref<128x16xf32, #tpu.memory_space<vmem>>, vector<128x16xf32>
    tpu.vector_store %arg4[%c0_7, %c0_8], %10 {strides = array<i32>} : memref<128x16xf32, #tpu.memory_space<vmem>>, vector<128x16xf32>,
    return
  }
  func.func @transform_0(%arg0: i32) -> (i32, i32) {
    %c0_i32 = arith.constant 0 : i32
    %c0_i32_0 = arith.constant 0 : i32
    return %arg0, %c0_i32 : i32, i32
  }
  func.func @transform_1(%arg0: i32) -> (i32, i32) {
    %c0_i32 = arith.constant 0 : i32
    %c0_i32_0 = arith.constant 0 : i32
    %c0_i32_1 = arith.constant 0 : i32
    return %c0_i32, %c0_i32_0 : i32, i32
  }
  func.func @transform_2(%arg0: i32) -> (i32, i32) {
    %c0_i32 = arith.constant 0 : i32
    %c0_i32_0 = arith.constant 0 : i32
    %c0_i32_1 = arith.constant 0 : i32
    return %c0_i32, %c0_i32_0 : i32, i32
  }
  func.func @transform_3(%arg0: i32) -> (i32, i32) {
    %c0_i32 = arith.constant 0 : i32
    %c0_i32_0 = arith.constant 0 : i32
    return %arg0, %c0_i32 : i32, i32
  }
}

module attributes {stable_mosaic.version = 11 : i64} {
  func.func @_drb_main_kernel(%arg0: i32, %arg1: memref<2048xi32, #tpu.memory_space<smem>>, %arg2: memref<256x16xf32, #tpu.memory_space<vmem>>, %arg3: memref<1024x6xf32, #tpu.memory_space<vmem>>, %arg4: memref<128x8xf32, #tpu.memory_space<vmem>>, %arg5: memref<6x16xf32, #tpu.memory_space<vmem>>, %arg6: memref<1x16xf32, #tpu.memory_space<vmem>>, %arg7: memref<16x32xf32, #tpu.memory_space<vmem>>, %arg8: memref<16x32xf32, #tpu.memory_space<vmem>>, %arg9: memref<16x32xf32, #tpu.memory_space<vmem>>, %arg10: memref<16x32xf32, #tpu.memory_space<vmem>>, %arg11: memref<1x32xf32, #tpu.memory_space<vmem>>, %arg12: memref<32x32xf32, #tpu.memory_space<vmem>>, %arg13: memref<8x32xf32, #tpu.memory_space<vmem>>, %arg14: memref<1x32xf32, #tpu.memory_space<vmem>>, %arg15: memref<128x32xf32, #tpu.memory_space<vmem>>, %arg16: memref<1024x16xf32, #tpu.memory_space<vmem>>) attributes {dimension_semantics = [#tpu.dimension_semantics<parallel>], iteration_bounds = array<i64: 2>, scalar_prefetch = 1 : i64, scratch_operands = 1 : i64, tpu.core_type = #tpu.core_type<tc>, window_params = [{pipeline_mode = #tpu.pipeline_mode<synchronous>, transform_indices = @transform_0, window_bounds = array<i64: 256, 16>}, {transform_indices = @transform_1, window_bounds = array<i64: 1024, 6>}, {transform_indices = @transform_2, window_bounds = array<i64: 128, 8>}, {pipeline_mode = #tpu.pipeline_mode<synchronous>, transform_indices = @transform_3, window_bounds = array<i64: 6, 16>}, {pipeline_mode = #tpu.pipeline_mode<synchronous>, transform_indices = @transform_4, window_bounds = array<i64: 1, 16>}, {pipeline_mode = #tpu.pipeline_mode<synchronous>, transform_indices = @transform_5, window_bounds = array<i64: 16, 32>}, {pipeline_mode = #tpu.pipeline_mode<synchronous>, transform_indices = @transform_6, window_bounds = array<i64: 16, 32>}, {pipeline_mode = #tpu.pipeline_mode<synchronous>, transform_indices = @transform_7, window_bounds = array<i64: 16, 32>}, {pipeline_mode = #tpu.pipeline_mode<synchronous>, transform_indices = @transform_8, window_bounds = array<i64: 16, 32>}, {pipeline_mode = #tpu.pipeline_mode<synchronous>, transform_indices = @transform_9, window_bounds = array<i64: 1, 32>}, {pipeline_mode = #tpu.pipeline_mode<synchronous>, transform_indices = @transform_10, window_bounds = array<i64: 32, 32>}, {pipeline_mode = #tpu.pipeline_mode<synchronous>, transform_indices = @transform_11, window_bounds = array<i64: 8, 32>}, {pipeline_mode = #tpu.pipeline_mode<synchronous>, transform_indices = @transform_12, window_bounds = array<i64: 1, 32>}, {transform_indices = @transform_13, window_bounds = array<i64: 128, 32>}]} {
    %c1024_i32 = arith.constant 1024 : i32
    %0 = arith.muli %arg0, %c1024_i32 : i32
    %c0_i32 = arith.constant 0 : i32
    %c128_i32 = arith.constant 128 : i32
    %1 = arith.addi %c0_i32, %c128_i32 : i32
    %c1_i32 = arith.constant 1 : i32
    scf.for %arg17 = %c0_i32 to %1 step %c1_i32  : i32 {
      %c8_i32 = arith.constant 8 : i32
      %59 = arith.muli %arg17, %c8_i32 : i32
      %c0_i32_42 = arith.constant 0 : i32
      %60 = arith.addi %59, %c0_i32_42 : i32
      %61 = arith.addi %0, %60 : i32
      %62 = arith.index_cast %61 : i32 to index
      %63 = memref.load %arg1[%62] : memref<2048xi32, #tpu.memory_space<smem>>
      %64 = arith.index_cast %63 : i32 to index
      %c0_43 = arith.constant 0 : index
      %65 = vector.load %arg2[%64, %c0_43] : memref<256x16xf32, #tpu.memory_space<vmem>>, vector<1x16xf32>
      %66 = arith.index_cast %60 : i32 to index
      %c0_44 = arith.constant 0 : index
      %67 = vector.load %arg16[%66, %c0_44] : memref<1024x16xf32, #tpu.memory_space<vmem>>, vector<1x16xf32>
      tpu.vector_store %arg16[%66, %c0_44], %65 {strides = array<i32>} : memref<1024x16xf32, #tpu.memory_space<vmem>>, vector<1x16xf32>,
      %c8_i32_45 = arith.constant 8 : i32
      %68 = arith.muli %arg17, %c8_i32_45 : i32
      %c1_i32_46 = arith.constant 1 : i32
      %69 = arith.addi %68, %c1_i32_46 : i32
      %70 = arith.addi %0, %69 : i32
      %71 = arith.index_cast %70 : i32 to index
      %72 = memref.load %arg1[%71] : memref<2048xi32, #tpu.memory_space<smem>>
      %73 = arith.index_cast %72 : i32 to index
      %c0_47 = arith.constant 0 : index
      %74 = vector.load %arg2[%73, %c0_47] : memref<256x16xf32, #tpu.memory_space<vmem>>, vector<1x16xf32>
      %75 = arith.index_cast %69 : i32 to index
      %c0_48 = arith.constant 0 : index
      %76 = vector.load %arg16[%75, %c0_48] : memref<1024x16xf32, #tpu.memory_space<vmem>>, vector<1x16xf32>
      tpu.vector_store %arg16[%75, %c0_48], %74 {strides = array<i32>} : memref<1024x16xf32, #tpu.memory_space<vmem>>, vector<1x16xf32>,
      %c8_i32_49 = arith.constant 8 : i32
      %77 = arith.muli %arg17, %c8_i32_49 : i32
      %c2_i32 = arith.constant 2 : i32
      %78 = arith.addi %77, %c2_i32 : i32
      %79 = arith.addi %0, %78 : i32
      %80 = arith.index_cast %79 : i32 to index
      %81 = memref.load %arg1[%80] : memref<2048xi32, #tpu.memory_space<smem>>
      %82 = arith.index_cast %81 : i32 to index
      %c0_50 = arith.constant 0 : index
      %83 = vector.load %arg2[%82, %c0_50] : memref<256x16xf32, #tpu.memory_space<vmem>>, vector<1x16xf32>
      %84 = arith.index_cast %78 : i32 to index
      %c0_51 = arith.constant 0 : index
      %85 = vector.load %arg16[%84, %c0_51] : memref<1024x16xf32, #tpu.memory_space<vmem>>, vector<1x16xf32>
      tpu.vector_store %arg16[%84, %c0_51], %83 {strides = array<i32>} : memref<1024x16xf32, #tpu.memory_space<vmem>>, vector<1x16xf32>,
      %c8_i32_52 = arith.constant 8 : i32
      %86 = arith.muli %arg17, %c8_i32_52 : i32
      %c3_i32 = arith.constant 3 : i32
      %87 = arith.addi %86, %c3_i32 : i32
      %88 = arith.addi %0, %87 : i32
      %89 = arith.index_cast %88 : i32 to index
      %90 = memref.load %arg1[%89] : memref<2048xi32, #tpu.memory_space<smem>>
      %91 = arith.index_cast %90 : i32 to index
      %c0_53 = arith.constant 0 : index
      %92 = vector.load %arg2[%91, %c0_53] : memref<256x16xf32, #tpu.memory_space<vmem>>, vector<1x16xf32>
      %93 = arith.index_cast %87 : i32 to index
      %c0_54 = arith.constant 0 : index
      %94 = vector.load %arg16[%93, %c0_54] : memref<1024x16xf32, #tpu.memory_space<vmem>>, vector<1x16xf32>
      tpu.vector_store %arg16[%93, %c0_54], %92 {strides = array<i32>} : memref<1024x16xf32, #tpu.memory_space<vmem>>, vector<1x16xf32>,
      %c8_i32_55 = arith.constant 8 : i32
      %95 = arith.muli %arg17, %c8_i32_55 : i32
      %c4_i32 = arith.constant 4 : i32
      %96 = arith.addi %95, %c4_i32 : i32
      %97 = arith.addi %0, %96 : i32
      %98 = arith.index_cast %97 : i32 to index
      %99 = memref.load %arg1[%98] : memref<2048xi32, #tpu.memory_space<smem>>
      %100 = arith.index_cast %99 : i32 to index
      %c0_56 = arith.constant 0 : index
      %101 = vector.load %arg2[%100, %c0_56] : memref<256x16xf32, #tpu.memory_space<vmem>>, vector<1x16xf32>
      %102 = arith.index_cast %96 : i32 to index
      %c0_57 = arith.constant 0 : index
      %103 = vector.load %arg16[%102, %c0_57] : memref<1024x16xf32, #tpu.memory_space<vmem>>, vector<1x16xf32>
      tpu.vector_store %arg16[%102, %c0_57], %101 {strides = array<i32>} : memref<1024x16xf32, #tpu.memory_space<vmem>>, vector<1x16xf32>,
      %c8_i32_58 = arith.constant 8 : i32
      %104 = arith.muli %arg17, %c8_i32_58 : i32
      %c5_i32 = arith.constant 5 : i32
      %105 = arith.addi %104, %c5_i32 : i32
      %106 = arith.addi %0, %105 : i32
      %107 = arith.index_cast %106 : i32 to index
      %108 = memref.load %arg1[%107] : memref<2048xi32, #tpu.memory_space<smem>>
      %109 = arith.index_cast %108 : i32 to index
      %c0_59 = arith.constant 0 : index
      %110 = vector.load %arg2[%109, %c0_59] : memref<256x16xf32, #tpu.memory_space<vmem>>, vector<1x16xf32>
      %111 = arith.index_cast %105 : i32 to index
      %c0_60 = arith.constant 0 : index
      %112 = vector.load %arg16[%111, %c0_60] : memref<1024x16xf32, #tpu.memory_space<vmem>>, vector<1x16xf32>
      tpu.vector_store %arg16[%111, %c0_60], %110 {strides = array<i32>} : memref<1024x16xf32, #tpu.memory_space<vmem>>, vector<1x16xf32>,
      %c8_i32_61 = arith.constant 8 : i32
      %113 = arith.muli %arg17, %c8_i32_61 : i32
      %c6_i32 = arith.constant 6 : i32
      %114 = arith.addi %113, %c6_i32 : i32
      %115 = arith.addi %0, %114 : i32
      %116 = arith.index_cast %115 : i32 to index
      %117 = memref.load %arg1[%116] : memref<2048xi32, #tpu.memory_space<smem>>
      %118 = arith.index_cast %117 : i32 to index
      %c0_62 = arith.constant 0 : index
      %119 = vector.load %arg2[%118, %c0_62] : memref<256x16xf32, #tpu.memory_space<vmem>>, vector<1x16xf32>
      %120 = arith.index_cast %114 : i32 to index
      %c0_63 = arith.constant 0 : index
      %121 = vector.load %arg16[%120, %c0_63] : memref<1024x16xf32, #tpu.memory_space<vmem>>, vector<1x16xf32>
      tpu.vector_store %arg16[%120, %c0_63], %119 {strides = array<i32>} : memref<1024x16xf32, #tpu.memory_space<vmem>>, vector<1x16xf32>,
      %c8_i32_64 = arith.constant 8 : i32
      %122 = arith.muli %arg17, %c8_i32_64 : i32
      %c7_i32 = arith.constant 7 : i32
      %123 = arith.addi %122, %c7_i32 : i32
      %124 = arith.addi %0, %123 : i32
      %125 = arith.index_cast %124 : i32 to index
      %126 = memref.load %arg1[%125] : memref<2048xi32, #tpu.memory_space<smem>>
      %127 = arith.index_cast %126 : i32 to index
      %c0_65 = arith.constant 0 : index
      %128 = vector.load %arg2[%127, %c0_65] : memref<256x16xf32, #tpu.memory_space<vmem>>, vector<1x16xf32>
      %129 = arith.index_cast %123 : i32 to index
      %c0_66 = arith.constant 0 : index
      %130 = vector.load %arg16[%129, %c0_66] : memref<1024x16xf32, #tpu.memory_space<vmem>>, vector<1x16xf32>
      tpu.vector_store %arg16[%129, %c0_66], %128 {strides = array<i32>} : memref<1024x16xf32, #tpu.memory_space<vmem>>, vector<1x16xf32>,
    }
    %c128_i32_0 = arith.constant 128 : i32
    %c0 = arith.constant 0 : index
    %c0_1 = arith.constant 0 : index
    %2 = vector.load %arg3[%c0, %c0_1] : memref<1024x6xf32, #tpu.memory_space<vmem>>, vector<1024x6xf32>
    %c0_2 = arith.constant 0 : index
    %c0_3 = arith.constant 0 : index
    %3 = vector.load %arg5[%c0_2, %c0_3] : memref<6x16xf32, #tpu.memory_space<vmem>>, vector<6x16xf32>
    %cst = arith.constant dense<0.000000e+00> : vector<1024x16xf32>
    %4 = tpu.matmul %2, %3, %cst {dimension_numbers = #tpu.dot_dimension_numbers<[1], [0], [0], [1], [0, 0, 1, 1], [], []>} : vector<1024x6xf32>, vector<6x16xf32>, vector<1024x16xf32> -> vector<1024x16xf32>
    %c0_4 = arith.constant 0 : index
    %c0_5 = arith.constant 0 : index
    %5 = vector.load %arg6[%c0_4, %c0_5] : memref<1x16xf32, #tpu.memory_space<vmem>>, vector<1x16xf32>
    %6 = vector.broadcast %5 : vector<1x16xf32> to vector<1024x16xf32>
    %7 = arith.addf %4, %6 : vector<1024x16xf32>
    %cst_6 = arith.constant 0.000000e+00 : f32
    %8 = vector.broadcast %cst_6 : f32 to vector<1024x16xf32>
    %9 = arith.maximumf %7, %8 : vector<1024x16xf32>
    %c0_7 = arith.constant 0 : index
    %c0_8 = arith.constant 0 : index
    %10 = vector.load %arg16[%c0_7, %c0_8] : memref<1024x16xf32, #tpu.memory_space<vmem>>, vector<1024x16xf32>
    %c0_9 = arith.constant 0 : index
    %c0_10 = arith.constant 0 : index
    %11 = vector.load %arg7[%c0_9, %c0_10] : memref<16x32xf32, #tpu.memory_space<vmem>>, vector<16x32xf32>
    %cst_11 = arith.constant dense<0.000000e+00> : vector<1024x32xf32>
    %12 = tpu.matmul %10, %11, %cst_11 {dimension_numbers = #tpu.dot_dimension_numbers<[1], [0], [0], [1], [0, 0, 1, 1], [], []>} : vector<1024x16xf32>, vector<16x32xf32>, vector<1024x32xf32> -> vector<1024x32xf32>
    %c0_12 = arith.constant 0 : index
    %c0_13 = arith.constant 0 : index
    %13 = vector.load %arg8[%c0_12, %c0_13] : memref<16x32xf32, #tpu.memory_space<vmem>>, vector<16x32xf32>
    %cst_14 = arith.constant dense<0.000000e+00> : vector<1024x32xf32>
    %14 = tpu.matmul %9, %13, %cst_14 {dimension_numbers = #tpu.dot_dimension_numbers<[1], [0], [0], [1], [0, 0, 1, 1], [], []>} : vector<1024x16xf32>, vector<16x32xf32>, vector<1024x32xf32> -> vector<1024x32xf32>
    %15 = arith.addf %12, %14 : vector<1024x32xf32>
    %16 = vector.shape_cast %15 : vector<1024x32xf32> to vector<128x8x32xf32>
    %cst_15 = arith.constant dense<0xFF800000> : vector<128x32xf32>
    %17 = vector.multi_reduction <maximumf>, %16, %cst_15 [1] : vector<128x8x32xf32> to vector<128x32xf32>
    %18 = vector.shape_cast %17 : vector<128x32xf32> to vector<128x1x32xf32>
    %19 = vector.broadcast %18 : vector<128x1x32xf32> to vector<128x8x32xf32>
    %20 = arith.subf %16, %19 : vector<128x8x32xf32>
    %21 = math.exp %20 : vector<128x8x32xf32>
    %cst_16 = arith.constant dense<0.000000e+00> : vector<128x32xf32>
    %22 = vector.multi_reduction <add>, %21, %cst_16 [1] : vector<128x8x32xf32> to vector<128x32xf32>
    %23 = vector.shape_cast %22 : vector<128x32xf32> to vector<128x1x32xf32>
    %24 = vector.broadcast %23 : vector<128x1x32xf32> to vector<128x8x32xf32>
    %25 = arith.divf %21, %24 : vector<128x8x32xf32>
    %26 = vector.shape_cast %10 : vector<1024x16xf32> to vector<128x8x16xf32>
    %27 = vector.shape_cast %9 : vector<1024x16xf32> to vector<128x8x16xf32>
    %28 = vector.extract_strided_slice %25 {offsets = [0, 0, 0], sizes = [128, 8, 16], strides = [1, 1, 1]} : vector<128x8x32xf32> to vector<128x8x16xf32>
    %29 = arith.mulf %26, %28 : vector<128x8x16xf32>
    %cst_17 = arith.constant dense<0.000000e+00> : vector<128x16xf32>
    %30 = vector.multi_reduction <add>, %29, %cst_17 [1] : vector<128x8x16xf32> to vector<128x16xf32>
    %31 = vector.extract_strided_slice %25 {offsets = [0, 0, 16], sizes = [128, 8, 16], strides = [1, 1, 1]} : vector<128x8x32xf32> to vector<128x8x16xf32>
    %32 = arith.mulf %27, %31 : vector<128x8x16xf32>
    %cst_18 = arith.constant dense<0.000000e+00> : vector<128x16xf32>
    %33 = vector.multi_reduction <add>, %32, %cst_18 [1] : vector<128x8x16xf32> to vector<128x16xf32>
    %c0_19 = arith.constant 0 : index
    %c0_20 = arith.constant 0 : index
    %34 = vector.load %arg9[%c0_19, %c0_20] : memref<16x32xf32, #tpu.memory_space<vmem>>, vector<16x32xf32>
    %cst_21 = arith.constant dense<0.000000e+00> : vector<128x32xf32>
    %35 = tpu.matmul %30, %34, %cst_21 {dimension_numbers = #tpu.dot_dimension_numbers<[1], [0], [0], [1], [0, 0, 1, 1], [], []>} : vector<128x16xf32>, vector<16x32xf32>, vector<128x32xf32> -> vector<128x32xf32>
    %c0_22 = arith.constant 0 : index
    %c0_23 = arith.constant 0 : index
    %36 = vector.load %arg10[%c0_22, %c0_23] : memref<16x32xf32, #tpu.memory_space<vmem>>, vector<16x32xf32>
    %cst_24 = arith.constant dense<0.000000e+00> : vector<128x32xf32>
    %37 = tpu.matmul %33, %36, %cst_24 {dimension_numbers = #tpu.dot_dimension_numbers<[1], [0], [0], [1], [0, 0, 1, 1], [], []>} : vector<128x16xf32>, vector<16x32xf32>, vector<128x32xf32> -> vector<128x32xf32>
    %38 = arith.addf %35, %37 : vector<128x32xf32>
    %c0_25 = arith.constant 0 : index
    %c0_26 = arith.constant 0 : index
    %39 = vector.load %arg11[%c0_25, %c0_26] : memref<1x32xf32, #tpu.memory_space<vmem>>, vector<1x32xf32>
    %40 = vector.broadcast %39 : vector<1x32xf32> to vector<128x32xf32>
    %41 = arith.addf %38, %40 : vector<128x32xf32>
    %cst_27 = arith.constant 0.000000e+00 : f32
    %42 = vector.broadcast %cst_27 : f32 to vector<128x32xf32>
    %43 = arith.maximumf %41, %42 : vector<128x32xf32>
    %c0_28 = arith.constant 0 : index
    %c0_29 = arith.constant 0 : index
    %44 = vector.load %arg12[%c0_28, %c0_29] : memref<32x32xf32, #tpu.memory_space<vmem>>, vector<32x32xf32>
    %cst_30 = arith.constant dense<0.000000e+00> : vector<128x32xf32>
    %45 = tpu.matmul %43, %44, %cst_30 {dimension_numbers = #tpu.dot_dimension_numbers<[1], [0], [0], [1], [0, 0, 1, 1], [], []>} : vector<128x32xf32>, vector<32x32xf32>, vector<128x32xf32> -> vector<128x32xf32>
    %c0_31 = arith.constant 0 : index
    %c0_32 = arith.constant 0 : index
    %46 = vector.load %arg4[%c0_31, %c0_32] : memref<128x8xf32, #tpu.memory_space<vmem>>, vector<128x8xf32>
    %c0_33 = arith.constant 0 : index
    %c0_34 = arith.constant 0 : index
    %47 = vector.load %arg13[%c0_33, %c0_34] : memref<8x32xf32, #tpu.memory_space<vmem>>, vector<8x32xf32>
    %cst_35 = arith.constant dense<0.000000e+00> : vector<128x32xf32>
    %48 = tpu.matmul %46, %47, %cst_35 {dimension_numbers = #tpu.dot_dimension_numbers<[1], [0], [0], [1], [0, 0, 1, 1], [], []>} : vector<128x8xf32>, vector<8x32xf32>, vector<128x32xf32> -> vector<128x32xf32>
    %49 = arith.addf %45, %48 : vector<128x32xf32>
    %c0_36 = arith.constant 0 : index
    %c0_37 = arith.constant 0 : index
    %50 = vector.load %arg14[%c0_36, %c0_37] : memref<1x32xf32, #tpu.memory_space<vmem>>, vector<1x32xf32>
    %51 = vector.broadcast %50 : vector<1x32xf32> to vector<128x32xf32>
    %52 = arith.addf %49, %51 : vector<128x32xf32>
    %cst_38 = arith.constant 0.000000e+00 : f32
    %53 = vector.broadcast %cst_38 : f32 to vector<128x32xf32>
    %54 = arith.cmpf ogt, %52, %53 : vector<128x32xf32>
    %cst_39 = arith.constant 2.000000e-01 : f32
    %55 = vector.broadcast %cst_39 : f32 to vector<128x32xf32>
    %56 = arith.mulf %55, %52 : vector<128x32xf32>
    %57 = arith.select %54, %52, %56 : vector<128x32xi1>, vector<128x32xf32>
    %c0_40 = arith.constant 0 : index
    %c0_41 = arith.constant 0 : index
    %58 = vector.load %arg15[%c0_40, %c0_41] : memref<128x32xf32, #tpu.memory_space<vmem>>, vector<128x32xf32>
    tpu.vector_store %arg15[%c0_40, %c0_41], %57 {strides = array<i32>} : memref<128x32xf32, #tpu.memory_space<vmem>>, vector<128x32xf32>,
    return
  }
  func.func @transform_0(%arg0: i32, %arg1: memref<2048xi32, #tpu.memory_space<smem>>) -> (i32, i32) {
    %c0_i32 = arith.constant 0 : i32
    %c0_i32_0 = arith.constant 0 : i32
    %c0_i32_1 = arith.constant 0 : i32
    return %c0_i32, %c0_i32_0 : i32, i32
  }
  func.func @transform_1(%arg0: i32, %arg1: memref<2048xi32, #tpu.memory_space<smem>>) -> (i32, i32) {
    %c0_i32 = arith.constant 0 : i32
    %c0_i32_0 = arith.constant 0 : i32
    return %arg0, %c0_i32 : i32, i32
  }
  func.func @transform_2(%arg0: i32, %arg1: memref<2048xi32, #tpu.memory_space<smem>>) -> (i32, i32) {
    %c0_i32 = arith.constant 0 : i32
    %c0_i32_0 = arith.constant 0 : i32
    return %arg0, %c0_i32 : i32, i32
  }
  func.func @transform_3(%arg0: i32, %arg1: memref<2048xi32, #tpu.memory_space<smem>>) -> (i32, i32) {
    %c0_i32 = arith.constant 0 : i32
    %c0_i32_0 = arith.constant 0 : i32
    %c0_i32_1 = arith.constant 0 : i32
    return %c0_i32, %c0_i32_0 : i32, i32
  }
  func.func @transform_4(%arg0: i32, %arg1: memref<2048xi32, #tpu.memory_space<smem>>) -> (i32, i32) {
    %c0_i32 = arith.constant 0 : i32
    %c0_i32_0 = arith.constant 0 : i32
    %c0_i32_1 = arith.constant 0 : i32
    return %c0_i32, %c0_i32_0 : i32, i32
  }
  func.func @transform_5(%arg0: i32, %arg1: memref<2048xi32, #tpu.memory_space<smem>>) -> (i32, i32) {
    %c0_i32 = arith.constant 0 : i32
    %c0_i32_0 = arith.constant 0 : i32
    %c0_i32_1 = arith.constant 0 : i32
    return %c0_i32, %c0_i32_0 : i32, i32
  }
  func.func @transform_6(%arg0: i32, %arg1: memref<2048xi32, #tpu.memory_space<smem>>) -> (i32, i32) {
    %c0_i32 = arith.constant 0 : i32
    %c0_i32_0 = arith.constant 0 : i32
    %c0_i32_1 = arith.constant 0 : i32
    return %c0_i32, %c0_i32_0 : i32, i32
  }
  func.func @transform_7(%arg0: i32, %arg1: memref<2048xi32, #tpu.memory_space<smem>>) -> (i32, i32) {
    %c0_i32 = arith.constant 0 : i32
    %c0_i32_0 = arith.constant 0 : i32
    %c0_i32_1 = arith.constant 0 : i32
    return %c0_i32, %c0_i32_0 : i32, i32
  }
  func.func @transform_8(%arg0: i32, %arg1: memref<2048xi32, #tpu.memory_space<smem>>) -> (i32, i32) {
    %c0_i32 = arith.constant 0 : i32
    %c0_i32_0 = arith.constant 0 : i32
    %c0_i32_1 = arith.constant 0 : i32
    return %c0_i32, %c0_i32_0 : i32, i32
  }
  func.func @transform_9(%arg0: i32, %arg1: memref<2048xi32, #tpu.memory_space<smem>>) -> (i32, i32) {
    %c0_i32 = arith.constant 0 : i32
    %c0_i32_0 = arith.constant 0 : i32
    %c0_i32_1 = arith.constant 0 : i32
    return %c0_i32, %c0_i32_0 : i32, i32
  }
  func.func @transform_10(%arg0: i32, %arg1: memref<2048xi32, #tpu.memory_space<smem>>) -> (i32, i32) {
    %c0_i32 = arith.constant 0 : i32
    %c0_i32_0 = arith.constant 0 : i32
    %c0_i32_1 = arith.constant 0 : i32
    return %c0_i32, %c0_i32_0 : i32, i32
  }
  func.func @transform_11(%arg0: i32, %arg1: memref<2048xi32, #tpu.memory_space<smem>>) -> (i32, i32) {
    %c0_i32 = arith.constant 0 : i32
    %c0_i32_0 = arith.constant 0 : i32
    %c0_i32_1 = arith.constant 0 : i32
    return %c0_i32, %c0_i32_0 : i32, i32
  }
  func.func @transform_12(%arg0: i32, %arg1: memref<2048xi32, #tpu.memory_space<smem>>) -> (i32, i32) {
    %c0_i32 = arith.constant 0 : i32
    %c0_i32_0 = arith.constant 0 : i32
    %c0_i32_1 = arith.constant 0 : i32
    return %c0_i32, %c0_i32_0 : i32, i32
  }
  func.func @transform_13(%arg0: i32, %arg1: memref<2048xi32, #tpu.memory_space<smem>>) -> (i32, i32) {
    %c0_i32 = arith.constant 0 : i32
    %c0_i32_0 = arith.constant 0 : i32
    return %arg0, %c0_i32 : i32, i32
  }
}

</mosaic_0001>

<llo_original>
// kernel: dilated_res_block.2
$region0: #{dilated_res_block.2}
  #allocation0 [shape = 'u32[]', space=smem, size = 0x4, offset = 0x4, fixed_abs, tag = 'smem constant byte address 0x4 - core index']
  #allocation1 [shape = 'u32[144,128]{1,0:T(1,128)}', space=vmem, size = 0x12000, scoped, tag = 'internal scratch']
  %s0 = inlined_call_operand.vmem [shape: f32[256,8], index: 0, kind: input, shape index: {}]
  %s1 = inlined_call_operand.vmem [shape: f32[8,16], index: 1, kind: input, shape index: {}]
  %s2 = inlined_call_operand.vmem [shape: f32[1,16], index: 2, kind: input, shape index: {}]
  %s3 = inlined_call_operand.vmem [shape: f32[256,16], index: 3, kind: output, shape index: {}]
  %s4 = sld [smem:[#allocation0]]
  $region45: #{dilated_res_block.2} parent=0
    _
  %s6 = ssub.s32 1, %s4
  %s7 = scalar_select 0, %s6, %s4
  loop: start=0, step=1, limit=4
  $region2: #{dilated_res_block.2} parent=0 // loop_pre_header
    _
  $region3: #{dilated_res_block.2} parent=0 // loop_header
    %s9 = sphi 0, %s13
    %p10 = scmp.ge.s32.totalorder %s9, 4
    %s19 = sphi 0, %s21
    %s22 = sphi 0, %s19
    %s23 = sphi 0, %s22
    %s39 = sphi 0, %s23
    %s43 = sphi 0, %s43
    %s45 = sphi 0, %s43
    %s46 = sphi 0, %s45
    %s60 = sphi 0, %s46
    %s64 = sphi 0, %s64
    %s66 = sphi 0, %s64
    %s67 = sphi 0, %s66
    %s81 = sphi 0, %s67
    %s87 = sphi 0, %s89
    %s90 = sphi 0, %s87
    %s91 = sphi 0, %s90
    %s107 = sphi 0, %s91
  $region4: #{dilated_res_block.2} parent=0 // loop_header_branch
    %12 = sbr.rel (%p10) target = $region8
  $region5: #{dilated_res_block.2} parent=0 // loop_body
    %s14 = ssub.s32 %s9, 1
    %s15 = ssub.s32 %s9, 2
    %s16 = sadd.s32 %s9, 1
    %s17 = ssub.s32 %s9, %s16
    %p18 = scmp.eq.s32.totalorder %s17, 0
    %s20 = sadd.s32 %s19, 1
    %s21 = scalar_select %p18, %s19, %s20
    %p24 = pneg %p18
    %p25 = scmp.eq.s32.totalorder %s9, 1
    %p26 = por %p24, %p25
    %p27 = scmp.ne.s32.totalorder %s19, %s22
    %p28 = scmp.eq.s32.totalorder %s9, 0
    %p29 = por %p27, %p28
    %p30 = scmp.ne.s32.totalorder %s19, %s22
    %p31 = scmp.eq.s32.totalorder %s14, 1
    %p32 = por %p30, %p31
    %p33 = scmp.ne.s32.totalorder %s22, %s23
    %p34 = scmp.eq.s32.totalorder %s14, 0
    %p35 = por %p33, %p34
    %p36 = scmp.ne.s32.totalorder %s22, %s23
    %p37 = scmp.eq.s32.totalorder %s15, 1
    %p38 = por %p36, %p37
    %p40 = scmp.ne.s32.totalorder %s23, %s39
    %p41 = scmp.eq.s32.totalorder %s15, 0
    %p42 = por %p40, %p41
    %s44 = sadd.s32 %s43, 1
    %p47 = scmp.eq.s32.totalorder %s9, 1
    %p48 = scmp.ne.s32.totalorder %s43, %s45
    %p49 = scmp.eq.s32.totalorder %s9, 0
    %p50 = por %p48, %p49
    %p51 = scmp.ne.s32.totalorder %s43, %s45
    %p52 = scmp.eq.s32.totalorder %s14, 1
    %p53 = por %p51, %p52
    %p54 = scmp.ne.s32.totalorder %s45, %s46
    %p55 = scmp.eq.s32.totalorder %s14, 0
    %p56 = por %p54, %p55
    %p57 = scmp.ne.s32.totalorder %s45, %s46
    %p58 = scmp.eq.s32.totalorder %s15, 1
    %p59 = por %p57, %p58
    %p61 = scmp.ne.s32.totalorder %s46, %s60
    %p62 = scmp.eq.s32.totalorder %s15, 0
    %p63 = por %p61, %p62
    %s65 = sadd.s32 %s64, 1
    %p68 = scmp.eq.s32.totalorder %s9, 1
    %p69 = scmp.ne.s32.totalorder %s64, %s66
    %p70 = scmp.eq.s32.totalorder %s9, 0
    %p71 = por %p69, %p70
    %p72 = scmp.ne.s32.totalorder %s64, %s66
    %p73 = scmp.eq.s32.totalorder %s14, 1
    %p74 = por %p72, %p73
    %p75 = scmp.ne.s32.totalorder %s66, %s67
    %p76 = scmp.eq.s32.totalorder %s14, 0
    %p77 = por %p75, %p76
    %p78 = scmp.ne.s32.totalorder %s66, %s67
    %p79 = scmp.eq.s32.totalorder %s15, 1
    %p80 = por %p78, %p79
    %p82 = scmp.ne.s32.totalorder %s67, %s81
    %p83 = scmp.eq.s32.totalorder %s15, 0
    %p84 = por %p82, %p83
    %s85 = ssub.s32 %s9, %s16
    %p86 = scmp.eq.s32.totalorder %s85, 0
    %s88 = sadd.s32 %s87, 1
    %s89 = scalar_select %p86, %s87, %s88
    %p92 = pneg %p86
    %p93 = scmp.eq.s32.totalorder %s9, 1
    %p94 = por %p92, %p93
    %p95 = scmp.ne.s32.totalorder %s87, %s90
    %p96 = scmp.eq.s32.totalorder %s9, 0
    %p97 = por %p95, %p96
    %p98 = scmp.ne.s32.totalorder %s87, %s90
    %p99 = scmp.eq.s32.totalorder %s14, 1
    %p100 = por %p98, %p99
    %p101 = scmp.ne.s32.totalorder %s90, %s91
    %p102 = scmp.eq.s32.totalorder %s14, 0
    %p103 = por %p101, %p102
    %p104 = scmp.ne.s32.totalorder %s90, %s91
    %p105 = scmp.eq.s32.totalorder %s15, 1
    %p106 = por %p104, %p105
    %p108 = scmp.ne.s32.totalorder %s91, %s107
    %p109 = scmp.eq.s32.totalorder %s15, 0
    %p110 = por %p108, %p109
    %p111 = scmp.le.s32.totalorder 1, %s9
    %p112 = scmp.lt.s32.totalorder %s9, 3
    %p113 = pnand %p111, %p112
    %p114 = pneg %p113
    // Predicated region
    $region9: #{dilated_res_block.2} parent=5 // pred_check
      _
    $region10: #{dilated_res_block.2} parent=5 // pred_check_branch
      %116 = sbr.rel (%p113) target = $region12
    $region11: #{dilated_res_block.2} parent=5 // pred_region
      %s117 = ssub.s32 %s9, 1
      // Predicated region
      $region13: #{dilated_res_block.2} parent=11 // pred_check
        %p118 = pneg %p56
      $region14: #{dilated_res_block.2} parent=11 // pred_check_branch
        %120 = sbr.rel (%p118) target = $region16
      $region15: #{dilated_res_block.2} parent=11 // pred_region
        _
      $region16: #{dilated_res_block.2} parent=11 // pred_fallthru
        _
      // Predicated region
      $region17: #{dilated_res_block.2} parent=11 // pred_check
        %p121 = pneg %p77
      $region18: #{dilated_res_block.2} parent=11 // pred_check_branch
        %123 = sbr.rel (%p121) target = $region20
      $region19: #{dilated_res_block.2} parent=11 // pred_region
        _
      $region20: #{dilated_res_block.2} parent=11 // pred_fallthru
        _
    $region12: #{dilated_res_block.2} parent=5 // pred_fallthru
      _
    %p124 = scmp.lt.s32.totalorder %s9, 2
    // Predicated region
    $region21: #{dilated_res_block.2} parent=5 // pred_check
      %p125 = pneg %p124
    $region22: #{dilated_res_block.2} parent=5 // pred_check_branch
      %127 = sbr.rel (%p125) target = $region24
    $region23: #{dilated_res_block.2} parent=5 // pred_region
      // Predicated region
      $region25: #{dilated_res_block.2} parent=23 // pred_check
        %p128 = pneg %p29
      $region26: #{dilated_res_block.2} parent=23 // pred_check_branch
        %130 = sbr.rel (%p128) target = $region28
      $region27: #{dilated_res_block.2} parent=23 // pred_region
        %s131 = smul.u32 16, %s9
        %p132 = scmp.lt.s32.totalorder %s131, 31
        %s133 = scalar_select %p132, %s131, 31
        %s134 = smul.addr %s133, 8
        %s135 = scalar_lea.vmem %s0, %s134
        %s136 = smul.u32 16, %s9
      $region28: #{dilated_res_block.2} parent=23 // pred_fallthru
        _
    $region24: #{dilated_res_block.2} parent=5 // pred_fallthru
      _
    %p137 = scmp.le.s32.totalorder 1, %s9
    %p138 = scmp.lt.s32.totalorder %s9, 3
    %p139 = pnand %p137, %p138
    %p140 = pneg %p139
    // Predicated region
    $region29: #{dilated_res_block.2} parent=5 // pred_check
      _
    $region30: #{dilated_res_block.2} parent=5 // pred_check_branch
      %142 = sbr.rel (%p139) target = $region32
    $region31: #{dilated_res_block.2} parent=5 // pred_region
      %s143 = ssub.s32 %s9, 1
      %s144 = smul.u32 16, %s14
      %p145 = scmp.lt.s32.totalorder %s144, 31
      %s146 = scalar_select %p145, %s144, 31
      %s147 = smul.addr %s146, 8
      %s148 = scalar_lea.vmem %s0, %s147
      %p149 = pneg %p35
      %p150 = pneg %p32
      %p151 = pneg %p56
      %p152 = pneg %p53
      %p153 = pneg %p77
      %p154 = pneg %p74
      %p155 = pneg %p103
      %p156 = pneg %p100
      %s157 = smul.u32 16, %s14
      %p158 = scmp.lt.s32.totalorder %s157, 31
      %s159 = scalar_select %p158, %s157, 31
      %s160 = smul.addr %s159, 8
      %s161 = scalar_lea.vmem %s3, %s160
      %s162 = smul.u32 16, %s14
      %p163 = scmp.lt.s32.totalorder %s162, 31
      %s164 = scalar_select %p163, %s162, 31
      %s165 = smul.addr %s164, 8
      %s166 = scalar_lea.vmem %s0, %s165
      %s167 = smul.u32 16, %s14
      %s168 = smul.u32 16, %s14
      %p169 = scmp.lt.s32.totalorder %s168, 31
      %s170 = scalar_select %p169, %s168, 31
      %s171 = smul.addr %s170, 8
      %s172 = scalar_lea.vmem %s3, %s171
      %s173 = smul.u32 16, %s14
      %v174 = vld [vmem:[%s166] sm:$0xff]
      %v175 = vld [vmem:[%s166 + $0x8] sm:$0xff]
      %v176 = vld [vmem:[%s166 + $0x10] sm:$0xff]
      %v177 = vld [vmem:[%s166 + $0x18] sm:$0xff]
      %v178 = vld [vmem:[%s166 + $0x20] sm:$0xff]
      %v179 = vld [vmem:[%s166 + $0x28] sm:$0xff]
      %v180 = vld [vmem:[%s166 + $0x30] sm:$0xff]
      %v181 = vld [vmem:[%s166 + $0x38] sm:$0xff]
      %v182 = vld [vmem:[%s166 + $0x40] sm:$0xff]
      %v183 = vld [vmem:[%s166 + $0x48] sm:$0xff]
      %v184 = vld [vmem:[%s166 + $0x50] sm:$0xff]
      %v185 = vld [vmem:[%s166 + $0x58] sm:$0xff]
      %v186 = vld [vmem:[%s166 + $0x60] sm:$0xff]
      %v187 = vld [vmem:[%s166 + $0x68] sm:$0xff]
      %v188 = vld [vmem:[%s166 + $0x70] sm:$0xff]
      %v189 = vld [vmem:[%s166 + $0x78] sm:$0xff]
      %v190 = vld [vmem:[%s1] sm:$0xff]
      %v191 = vld [vmem:[%s2] sm:$0x1]
      %v193 = vlaneseq
      %v194 = vshrl.u32 %v193, 7
      %v195 = vsub.s32 0, %v194
      %v196 = vrot.slane %v191, %v195
      %vm198 = vcmask 64512
      %v200 = vsel %vm198, %v174, 0
      %v203 = vsel %vm198, %v175, 0
      %v206 = vsel %vm198, %v176, 0
      %v209 = vsel %vm198, %v177, 0
      %v212 = vsel %vm198, %v178, 0
      %v215 = vsel %vm198, %v179, 0
      %v218 = vsel %vm198, %v180, 0
      %v221 = vsel %vm198, %v181, 0
      %v224 = vsel %vm198, %v182, 0
      %v227 = vsel %vm198, %v183, 0
      %v230 = vsel %vm198, %v184, 0
      %v233 = vsel %vm198, %v185, 0
      %v236 = vsel %vm198, %v186, 0
      %v239 = vsel %vm198, %v187, 0
      %v242 = vsel %vm198, %v188, 0
      %v245 = vsel %vm198, %v189, 0
      %247 = vmatprep.subr.mxu0 0.0
      %248 = vmatpush1.msra.mxu0 %v190
      %249 = vmatprep.subr.mxu0 0.0
      %250 = vmatpush1.msra.mxu0 0.0
      %251 = vmatprep.subr.mxu0 0.0
      %252 = vmatpush1.msra.mxu0 0.0
      %253 = vmatprep.subr.mxu0 0.0
      %254 = vmatpush1.msra.mxu0 0.0
      %255 = vmatprep.subr.mxu0 0.0
      %256 = vmatpush1.msra.mxu0 0.0
      %257 = vmatprep.subr.mxu0 0.0
      %258 = vmatpush1.msra.mxu0 0.0
      %259 = vmatprep.subr.mxu0 0.0
      %260 = vmatpush1.msra.mxu0 0.0
      %261 = vmatprep.subr.mxu0 0.0
      %262 = vmatpush1.msra.mxu0 0.0
      %263 = vmatprep.subr.mxu0 0.0
      %264 = vmatpush1.msra.mxu0 0.0
      %265 = vmatprep.subr.mxu0 0.0
      %266 = vmatpush1.msra.mxu0 0.0
      %267 = vmatprep.subr.mxu0 0.0
      %268 = vmatpush1.msra.mxu0 0.0
      %269 = vmatprep.subr.mxu0 0.0
      %270 = vmatpush1.msra.mxu0 0.0
      %271 = vmatprep.subr.mxu0 0.0
      %272 = vmatpush1.msra.mxu0 0.0
      %273 = vmatprep.subr.mxu0 0.0
      %274 = vmatpush1.msra.mxu0 0.0
      %275 = vmatprep.subr.mxu0 0.0
      %276 = vmatpush1.msra.mxu0 0.0
      %277 = vmatprep.subr.mxu0 0.0
      %278 = vmatpush1.msra.mxu0 0.0
      %279 = vmatprep.subr.mxu0 0.0
      %280 = vmatpush1.msra.mxu0 0.0
      %281 = vmatprep.subr.mxu0 0.0
      %282 = vmatpush1.msra.mxu0 0.0
      %283 = vmatprep.subr.mxu0 0.0
      %284 = vmatpush1.msra.mxu0 0.0
      %285 = vmatprep.subr.mxu0 0.0
      %286 = vmatpush1.msra.mxu0 0.0
      %287 = vmatprep.subr.mxu0 0.0
      %288 = vmatpush1.msra.mxu0 0.0
      %289 = vmatprep.subr.mxu0 0.0
      %290 = vmatpush1.msra.mxu0 0.0
      %291 = vmatprep.subr.mxu0 0.0
      %292 = vmatpush1.msra.mxu0 0.0
      %293 = vmatprep.subr.mxu0 0.0
      %294 = vmatpush1.msra.mxu0 0.0
      %295 = vmatprep.subr.mxu0 0.0
      %296 = vmatpush1.msra.mxu0 0.0
      %297 = vmatprep.subr.mxu0 0.0
      %298 = vmatpush1.msra.mxu0 0.0
      %299 = vmatprep.subr.mxu0 0.0
      %300 = vmatpush1.msra.mxu0 0.0
      %301 = vmatprep.subr.mxu0 0.0
      %302 = vmatpush1.msra.mxu0 0.0
      %303 = vmatprep.subr.mxu0 0.0
      %304 = vmatpush1.msra.mxu0 0.0
      %305 = vmatprep.subr.mxu0 0.0
      %306 = vmatpush1.msra.mxu0 0.0
      %307 = vmatprep.subr.mxu0 0.0
      %308 = vmatpush1.msra.mxu0 0.0
      %309 = vmatprep.subr.mxu0 0.0
      %310 = vmatpush1.msra.mxu0 0.0
      %311 = vmatprep.mubr.f32.mxu0 0.0
      %312 = vmatmul.mubr.f32.gmra.mrb[0].mxu0 %v200
      %v313 = vpop.f32.mrb[0].mxu0
      %v314 = vadd.f32 %v196, %v313
      %v315 = vpop.f32.mrb[0].mxu0
      %316 = vmatprep.mubr.f32.mxu0 0.0
      %317 = vmatmul.mubr.f32.gmra.mrb[0].mxu0 %v203
      %v318 = vpop.f32.mrb[0].mxu0
      %v319 = vadd.f32 %v196, %v318
      %v320 = vpop.f32.mrb[0].mxu0
      %321 = vmatprep.mubr.f32.mxu0 0.0
      %322 = vmatmul.mubr.f32.gmra.mrb[0].mxu0 %v206
      %v323 = vpop.f32.mrb[0].mxu0
      %v324 = vadd.f32 %v196, %v323
      %v325 = vpop.f32.mrb[0].mxu0
      %326 = vmatprep.mubr.f32.mxu0 0.0
      %327 = vmatmul.mubr.f32.gmra.mrb[0].mxu0 %v209
      %v328 = vpop.f32.mrb[0].mxu0
      %v329 = vadd.f32 %v196, %v328
      %v330 = vpop.f32.mrb[0].mxu0
      %331 = vmatprep.mubr.f32.mxu0 0.0
      %332 = vmatmul.mubr.f32.gmra.mrb[0].mxu0 %v212
      %v333 = vpop.f32.mrb[0].mxu0
      %v334 = vadd.f32 %v196, %v333
      %v335 = vpop.f32.mrb[0].mxu0
      %336 = vmatprep.mubr.f32.mxu0 0.0
      %337 = vmatmul.mubr.f32.gmra.mrb[0].mxu0 %v215
      %v338 = vpop.f32.mrb[0].mxu0
      %v339 = vadd.f32 %v196, %v338
      %v340 = vpop.f32.mrb[0].mxu0
      %341 = vmatprep.mubr.f32.mxu0 0.0
      %342 = vmatmul.mubr.f32.gmra.mrb[0].mxu0 %v218
      %v343 = vpop.f32.mrb[0].mxu0
      %v344 = vadd.f32 %v196, %v343
      %v345 = vpop.f32.mrb[0].mxu0
      %346 = vmatprep.mubr.f32.mxu0 0.0
      %347 = vmatmul.mubr.f32.gmra.mrb[0].mxu0 %v221
      %v348 = vpop.f32.mrb[0].mxu0
      %v349 = vadd.f32 %v196, %v348
      %v350 = vpop.f32.mrb[0].mxu0
      %351 = vmatprep.mubr.f32.mxu0 0.0
      %352 = vmatmul.mubr.f32.gmra.mrb[0].mxu0 %v224
      %v353 = vpop.f32.mrb[0].mxu0
      %v354 = vadd.f32 %v196, %v353
      %v355 = vpop.f32.mrb[0].mxu0
      %356 = vmatprep.mubr.f32.mxu0 0.0
      %357 = vmatmul.mubr.f32.gmra.mrb[0].mxu0 %v227
      %v358 = vpop.f32.mrb[0].mxu0
      %v359 = vadd.f32 %v196, %v358
      %v360 = vpop.f32.mrb[0].mxu0
      %361 = vmatprep.mubr.f32.mxu0 0.0
      %362 = vmatmul.mubr.f32.gmra.mrb[0].mxu0 %v230
      %v363 = vpop.f32.mrb[0].mxu0
      %v364 = vadd.f32 %v196, %v363
      %v365 = vpop.f32.mrb[0].mxu0
      %366 = vmatprep.mubr.f32.mxu0 0.0
      %367 = vmatmul.mubr.f32.gmra.mrb[0].mxu0 %v233
      %v368 = vpop.f32.mrb[0].mxu0
      %v369 = vadd.f32 %v196, %v368
      %v370 = vpop.f32.mrb[0].mxu0
      %371 = vmatprep.mubr.f32.mxu0 0.0
      %372 = vmatmul.mubr.f32.gmra.mrb[0].mxu0 %v236
      %v373 = vpop.f32.mrb[0].mxu0
      %v374 = vadd.f32 %v196, %v373
      %v375 = vpop.f32.mrb[0].mxu0
      %376 = vmatprep.mubr.f32.mxu0 0.0
      %377 = vmatmul.mubr.f32.gmra.mrb[0].mxu0 %v239
      %v378 = vpop.f32.mrb[0].mxu0
      %v379 = vadd.f32 %v196, %v378
      %v380 = vpop.f32.mrb[0].mxu0
      %381 = vmatprep.mubr.f32.mxu0 0.0
      %382 = vmatmul.mubr.f32.gmra.mrb[0].mxu0 %v242
      %v383 = vpop.f32.mrb[0].mxu0
      %v384 = vadd.f32 %v196, %v383
      %v385 = vpop.f32.mrb[0].mxu0
      %386 = vmatprep.mubr.f32.mxu0 0.0
      %387 = vmatmul.mubr.f32.gmra.mrb[0].mxu0 %v245
      %v388 = vpop.f32.mrb[0].mxu0
      %v389 = vadd.f32 %v196, %v388
      %v390 = vpop.f32.mrb[0].mxu0
      %391 = vdwg.mxu0
      %vm392 = vcmp.gt.f32.partialorder %v314, 0.0
      %vm393 = vcmp.gt.f32.partialorder %v319, 0.0
      %vm394 = vcmp.gt.f32.partialorder %v324, 0.0
      %vm395 = vcmp.gt.f32.partialorder %v329, 0.0
      %vm396 = vcmp.gt.f32.partialorder %v334, 0.0
      %vm397 = vcmp.gt.f32.partialorder %v339, 0.0
      %vm398 = vcmp.gt.f32.partialorder %v344, 0.0
      %vm399 = vcmp.gt.f32.partialorder %v349, 0.0
      %vm400 = vcmp.gt.f32.partialorder %v354, 0.0
      %vm401 = vcmp.gt.f32.partialorder %v359, 0.0
      %vm402 = vcmp.gt.f32.partialorder %v364, 0.0
      %vm403 = vcmp.gt.f32.partialorder %v369, 0.0
      %vm404 = vcmp.gt.f32.partialorder %v374, 0.0
      %vm405 = vcmp.gt.f32.partialorder %v379, 0.0
      %vm406 = vcmp.gt.f32.partialorder %v384, 0.0
      %vm407 = vcmp.gt.f32.partialorder %v389, 0.0
      %v408 = vmul.f32 %v314, 0.2
      %v409 = vmul.f32 %v319, 0.2
      %v410 = vmul.f32 %v324, 0.2
      %v411 = vmul.f32 %v329, 0.2
      %v412 = vmul.f32 %v334, 0.2
      %v413 = vmul.f32 %v339, 0.2
      %v414 = vmul.f32 %v344, 0.2
      %v415 = vmul.f32 %v349, 0.2
      %v416 = vmul.f32 %v354, 0.2
      %v417 = vmul.f32 %v359, 0.2
      %v418 = vmul.f32 %v364, 0.2
      %v419 = vmul.f32 %v369, 0.2
      %v420 = vmul.f32 %v374, 0.2
      %v421 = vmul.f32 %v379, 0.2
      %v422 = vmul.f32 %v384, 0.2
      %v423 = vmul.f32 %v389, 0.2
      %v424 = vsel %vm392, %v314, %v408
      %v425 = vsel %vm393, %v319, %v409
      %v426 = vsel %vm394, %v324, %v410
      %v427 = vsel %vm395, %v329, %v411
      %v428 = vsel %vm396, %v334, %v412
      %v429 = vsel %vm397, %v339, %v413
      %v430 = vsel %vm398, %v344, %v414
      %v431 = vsel %vm399, %v349, %v415
      %v432 = vsel %vm400, %v354, %v416
      %v433 = vsel %vm401, %v359, %v417
      %v434 = vsel %vm402, %v364, %v418
      %v435 = vsel %vm403, %v369, %v419
      %v436 = vsel %vm404, %v374, %v420
      %v437 = vsel %vm405, %v379, %v421
      %v438 = vsel %vm406, %v384, %v422
      %v439 = vsel %vm407, %v389, %v423
      %vm440 = vcmask 130048
      %441 = vst.msk [vmem:[%s172] sm:$0xff] %vm440, %v424
      %442 = vst.msk [vmem:[%s172 + $0x8] sm:$0xff] %vm440, %v425
      %443 = vst.msk [vmem:[%s172 + $0x10] sm:$0xff] %vm440, %v426
      %444 = vst.msk [vmem:[%s172 + $0x18] sm:$0xff] %vm440, %v427
      %445 = vst.msk [vmem:[%s172 + $0x20] sm:$0xff] %vm440, %v428
      %446 = vst.msk [vmem:[%s172 + $0x28] sm:$0xff] %vm440, %v429
      %447 = vst.msk [vmem:[%s172 + $0x30] sm:$0xff] %vm440, %v430
      %448 = vst.msk [vmem:[%s172 + $0x38] sm:$0xff] %vm440, %v431
      %449 = vst.msk [vmem:[%s172 + $0x40] sm:$0xff] %vm440, %v432
      %450 = vst.msk [vmem:[%s172 + $0x48] sm:$0xff] %vm440, %v433
      %451 = vst.msk [vmem:[%s172 + $0x50] sm:$0xff] %vm440, %v434
      %452 = vst.msk [vmem:[%s172 + $0x58] sm:$0xff] %vm440, %v435
      %453 = vst.msk [vmem:[%s172 + $0x60] sm:$0xff] %vm440, %v436
      %454 = vst.msk [vmem:[%s172 + $0x68] sm:$0xff] %vm440, %v437
      %455 = vst.msk [vmem:[%s172 + $0x70] sm:$0xff] %vm440, %v438
      %456 = vst.msk [vmem:[%s172 + $0x78] sm:$0xff] %vm440, %v439
      %s457 = smul.u32 16, %s14
      %p458 = scmp.lt.s32.totalorder %s457, 31
      %s459 = scalar_select %p458, %s457, 31
      %s460 = smul.addr %s459, 8
      %s461 = scalar_lea.vmem %s3, %s460
      // Predicated region
      $region33: #{dilated_res_block.2} parent=31 // pred_check
        %p462 = pneg %p100
      $region34: #{dilated_res_block.2} parent=31 // pred_check_branch
        %464 = sbr.rel (%p462) target = $region36
      $region35: #{dilated_res_block.2} parent=31 // pred_region
        %s465 = smul.u32 16, %s14
      $region36: #{dilated_res_block.2} parent=31 // pred_fallthru
        _
    $region32: #{dilated_res_block.2} parent=5 // pred_fallthru
      _
    %p466 = scmp.le.s32.totalorder 2, %s9
    // Predicated region
    $region37: #{dilated_res_block.2} parent=5 // pred_check
      %p467 = pneg %p466
    $region38: #{dilated_res_block.2} parent=5 // pred_check_branch
      %469 = sbr.rel (%p467) target = $region40
    $region39: #{dilated_res_block.2} parent=5 // pred_region
      %s470 = ssub.s32 %s9, 2
      // Predicated region
      $region41: #{dilated_res_block.2} parent=39 // pred_check
        %p471 = pneg %p106
      $region42: #{dilated_res_block.2} parent=39 // pred_check_branch
        %473 = sbr.rel (%p471) target = $region44
      $region43: #{dilated_res_block.2} parent=39 // pred_region
        %s474 = smul.u32 16, %s15
        %p475 = scmp.lt.s32.totalorder %s474, 31
        %s476 = scalar_select %p475, %s474, 31
        %s477 = smul.addr %s476, 8
        %s478 = scalar_lea.vmem %s3, %s477
      $region44: #{dilated_res_block.2} parent=39 // pred_fallthru
        _
    $region40: #{dilated_res_block.2} parent=5 // pred_fallthru
      _
  $region6: #{dilated_res_block.2} parent=0 // loop_footer
    %s13 = sadd.s32 1, %s9
  $region7: #{dilated_res_block.2} parent=0 // loop_footer_branch
    %8 = sbr.rel target = $region3
  $region8: #{dilated_res_block.2} parent=0 // loop_exit
    _

// kernel: dilated_res_block.3
$region0: #{dilated_res_block.3}
  #allocation0 [shape = 'u32[]', space=smem, size = 0x4, offset = 0x4, fixed_abs, tag = 'smem constant byte address 0x4 - core index']
  #allocation1 [shape = 'u32[144,128]{1,0:T(1,128)}', space=vmem, size = 0x12000, scoped, tag = 'internal scratch']
  #allocation2 [shape = 'f32[1024,16]{1,0:T(8,128)}', space=vmem, size = 0x80000, scoped, tag = 'scratch operand']
  #allocation3 [shape = 's32[1]{0}', space=sflag, size = 0x4, scoped, tag = 'scoped memory for dilated_res_block.3']
  #allocation4 [shape = 'u8[8192]{0}', space=smem, size = 0x2000, scoped, tag = 'prefetched SMEM operand 0']
  %s0 = inlined_call_operand.vmem [shape: s32[2048], index: 0, kind: input, shape index: {}]
  %s1 = inlined_call_operand.vmem [shape: f32[256,16], index: 1, kind: input, shape index: {}]
  %s2 = inlined_call_operand.vmem [shape: f32[2048,6], index: 2, kind: input, shape index: {}]
  %s3 = inlined_call_operand.vmem [shape: f32[256,8], index: 3, kind: input, shape index: {}]
  %s4 = inlined_call_operand.vmem [shape: f32[6,16], index: 4, kind: input, shape index: {}]
  %s5 = inlined_call_operand.vmem [shape: f32[1,16], index: 5, kind: input, shape index: {}]
  %s6 = inlined_call_operand.vmem [shape: f32[16,32], index: 6, kind: input, shape index: {}]
  %s7 = inlined_call_operand.vmem [shape: f32[16,32], index: 7, kind: input, shape index: {}]
  %s8 = inlined_call_operand.vmem [shape: f32[16,32], index: 8, kind: input, shape index: {}]
  %s9 = inlined_call_operand.vmem [shape: f32[16,32], index: 9, kind: input, shape index: {}]
  %s10 = inlined_call_operand.vmem [shape: f32[1,32], index: 10, kind: input, shape index: {}]
  %s11 = inlined_call_operand.vmem [shape: f32[32,32], index: 11, kind: input, shape index: {}]
  %s12 = inlined_call_operand.vmem [shape: f32[8,32], index: 12, kind: input, shape index: {}]
  %s13 = inlined_call_operand.vmem [shape: f32[1,32], index: 13, kind: input, shape index: {}]
  %s14 = inlined_call_operand.vmem [shape: f32[256,32], index: 14, kind: output, shape index: {}]
  %s15 = sld [smem:[#allocation0]]
  $region92: #{dilated_res_block.3} parent=0
    _
  %s17 = ssub.s32 1, %s15
  %s18 = scalar_select 0, %s17, %s15
  %s19 = sshll.u32 %s0, 4
  %s20 = int_to_ptr.vmem [resolvable:$true] %s19
  %22 = dma.vmem_to_smem %s20, 256, [#allocation4], [#allocation3]
  %23 = dma.done [#allocation3], 256
  %24 = sfence
  loop: start=0, step=1, limit=4
  $region2: #{dilated_res_block.3} parent=0 // loop_pre_header
    _
  $region3: #{dilated_res_block.3} parent=0 // loop_header
    %s26 = sphi 0, %s30
    %p27 = scmp.ge.s32.totalorder %s26, 4
    %s34 = sphi 0, %s34
    %s36 = sphi 0, %s34
    %s37 = sphi 0, %s36
    %s51 = sphi 0, %s37
    %s57 = sphi 0, %s59
    %s60 = sphi 0, %s57
    %s61 = sphi 0, %s60
    %s77 = sphi 0, %s61
    %s83 = sphi 0, %s85
    %s86 = sphi 0, %s83
    %s87 = sphi 0, %s86
    %s103 = sphi 0, %s87
    %s107 = sphi 0, %s107
    %s109 = sphi 0, %s107
    %s110 = sphi 0, %s109
    %s124 = sphi 0, %s110
    %s128 = sphi 0, %s128
    %s130 = sphi 0, %s128
    %s131 = sphi 0, %s130
    %s145 = sphi 0, %s131
    %s149 = sphi 0, %s149
    %s151 = sphi 0, %s149
    %s152 = sphi 0, %s151
    %s166 = sphi 0, %s152
    %s170 = sphi 0, %s170
    %s172 = sphi 0, %s170
    %s173 = sphi 0, %s172
    %s187 = sphi 0, %s173
    %s191 = sphi 0, %s191
    %s193 = sphi 0, %s191
    %s194 = sphi 0, %s193
    %s208 = sphi 0, %s194
    %s212 = sphi 0, %s212
    %s214 = sphi 0, %s212
    %s215 = sphi 0, %s214
    %s229 = sphi 0, %s215
    %s233 = sphi 0, %s233
    %s235 = sphi 0, %s233
    %s236 = sphi 0, %s235
    %s250 = sphi 0, %s236
    %s254 = sphi 0, %s254
    %s256 = sphi 0, %s254
    %s257 = sphi 0, %s256
    %s271 = sphi 0, %s257
    %s275 = sphi 0, %s275
    %s277 = sphi 0, %s275
    %s278 = sphi 0, %s277
    %s292 = sphi 0, %s278
    %s296 = sphi 0, %s296
    %s298 = sphi 0, %s296
    %s299 = sphi 0, %s298
    %s313 = sphi 0, %s299
    %s319 = sphi 0, %s321
    %s322 = sphi 0, %s319
    %s323 = sphi 0, %s322
    %s339 = sphi 0, %s323
  $region4: #{dilated_res_block.3} parent=0 // loop_header_branch
    %29 = sbr.rel (%p27) target = $region8
  $region5: #{dilated_res_block.3} parent=0 // loop_body
    %s31 = ssub.s32 %s26, 1
    %s32 = ssub.s32 %s26, 2
    %s33 = sadd.s32 %s26, 1
    %s35 = sadd.s32 %s34, 1
    %p38 = scmp.eq.s32.totalorder %s26, 1
    %p39 = scmp.ne.s32.totalorder %s34, %s36
    %p40 = scmp.eq.s32.totalorder %s26, 0
    %p41 = por %p39, %p40
    %p42 = scmp.ne.s32.totalorder %s34, %s36
    %p43 = scmp.eq.s32.totalorder %s31, 1
    %p44 = por %p42, %p43
    %p45 = scmp.ne.s32.totalorder %s36, %s37
    %p46 = scmp.eq.s32.totalorder %s31, 0
    %p47 = por %p45, %p46
    %p48 = scmp.ne.s32.totalorder %s36, %s37
    %p49 = scmp.eq.s32.totalorder %s32, 1
    %p50 = por %p48, %p49
    %p52 = scmp.ne.s32.totalorder %s37, %s51
    %p53 = scmp.eq.s32.totalorder %s32, 0
    %p54 = por %p52, %p53
    %s55 = ssub.s32 %s26, %s33
    %p56 = scmp.eq.s32.totalorder %s55, 0
    %s58 = sadd.s32 %s57, 1
    %s59 = scalar_select %p56, %s57, %s58
    %p62 = pneg %p56
    %p63 = scmp.eq.s32.totalorder %s26, 1
    %p64 = por %p62, %p63
    %p65 = scmp.ne.s32.totalorder %s57, %s60
    %p66 = scmp.eq.s32.totalorder %s26, 0
    %p67 = por %p65, %p66
    %p68 = scmp.ne.s32.totalorder %s57, %s60
    %p69 = scmp.eq.s32.totalorder %s31, 1
    %p70 = por %p68, %p69
    %p71 = scmp.ne.s32.totalorder %s60, %s61
    %p72 = scmp.eq.s32.totalorder %s31, 0
    %p73 = por %p71, %p72
    %p74 = scmp.ne.s32.totalorder %s60, %s61
    %p75 = scmp.eq.s32.totalorder %s32, 1
    %p76 = por %p74, %p75
    %p78 = scmp.ne.s32.totalorder %s61, %s77
    %p79 = scmp.eq.s32.totalorder %s32, 0
    %p80 = por %p78, %p79
    %s81 = ssub.s32 %s26, %s33
    %p82 = scmp.eq.s32.totalorder %s81, 0
    %s84 = sadd.s32 %s83, 1
    %s85 = scalar_select %p82, %s83, %s84
    %p88 = pneg %p82
    %p89 = scmp.eq.s32.totalorder %s26, 1
    %p90 = por %p88, %p89
    %p91 = scmp.ne.s32.totalorder %s83, %s86
    %p92 = scmp.eq.s32.totalorder %s26, 0
    %p93 = por %p91, %p92
    %p94 = scmp.ne.s32.totalorder %s83, %s86
    %p95 = scmp.eq.s32.totalorder %s31, 1
    %p96 = por %p94, %p95
    %p97 = scmp.ne.s32.totalorder %s86, %s87
    %p98 = scmp.eq.s32.totalorder %s31, 0
    %p99 = por %p97, %p98
    %p100 = scmp.ne.s32.totalorder %s86, %s87
    %p101 = scmp.eq.s32.totalorder %s32, 1
    %p102 = por %p100, %p101
    %p104 = scmp.ne.s32.totalorder %s87, %s103
    %p105 = scmp.eq.s32.totalorder %s32, 0
    %p106 = por %p104, %p105
    %s108 = sadd.s32 %s107, 1
    %p111 = scmp.eq.s32.totalorder %s26, 1
    %p112 = scmp.ne.s32.totalorder %s107, %s109
    %p113 = scmp.eq.s32.totalorder %s26, 0
    %p114 = por %p112, %p113
    %p115 = scmp.ne.s32.totalorder %s107, %s109
    %p116 = scmp.eq.s32.totalorder %s31, 1
    %p117 = por %p115, %p116
    %p118 = scmp.ne.s32.totalorder %s109, %s110
    %p119 = scmp.eq.s32.totalorder %s31, 0
    %p120 = por %p118, %p119
    %p121 = scmp.ne.s32.totalorder %s109, %s110
    %p122 = scmp.eq.s32.totalorder %s32, 1
    %p123 = por %p121, %p122
    %p125 = scmp.ne.s32.totalorder %s110, %s124
    %p126 = scmp.eq.s32.totalorder %s32, 0
    %p127 = por %p125, %p126
    %s129 = sadd.s32 %s128, 1
    %p132 = scmp.eq.s32.totalorder %s26, 1
    %p133 = scmp.ne.s32.totalorder %s128, %s130
    %p134 = scmp.eq.s32.totalorder %s26, 0
    %p135 = por %p133, %p134
    %p136 = scmp.ne.s32.totalorder %s128, %s130
    %p137 = scmp.eq.s32.totalorder %s31, 1
    %p138 = por %p136, %p137
    %p139 = scmp.ne.s32.totalorder %s130, %s131
    %p140 = scmp.eq.s32.totalorder %s31, 0
    %p141 = por %p139, %p140
    %p142 = scmp.ne.s32.totalorder %s130, %s131
    %p143 = scmp.eq.s32.totalorder %s32, 1
    %p144 = por %p142, %p143
    %p146 = scmp.ne.s32.totalorder %s131, %s145
    %p147 = scmp.eq.s32.totalorder %s32, 0
    %p148 = por %p146, %p147
    %s150 = sadd.s32 %s149, 1
    %p153 = scmp.eq.s32.totalorder %s26, 1
    %p154 = scmp.ne.s32.totalorder %s149, %s151
    %p155 = scmp.eq.s32.totalorder %s26, 0
    %p156 = por %p154, %p155
    %p157 = scmp.ne.s32.totalorder %s149, %s151
    %p158 = scmp.eq.s32.totalorder %s31, 1
    %p159 = por %p157, %p158
    %p160 = scmp.ne.s32.totalorder %s151, %s152
    %p161 = scmp.eq.s32.totalorder %s31, 0
    %p162 = por %p160, %p161
    %p163 = scmp.ne.s32.totalorder %s151, %s152
    %p164 = scmp.eq.s32.totalorder %s32, 1
    %p165 = por %p163, %p164
    %p167 = scmp.ne.s32.totalorder %s152, %s166
    %p168 = scmp.eq.s32.totalorder %s32, 0
    %p169 = por %p167, %p168
    %s171 = sadd.s32 %s170, 1
    %p174 = scmp.eq.s32.totalorder %s26, 1
    %p175 = scmp.ne.s32.totalorder %s170, %s172
    %p176 = scmp.eq.s32.totalorder %s26, 0
    %p177 = por %p175, %p176
    %p178 = scmp.ne.s32.totalorder %s170, %s172
    %p179 = scmp.eq.s32.totalorder %s31, 1
    %p180 = por %p178, %p179
    %p181 = scmp.ne.s32.totalorder %s172, %s173
    %p182 = scmp.eq.s32.totalorder %s31, 0
    %p183 = por %p181, %p182
    %p184 = scmp.ne.s32.totalorder %s172, %s173
    %p185 = scmp.eq.s32.totalorder %s32, 1
    %p186 = por %p184, %p185
    %p188 = scmp.ne.s32.totalorder %s173, %s187
    %p189 = scmp.eq.s32.totalorder %s32, 0
    %p190 = por %p188, %p189
    %s192 = sadd.s32 %s191, 1
    %p195 = scmp.eq.s32.totalorder %s26, 1
    %p196 = scmp.ne.s32.totalorder %s191, %s193
    %p197 = scmp.eq.s32.totalorder %s26, 0
    %p198 = por %p196, %p197
    %p199 = scmp.ne.s32.totalorder %s191, %s193
    %p200 = scmp.eq.s32.totalorder %s31, 1
    %p201 = por %p199, %p200
    %p202 = scmp.ne.s32.totalorder %s193, %s194
    %p203 = scmp.eq.s32.totalorder %s31, 0
    %p204 = por %p202, %p203
    %p205 = scmp.ne.s32.totalorder %s193, %s194
    %p206 = scmp.eq.s32.totalorder %s32, 1
    %p207 = por %p205, %p206
    %p209 = scmp.ne.s32.totalorder %s194, %s208
    %p210 = scmp.eq.s32.totalorder %s32, 0
    %p211 = por %p209, %p210
    %s213 = sadd.s32 %s212, 1
    %p216 = scmp.eq.s32.totalorder %s26, 1
    %p217 = scmp.ne.s32.totalorder %s212, %s214
    %p218 = scmp.eq.s32.totalorder %s26, 0
    %p219 = por %p217, %p218
    %p220 = scmp.ne.s32.totalorder %s212, %s214
    %p221 = scmp.eq.s32.totalorder %s31, 1
    %p222 = por %p220, %p221
    %p223 = scmp.ne.s32.totalorder %s214, %s215
    %p224 = scmp.eq.s32.totalorder %s31, 0
    %p225 = por %p223, %p224
    %p226 = scmp.ne.s32.totalorder %s214, %s215
    %p227 = scmp.eq.s32.totalorder %s32, 1
    %p228 = por %p226, %p227
    %p230 = scmp.ne.s32.totalorder %s215, %s229
    %p231 = scmp.eq.s32.totalorder %s32, 0
    %p232 = por %p230, %p231
    %s234 = sadd.s32 %s233, 1
    %p237 = scmp.eq.s32.totalorder %s26, 1
    %p238 = scmp.ne.s32.totalorder %s233, %s235
    %p239 = scmp.eq.s32.totalorder %s26, 0
    %p240 = por %p238, %p239
    %p241 = scmp.ne.s32.totalorder %s233, %s235
    %p242 = scmp.eq.s32.totalorder %s31, 1
    %p243 = por %p241, %p242
    %p244 = scmp.ne.s32.totalorder %s235, %s236
    %p245 = scmp.eq.s32.totalorder %s31, 0
    %p246 = por %p244, %p245
    %p247 = scmp.ne.s32.totalorder %s235, %s236
    %p248 = scmp.eq.s32.totalorder %s32, 1
    %p249 = por %p247, %p248
    %p251 = scmp.ne.s32.totalorder %s236, %s250
    %p252 = scmp.eq.s32.totalorder %s32, 0
    %p253 = por %p251, %p252
    %s255 = sadd.s32 %s254, 1
    %p258 = scmp.eq.s32.totalorder %s26, 1
    %p259 = scmp.ne.s32.totalorder %s254, %s256
    %p260 = scmp.eq.s32.totalorder %s26, 0
    %p261 = por %p259, %p260
    %p262 = scmp.ne.s32.totalorder %s254, %s256
    %p263 = scmp.eq.s32.totalorder %s31, 1
    %p264 = por %p262, %p263
    %p265 = scmp.ne.s32.totalorder %s256, %s257
    %p266 = scmp.eq.s32.totalorder %s31, 0
    %p267 = por %p265, %p266
    %p268 = scmp.ne.s32.totalorder %s256, %s257
    %p269 = scmp.eq.s32.totalorder %s32, 1
    %p270 = por %p268, %p269
    %p272 = scmp.ne.s32.totalorder %s257, %s271
    %p273 = scmp.eq.s32.totalorder %s32, 0
    %p274 = por %p272, %p273
    %s276 = sadd.s32 %s275, 1
    %p279 = scmp.eq.s32.totalorder %s26, 1
    %p280 = scmp.ne.s32.totalorder %s275, %s277
    %p281 = scmp.eq.s32.totalorder %s26, 0
    %p282 = por %p280, %p281
    %p283 = scmp.ne.s32.totalorder %s275, %s277
    %p284 = scmp.eq.s32.totalorder %s31, 1
    %p285 = por %p283, %p284
    %p286 = scmp.ne.s32.totalorder %s277, %s278
    %p287 = scmp.eq.s32.totalorder %s31, 0
    %p288 = por %p286, %p287
    %p289 = scmp.ne.s32.totalorder %s277, %s278
    %p290 = scmp.eq.s32.totalorder %s32, 1
    %p291 = por %p289, %p290
    %p293 = scmp.ne.s32.totalorder %s278, %s292
    %p294 = scmp.eq.s32.totalorder %s32, 0
    %p295 = por %p293, %p294
    %s297 = sadd.s32 %s296, 1
    %p300 = scmp.eq.s32.totalorder %s26, 1
    %p301 = scmp.ne.s32.totalorder %s296, %s298
    %p302 = scmp.eq.s32.totalorder %s26, 0
    %p303 = por %p301, %p302
    %p304 = scmp.ne.s32.totalorder %s296, %s298
    %p305 = scmp.eq.s32.totalorder %s31, 1
    %p306 = por %p304, %p305
    %p307 = scmp.ne.s32.totalorder %s298, %s299
    %p308 = scmp.eq.s32.totalorder %s31, 0
    %p309 = por %p307, %p308
    %p310 = scmp.ne.s32.totalorder %s298, %s299
    %p311 = scmp.eq.s32.totalorder %s32, 1
    %p312 = por %p310, %p311
    %p314 = scmp.ne.s32.totalorder %s299, %s313
    %p315 = scmp.eq.s32.totalorder %s32, 0
    %p316 = por %p314, %p315
    %s317 = ssub.s32 %s26, %s33
    %p318 = scmp.eq.s32.totalorder %s317, 0
    %s320 = sadd.s32 %s319, 1
    %s321 = scalar_select %p318, %s319, %s320
    %p324 = pneg %p318
    %p325 = scmp.eq.s32.totalorder %s26, 1
    %p326 = por %p324, %p325
    %p327 = scmp.ne.s32.totalorder %s319, %s322
    %p328 = scmp.eq.s32.totalorder %s26, 0
    %p329 = por %p327, %p328
    %p330 = scmp.ne.s32.totalorder %s319, %s322
    %p331 = scmp.eq.s32.totalorder %s31, 1
    %p332 = por %p330, %p331
    %p333 = scmp.ne.s32.totalorder %s322, %s323
    %p334 = scmp.eq.s32.totalorder %s31, 0
    %p335 = por %p333, %p334
    %p336 = scmp.ne.s32.totalorder %s322, %s323
    %p337 = scmp.eq.s32.totalorder %s32, 1
    %p338 = por %p336, %p337
    %p340 = scmp.ne.s32.totalorder %s323, %s339
    %p341 = scmp.eq.s32.totalorder %s32, 0
    %p342 = por %p340, %p341
    %p343 = scmp.le.s32.totalorder 1, %s26
    %p344 = scmp.lt.s32.totalorder %s26, 3
    %p345 = pnand %p343, %p344
    %p346 = pneg %p345
    // Predicated region
    $region9: #{dilated_res_block.3} parent=5 // pred_check
      _
    $region10: #{dilated_res_block.3} parent=5 // pred_check_branch
      %348 = sbr.rel (%p345) target = $region12
    $region11: #{dilated_res_block.3} parent=5 // pred_region
      %s349 = ssub.s32 %s26, 1
      // Predicated region
      $region13: #{dilated_res_block.3} parent=11 // pred_check
        %p350 = pneg %p47
      $region14: #{dilated_res_block.3} parent=11 // pred_check_branch
        %352 = sbr.rel (%p350) target = $region16
      $region15: #{dilated_res_block.3} parent=11 // pred_region
        _
      $region16: #{dilated_res_block.3} parent=11 // pred_fallthru
        _
      // Predicated region
      $region17: #{dilated_res_block.3} parent=11 // pred_check
        %p353 = pneg %p120
      $region18: #{dilated_res_block.3} parent=11 // pred_check_branch
        %355 = sbr.rel (%p353) target = $region20
      $region19: #{dilated_res_block.3} parent=11 // pred_region
        _
      $region20: #{dilated_res_block.3} parent=11 // pred_fallthru
        _
      // Predicated region
      $region21: #{dilated_res_block.3} parent=11 // pred_check
        %p356 = pneg %p141
      $region22: #{dilated_res_block.3} parent=11 // pred_check_branch
        %358 = sbr.rel (%p356) target = $region24
      $region23: #{dilated_res_block.3} parent=11 // pred_region
        _
      $region24: #{dilated_res_block.3} parent=11 // pred_fallthru
        _
      // Predicated region
      $region25: #{dilated_res_block.3} parent=11 // pred_check
        %p359 = pneg %p162
      $region26: #{dilated_res_block.3} parent=11 // pred_check_branch
        %361 = sbr.rel (%p359) target = $region28
      $region27: #{dilated_res_block.3} parent=11 // pred_region
        _
      $region28: #{dilated_res_block.3} parent=11 // pred_fallthru
        _
      // Predicated region
      $region29: #{dilated_res_block.3} parent=11 // pred_check
        %p362 = pneg %p183
      $region30: #{dilated_res_block.3} parent=11 // pred_check_branch
        %364 = sbr.rel (%p362) target = $region32
      $region31: #{dilated_res_block.3} parent=11 // pred_region
        _
      $region32: #{dilated_res_block.3} parent=11 // pred_fallthru
        _
      // Predicated region
      $region33: #{dilated_res_block.3} parent=11 // pred_check
        %p365 = pneg %p204
      $region34: #{dilated_res_block.3} parent=11 // pred_check_branch
        %367 = sbr.rel (%p365) target = $region36
      $region35: #{dilated_res_block.3} parent=11 // pred_region
        _
      $region36: #{dilated_res_block.3} parent=11 // pred_fallthru
        _
      // Predicated region
      $region37: #{dilated_res_block.3} parent=11 // pred_check
        %p368 = pneg %p225
      $region38: #{dilated_res_block.3} parent=11 // pred_check_branch
        %370 = sbr.rel (%p368) target = $region40
      $region39: #{dilated_res_block.3} parent=11 // pred_region
        _
      $region40: #{dilated_res_block.3} parent=11 // pred_fallthru
        _
      // Predicated region
      $region41: #{dilated_res_block.3} parent=11 // pred_check
        %p371 = pneg %p246
      $region42: #{dilated_res_block.3} parent=11 // pred_check_branch
        %373 = sbr.rel (%p371) target = $region44
      $region43: #{dilated_res_block.3} parent=11 // pred_region
        _
      $region44: #{dilated_res_block.3} parent=11 // pred_fallthru
        _
      // Predicated region
      $region45: #{dilated_res_block.3} parent=11 // pred_check
        %p374 = pneg %p267
      $region46: #{dilated_res_block.3} parent=11 // pred_check_branch
        %376 = sbr.rel (%p374) target = $region48
      $region47: #{dilated_res_block.3} parent=11 // pred_region
        _
      $region48: #{dilated_res_block.3} parent=11 // pred_fallthru
        _
      // Predicated region
      $region49: #{dilated_res_block.3} parent=11 // pred_check
        %p377 = pneg %p288
      $region50: #{dilated_res_block.3} parent=11 // pred_check_branch
        %379 = sbr.rel (%p377) target = $region52
      $region51: #{dilated_res_block.3} parent=11 // pred_region
        _
      $region52: #{dilated_res_block.3} parent=11 // pred_fallthru
        _
      // Predicated region
      $region53: #{dilated_res_block.3} parent=11 // pred_check
        %p380 = pneg %p309
      $region54: #{dilated_res_block.3} parent=11 // pred_check_branch
        %382 = sbr.rel (%p380) target = $region56
      $region55: #{dilated_res_block.3} parent=11 // pred_region
        _
      $region56: #{dilated_res_block.3} parent=11 // pred_fallthru
        _
    $region12: #{dilated_res_block.3} parent=5 // pred_fallthru
      _
    %p383 = scmp.lt.s32.totalorder %s26, 2
    // Predicated region
    $region57: #{dilated_res_block.3} parent=5 // pred_check
      %p384 = pneg %p383
    $region58: #{dilated_res_block.3} parent=5 // pred_check_branch
      %386 = sbr.rel (%p384) target = $region60
    $region59: #{dilated_res_block.3} parent=5 // pred_region
      // Predicated region
      $region61: #{dilated_res_block.3} parent=59 // pred_check
        %p387 = pneg %p67
      $region62: #{dilated_res_block.3} parent=59 // pred_check_branch
        %389 = sbr.rel (%p387) target = $region64
      $region63: #{dilated_res_block.3} parent=59 // pred_region
        %s390 = smul.u32 128, %s26
        %p391 = scmp.lt.s32.totalorder %s390, 255
        %s392 = scalar_select %p391, %s390, 255
        %s393 = smul.addr %s392, 8
        %s394 = scalar_lea.vmem %s2, %s393
        %s395 = smul.u32 128, %s26
      $region64: #{dilated_res_block.3} parent=59 // pred_fallthru
        _
      // Predicated region
      $region65: #{dilated_res_block.3} parent=59 // pred_check
        %p396 = pneg %p93
      $region66: #{dilated_res_block.3} parent=59 // pred_check_branch
        %398 = sbr.rel (%p396) target = $region68
      $region67: #{dilated_res_block.3} parent=59 // pred_region
        %s399 = smul.u32 16, %s26
        %p400 = scmp.lt.s32.totalorder %s399, 31
        %s401 = scalar_select %p400, %s399, 31
        %s402 = smul.addr %s401, 8
        %s403 = scalar_lea.vmem %s3, %s402
        %s404 = smul.u32 16, %s26
      $region68: #{dilated_res_block.3} parent=59 // pred_fallthru
        _
    $region60: #{dilated_res_block.3} parent=5 // pred_fallthru
      _
    %p405 = scmp.le.s32.totalorder 1, %s26
    %p406 = scmp.lt.s32.totalorder %s26, 3
    %p407 = pnand %p405, %p406
    %p408 = pneg %p407
    // Predicated region
    $region69: #{dilated_res_block.3} parent=5 // pred_check
      _
    $region70: #{dilated_res_block.3} parent=5 // pred_check_branch
      %410 = sbr.rel (%p407) target = $region72
    $region71: #{dilated_res_block.3} parent=5 // pred_region
      %s411 = ssub.s32 %s26, 1
      %p412 = pneg %p47
      %p413 = pneg %p44
      %s414 = smul.u32 128, %s31
      %p415 = scmp.lt.s32.totalorder %s414, 255
      %s416 = scalar_select %p415, %s414, 255
      %s417 = smul.addr %s416, 8
      %s418 = scalar_lea.vmem %s2, %s417
      %p419 = pneg %p73
      %p420 = pneg %p70
      %s421 = smul.u32 16, %s31
      %p422 = scmp.lt.s32.totalorder %s421, 31
      %s423 = scalar_select %p422, %s421, 31
      %s424 = smul.addr %s423, 8
      %s425 = scalar_lea.vmem %s3, %s424
      %p426 = pneg %p99
      %p427 = pneg %p96
      %p428 = pneg %p120
      %p429 = pneg %p117
      %p430 = pneg %p141
      %p431 = pneg %p138
      %p432 = pneg %p162
      %p433 = pneg %p159
      %p434 = pneg %p183
      %p435 = pneg %p180
      %p436 = pneg %p204
      %p437 = pneg %p201
      %p438 = pneg %p225
      %p439 = pneg %p222
      %p440 = pneg %p246
      %p441 = pneg %p243
      %p442 = pneg %p267
      %p443 = pneg %p264
      %p444 = pneg %p288
      %p445 = pneg %p285
      %p446 = pneg %p309
      %p447 = pneg %p306
      %p448 = pneg %p335
      %p449 = pneg %p332
      %s450 = smul.u32 16, %s31
      %p451 = scmp.lt.s32.totalorder %s450, 31
      %s452 = scalar_select %p451, %s450, 31
      %s453 = smul.addr %s452, 8
      %s454 = scalar_lea.vmem %s14, %s453
      %s455 = smul.u32 128, %s31
      %p456 = scmp.lt.s32.totalorder %s455, 255
      %s457 = scalar_select %p456, %s455, 255
      %s458 = smul.addr %s457, 8
      %s459 = scalar_lea.vmem %s2, %s458
      %s460 = smul.u32 128, %s31
      %s461 = smul.u32 16, %s31
      %p462 = scmp.lt.s32.totalorder %s461, 31
      %s463 = scalar_select %p462, %s461, 31
      %s464 = smul.addr %s463, 8
      %s465 = scalar_lea.vmem %s3, %s464
      %s466 = smul.u32 16, %s31
      %s467 = smul.u32 16, %s31
      %p468 = scmp.lt.s32.totalorder %s467, 31
      %s469 = scalar_select %p468, %s467, 31
      %s470 = smul.addr %s469, 8
      %s471 = scalar_lea.vmem %s14, %s470
      %s472 = smul.u32 16, %s31
      %s473 = smul.u32 %s31, 1024
      loop: start=0, step=1, limit=128
      $region73: #{dilated_res_block.3} parent=71 // loop_pre_header
        _
      $region74: #{dilated_res_block.3} parent=71 // loop_header
        %s475 = sphi 0, %s479
        %p476 = scmp.ge.s32.totalorder %s475, 128
      $region75: #{dilated_res_block.3} parent=71 // loop_header_branch
        %478 = sbr.rel (%p476) target = $region79
      $region76: #{dilated_res_block.3} parent=71 // loop_body
        %s480 = smul.u32 %s475, 8
        %s481 = sadd.s32 %s473, %s480
        %s482 = sld [smem:[#allocation4 + %s481]]
        %s483 = scalar_lea.vmem %s1, %s482
        %v484 = vld [vmem:[%s483] sm:$0x1]
        %s485 = scalar_lea.vmem [#allocation2], %s480
        %vm486 = vcmask 122880
        %487 = vst.msk [vmem:[%s485] sm:$0x1] %vm486, %v484
        %s488 = sadd.s32 %s480, 1
        %s489 = sadd.s32 %s473, %s488
        %s490 = sld [smem:[#allocation4 + %s489]]
        %s491 = scalar_lea.vmem %s1, %s490
        %v492 = vld [vmem:[%s491] sm:$0x1]
        %s493 = scalar_lea.vmem [#allocation2], %s488
        %494 = vst.msk [vmem:[%s493] sm:$0x1] %vm486, %v492
        %s495 = sadd.s32 %s480, 2
        %s496 = sadd.s32 %s473, %s495
        %s497 = sld [smem:[#allocation4 + %s496]]
        %s498 = scalar_lea.vmem %s1, %s497
        %v499 = vld [vmem:[%s498] sm:$0x1]
        %s500 = scalar_lea.vmem [#allocation2], %s495
        %501 = vst.msk [vmem:[%s500] sm:$0x1] %vm486, %v499
        %s502 = sadd.s32 %s480, 3
        %s503 = sadd.s32 %s473, %s502
        %s504 = sld [smem:[#allocation4 + %s503]]
        %s505 = scalar_lea.vmem %s1, %s504
        %v506 = vld [vmem:[%s505] sm:$0x1]
        %s507 = scalar_lea.vmem [#allocation2], %s502
        %508 = vst.msk [vmem:[%s507] sm:$0x1] %vm486, %v506
        %s509 = sadd.s32 %s480, 4
        %s510 = sadd.s32 %s473, %s509
        %s511 = sld [smem:[#allocation4 + %s510]]
        %s512 = scalar_lea.vmem %s1, %s511
        %v513 = vld [vmem:[%s512] sm:$0x1]
        %s514 = scalar_lea.vmem [#allocation2], %s509
        %515 = vst.msk [vmem:[%s514] sm:$0x1] %vm486, %v513
        %s516 = sadd.s32 %s480, 5
        %s517 = sadd.s32 %s473, %s516
        %s518 = sld [smem:[#allocation4 + %s517]]
        %s519 = scalar_lea.vmem %s1, %s518
        %v520 = vld [vmem:[%s519] sm:$0x1]
        %s521 = scalar_lea.vmem [#allocation2], %s516
        %522 = vst.msk [vmem:[%s521] sm:$0x1] %vm486, %v520
        %s523 = sadd.s32 %s480, 6
        %s524 = sadd.s32 %s473, %s523
        %s525 = sld [smem:[#allocation4 + %s524]]
        %s526 = scalar_lea.vmem %s1, %s525
        %v527 = vld [vmem:[%s526] sm:$0x1]
        %s528 = scalar_lea.vmem [#allocation2], %s523
        %529 = vst.msk [vmem:[%s528] sm:$0x1] %vm486, %v527
        %s530 = sadd.s32 %s480, 7
        %s531 = sadd.s32 %s473, %s530
        %s532 = sld [smem:[#allocation4 + %s531]]
        %s533 = scalar_lea.vmem %s1, %s532
        %v534 = vld [vmem:[%s533] sm:$0x1]
        %s535 = scalar_lea.vmem [#allocation2], %s530
        %536 = vst.msk [vmem:[%s535] sm:$0x1] %vm486, %v534
      $region77: #{dilated_res_block.3} parent=71 // loop_footer
        %s479 = sadd.s32 1, %s475
      $region78: #{dilated_res_block.3} parent=71 // loop_footer_branch
        %474 = sbr.rel target = $region74
      $region79: #{dilated_res_block.3} parent=71 // loop_exit
        _
      %v537 = vld [vmem:[%s459] sm:$0xff]
      %v538 = vld [vmem:[%s459 + $0x8] sm:$0xff]
      %v539 = vld [vmem:[%s459 + $0x10] sm:$0xff]
      %v540 = vld [vmem:[%s459 + $0x18] sm:$0xff]
      %v541 = vld [vmem:[%s459 + $0x20] sm:$0xff]
      %v542 = vld [vmem:[%s459 + $0x28] sm:$0xff]
      %v543 = vld [vmem:[%s459 + $0x30] sm:$0xff]
      %v544 = vld [vmem:[%s459 + $0x38] sm:$0xff]
      %v545 = vld [vmem:[%s459 + $0x40] sm:$0xff]
      %v546 = vld [vmem:[%s459 + $0x48] sm:$0xff]
      %v547 = vld [vmem:[%s459 + $0x50] sm:$0xff]
      %v548 = vld [vmem:[%s459 + $0x58] sm:$0xff]
      %v549 = vld [vmem:[%s459 + $0x60] sm:$0xff]
      %v550 = vld [vmem:[%s459 + $0x68] sm:$0xff]
      %v551 = vld [vmem:[%s459 + $0x70] sm:$0xff]
      %v552 = vld [vmem:[%s459 + $0x78] sm:$0xff]
      %v553 = vld [vmem:[%s459 + $0x80] sm:$0xff]
      %v554 = vld [vmem:[%s459 + $0x88] sm:$0xff]
      %v555 = vld [vmem:[%s459 + $0x90] sm:$0xff]
      %v556 = vld [vmem:[%s459 + $0x98] sm:$0xff]
      %v557 = vld [vmem:[%s459 + $0xa0] sm:$0xff]
      %v558 = vld [vmem:[%s459 + $0xa8] sm:$0xff]
      %v559 = vld [vmem:[%s459 + $0xb0] sm:$0xff]
      %v560 = vld [vmem:[%s459 + $0xb8] sm:$0xff]
      %v561 = vld [vmem:[%s459 + $0xc0] sm:$0xff]
      %v562 = vld [vmem:[%s459 + $0xc8] sm:$0xff]
      %v563 = vld [vmem:[%s459 + $0xd0] sm:$0xff]
      %v564 = vld [vmem:[%s459 + $0xd8] sm:$0xff]
      %v565 = vld [vmem:[%s459 + $0xe0] sm:$0xff]
      %v566 = vld [vmem:[%s459 + $0xe8] sm:$0xff]
      %v567 = vld [vmem:[%s459 + $0xf0] sm:$0xff]
      %v568 = vld [vmem:[%s459 + $0xf8] sm:$0xff]
      %v569 = vld [vmem:[%s459 + $0x100] sm:$0xff]
      %v570 = vld [vmem:[%s459 + $0x108] sm:$0xff]
      %v571 = vld [vmem:[%s459 + $0x110] sm:$0xff]
      %v572 = vld [vmem:[%s459 + $0x118] sm:$0xff]
      %v573 = vld [vmem:[%s459 + $0x120] sm:$0xff]
      %v574 = vld [vmem:[%s459 + $0x128] sm:$0xff]
      %v575 = vld [vmem:[%s459 + $0x130] sm:$0xff]
      %v576 = vld [vmem:[%s459 + $0x138] sm:$0xff]
      %v577 = vld [vmem:[%s459 + $0x140] sm:$0xff]
      %v578 = vld [vmem:[%s459 + $0x148] sm:$0xff]
      %v579 = vld [vmem:[%s459 + $0x150] sm:$0xff]
      %v580 = vld [vmem:[%s459 + $0x158] sm:$0xff]
      %v581 = vld [vmem:[%s459 + $0x160] sm:$0xff]
      %v582 = vld [vmem:[%s459 + $0x168] sm:$0xff]
      %v583 = vld [vmem:[%s459 + $0x170] sm:$0xff]
      %v584 = vld [vmem:[%s459 + $0x178] sm:$0xff]
      %v585 = vld [vmem:[%s459 + $0x180] sm:$0xff]
      %v586 = vld [vmem:[%s459 + $0x188] sm:$0xff]
      %v587 = vld [vmem:[%s459 + $0x190] sm:$0xff]
      %v588 = vld [vmem:[%s459 + $0x198] sm:$0xff]
      %v589 = vld [vmem:[%s459 + $0x1a0] sm:$0xff]
      %v590 = vld [vmem:[%s459 + $0x1a8] sm:$0xff]
      %v591 = vld [vmem:[%s459 + $0x1b0] sm:$0xff]
      %v592 = vld [vmem:[%s459 + $0x1b8] sm:$0xff]
      %v593 = vld [vmem:[%s459 + $0x1c0] sm:$0xff]
      %v594 = vld [vmem:[%s459 + $0x1c8] sm:$0xff]
      %v595 = vld [vmem:[%s459 + $0x1d0] sm:$0xff]
      %v596 = vld [vmem:[%s459 + $0x1d8] sm:$0xff]
      %v597 = vld [vmem:[%s459 + $0x1e0] sm:$0xff]
      %v598 = vld [vmem:[%s459 + $0x1e8] sm:$0xff]
      %v599 = vld [vmem:[%s459 + $0x1f0] sm:$0xff]
      %v600 = vld [vmem:[%s459 + $0x1f8] sm:$0xff]
      %v601 = vld [vmem:[%s459 + $0x200] sm:$0xff]
      %v602 = vld [vmem:[%s459 + $0x208] sm:$0xff]
      %v603 = vld [vmem:[%s459 + $0x210] sm:$0xff]
      %v604 = vld [vmem:[%s459 + $0x218] sm:$0xff]
      %v605 = vld [vmem:[%s459 + $0x220] sm:$0xff]
      %v606 = vld [vmem:[%s459 + $0x228] sm:$0xff]
      %v607 = vld [vmem:[%s459 + $0x230] sm:$0xff]
      %v608 = vld [vmem:[%s459 + $0x238] sm:$0xff]
      %v609 = vld [vmem:[%s459 + $0x240] sm:$0xff]
      %v610 = vld [vmem:[%s459 + $0x248] sm:$0xff]
      %v611 = vld [vmem:[%s459 + $0x250] sm:$0xff]
      %v612 = vld [vmem:[%s459 + $0x258] sm:$0xff]
      %v613 = vld [vmem:[%s459 + $0x260] sm:$0xff]
      %v614 = vld [vmem:[%s459 + $0x268] sm:$0xff]
      %v615 = vld [vmem:[%s459 + $0x270] sm:$0xff]
      %v616 = vld [vmem:[%s459 + $0x278] sm:$0xff]
      %v617 = vld [vmem:[%s459 + $0x280] sm:$0xff]
      %v618 = vld [vmem:[%s459 + $0x288] sm:$0xff]
      %v619 = vld [vmem:[%s459 + $0x290] sm:$0xff]
      %v620 = vld [vmem:[%s459 + $0x298] sm:$0xff]
      %v621 = vld [vmem:[%s459 + $0x2a0] sm:$0xff]
      %v622 = vld [vmem:[%s459 + $0x2a8] sm:$0xff]
      %v623 = vld [vmem:[%s459 + $0x2b0] sm:$0xff]
      %v624 = vld [vmem:[%s459 + $0x2b8] sm:$0xff]
      %v625 = vld [vmem:[%s459 + $0x2c0] sm:$0xff]
      %v626 = vld [vmem:[%s459 + $0x2c8] sm:$0xff]
      %v627 = vld [vmem:[%s459 + $0x2d0] sm:$0xff]
      %v628 = vld [vmem:[%s459 + $0x2d8] sm:$0xff]
      %v629 = vld [vmem:[%s459 + $0x2e0] sm:$0xff]
      %v630 = vld [vmem:[%s459 + $0x2e8] sm:$0xff]
      %v631 = vld [vmem:[%s459 + $0x2f0] sm:$0xff]
      %v632 = vld [vmem:[%s459 + $0x2f8] sm:$0xff]
      %v633 = vld [vmem:[%s459 + $0x300] sm:$0xff]
      %v634 = vld [vmem:[%s459 + $0x308] sm:$0xff]
      %v635 = vld [vmem:[%s459 + $0x310] sm:$0xff]
      %v636 = vld [vmem:[%s459 + $0x318] sm:$0xff]
      %v637 = vld [vmem:[%s459 + $0x320] sm:$0xff]
      %v638 = vld [vmem:[%s459 + $0x328] sm:$0xff]
      %v639 = vld [vmem:[%s459 + $0x330] sm:$0xff]
      %v640 = vld [vmem:[%s459 + $0x338] sm:$0xff]
      %v641 = vld [vmem:[%s459 + $0x340] sm:$0xff]
      %v642 = vld [vmem:[%s459 + $0x348] sm:$0xff]
      %v643 = vld [vmem:[%s459 + $0x350] sm:$0xff]
      %v644 = vld [vmem:[%s459 + $0x358] sm:$0xff]
      %v645 = vld [vmem:[%s459 + $0x360] sm:$0xff]
      %v646 = vld [vmem:[%s459 + $0x368] sm:$0xff]
      %v647 = vld [vmem:[%s459 + $0x370] sm:$0xff]
      %v648 = vld [vmem:[%s459 + $0x378] sm:$0xff]
      %v649 = vld [vmem:[%s459 + $0x380] sm:$0xff]
      %v650 = vld [vmem:[%s459 + $0x388] sm:$0xff]
      %v651 = vld [vmem:[%s459 + $0x390] sm:$0xff]
      %v652 = vld [vmem:[%s459 + $0x398] sm:$0xff]
      %v653 = vld [vmem:[%s459 + $0x3a0] sm:$0xff]
      %v654 = vld [vmem:[%s459 + $0x3a8] sm:$0xff]
      %v655 = vld [vmem:[%s459 + $0x3b0] sm:$0xff]
      %v656 = vld [vmem:[%s459 + $0x3b8] sm:$0xff]
      %v657 = vld [vmem:[%s459 + $0x3c0] sm:$0xff]
      %v658 = vld [vmem:[%s459 + $0x3c8] sm:$0xff]
      %v659 = vld [vmem:[%s459 + $0x3d0] sm:$0xff]
      %v660 = vld [vmem:[%s459 + $0x3d8] sm:$0xff]
      %v661 = vld [vmem:[%s459 + $0x3e0] sm:$0xff]
      %v662 = vld [vmem:[%s459 + $0x3e8] sm:$0xff]
      %v663 = vld [vmem:[%s459 + $0x3f0] sm:$0xff]
      %v664 = vld [vmem:[%s459 + $0x3f8] sm:$0xff]
      %v665 = vld [vmem:[%s4] sm:$0x3f]
      %v666 = vld [vmem:[%s5] sm:$0x1]
      %v668 = vlaneseq
      %v669 = vshrl.u32 %v668, 7
      %v670 = vsub.s32 0, %v669
      %v671 = vrot.slane %v666, %v670
      %vm673 = vcmask 48128
      %v675 = vsel %vm673, %v537, 0
      %v678 = vsel %vm673, %v538, 0
      %v681 = vsel %vm673, %v539, 0
      %v684 = vsel %vm673, %v540, 0
      %v687 = vsel %vm673, %v541, 0
      %v690 = vsel %vm673, %v542, 0
      %v693 = vsel %vm673, %v543, 0
      %v696 = vsel %vm673, %v544, 0
      %v699 = vsel %vm673, %v545, 0
      %v702 = vsel %vm673, %v546, 0
      %v705 = vsel %vm673, %v547, 0
      %v708 = vsel %vm673, %v548, 0
      %v711 = vsel %vm673, %v549, 0
      %v714 = vsel %vm673, %v550, 0
      %v717 = vsel %vm673, %v551, 0
      %v720 = vsel %vm673, %v552, 0
      %v723 = vsel %vm673, %v553, 0
      %v726 = vsel %vm673, %v554, 0
      %v729 = vsel %vm673, %v555, 0
      %v732 = vsel %vm673, %v556, 0
      %v735 = vsel %vm673, %v557, 0
      %v738 = vsel %vm673, %v558, 0
      %v741 = vsel %vm673, %v559, 0
      %v744 = vsel %vm673, %v560, 0
      %v747 = vsel %vm673, %v561, 0
      %v750 = vsel %vm673, %v562, 0
      %v753 = vsel %vm673, %v563, 0
      %v756 = vsel %vm673, %v564, 0
      %v759 = vsel %vm673, %v565, 0
      %v762 = vsel %vm673, %v566, 0
      %v765 = vsel %vm673, %v567, 0
      %v768 = vsel %vm673, %v568, 0
      %v771 = vsel %vm673, %v569, 0
      %v774 = vsel %vm673, %v570, 0
      %v777 = vsel %vm673, %v571, 0
      %v780 = vsel %vm673, %v572, 0
      %v783 = vsel %vm673, %v573, 0
      %v786 = vsel %vm673, %v574, 0
      %v789 = vsel %vm673, %v575, 0
      %v792 = vsel %vm673, %v576, 0
      %v795 = vsel %vm673, %v577, 0
      %v798 = vsel %vm673, %v578, 0
      %v801 = vsel %vm673, %v579, 0
      %v804 = vsel %vm673, %v580, 0
      %v807 = vsel %vm673, %v581, 0
      %v810 = vsel %vm673, %v582, 0
      %v813 = vsel %vm673, %v583, 0
      %v816 = vsel %vm673, %v584, 0
      %v819 = vsel %vm673, %v585, 0
      %v822 = vsel %vm673, %v586, 0
      %v825 = vsel %vm673, %v587, 0
      %v828 = vsel %vm673, %v588, 0
      %v831 = vsel %vm673, %v589, 0
      %v834 = vsel %vm673, %v590, 0
      %v837 = vsel %vm673, %v591, 0
      %v840 = vsel %vm673, %v592, 0
      %v843 = vsel %vm673, %v593, 0
      %v846 = vsel %vm673, %v594, 0
      %v849 = vsel %vm673, %v595, 0
      %v852 = vsel %vm673, %v596, 0
      %v855 = vsel %vm673, %v597, 0
      %v858 = vsel %vm673, %v598, 0
      %v861 = vsel %vm673, %v599, 0
      %v864 = vsel %vm673, %v600, 0
      %v867 = vsel %vm673, %v601, 0
      %v870 = vsel %vm673, %v602, 0
      %v873 = vsel %vm673, %v603, 0
      %v876 = vsel %vm673, %v604, 0
      %v879 = vsel %vm673, %v605, 0
      %v882 = vsel %vm673, %v606, 0
      %v885 = vsel %vm673, %v607, 0
      %v888 = vsel %vm673, %v608, 0
      %v891 = vsel %vm673, %v609, 0
      %v894 = vsel %vm673, %v610, 0
      %v897 = vsel %vm673, %v611, 0
      %v900 = vsel %vm673, %v612, 0
      %v903 = vsel %vm673, %v613, 0
      %v906 = vsel %vm673, %v614, 0
      %v909 = vsel %vm673, %v615, 0
      %v912 = vsel %vm673, %v616, 0
      %v915 = vsel %vm673, %v617, 0
      %v918 = vsel %vm673, %v618, 0
      %v921 = vsel %vm673, %v619, 0
      %v924 = vsel %vm673, %v620, 0
      %v927 = vsel %vm673, %v621, 0
      %v930 = vsel %vm673, %v622, 0
      %v933 = vsel %vm673, %v623, 0
      %v936 = vsel %vm673, %v624, 0
      %v939 = vsel %vm673, %v625, 0
      %v942 = vsel %vm673, %v626, 0
      %v945 = vsel %vm673, %v627, 0
      %v948 = vsel %vm673, %v628, 0
      %v951 = vsel %vm673, %v629, 0
      %v954 = vsel %vm673, %v630, 0
      %v957 = vsel %vm673, %v631, 0
      %v960 = vsel %vm673, %v632, 0
      %v963 = vsel %vm673, %v633, 0
      %v966 = vsel %vm673, %v634, 0
      %v969 = vsel %vm673, %v635, 0
      %v972 = vsel %vm673, %v636, 0
      %v975 = vsel %vm673, %v637, 0
      %v978 = vsel %vm673, %v638, 0
      %v981 = vsel %vm673, %v639, 0
      %v984 = vsel %vm673, %v640, 0
      %v987 = vsel %vm673, %v641, 0
      %v990 = vsel %vm673, %v642, 0
      %v993 = vsel %vm673, %v643, 0
      %v996 = vsel %vm673, %v644, 0
      %v999 = vsel %vm673, %v645, 0
      %v1002 = vsel %vm673, %v646, 0
      %v1005 = vsel %vm673, %v647, 0
      %v1008 = vsel %vm673, %v648, 0
      %v1011 = vsel %vm673, %v649, 0
      %v1014 = vsel %vm673, %v650, 0
      %v1017 = vsel %vm673, %v651, 0
      %v1020 = vsel %vm673, %v652, 0
      %v1023 = vsel %vm673, %v653, 0
      %v1026 = vsel %vm673, %v654, 0
      %v1029 = vsel %vm673, %v655, 0
      %v1032 = vsel %vm673, %v656, 0
      %v1035 = vsel %vm673, %v657, 0
      %v1038 = vsel %vm673, %v658, 0
      %v1041 = vsel %vm673, %v659, 0
      %v1044 = vsel %vm673, %v660, 0
      %v1047 = vsel %vm673, %v661, 0
      %v1050 = vsel %vm673, %v662, 0
      %v1053 = vsel %vm673, %v663, 0
      %v1056 = vsel %vm673, %v664, 0
      %vm1058 = vcmask 1045504
      %v1060 = vsel %vm1058, %v665, 0
      %1062 = vmatprep.subr.mxu0 0.0
      %1063 = vmatpush1.msra.mxu0 %v1060
      %1064 = vmatprep.subr.mxu0 0.0
      %1065 = vmatpush1.msra.mxu0 0.0
      %1066 = vmatprep.subr.mxu0 0.0
      %1067 = vmatpush1.msra.mxu0 0.0
      %1068 = vmatprep.subr.mxu0 0.0
      %1069 = vmatpush1.msra.mxu0 0.0
      %1070 = vmatprep.subr.mxu0 0.0
      %1071 = vmatpush1.msra.mxu0 0.0
      %1072 = vmatprep.subr.mxu0 0.0
      %1073 = vmatpush1.msra.mxu0 0.0
      %1074 = vmatprep.subr.mxu0 0.0
      %1075 = vmatpush1.msra.mxu0 0.0
      %1076 = vmatprep.subr.mxu0 0.0
      %1077 = vmatpush1.msra.mxu0 0.0
      %1078 = vmatprep.subr.mxu0 0.0
      %1079 = vmatpush1.msra.mxu0 0.0
      %1080 = vmatprep.subr.mxu0 0.0
      %1081 = vmatpush1.msra.mxu0 0.0
      %1082 = vmatprep.subr.mxu0 0.0
      %1083 = vmatpush1.msra.mxu0 0.0
      %1084 = vmatprep.subr.mxu0 0.0
      %1085 = vmatpush1.msra.mxu0 0.0
      %1086 = vmatprep.subr.mxu0 0.0
      %1087 = vmatpush1.msra.mxu0 0.0
      %1088 = vmatprep.subr.mxu0 0.0
      %1089 = vmatpush1.msra.mxu0 0.0
      %1090 = vmatprep.subr.mxu0 0.0
      %1091 = vmatpush1.msra.mxu0 0.0
      %1092 = vmatprep.subr.mxu0 0.0
      %1093 = vmatpush1.msra.mxu0 0.0
      %1094 = vmatprep.subr.mxu0 0.0
      %1095 = vmatpush1.msra.mxu0 0.0
      %1096 = vmatprep.subr.mxu0 0.0
      %1097 = vmatpush1.msra.mxu0 0.0
      %1098 = vmatprep.subr.mxu0 0.0
      %1099 = vmatpush1.msra.mxu0 0.0
      %1100 = vmatprep.subr.mxu0 0.0
      %1101 = vmatpush1.msra.mxu0 0.0
      %1102 = vmatprep.subr.mxu0 0.0
      %1103 = vmatpush1.msra.mxu0 0.0
      %1104 = vmatprep.subr.mxu0 0.0
      %1105 = vmatpush1.msra.mxu0 0.0
      %1106 = vmatprep.subr.mxu0 0.0
      %1107 = vmatpush1.msra.mxu0 0.0
      %1108 = vmatprep.subr.mxu0 0.0
      %1109 = vmatpush1.msra.mxu0 0.0
      %1110 = vmatprep.subr.mxu0 0.0
      %1111 = vmatpush1.msra.mxu0 0.0
      %1112 = vmatprep.subr.mxu0 0.0
      %1113 = vmatpush1.msra.mxu0 0.0
      %1114 = vmatprep.subr.mxu0 0.0
      %1115 = vmatpush1.msra.mxu0 0.0
      %1116 = vmatprep.subr.mxu0 0.0
      %1117 = vmatpush1.msra.mxu0 0.0
      %1118 = vmatprep.subr.mxu0 0.0
      %1119 = vmatpush1.msra.mxu0 0.0
      %1120 = vmatprep.subr.mxu0 0.0
      %1121 = vmatpush1.msra.mxu0 0.0
      %1122 = vmatprep.subr.mxu0 0.0
      %1123 = vmatpush1.msra.mxu0 0.0
      %1124 = vmatprep.subr.mxu0 0.0
      %1125 = vmatpush1.msra.mxu0 0.0
      %1126 = vmatprep.mubr.f32.mxu0 0.0
      %1127 = vmatmul.mubr.f32.gmra.mrb[0].mxu0 %v675
      %v1128 = vpop.f32.mrb[0].mxu0
      %v1129 = vadd.f32 %v671, %v1128
      %v1130 = vpop.f32.mrb[0].mxu0
      %1131 = vmatprep.mubr.f32.mxu0 0.0
      %1132 = vmatmul.mubr.f32.gmra.mrb[0].mxu0 %v678
      %v1133 = vpop.f32.mrb[0].mxu0
      %v1134 = vadd.f32 %v671, %v1133
      %v1135 = vpop.f32.mrb[0].mxu0
      %1136 = vmatprep.mubr.f32.mxu0 0.0
      %1137 = vmatmul.mubr.f32.gmra.mrb[0].mxu0 %v681
      %v1138 = vpop.f32.mrb[0].mxu0
      %v1139 = vadd.f32 %v671, %v1138
      %v1140 = vpop.f32.mrb[0].mxu0
      %1141 = vmatprep.mubr.f32.mxu0 0.0
      %1142 = vmatmul.mubr.f32.gmra.mrb[0].mxu0 %v684
      %v1143 = vpop.f32.mrb[0].mxu0
      %v1144 = vadd.f32 %v671, %v1143
      %v1145 = vpop.f32.mrb[0].mxu0
      %1146 = vmatprep.mubr.f32.mxu0 0.0
      %1147 = vmatmul.mubr.f32.gmra.mrb[0].mxu0 %v687
      %v1148 = vpop.f32.mrb[0].mxu0
      %v1149 = vadd.f32 %v671, %v1148
      %v1150 = vpop.f32.mrb[0].mxu0
      %1151 = vmatprep.mubr.f32.mxu0 0.0
      %1152 = vmatmul.mubr.f32.gmra.mrb[0].mxu0 %v690
      %v1153 = vpop.f32.mrb[0].mxu0
      %v1154 = vadd.f32 %v671, %v1153
      %v1155 = vpop.f32.mrb[0].mxu0
      %1156 = vmatprep.mubr.f32.mxu0 0.0
      %1157 = vmatmul.mubr.f32.gmra.mrb[0].mxu0 %v693
      %v1158 = vpop.f32.mrb[0].mxu0
      %v1159 = vadd.f32 %v671, %v1158
      %v1160 = vpop.f32.mrb[0].mxu0
      %1161 = vmatprep.mubr.f32.mxu0 0.0
      %1162 = vmatmul.mubr.f32.gmra.mrb[0].mxu0 %v696
      %v1163 = vpop.f32.mrb[0].mxu0
      %v1164 = vadd.f32 %v671, %v1163
      %v1165 = vpop.f32.mrb[0].mxu0
      %1166 = vmatprep.mubr.f32.mxu0 0.0
      %1167 = vmatmul.mubr.f32.gmra.mrb[0].mxu0 %v699
      %v1168 = vpop.f32.mrb[0].mxu0
      %v1169 = vadd.f32 %v671, %v1168
      %v1170 = vpop.f32.mrb[0].mxu0
      %1171 = vmatprep.mubr.f32.mxu0 0.0
      %1172 = vmatmul.mubr.f32.gmra.mrb[0].mxu0 %v702
      %v1173 = vpop.f32.mrb[0].mxu0
      %v1174 = vadd.f32 %v671, %v1173
      %v1175 = vpop.f32.mrb[0].mxu0
      %1176 = vmatprep.mubr.f32.mxu0 0.0
      %1177 = vmatmul.mubr.f32.gmra.mrb[0].mxu0 %v705
      %v1178 = vpop.f32.mrb[0].mxu0
      %v1179 = vadd.f32 %v671, %v1178
      %v1180 = vpop.f32.mrb[0].mxu0
      %1181 = vmatprep.mubr.f32.mxu0 0.0
      %1182 = vmatmul.mubr.f32.gmra.mrb[0].mxu0 %v708
      %v1183 = vpop.f32.mrb[0].mxu0
      %v1184 = vadd.f32 %v671, %v1183
      %v1185 = vpop.f32.mrb[0].mxu0
      %1186 = vmatprep.mubr.f32.mxu0 0.0
      %1187 = vmatmul.mubr.f32.gmra.mrb[0].mxu0 %v711
      %v1188 = vpop.f32.mrb[0].mxu0
      %v1189 = vadd.f32 %v671, %v1188
      %v1190 = vpop.f32.mrb[0].mxu0
      %1191 = vmatprep.mubr.f32.mxu0 0.0
      %1192 = vmatmul.mubr.f32.gmra.mrb[0].mxu0 %v714
      %v1193 = vpop.f32.mrb[0].mxu0
      %v1194 = vadd.f32 %v671, %v1193
      %v1195 = vpop.f32.mrb[0].mxu0
      %1196 = vmatprep.mubr.f32.mxu0 0.0
      %1197 = vmatmul.mubr.f32.gmra.mrb[0].mxu0 %v717
      %v1198 = vpop.f32.mrb[0].mxu0
      %v1199 = vadd.f32 %v671, %v1198
      %v1200 = vpop.f32.mrb[0].mxu0
      %1201 = vmatprep.mubr.f32.mxu0 0.0
      %1202 = vmatmul.mubr.f32.gmra.mrb[0].mxu0 %v720
      %v1203 = vpop.f32.mrb[0].mxu0
      %v1204 = vadd.f32 %v671, %v1203
      %v1205 = vpop.f32.mrb[0].mxu0
      %1206 = vmatprep.mubr.f32.mxu0 0.0
      %1207 = vmatmul.mubr.f32.gmra.mrb[0].mxu0 %v723
      %v1208 = vpop.f32.mrb[0].mxu0
      %v1209 = vadd.f32 %v671, %v1208
      %v1210 = vpop.f32.mrb[0].mxu0
      %1211 = vmatprep.mubr.f32.mxu0 0.0
      %1212 = vmatmul.mubr.f32.gmra.mrb[0].mxu0 %v726
      %v1213 = vpop.f32.mrb[0].mxu0
      %v1214 = vadd.f32 %v671, %v1213
      %v1215 = vpop.f32.mrb[0].mxu0
      %1216 = vmatprep.mubr.f32.mxu0 0.0
      %1217 = vmatmul.mubr.f32.gmra.mrb[0].mxu0 %v729
      %v1218 = vpop.f32.mrb[0].mxu0
      %v1219 = vadd.f32 %v671, %v1218
      %v1220 = vpop.f32.mrb[0].mxu0
      %1221 = vmatprep.mubr.f32.mxu0 0.0
      %1222 = vmatmul.mubr.f32.gmra.mrb[0].mxu0 %v732
      %v1223 = vpop.f32.mrb[0].mxu0
      %v1224 = vadd.f32 %v671, %v1223
      %v1225 = vpop.f32.mrb[0].mxu0
      %1226 = vmatprep.mubr.f32.mxu0 0.0
      %1227 = vmatmul.mubr.f32.gmra.mrb[0].mxu0 %v735
      %v1228 = vpop.f32.mrb[0].mxu0
      %v1229 = vadd.f32 %v671, %v1228
      %v1230 = vpop.f32.mrb[0].mxu0
      %1231 = vmatprep.mubr.f32.mxu0 0.0
      %1232 = vmatmul.mubr.f32.gmra.mrb[0].mxu0 %v738
      %v1233 = vpop.f32.mrb[0].mxu0
      %v1234 = vadd.f32 %v671, %v1233
      %v1235 = vpop.f32.mrb[0].mxu0
      %1236 = vmatprep.mubr.f32.mxu0 0.0
      %1237 = vmatmul.mubr.f32.gmra.mrb[0].mxu0 %v741
      %v1238 = vpop.f32.mrb[0].mxu0
      %v1239 = vadd.f32 %v671, %v1238
      %v1240 = vpop.f32.mrb[0].mxu0
      %1241 = vmatprep.mubr.f32.mxu0 0.0
      %1242 = vmatmul.mubr.f32.gmra.mrb[0].mxu0 %v744
      %v1243 = vpop.f32.mrb[0].mxu0
      %v1244 = vadd.f32 %v671, %v1243
      %v1245 = vpop.f32.mrb[0].mxu0
      %1246 = vmatprep.mubr.f32.mxu0 0.0
      %1247 = vmatmul.mubr.f32.gmra.mrb[0].mxu0 %v747
      %v1248 = vpop.f32.mrb[0].mxu0
      %v1249 = vadd.f32 %v671, %v1248
      %v1250 = vpop.f32.mrb[0].mxu0
      %1251 = vmatprep.mubr.f32.mxu0 0.0
      %1252 = vmatmul.mubr.f32.gmra.mrb[0].mxu0 %v750
      %v1253 = vpop.f32.mrb[0].mxu0
      %v1254 = vadd.f32 %v671, %v1253
      %v1255 = vpop.f32.mrb[0].mxu0
      %1256 = vmatprep.mubr.f32.mxu0 0.0
      %1257 = vmatmul.mubr.f32.gmra.mrb[0].mxu0 %v753
      %v1258 = vpop.f32.mrb[0].mxu0
      %v1259 = vadd.f32 %v671, %v1258
      %v1260 = vpop.f32.mrb[0].mxu0
      %1261 = vmatprep.mubr.f32.mxu0 0.0
      %1262 = vmatmul.mubr.f32.gmra.mrb[0].mxu0 %v756
      %v1263 = vpop.f32.mrb[0].mxu0
      %v1264 = vadd.f32 %v671, %v1263
      %v1265 = vpop.f32.mrb[0].mxu0
      %1266 = vmatprep.mubr.f32.mxu0 0.0
      %1267 = vmatmul.mubr.f32.gmra.mrb[0].mxu0 %v759
      %v1268 = vpop.f32.mrb[0].mxu0
      %v1269 = vadd.f32 %v671, %v1268
      %v1270 = vpop.f32.mrb[0].mxu0
      %1271 = vmatprep.mubr.f32.mxu0 0.0
      %1272 = vmatmul.mubr.f32.gmra.mrb[0].mxu0 %v762
      %v1273 = vpop.f32.mrb[0].mxu0
      %v1274 = vadd.f32 %v671, %v1273
      %v1275 = vpop.f32.mrb[0].mxu0
      %1276 = vmatprep.mubr.f32.mxu0 0.0
      %1277 = vmatmul.mubr.f32.gmra.mrb[0].mxu0 %v765
      %v1278 = vpop.f32.mrb[0].mxu0
      %v1279 = vadd.f32 %v671, %v1278
      %v1280 = vpop.f32.mrb[0].mxu0
      %1281 = vmatprep.mubr.f32.mxu0 0.0
      %1282 = vmatmul.mubr.f32.gmra.mrb[0].mxu0 %v768
      %v1283 = vpop.f32.mrb[0].mxu0
      %v1284 = vadd.f32 %v671, %v1283
      %v1285 = vpop.f32.mrb[0].mxu0
      %1286 = vmatprep.mubr.f32.mxu0 0.0
      %1287 = vmatmul.mubr.f32.gmra.mrb[0].mxu0 %v771
      %v1288 = vpop.f32.mrb[0].mxu0
      %v1289 = vadd.f32 %v671, %v1288
      %v1290 = vpop.f32.mrb[0].mxu0
      %1291 = vmatprep.mubr.f32.mxu0 0.0
      %1292 = vmatmul.mubr.f32.gmra.mrb[0].mxu0 %v774
      %v1293 = vpop.f32.mrb[0].mxu0
      %v1294 = vadd.f32 %v671, %v1293
      %v1295 = vpop.f32.mrb[0].mxu0
      %1296 = vmatprep.mubr.f32.mxu0 0.0
      %1297 = vmatmul.mubr.f32.gmra.mrb[0].mxu0 %v777
      %v1298 = vpop.f32.mrb[0].mxu0
      %v1299 = vadd.f32 %v671, %v1298
      %v1300 = vpop.f32.mrb[0].mxu0
      %1301 = vmatprep.mubr.f32.mxu0 0.0
      %1302 = vmatmul.mubr.f32.gmra.mrb[0].mxu0 %v780
      %v1303 = vpop.f32.mrb[0].mxu0
      %v1304 = vadd.f32 %v671, %v1303
      %v1305 = vpop.f32.mrb[0].mxu0
      %1306 = vmatprep.mubr.f32.mxu0 0.0
      %1307 = vmatmul.mubr.f32.gmra.mrb[0].mxu0 %v783
      %v1308 = vpop.f32.mrb[0].mxu0
      %v1309 = vadd.f32 %v671, %v1308
      %v1310 = vpop.f32.mrb[0].mxu0
      %1311 = vmatprep.mubr.f32.mxu0 0.0
      %1312 = vmatmul.mubr.f32.gmra.mrb[0].mxu0 %v786
      %v1313 = vpop.f32.mrb[0].mxu0
      %v1314 = vadd.f32 %v671, %v1313
      %v1315 = vpop.f32.mrb[0].mxu0
      %1316 = vmatprep.mubr.f32.mxu0 0.0
      %1317 = vmatmul.mubr.f32.gmra.mrb[0].mxu0 %v789
      %v1318 = vpop.f32.mrb[0].mxu0
      %v1319 = vadd.f32 %v671, %v1318
      %v1320 = vpop.f32.mrb[0].mxu0
      %1321 = vmatprep.mubr.f32.mxu0 0.0
      %1322 = vmatmul.mubr.f32.gmra.mrb[0].mxu0 %v792
      %v1323 = vpop.f32.mrb[0].mxu0
      %v1324 = vadd.f32 %v671, %v1323
      %v1325 = vpop.f32.mrb[0].mxu0
      %1326 = vmatprep.mubr.f32.mxu0 0.0
      %1327 = vmatmul.mubr.f32.gmra.mrb[0].mxu0 %v795
      %v1328 = vpop.f32.mrb[0].mxu0
      %v1329 = vadd.f32 %v671, %v1328
      %v1330 = vpop.f32.mrb[0].mxu0
      %1331 = vmatprep.mubr.f32.mxu0 0.0
      %1332 = vmatmul.mubr.f32.gmra.mrb[0].mxu0 %v798
      %v1333 = vpop.f32.mrb[0].mxu0
      %v1334 = vadd.f32 %v671, %v1333
      %v1335 = vpop.f32.mrb[0].mxu0
      %1336 = vmatprep.mubr.f32.mxu0 0.0
      %1337 = vmatmul.mubr.f32.gmra.mrb[0].mxu0 %v801
      %v1338 = vpop.f32.mrb[0].mxu0
      %v1339 = vadd.f32 %v671, %v1338
      %v1340 = vpop.f32.mrb[0].mxu0
      %1341 = vmatprep.mubr.f32.mxu0 0.0
      %1342 = vmatmul.mubr.f32.gmra.mrb[0].mxu0 %v804
      %v1343 = vpop.f32.mrb[0].mxu0
      %v1344 = vadd.f32 %v671, %v1343
      %v1345 = vpop.f32.mrb[0].mxu0
      %1346 = vmatprep.mubr.f32.mxu0 0.0
      %1347 = vmatmul.mubr.f32.gmra.mrb[0].mxu0 %v807
      %v1348 = vpop.f32.mrb[0].mxu0
      %v1349 = vadd.f32 %v671, %v1348
      %v1350 = vpop.f32.mrb[0].mxu0
      %1351 = vmatprep.mubr.f32.mxu0 0.0
      %1352 = vmatmul.mubr.f32.gmra.mrb[0].mxu0 %v810
      %v1353 = vpop.f32.mrb[0].mxu0
      %v1354 = vadd.f32 %v671, %v1353
      %v1355 = vpop.f32.mrb[0].mxu0
      %1356 = vmatprep.mubr.f32.mxu0 0.0
      %1357 = vmatmul.mubr.f32.gmra.mrb[0].mxu0 %v813
      %v1358 = vpop.f32.mrb[0].mxu0
      %v1359 = vadd.f32 %v671, %v1358
      %v1360 = vpop.f32.mrb[0].mxu0
      %1361 = vmatprep.mubr.f32.mxu0 0.0
      %1362 = vmatmul.mubr.f32.gmra.mrb[0].mxu0 %v816
      %v1363 = vpop.f32.mrb[0].mxu0
      %v1364 = vadd.f32 %v671, %v1363
      %v1365 = vpop.f32.mrb[0].mxu0
      %1366 = vmatprep.mubr.f32.mxu0 0.0
      %1367 = vmatmul.mubr.f32.gmra.mrb[0].mxu0 %v819
      %v1368 = vpop.f32.mrb[0].mxu0
      %v1369 = vadd.f32 %v671, %v1368
      %v1370 = vpop.f32.mrb[0].mxu0
      %1371 = vmatprep.mubr.f32.mxu0 0.0
      %1372 = vmatmul.mubr.f32.gmra.mrb[0].mxu0 %v822
      %v1373 = vpop.f32.mrb[0].mxu0
      %v1374 = vadd.f32 %v671, %v1373
      %v1375 = vpop.f32.mrb[0].mxu0
      %1376 = vmatprep.mubr.f32.mxu0 0.0
      %1377 = vmatmul.mubr.f32.gmra.mrb[0].mxu0 %v825
      %v1378 = vpop.f32.mrb[0].mxu0
      %v1379 = vadd.f32 %v671, %v1378
      %v1380 = vpop.f32.mrb[0].mxu0
      %1381 = vmatprep.mubr.f32.mxu0 0.0
      %1382 = vmatmul.mubr.f32.gmra.mrb[0].mxu0 %v828
      %v1383 = vpop.f32.mrb[0].mxu0
      %v1384 = vadd.f32 %v671, %v1383
      %v1385 = vpop.f32.mrb[0].mxu0
      %1386 = vmatprep.mubr.f32.mxu0 0.0
      %1387 = vmatmul.mubr.f32.gmra.mrb[0].mxu0 %v831
      %v1388 = vpop.f32.mrb[0].mxu0
      %v1389 = vadd.f32 %v671, %v1388
      %v1390 = vpop.f32.mrb[0].mxu0
      %1391 = vmatprep.mubr.f32.mxu0 0.0
      %1392 = vmatmul.mubr.f32.gmra.mrb[0].mxu0 %v834
      %v1393 = vpop.f32.mrb[0].mxu0
      %v1394 = vadd.f32 %v671, %v1393
      %v1395 = vpop.f32.mrb[0].mxu0
      %1396 = vmatprep.mubr.f32.mxu0 0.0
      %1397 = vmatmul.mubr.f32.gmra.mrb[0].mxu0 %v837
      %v1398 = vpop.f32.mrb[0].mxu0
      %v1399 = vadd.f32 %v671, %v1398
      %v1400 = vpop.f32.mrb[0].mxu0
      %1401 = vmatprep.mubr.f32.mxu0 0.0
      %1402 = vmatmul.mubr.f32.gmra.mrb[0].mxu0 %v840
      %v1403 = vpop.f32.mrb[0].mxu0
      %v1404 = vadd.f32 %v671, %v1403
      %v1405 = vpop.f32.mrb[0].mxu0
      %1406 = vmatprep.mubr.f32.mxu0 0.0
      %1407 = vmatmul.mubr.f32.gmra.mrb[0].mxu0 %v843
      %v1408 = vpop.f32.mrb[0].mxu0
      %v1409 = vadd.f32 %v671, %v1408
      %v1410 = vpop.f32.mrb[0].mxu0
      %1411 = vmatprep.mubr.f32.mxu0 0.0
      %1412 = vmatmul.mubr.f32.gmra.mrb[0].mxu0 %v846
      %v1413 = vpop.f32.mrb[0].mxu0
      %v1414 = vadd.f32 %v671, %v1413
      %v1415 = vpop.f32.mrb[0].mxu0
      %1416 = vmatprep.mubr.f32.mxu0 0.0
      %1417 = vmatmul.mubr.f32.gmra.mrb[0].mxu0 %v849
      %v1418 = vpop.f32.mrb[0].mxu0
      %v1419 = vadd.f32 %v671, %v1418
      %v1420 = vpop.f32.mrb[0].mxu0
      %1421 = vmatprep.mubr.f32.mxu0 0.0
      %1422 = vmatmul.mubr.f32.gmra.mrb[0].mxu0 %v852
      %v1423 = vpop.f32.mrb[0].mxu0
      %v1424 = vadd.f32 %v671, %v1423
      %v1425 = vpop.f32.mrb[0].mxu0
      %1426 = vmatprep.mubr.f32.mxu0 0.0
      %1427 = vmatmul.mubr.f32.gmra.mrb[0].mxu0 %v855
      %v1428 = vpop.f32.mrb[0].mxu0
      %v1429 = vadd.f32 %v671, %v1428
      %v1430 = vpop.f32.mrb[0].mxu0
      %1431 = vmatprep.mubr.f32.mxu0 0.0
      %1432 = vmatmul.mubr.f32.gmra.mrb[0].mxu0 %v858
      %v1433 = vpop.f32.mrb[0].mxu0
      %v1434 = vadd.f32 %v671, %v1433
      %v1435 = vpop.f32.mrb[0].mxu0
      %1436 = vmatprep.mubr.f32.mxu0 0.0
      %1437 = vmatmul.mubr.f32.gmra.mrb[0].mxu0 %v861
      %v1438 = vpop.f32.mrb[0].mxu0
      %v1439 = vadd.f32 %v671, %v1438
      %v1440 = vpop.f32.mrb[0].mxu0
      %1441 = vmatprep.mubr.f32.mxu0 0.0
      %1442 = vmatmul.mubr.f32.gmra.mrb[0].mxu0 %v864
      %v1443 = vpop.f32.mrb[0].mxu0
      %v1444 = vadd.f32 %v671, %v1443
      %v1445 = vpop.f32.mrb[0].mxu0
      %1446 = vmatprep.mubr.f32.mxu0 0.0
      %1447 = vmatmul.mubr.f32.gmra.mrb[0].mxu0 %v867
      %v1448 = vpop.f32.mrb[0].mxu0
      %v1449 = vadd.f32 %v671, %v1448
      %v1450 = vpop.f32.mrb[0].mxu0
      %1451 = vmatprep.mubr.f32.mxu0 0.0
      %1452 = vmatmul.mubr.f32.gmra.mrb[0].mxu0 %v870
      %v1453 = vpop.f32.mrb[0].mxu0
      %v1454 = vadd.f32 %v671, %v1453
      %v1455 = vpop.f32.mrb[0].mxu0
      %1456 = vmatprep.mubr.f32.mxu0 0.0
      %1457 = vmatmul.mubr.f32.gmra.mrb[0].mxu0 %v873
      %v1458 = vpop.f32.mrb[0].mxu0
      %v1459 = vadd.f32 %v671, %v1458
      %v1460 = vpop.f32.mrb[0].mxu0
      %1461 = vmatprep.mubr.f32.mxu0 0.0
      %1462 = vmatmul.mubr.f32.gmra.mrb[0].mxu0 %v876
      %v1463 = vpop.f32.mrb[0].mxu0
      %v1464 = vadd.f32 %v671, %v1463
      %v1465 = vpop.f32.mrb[0].mxu0
      %1466 = vmatprep.mubr.f32.mxu0 0.0
      %1467 = vmatmul.mubr.f32.gmra.mrb[0].mxu0 %v879
      %v1468 = vpop.f32.mrb[0].mxu0
      %v1469 = vadd.f32 %v671, %v1468
      %v1470 = vpop.f32.mrb[0].mxu0
      %1471 = vmatprep.mubr.f32.mxu0 0.0
      %1472 = vmatmul.mubr.f32.gmra.mrb[0].mxu0 %v882
      %v1473 = vpop.f32.mrb[0].mxu0
      %v1474 = vadd.f32 %v671, %v1473
      %v1475 = vpop.f32.mrb[0].mxu0
      %1476 = vmatprep.mubr.f32.mxu0 0.0
      %1477 = vmatmul.mubr.f32.gmra.mrb[0].mxu0 %v885
      %v1478 = vpop.f32.mrb[0].mxu0
      %v1479 = vadd.f32 %v671, %v1478
      %v1480 = vpop.f32.mrb[0].mxu0
      %1481 = vmatprep.mubr.f32.mxu0 0.0
      %1482 = vmatmul.mubr.f32.gmra.mrb[0].mxu0 %v888
      %v1483 = vpop.f32.mrb[0].mxu0
      %v1484 = vadd.f32 %v671, %v1483
      %v1485 = vpop.f32.mrb[0].mxu0
      %1486 = vmatprep.mubr.f32.mxu0 0.0
      %1487 = vmatmul.mubr.f32.gmra.mrb[0].mxu0 %v891
      %v1488 = vpop.f32.mrb[0].mxu0
      %v1489 = vadd.f32 %v671, %v1488
      %v1490 = vpop.f32.mrb[0].mxu0
      %1491 = vmatprep.mubr.f32.mxu0 0.0
      %1492 = vmatmul.mubr.f32.gmra.mrb[0].mxu0 %v894
      %v1493 = vpop.f32.mrb[0].mxu0
      %v1494 = vadd.f32 %v671, %v1493
      %v1495 = vpop.f32.mrb[0].mxu0
      %1496 = vmatprep.mubr.f32.mxu0 0.0
      %1497 = vmatmul.mubr.f32.gmra.mrb[0].mxu0 %v897
      %v1498 = vpop.f32.mrb[0].mxu0
      %v1499 = vadd.f32 %v671, %v1498
      %v1500 = vpop.f32.mrb[0].mxu0
      %1501 = vmatprep.mubr.f32.mxu0 0.0
      %1502 = vmatmul.mubr.f32.gmra.mrb[0].mxu0 %v900
      %v1503 = vpop.f32.mrb[0].mxu0
      %v1504 = vadd.f32 %v671, %v1503
      %v1505 = vpop.f32.mrb[0].mxu0
      %1506 = vmatprep.mubr.f32.mxu0 0.0
      %1507 = vmatmul.mubr.f32.gmra.mrb[0].mxu0 %v903
      %v1508 = vpop.f32.mrb[0].mxu0
      %v1509 = vadd.f32 %v671, %v1508
      %v1510 = vpop.f32.mrb[0].mxu0
      %1511 = vmatprep.mubr.f32.mxu0 0.0
      %1512 = vmatmul.mubr.f32.gmra.mrb[0].mxu0 %v906
      %v1513 = vpop.f32.mrb[0].mxu0
      %v1514 = vadd.f32 %v671, %v1513
      %v1515 = vpop.f32.mrb[0].mxu0
      %1516 = vmatprep.mubr.f32.mxu0 0.0
      %1517 = vmatmul.mubr.f32.gmra.mrb[0].mxu0 %v909
      %v1518 = vpop.f32.mrb[0].mxu0
      %v1519 = vadd.f32 %v671, %v1518
      %v1520 = vpop.f32.mrb[0].mxu0
      %1521 = vmatprep.mubr.f32.mxu0 0.0
      %1522 = vmatmul.mubr.f32.gmra.mrb[0].mxu0 %v912
      %v1523 = vpop.f32.mrb[0].mxu0
      %v1524 = vadd.f32 %v671, %v1523
      %v1525 = vpop.f32.mrb[0].mxu0
      %1526 = vmatprep.mubr.f32.mxu0 0.0
      %1527 = vmatmul.mubr.f32.gmra.mrb[0].mxu0 %v915
      %v1528 = vpop.f32.mrb[0].mxu0
      %v1529 = vadd.f32 %v671, %v1528
      %v1530 = vpop.f32.mrb[0].mxu0
      %1531 = vmatprep.mubr.f32.mxu0 0.0
      %1532 = vmatmul.mubr.f32.gmra.mrb[0].mxu0 %v918
      %v1533 = vpop.f32.mrb[0].mxu0
      %v1534 = vadd.f32 %v671, %v1533
      %v1535 = vpop.f32.mrb[0].mxu0
      %1536 = vmatprep.mubr.f32.mxu0 0.0
      %1537 = vmatmul.mubr.f32.gmra.mrb[0].mxu0 %v921
      %v1538 = vpop.f32.mrb[0].mxu0
      %v1539 = vadd.f32 %v671, %v1538
      %v1540 = vpop.f32.mrb[0].mxu0
      %1541 = vmatprep.mubr.f32.mxu0 0.0
      %1542 = vmatmul.mubr.f32.gmra.mrb[0].mxu0 %v924
      %v1543 = vpop.f32.mrb[0].mxu0
      %v1544 = vadd.f32 %v671, %v1543
      %v1545 = vpop.f32.mrb[0].mxu0
      %1546 = vmatprep.mubr.f32.mxu0 0.0
      %1547 = vmatmul.mubr.f32.gmra.mrb[0].mxu0 %v927
      %v1548 = vpop.f32.mrb[0].mxu0
      %v1549 = vadd.f32 %v671, %v1548
      %v1550 = vpop.f32.mrb[0].mxu0
      %1551 = vmatprep.mubr.f32.mxu0 0.0
      %1552 = vmatmul.mubr.f32.gmra.mrb[0].mxu0 %v930
      %v1553 = vpop.f32.mrb[0].mxu0
      %v1554 = vadd.f32 %v671, %v1553
      %v1555 = vpop.f32.mrb[0].mxu0
      %1556 = vmatprep.mubr.f32.mxu0 0.0
      %1557 = vmatmul.mubr.f32.gmra.mrb[0].mxu0 %v933
      %v1558 = vpop.f32.mrb[0].mxu0
      %v1559 = vadd.f32 %v671, %v1558
      %v1560 = vpop.f32.mrb[0].mxu0
      %1561 = vmatprep.mubr.f32.mxu0 0.0
      %1562 = vmatmul.mubr.f32.gmra.mrb[0].mxu0 %v936
      %v1563 = vpop.f32.mrb[0].mxu0
      %v1564 = vadd.f32 %v671, %v1563
      %v1565 = vpop.f32.mrb[0].mxu0
      %1566 = vmatprep.mubr.f32.mxu0 0.0
      %1567 = vmatmul.mubr.f32.gmra.mrb[0].mxu0 %v939
      %v1568 = vpop.f32.mrb[0].mxu0
      %v1569 = vadd.f32 %v671, %v1568
      %v1570 = vpop.f32.mrb[0].mxu0
      %1571 = vmatprep.mubr.f32.mxu0 0.0
      %1572 = vmatmul.mubr.f32.gmra.mrb[0].mxu0 %v942
      %v1573 = vpop.f32.mrb[0].mxu0
      %v1574 = vadd.f32 %v671, %v1573
      %v1575 = vpop.f32.mrb[0].mxu0
      %1576 = vmatprep.mubr.f32.mxu0 0.0
      %1577 = vmatmul.mubr.f32.gmra.mrb[0].mxu0 %v945
      %v1578 = vpop.f32.mrb[0].mxu0
      %v1579 = vadd.f32 %v671, %v1578
      %v1580 = vpop.f32.mrb[0].mxu0
      %1581 = vmatprep.mubr.f32.mxu0 0.0
      %1582 = vmatmul.mubr.f32.gmra.mrb[0].mxu0 %v948
      %v1583 = vpop.f32.mrb[0].mxu0
      %v1584 = vadd.f32 %v671, %v1583
      %v1585 = vpop.f32.mrb[0].mxu0
      %1586 = vmatprep.mubr.f32.mxu0 0.0
      %1587 = vmatmul.mubr.f32.gmra.mrb[0].mxu0 %v951
      %v1588 = vpop.f32.mrb[0].mxu0
      %v1589 = vadd.f32 %v671, %v1588
      %v1590 = vpop.f32.mrb[0].mxu0
      %1591 = vmatprep.mubr.f32.mxu0 0.0
      %1592 = vmatmul.mubr.f32.gmra.mrb[0].mxu0 %v954
      %v1593 = vpop.f32.mrb[0].mxu0
      %v1594 = vadd.f32 %v671, %v1593
      %v1595 = vpop.f32.mrb[0].mxu0
      %1596 = vmatprep.mubr.f32.mxu0 0.0
      %1597 = vmatmul.mubr.f32.gmra.mrb[0].mxu0 %v957
      %v1598 = vpop.f32.mrb[0].mxu0
      %v1599 = vadd.f32 %v671, %v1598
      %v1600 = vpop.f32.mrb[0].mxu0
      %1601 = vmatprep.mubr.f32.mxu0 0.0
      %1602 = vmatmul.mubr.f32.gmra.mrb[0].mxu0 %v960
      %v1603 = vpop.f32.mrb[0].mxu0
      %v1604 = vadd.f32 %v671, %v1603
      %v1605 = vpop.f32.mrb[0].mxu0
      %1606 = vmatprep.mubr.f32.mxu0 0.0
      %1607 = vmatmul.mubr.f32.gmra.mrb[0].mxu0 %v963
      %v1608 = vpop.f32.mrb[0].mxu0
      %v1609 = vadd.f32 %v671, %v1608
      %v1610 = vpop.f32.mrb[0].mxu0
      %1611 = vmatprep.mubr.f32.mxu0 0.0
      %1612 = vmatmul.mubr.f32.gmra.mrb[0].mxu0 %v966
      %v1613 = vpop.f32.mrb[0].mxu0
      %v1614 = vadd.f32 %v671, %v1613
      %v1615 = vpop.f32.mrb[0].mxu0
      %1616 = vmatprep.mubr.f32.mxu0 0.0
      %1617 = vmatmul.mubr.f32.gmra.mrb[0].mxu0 %v969
      %v1618 = vpop.f32.mrb[0].mxu0
      %v1619 = vadd.f32 %v671, %v1618
      %v1620 = vpop.f32.mrb[0].mxu0
      %1621 = vmatprep.mubr.f32.mxu0 0.0
      %1622 = vmatmul.mubr.f32.gmra.mrb[0].mxu0 %v972
      %v1623 = vpop.f32.mrb[0].mxu0
      %v1624 = vadd.f32 %v671, %v1623
      %v1625 = vpop.f32.mrb[0].mxu0
      %1626 = vmatprep.mubr.f32.mxu0 0.0
      %1627 = vmatmul.mubr.f32.gmra.mrb[0].mxu0 %v975
      %v1628 = vpop.f32.mrb[0].mxu0
      %v1629 = vadd.f32 %v671, %v1628
      %v1630 = vpop.f32.mrb[0].mxu0
      %1631 = vmatprep.mubr.f32.mxu0 0.0
      %1632 = vmatmul.mubr.f32.gmra.mrb[0].mxu0 %v978
      %v1633 = vpop.f32.mrb[0].mxu0
      %v1634 = vadd.f32 %v671, %v1633
      %v1635 = vpop.f32.mrb[0].mxu0
      %1636 = vmatprep.mubr.f32.mxu0 0.0
      %1637 = vmatmul.mubr.f32.gmra.mrb[0].mxu0 %v981
      %v1638 = vpop.f32.mrb[0].mxu0
      %v1639 = vadd.f32 %v671, %v1638
      %v1640 = vpop.f32.mrb[0].mxu0
      %1641 = vmatprep.mubr.f32.mxu0 0.0
      %1642 = vmatmul.mubr.f32.gmra.mrb[0].mxu0 %v984
      %v1643 = vpop.f32.mrb[0].mxu0
      %v1644 = vadd.f32 %v671, %v1643
      %v1645 = vpop.f32.mrb[0].mxu0
      %1646 = vmatprep.mubr.f32.mxu0 0.0
      %1647 = vmatmul.mubr.f32.gmra.mrb[0].mxu0 %v987
      %v1648 = vpop.f32.mrb[0].mxu0
      %v1649 = vadd.f32 %v671, %v1648
      %v1650 = vpop.f32.mrb[0].mxu0
      %1651 = vmatprep.mubr.f32.mxu0 0.0
      %1652 = vmatmul.mubr.f32.gmra.mrb[0].mxu0 %v990
      %v1653 = vpop.f32.mrb[0].mxu0
      %v1654 = vadd.f32 %v671, %v1653
      %v1655 = vpop.f32.mrb[0].mxu0
      %1656 = vmatprep.mubr.f32.mxu0 0.0
      %1657 = vmatmul.mubr.f32.gmra.mrb[0].mxu0 %v993
      %v1658 = vpop.f32.mrb[0].mxu0
      %v1659 = vadd.f32 %v671, %v1658
      %v1660 = vpop.f32.mrb[0].mxu0
      %1661 = vmatprep.mubr.f32.mxu0 0.0
      %1662 = vmatmul.mubr.f32.gmra.mrb[0].mxu0 %v996
      %v1663 = vpop.f32.mrb[0].mxu0
      %v1664 = vadd.f32 %v671, %v1663
      %v1665 = vpop.f32.mrb[0].mxu0
      %1666 = vmatprep.mubr.f32.mxu0 0.0
      %1667 = vmatmul.mubr.f32.gmra.mrb[0].mxu0 %v999
      %v1668 = vpop.f32.mrb[0].mxu0
      %v1669 = vadd.f32 %v671, %v1668
      %v1670 = vpop.f32.mrb[0].mxu0
      %1671 = vmatprep.mubr.f32.mxu0 0.0
      %1672 = vmatmul.mubr.f32.gmra.mrb[0].mxu0 %v1002
      %v1673 = vpop.f32.mrb[0].mxu0
      %v1674 = vadd.f32 %v671, %v1673
      %v1675 = vpop.f32.mrb[0].mxu0
      %1676 = vmatprep.mubr.f32.mxu0 0.0
      %1677 = vmatmul.mubr.f32.gmra.mrb[0].mxu0 %v1005
      %v1678 = vpop.f32.mrb[0].mxu0
      %v1679 = vadd.f32 %v671, %v1678
      %v1680 = vpop.f32.mrb[0].mxu0
      %1681 = vmatprep.mubr.f32.mxu0 0.0
      %1682 = vmatmul.mubr.f32.gmra.mrb[0].mxu0 %v1008
      %v1683 = vpop.f32.mrb[0].mxu0
      %v1684 = vadd.f32 %v671, %v1683
      %v1685 = vpop.f32.mrb[0].mxu0
      %1686 = vmatprep.mubr.f32.mxu0 0.0
      %1687 = vmatmul.mubr.f32.gmra.mrb[0].mxu0 %v1011
      %v1688 = vpop.f32.mrb[0].mxu0
      %v1689 = vadd.f32 %v671, %v1688
      %v1690 = vpop.f32.mrb[0].mxu0
      %1691 = vmatprep.mubr.f32.mxu0 0.0
      %1692 = vmatmul.mubr.f32.gmra.mrb[0].mxu0 %v1014
      %v1693 = vpop.f32.mrb[0].mxu0
      %v1694 = vadd.f32 %v671, %v1693
      %v1695 = vpop.f32.mrb[0].mxu0
      %1696 = vmatprep.mubr.f32.mxu0 0.0
      %1697 = vmatmul.mubr.f32.gmra.mrb[0].mxu0 %v1017
      %v1698 = vpop.f32.mrb[0].mxu0
      %v1699 = vadd.f32 %v671, %v1698
      %v1700 = vpop.f32.mrb[0].mxu0
      %1701 = vmatprep.mubr.f32.mxu0 0.0
      %1702 = vmatmul.mubr.f32.gmra.mrb[0].mxu0 %v1020
      %v1703 = vpop.f32.mrb[0].mxu0
      %v1704 = vadd.f32 %v671, %v1703
      %v1705 = vpop.f32.mrb[0].mxu0
      %1706 = vmatprep.mubr.f32.mxu0 0.0
      %1707 = vmatmul.mubr.f32.gmra.mrb[0].mxu0 %v1023
      %v1708 = vpop.f32.mrb[0].mxu0
      %v1709 = vadd.f32 %v671, %v1708
      %v1710 = vpop.f32.mrb[0].mxu0
      %1711 = vmatprep.mubr.f32.mxu0 0.0
      %1712 = vmatmul.mubr.f32.gmra.mrb[0].mxu0 %v1026
      %v1713 = vpop.f32.mrb[0].mxu0
      %v1714 = vadd.f32 %v671, %v1713
      %v1715 = vpop.f32.mrb[0].mxu0
      %1716 = vmatprep.mubr.f32.mxu0 0.0
      %1717 = vmatmul.mubr.f32.gmra.mrb[0].mxu0 %v1029
      %v1718 = vpop.f32.mrb[0].mxu0
      %v1719 = vadd.f32 %v671, %v1718
      %v1720 = vpop.f32.mrb[0].mxu0
      %1721 = vmatprep.mubr.f32.mxu0 0.0
      %1722 = vmatmul.mubr.f32.gmra.mrb[0].mxu0 %v1032
      %v1723 = vpop.f32.mrb[0].mxu0
      %v1724 = vadd.f32 %v671, %v1723
      %v1725 = vpop.f32.mrb[0].mxu0
      %1726 = vmatprep.mubr.f32.mxu0 0.0
      %1727 = vmatmul.mubr.f32.gmra.mrb[0].mxu0 %v1035
      %v1728 = vpop.f32.mrb[0].mxu0
      %v1729 = vadd.f32 %v671, %v1728
      %v1730 = vpop.f32.mrb[0].mxu0
      %1731 = vmatprep.mubr.f32.mxu0 0.0
      %1732 = vmatmul.mubr.f32.gmra.mrb[0].mxu0 %v1038
      %v1733 = vpop.f32.mrb[0].mxu0
      %v1734 = vadd.f32 %v671, %v1733
      %v1735 = vpop.f32.mrb[0].mxu0
      %1736 = vmatprep.mubr.f32.mxu0 0.0
      %1737 = vmatmul.mubr.f32.gmra.mrb[0].mxu0 %v1041
      %v1738 = vpop.f32.mrb[0].mxu0
      %v1739 = vadd.f32 %v671, %v1738
      %v1740 = vpop.f32.mrb[0].mxu0
      %1741 = vmatprep.mubr.f32.mxu0 0.0
      %1742 = vmatmul.mubr.f32.gmra.mrb[0].mxu0 %v1044
      %v1743 = vpop.f32.mrb[0].mxu0
      %v1744 = vadd.f32 %v671, %v1743
      %v1745 = vpop.f32.mrb[0].mxu0
      %1746 = vmatprep.mubr.f32.mxu0 0.0
      %1747 = vmatmul.mubr.f32.gmra.mrb[0].mxu0 %v1047
      %v1748 = vpop.f32.mrb[0].mxu0
      %v1749 = vadd.f32 %v671, %v1748
      %v1750 = vpop.f32.mrb[0].mxu0
      %1751 = vmatprep.mubr.f32.mxu0 0.0
      %1752 = vmatmul.mubr.f32.gmra.mrb[0].mxu0 %v1050
      %v1753 = vpop.f32.mrb[0].mxu0
      %v1754 = vadd.f32 %v671, %v1753
      %v1755 = vpop.f32.mrb[0].mxu0
      %1756 = vmatprep.mubr.f32.mxu0 0.0
      %1757 = vmatmul.mubr.f32.gmra.mrb[0].mxu0 %v1053
      %v1758 = vpop.f32.mrb[0].mxu0
      %v1759 = vadd.f32 %v671, %v1758
      %v1760 = vpop.f32.mrb[0].mxu0
      %1761 = vmatprep.mubr.f32.mxu0 0.0
      %1762 = vmatmul.mubr.f32.gmra.mrb[0].mxu0 %v1056
      %v1763 = vpop.f32.mrb[0].mxu0
      %v1764 = vadd.f32 %v671, %v1763
      %v1765 = vpop.f32.mrb[0].mxu0
      %1766 = vdwg.mxu0
      %v1767 = vmax.f32 %v1129, 0.0
      %v1768 = vmax.f32 %v1134, 0.0
      %v1769 = vmax.f32 %v1139, 0.0
      %v1770 = vmax.f32 %v1144, 0.0
      %v1771 = vmax.f32 %v1149, 0.0
      %v1772 = vmax.f32 %v1154, 0.0
      %v1773 = vmax.f32 %v1159, 0.0
      %v1774 = vmax.f32 %v1164, 0.0
      %v1775 = vmax.f32 %v1169, 0.0
      %v1776 = vmax.f32 %v1174, 0.0
      %v1777 = vmax.f32 %v1179, 0.0
      %v1778 = vmax.f32 %v1184, 0.0
      %v1779 = vmax.f32 %v1189, 0.0
      %v1780 = vmax.f32 %v1194, 0.0
      %v1781 = vmax.f32 %v1199, 0.0
      %v1782 = vmax.f32 %v1204, 0.0
      %v1783 = vmax.f32 %v1209, 0.0
      %v1784 = vmax.f32 %v1214, 0.0
      %v1785 = vmax.f32 %v1219, 0.0
      %v1786 = vmax.f32 %v1224, 0.0
      %v1787 = vmax.f32 %v1229, 0.0
      %v1788 = vmax.f32 %v1234, 0.0
      %v1789 = vmax.f32 %v1239, 0.0
      %v1790 = vmax.f32 %v1244, 0.0
      %v1791 = vmax.f32 %v1249, 0.0
      %v1792 = vmax.f32 %v1254, 0.0
      %v1793 = vmax.f32 %v1259, 0.0
      %v1794 = vmax.f32 %v1264, 0.0
      %v1795 = vmax.f32 %v1269, 0.0
      %v1796 = vmax.f32 %v1274, 0.0
      %v1797 = vmax.f32 %v1279, 0.0
      %v1798 = vmax.f32 %v1284, 0.0
      %v1799 = vmax.f32 %v1289, 0.0
      %v1800 = vmax.f32 %v1294, 0.0
      %v1801 = vmax.f32 %v1299, 0.0
      %v1802 = vmax.f32 %v1304, 0.0
      %v1803 = vmax.f32 %v1309, 0.0
      %v1804 = vmax.f32 %v1314, 0.0
      %v1805 = vmax.f32 %v1319, 0.0
      %v1806 = vmax.f32 %v1324, 0.0
      %v1807 = vmax.f32 %v1329, 0.0
      %v1808 = vmax.f32 %v1334, 0.0
      %v1809 = vmax.f32 %v1339, 0.0
      %v1810 = vmax.f32 %v1344, 0.0
      %v1811 = vmax.f32 %v1349, 0.0
      %v1812 = vmax.f32 %v1354, 0.0
      %v1813 = vmax.f32 %v1359, 0.0
      %v1814 = vmax.f32 %v1364, 0.0
      %v1815 = vmax.f32 %v1369, 0.0
      %v1816 = vmax.f32 %v1374, 0.0
      %v1817 = vmax.f32 %v1379, 0.0
      %v1818 = vmax.f32 %v1384, 0.0
      %v1819 = vmax.f32 %v1389, 0.0
      %v1820 = vmax.f32 %v1394, 0.0
      %v1821 = vmax.f32 %v1399, 0.0
      %v1822 = vmax.f32 %v1404, 0.0
      %v1823 = vmax.f32 %v1409, 0.0
      %v1824 = vmax.f32 %v1414, 0.0
      %v1825 = vmax.f32 %v1419, 0.0
      %v1826 = vmax.f32 %v1424, 0.0
      %v1827 = vmax.f32 %v1429, 0.0
      %v1828 = vmax.f32 %v1434, 0.0
      %v1829 = vmax.f32 %v1439, 0.0
      %v1830 = vmax.f32 %v1444, 0.0
      %v1831 = vmax.f32 %v1449, 0.0
      %v1832 = vmax.f32 %v1454, 0.0
      %v1833 = vmax.f32 %v1459, 0.0
      %v1834 = vmax.f32 %v1464, 0.0
      %v1835 = vmax.f32 %v1469, 0.0
      %v1836 = vmax.f32 %v1474, 0.0
      %v1837 = vmax.f32 %v1479, 0.0
      %v1838 = vmax.f32 %v1484, 0.0
      %v1839 = vmax.f32 %v1489, 0.0
      %v1840 = vmax.f32 %v1494, 0.0
      %v1841 = vmax.f32 %v1499, 0.0
      %v1842 = vmax.f32 %v1504, 0.0
      %v1843 = vmax.f32 %v1509, 0.0
      %v1844 = vmax.f32 %v1514, 0.0
      %v1845 = vmax.f32 %v1519, 0.0
      %v1846 = vmax.f32 %v1524, 0.0
      %v1847 = vmax.f32 %v1529, 0.0
      %v1848 = vmax.f32 %v1534, 0.0
      %v1849 = vmax.f32 %v1539, 0.0
      %v1850 = vmax.f32 %v1544, 0.0
      %v1851 = vmax.f32 %v1549, 0.0
      %v1852 = vmax.f32 %v1554, 0.0
      %v1853 = vmax.f32 %v1559, 0.0
      %v1854 = vmax.f32 %v1564, 0.0
      %v1855 = vmax.f32 %v1569, 0.0
      %v1856 = vmax.f32 %v1574, 0.0
      %v1857 = vmax.f32 %v1579, 0.0
      %v1858 = vmax.f32 %v1584, 0.0
      %v1859 = vmax.f32 %v1589, 0.0
      %v1860 = vmax.f32 %v1594, 0.0
      %v1861 = vmax.f32 %v1599, 0.0
      %v1862 = vmax.f32 %v1604, 0.0
      %v1863 = vmax.f32 %v1609, 0.0
      %v1864 = vmax.f32 %v1614, 0.0
      %v1865 = vmax.f32 %v1619, 0.0
      %v1866 = vmax.f32 %v1624, 0.0
      %v1867 = vmax.f32 %v1629, 0.0
      %v1868 = vmax.f32 %v1634, 0.0
      %v1869 = vmax.f32 %v1639, 0.0
      %v1870 = vmax.f32 %v1644, 0.0
      %v1871 = vmax.f32 %v1649, 0.0
      %v1872 = vmax.f32 %v1654, 0.0
      %v1873 = vmax.f32 %v1659, 0.0
      %v1874 = vmax.f32 %v1664, 0.0
      %v1875 = vmax.f32 %v1669, 0.0
      %v1876 = vmax.f32 %v1674, 0.0
      %v1877 = vmax.f32 %v1679, 0.0
      %v1878 = vmax.f32 %v1684, 0.0
      %v1879 = vmax.f32 %v1689, 0.0
      %v1880 = vmax.f32 %v1694, 0.0
      %v1881 = vmax.f32 %v1699, 0.0
      %v1882 = vmax.f32 %v1704, 0.0
      %v1883 = vmax.f32 %v1709, 0.0
      %v1884 = vmax.f32 %v1714, 0.0
      %v1885 = vmax.f32 %v1719, 0.0
      %v1886 = vmax.f32 %v1724, 0.0
      %v1887 = vmax.f32 %v1729, 0.0
      %v1888 = vmax.f32 %v1734, 0.0
      %v1889 = vmax.f32 %v1739, 0.0
      %v1890 = vmax.f32 %v1744, 0.0
      %v1891 = vmax.f32 %v1749, 0.0
      %v1892 = vmax.f32 %v1754, 0.0
      %v1893 = vmax.f32 %v1759, 0.0
      %v1894 = vmax.f32 %v1764, 0.0
      %v1895 = vld [vmem:[#allocation2] sm:$0xff]
      %v1896 = vld [vmem:[#allocation2 + $0x8] sm:$0xff]
      %v1897 = vld [vmem:[#allocation2 + $0x10] sm:$0xff]
      %v1898 = vld [vmem:[#allocation2 + $0x18] sm:$0xff]
      %v1899 = vld [vmem:[#allocation2 + $0x20] sm:$0xff]
      %v1900 = vld [vmem:[#allocation2 + $0x28] sm:$0xff]
      %v1901 = vld [vmem:[#allocation2 + $0x30] sm:$0xff]
      %v1902 = vld [vmem:[#allocation2 + $0x38] sm:$0xff]
      %v1903 = vld [vmem:[#allocation2 + $0x40] sm:$0xff]
      %v1904 = vld [vmem:[#allocation2 + $0x48] sm:$0xff]
      %v1905 = vld [vmem:[#allocation2 + $0x50] sm:$0xff]
      %v1906 = vld [vmem:[#allocation2 + $0x58] sm:$0xff]
      %v1907 = vld [vmem:[#allocation2 + $0x60] sm:$0xff]
      %v1908 = vld [vmem:[#allocation2 + $0x68] sm:$0xff]
      %v1909 = vld [vmem:[#allocation2 + $0x70] sm:$0xff]
      %v1910 = vld [vmem:[#allocation2 + $0x78] sm:$0xff]
      %v1911 = vld [vmem:[#allocation2 + $0x80] sm:$0xff]
      %v1912 = vld [vmem:[#allocation2 + $0x88] sm:$0xff]
      %v1913 = vld [vmem:[#allocation2 + $0x90] sm:$0xff]
      %v1914 = vld [vmem:[#allocation2 + $0x98] sm:$0xff]
      %v1915 = vld [vmem:[#allocation2 + $0xa0] sm:$0xff]
      %v1916 = vld [vmem:[#allocation2 + $0xa8] sm:$0xff]
      %v1917 = vld [vmem:[#allocation2 + $0xb0] sm:$0xff]
      %v1918 = vld [vmem:[#allocation2 + $0xb8] sm:$0xff]
      %v1919 = vld [vmem:[#allocation2 + $0xc0] sm:$0xff]
      %v1920 = vld [vmem:[#allocation2 + $0xc8] sm:$0xff]
      %v1921 = vld [vmem:[#allocation2 + $0xd0] sm:$0xff]
      %v1922 = vld [vmem:[#allocation2 + $0xd8] sm:$0xff]
      %v1923 = vld [vmem:[#allocation2 + $0xe0] sm:$0xff]
      %v1924 = vld [vmem:[#allocation2 + $0xe8] sm:$0xff]
      %v1925 = vld [vmem:[#allocation2 + $0xf0] sm:$0xff]
      %v1926 = vld [vmem:[#allocation2 + $0xf8] sm:$0xff]
      %v1927 = vld [vmem:[#allocation2 + $0x100] sm:$0xff]
      %v1928 = vld [vmem:[#allocation2 + $0x108] sm:$0xff]
      %v1929 = vld [vmem:[#allocation2 + $0x110] sm:$0xff]
      %v1930 = vld [vmem:[#allocation2 + $0x118] sm:$0xff]
      %v1931 = vld [vmem:[#allocation2 + $0x120] sm:$0xff]
      %v1932 = vld [vmem:[#allocation2 + $0x128] sm:$0xff]
      %v1933 = vld [vmem:[#allocation2 + $0x130] sm:$0xff]
      %v1934 = vld [vmem:[#allocation2 + $0x138] sm:$0xff]
      %v1935 = vld [vmem:[#allocation2 + $0x140] sm:$0xff]
      %v1936 = vld [vmem:[#allocation2 + $0x148] sm:$0xff]
      %v1937 = vld [vmem:[#allocation2 + $0x150] sm:$0xff]
      %v1938 = vld [vmem:[#allocation2 + $0x158] sm:$0xff]
      %v1939 = vld [vmem:[#allocation2 + $0x160] sm:$0xff]
      %v1940 = vld [vmem:[#allocation2 + $0x168] sm:$0xff]
      %v1941 = vld [vmem:[#allocation2 + $0x170] sm:$0xff]
      %v1942 = vld [vmem:[#allocation2 + $0x178] sm:$0xff]
      %v1943 = vld [vmem:[#allocation2 + $0x180] sm:$0xff]
      %v1944 = vld [vmem:[#allocation2 + $0x188] sm:$0xff]
      %v1945 = vld [vmem:[#allocation2 + $0x190] sm:$0xff]
      %v1946 = vld [vmem:[#allocation2 + $0x198] sm:$0xff]
      %v1947 = vld [vmem:[#allocation2 + $0x1a0] sm:$0xff]
      %v1948 = vld [vmem:[#allocation2 + $0x1a8] sm:$0xff]
      %v1949 = vld [vmem:[#allocation2 + $0x1b0] sm:$0xff]
      %v1950 = vld [vmem:[#allocation2 + $0x1b8] sm:$0xff]
      %v1951 = vld [vmem:[#allocation2 + $0x1c0] sm:$0xff]
      %v1952 = vld [vmem:[#allocation2 + $0x1c8] sm:$0xff]
      %v1953 = vld [vmem:[#allocation2 + $0x1d0] sm:$0xff]
      %v1954 = vld [vmem:[#allocation2 + $0x1d8] sm:$0xff]
      %v1955 = vld [vmem:[#allocation2 + $0x1e0] sm:$0xff]
      %v1956 = vld [vmem:[#allocation2 + $0x1e8] sm:$0xff]
      %v1957 = vld [vmem:[#allocation2 + $0x1f0] sm:$0xff]
      %v1958 = vld [vmem:[#allocation2 + $0x1f8] sm:$0xff]
      %v1959 = vld [vmem:[#allocation2 + $0x200] sm:$0xff]
      %v1960 = vld [vmem:[#allocation2 + $0x208] sm:$0xff]
      %v1961 = vld [vmem:[#allocation2 + $0x210] sm:$0xff]
      %v1962 = vld [vmem:[#allocation2 + $0x218] sm:$0xff]
      %v1963 = vld [vmem:[#allocation2 + $0x220] sm:$0xff]
      %v1964 = vld [vmem:[#allocation2 + $0x228] sm:$0xff]
      %v1965 = vld [vmem:[#allocation2 + $0x230] sm:$0xff]
      %v1966 = vld [vmem:[#allocation2 + $0x238] sm:$0xff]
      %v1967 = vld [vmem:[#allocation2 + $0x240] sm:$0xff]
      %v1968 = vld [vmem:[#allocation2 + $0x248] sm:$0xff]
      %v1969 = vld [vmem:[#allocation2 + $0x250] sm:$0xff]
      %v1970 = vld [vmem:[#allocation2 + $0x258] sm:$0xff]
      %v1971 = vld [vmem:[#allocation2 + $0x260] sm:$0xff]
      %v1972 = vld [vmem:[#allocation2 + $0x268] sm:$0xff]
      %v1973 = vld [vmem:[#allocation2 + $0x270] sm:$0xff]
      %v1974 = vld [vmem:[#allocation2 + $0x278] sm:$0xff]
      %v1975 = vld [vmem:[#allocation2 + $0x280] sm:$0xff]
      %v1976 = vld [vmem:[#allocation2 + $0x288] sm:$0xff]
      %v1977 = vld [vmem:[#allocation2 + $0x290] sm:$0xff]
      %v1978 = vld [vmem:[#allocation2 + $0x298] sm:$0xff]
      %v1979 = vld [vmem:[#allocation2 + $0x2a0] sm:$0xff]
      %v1980 = vld [vmem:[#allocation2 + $0x2a8] sm:$0xff]
      %v1981 = vld [vmem:[#allocation2 + $0x2b0] sm:$0xff]
      %v1982 = vld [vmem:[#allocation2 + $0x2b8] sm:$0xff]
      %v1983 = vld [vmem:[#allocation2 + $0x2c0] sm:$0xff]
      %v1984 = vld [vmem:[#allocation2 + $0x2c8] sm:$0xff]
      %v1985 = vld [vmem:[#allocation2 + $0x2d0] sm:$0xff]
      %v1986 = vld [vmem:[#allocation2 + $0x2d8] sm:$0xff]
      %v1987 = vld [vmem:[#allocation2 + $0x2e0] sm:$0xff]
      %v1988 = vld [vmem:[#allocation2 + $0x2e8] sm:$0xff]
      %v1989 = vld [vmem:[#allocation2 + $0x2f0] sm:$0xff]
      %v1990 = vld [vmem:[#allocation2 + $0x2f8] sm:$0xff]
      %v1991 = vld [vmem:[#allocation2 + $0x300] sm:$0xff]
      %v1992 = vld [vmem:[#allocation2 + $0x308] sm:$0xff]
      %v1993 = vld [vmem:[#allocation2 + $0x310] sm:$0xff]
      %v1994 = vld [vmem:[#allocation2 + $0x318] sm:$0xff]
      %v1995 = vld [vmem:[#allocation2 + $0x320] sm:$0xff]
      %v1996 = vld [vmem:[#allocation2 + $0x328] sm:$0xff]
      %v1997 = vld [vmem:[#allocation2 + $0x330] sm:$0xff]
      %v1998 = vld [vmem:[#allocation2 + $0x338] sm:$0xff]
      %v1999 = vld [vmem:[#allocation2 + $0x340] sm:$0xff]
      %v2000 = vld [vmem:[#allocation2 + $0x348] sm:$0xff]
      %v2001 = vld [vmem:[#allocation2 + $0x350] sm:$0xff]
      %v2002 = vld [vmem:[#allocation2 + $0x358] sm:$0xff]
      %v2003 = vld [vmem:[#allocation2 + $0x360] sm:$0xff]
      %v2004 = vld [vmem:[#allocation2 + $0x368] sm:$0xff]
      %v2005 = vld [vmem:[#allocation2 + $0x370] sm:$0xff]
      %v2006 = vld [vmem:[#allocation2 + $0x378] sm:$0xff]
      %v2007 = vld [vmem:[#allocation2 + $0x380] sm:$0xff]
      %v2008 = vld [vmem:[#allocation2 + $0x388] sm:$0xff]
      %v2009 = vld [vmem:[#allocation2 + $0x390] sm:$0xff]
      %v2010 = vld [vmem:[#allocation2 + $0x398] sm:$0xff]
      %v2011 = vld [vmem:[#allocation2 + $0x3a0] sm:$0xff]
      %v2012 = vld [vmem:[#allocation2 + $0x3a8] sm:$0xff]
      %v2013 = vld [vmem:[#allocation2 + $0x3b0] sm:$0xff]
      %v2014 = vld [vmem:[#allocation2 + $0x3b8] sm:$0xff]
      %v2015 = vld [vmem:[#allocation2 + $0x3c0] sm:$0xff]
      %v2016 = vld [vmem:[#allocation2 + $0x3c8] sm:$0xff]
      %v2017 = vld [vmem:[#allocation2 + $0x3d0] sm:$0xff]
      %v2018 = vld [vmem:[#allocation2 + $0x3d8] sm:$0xff]
      %v2019 = vld [vmem:[#allocation2 + $0x3e0] sm:$0xff]
      %v2020 = vld [vmem:[#allocation2 + $0x3e8] sm:$0xff]
      %v2021 = vld [vmem:[#allocation2 + $0x3f0] sm:$0xff]
      %v2022 = vld [vmem:[#allocation2 + $0x3f8] sm:$0xff]
      %v2023 = vld [vmem:[%s6] sm:$0xff]
      %v2024 = vld [vmem:[%s6 + $0x8] sm:$0xff]
      %v2025 = vld [vmem:[%s7] sm:$0xff]
      %v2026 = vld [vmem:[%s7 + $0x8] sm:$0xff]
      %vm2027 = vcmask 130048
      %v2029 = vsel %vm2027, %v1767, 0
      %v2032 = vsel %vm2027, %v1768, 0
      %v2035 = vsel %vm2027, %v1769, 0
      %v2038 = vsel %vm2027, %v1770, 0
      %v2041 = vsel %vm2027, %v1771, 0
      %v2044 = vsel %vm2027, %v1772, 0
      %v2047 = vsel %vm2027, %v1773, 0
      %v2050 = vsel %vm2027, %v1774, 0
      %v2053 = vsel %vm2027, %v1775, 0
      %v2056 = vsel %vm2027, %v1776, 0
      %v2059 = vsel %vm2027, %v1777, 0
      %v2062 = vsel %vm2027, %v1778, 0
      %v2065 = vsel %vm2027, %v1779, 0
      %v2068 = vsel %vm2027, %v1780, 0
      %v2071 = vsel %vm2027, %v1781, 0
      %v2074 = vsel %vm2027, %v1782, 0
      %v2077 = vsel %vm2027, %v1783, 0
      %v2080 = vsel %vm2027, %v1784, 0
      %v2083 = vsel %vm2027, %v1785, 0
      %v2086 = vsel %vm2027, %v1786, 0
      %v2089 = vsel %vm2027, %v1787, 0
      %v2092 = vsel %vm2027, %v1788, 0
      %v2095 = vsel %vm2027, %v1789, 0
      %v2098 = vsel %vm2027, %v1790, 0
      %v2101 = vsel %vm2027, %v1791, 0
      %v2104 = vsel %vm2027, %v1792, 0
      %v2107 = vsel %vm2027, %v1793, 0
      %v2110 = vsel %vm2027, %v1794, 0
      %v2113 = vsel %vm2027, %v1795, 0
      %v2116 = vsel %vm2027, %v1796, 0
      %v2119 = vsel %vm2027, %v1797, 0
      %v2122 = vsel %vm2027, %v1798, 0
      %v2125 = vsel %vm2027, %v1799, 0
      %v2128 = vsel %vm2027, %v1800, 0
      %v2131 = vsel %vm2027, %v1801, 0
      %v2134 = vsel %vm2027, %v1802, 0
      %v2137 = vsel %vm2027, %v1803, 0
      %v2140 = vsel %vm2027, %v1804, 0
      %v2143 = vsel %vm2027, %v1805, 0
      %v2146 = vsel %vm2027, %v1806, 0
      %v2149 = vsel %vm2027, %v1807, 0
      %v2152 = vsel %vm2027, %v1808, 0
      %v2155 = vsel %vm2027, %v1809, 0
      %v2158 = vsel %vm2027, %v1810, 0
      %v2161 = vsel %vm2027, %v1811, 0
      %v2164 = vsel %vm2027, %v1812, 0
      %v2167 = vsel %vm2027, %v1813, 0
      %v2170 = vsel %vm2027, %v1814, 0
      %v2173 = vsel %vm2027, %v1815, 0
      %v2176 = vsel %vm2027, %v1816, 0
      %v2179 = vsel %vm2027, %v1817, 0
      %v2182 = vsel %vm2027, %v1818, 0
      %v2185 = vsel %vm2027, %v1819, 0
      %v2188 = vsel %vm2027, %v1820, 0
      %v2191 = vsel %vm2027, %v1821, 0
      %v2194 = vsel %vm2027, %v1822, 0
      %v2197 = vsel %vm2027, %v1823, 0
      %v2200 = vsel %vm2027, %v1824, 0
      %v2203 = vsel %vm2027, %v1825, 0
      %v2206 = vsel %vm2027, %v1826, 0
      %v2209 = vsel %vm2027, %v1827, 0
      %v2212 = vsel %vm2027, %v1828, 0
      %v2215 = vsel %vm2027, %v1829, 0
      %v2218 = vsel %vm2027, %v1830, 0
      %v2221 = vsel %vm2027, %v1831, 0
      %v2224 = vsel %vm2027, %v1832, 0
      %v2227 = vsel %vm2027, %v1833, 0
      %v2230 = vsel %vm2027, %v1834, 0
      %v2233 = vsel %vm2027, %v1835, 0
      %v2236 = vsel %vm2027, %v1836, 0
      %v2239 = vsel %vm2027, %v1837, 0
      %v2242 = vsel %vm2027, %v1838, 0
      %v2245 = vsel %vm2027, %v1839, 0
      %v2248 = vsel %vm2027, %v1840, 0
      %v2251 = vsel %vm2027, %v1841, 0
      %v2254 = vsel %vm2027, %v1842, 0
      %v2257 = vsel %vm2027, %v1843, 0
      %v2260 = vsel %vm2027, %v1844, 0
      %v2263 = vsel %vm2027, %v1845, 0
      %v2266 = vsel %vm2027, %v1846, 0
      %v2269 = vsel %vm2027, %v1847, 0
      %v2272 = vsel %vm2027, %v1848, 0
      %v2275 = vsel %vm2027, %v1849, 0
      %v2278 = vsel %vm2027, %v1850, 0
      %v2281 = vsel %vm2027, %v1851, 0
      %v2284 = vsel %vm2027, %v1852, 0
      %v2287 = vsel %vm2027, %v1853, 0
      %v2290 = vsel %vm2027, %v1854, 0
      %v2293 = vsel %vm2027, %v1855, 0
      %v2296 = vsel %vm2027, %v1856, 0
      %v2299 = vsel %vm2027, %v1857, 0
      %v2302 = vsel %vm2027, %v1858, 0
      %v2305 = vsel %vm2027, %v1859, 0
      %v2308 = vsel %vm2027, %v1860, 0
      %v2311 = vsel %vm2027, %v1861, 0
      %v2314 = vsel %vm2027, %v1862, 0
      %v2317 = vsel %vm2027, %v1863, 0
      %v2320 = vsel %vm2027, %v1864, 0
      %v2323 = vsel %vm2027, %v1865, 0
      %v2326 = vsel %vm2027, %v1866, 0
      %v2329 = vsel %vm2027, %v1867, 0
      %v2332 = vsel %vm2027, %v1868, 0
      %v2335 = vsel %vm2027, %v1869, 0
      %v2338 = vsel %vm2027, %v1870, 0
      %v2341 = vsel %vm2027, %v1871, 0
      %v2344 = vsel %vm2027, %v1872, 0
      %v2347 = vsel %vm2027, %v1873, 0
      %v2350 = vsel %vm2027, %v1874, 0
      %v2353 = vsel %vm2027, %v1875, 0
      %v2356 = vsel %vm2027, %v1876, 0
      %v2359 = vsel %vm2027, %v1877, 0
      %v2362 = vsel %vm2027, %v1878, 0
      %v2365 = vsel %vm2027, %v1879, 0
      %v2368 = vsel %vm2027, %v1880, 0
      %v2371 = vsel %vm2027, %v1881, 0
      %v2374 = vsel %vm2027, %v1882, 0
      %v2377 = vsel %vm2027, %v1883, 0
      %v2380 = vsel %vm2027, %v1884, 0
      %v2383 = vsel %vm2027, %v1885, 0
      %v2386 = vsel %vm2027, %v1886, 0
      %v2389 = vsel %vm2027, %v1887, 0
      %v2392 = vsel %vm2027, %v1888, 0
      %v2395 = vsel %vm2027, %v1889, 0
      %v2398 = vsel %vm2027, %v1890, 0
      %v2401 = vsel %vm2027, %v1891, 0
      %v2404 = vsel %vm2027, %v1892, 0
      %v2407 = vsel %vm2027, %v1893, 0
      %v2410 = vsel %vm2027, %v1894, 0
      %2412 = vmatprep.subr.mxu0 0.0
      %2413 = vmatpush1.msra.mxu0 %v2025
      %2414 = vmatprep.subr.mxu0 0.0
      %2415 = vmatpush1.msra.mxu0 %v2026
      %2416 = vmatprep.subr.mxu0 0.0
      %2417 = vmatpush1.msra.mxu0 0.0
      %2418 = vmatprep.subr.mxu0 0.0
      %2419 = vmatpush1.msra.mxu0 0.0
      %2420 = vmatprep.subr.mxu0 0.0
      %2421 = vmatpush1.msra.mxu0 0.0
      %2422 = vmatprep.subr.mxu0 0.0
      %2423 = vmatpush1.msra.mxu0 0.0
      %2424 = vmatprep.subr.mxu0 0.0
      %2425 = vmatpush1.msra.mxu0 0.0
      %2426 = vmatprep.subr.mxu0 0.0
      %2427 = vmatpush1.msra.mxu0 0.0
      %2428 = vmatprep.subr.mxu0 0.0
      %2429 = vmatpush1.msra.mxu0 0.0
      %2430 = vmatprep.subr.mxu0 0.0
      %2431 = vmatpush1.msra.mxu0 0.0
      %2432 = vmatprep.subr.mxu0 0.0
      %2433 = vmatpush1.msra.mxu0 0.0
      %2434 = vmatprep.subr.mxu0 0.0
      %2435 = vmatpush1.msra.mxu0 0.0
      %2436 = vmatprep.subr.mxu0 0.0
      %2437 = vmatpush1.msra.mxu0 0.0
      %2438 = vmatprep.subr.mxu0 0.0
      %2439 = vmatpush1.msra.mxu0 0.0
      %2440 = vmatprep.subr.mxu0 0.0
      %2441 = vmatpush1.msra.mxu0 0.0
      %2442 = vmatprep.subr.mxu0 0.0
      %2443 = vmatpush1.msra.mxu0 0.0
      %2444 = vmatprep.subr.mxu0 0.0
      %2445 = vmatpush1.msra.mxu0 0.0
      %2446 = vmatprep.subr.mxu0 0.0
      %2447 = vmatpush1.msra.mxu0 0.0
      %2448 = vmatprep.subr.mxu0 0.0
      %2449 = vmatpush1.msra.mxu0 0.0
      %2450 = vmatprep.subr.mxu0 0.0
      %2451 = vmatpush1.msra.mxu0 0.0
      %2452 = vmatprep.subr.mxu0 0.0
      %2453 = vmatpush1.msra.mxu0 0.0
      %2454 = vmatprep.subr.mxu0 0.0
      %2455 = vmatpush1.msra.mxu0 0.0
      %2456 = vmatprep.subr.mxu0 0.0
      %2457 = vmatpush1.msra.mxu0 0.0
      %2458 = vmatprep.subr.mxu0 0.0
      %2459 = vmatpush1.msra.mxu0 0.0
      %2460 = vmatprep.subr.mxu0 0.0
      %2461 = vmatpush1.msra.mxu0 0.0
      %2462 = vmatprep.subr.mxu0 0.0
      %2463 = vmatpush1.msra.mxu0 0.0
      %2464 = vmatprep.subr.mxu0 0.0
      %2465 = vmatpush1.msra.mxu0 0.0
      %2466 = vmatprep.subr.mxu0 0.0
      %2467 = vmatpush1.msra.mxu0 0.0
      %2468 = vmatprep.subr.mxu0 0.0
      %2469 = vmatpush1.msra.mxu0 0.0
      %2470 = vmatprep.subr.mxu0 0.0
      %2471 = vmatpush1.msra.mxu0 0.0
      %2472 = vmatprep.subr.mxu0 0.0
      %2473 = vmatpush1.msra.mxu0 0.0
      %2474 = vmatprep.subr.mxu0 0.0
      %2475 = vmatpush1.msra.mxu0 0.0
      %2476 = vmatprep.mubr.f32.mxu0 0.0
      %2477 = vmatmul.mubr.f32.gmra.mrb[0].mxu0 %v2029
      %v2478 = vpop.f32.mrb[0].mxu0
      %v2479 = vadd.f32 0.0, %v2478
      %v2480 = vpop.f32.mrb[0].mxu0
      %2481 = vmatprep.mubr.f32.mxu0 0.0
      %2482 = vmatmul.mubr.f32.gmra.mrb[0].mxu0 %v2032
      %v2483 = vpop.f32.mrb[0].mxu0
      %v2484 = vadd.f32 0.0, %v2483
      %v2485 = vpop.f32.mrb[0].mxu0
      %2486 = vmatprep.mubr.f32.mxu0 0.0
      %2487 = vmatmul.mubr.f32.gmra.mrb[0].mxu0 %v2035
      %v2488 = vpop.f32.mrb[0].mxu0
      %v2489 = vadd.f32 0.0, %v2488
      %v2490 = vpop.f32.mrb[0].mxu0
      %2491 = vmatprep.mubr.f32.mxu0 0.0
      %2492 = vmatmul.mubr.f32.gmra.mrb[0].mxu0 %v2038
      %v2493 = vpop.f32.mrb[0].mxu0
      %v2494 = vadd.f32 0.0, %v2493
      %v2495 = vpop.f32.mrb[0].mxu0
      %2496 = vmatprep.mubr.f32.mxu0 0.0
      %2497 = vmatmul.mubr.f32.gmra.mrb[0].mxu0 %v2041
      %v2498 = vpop.f32.mrb[0].mxu0
      %v2499 = vadd.f32 0.0, %v2498
      %v2500 = vpop.f32.mrb[0].mxu0
      %2501 = vmatprep.mubr.f32.mxu0 0.0
      %2502 = vmatmul.mubr.f32.gmra.mrb[0].mxu0 %v2044
      %v2503 = vpop.f32.mrb[0].mxu0
      %v2504 = vadd.f32 0.0, %v2503
      %v2505 = vpop.f32.mrb[0].mxu0
      %2506 = vmatprep.mubr.f32.mxu0 0.0
      %2507 = vmatmul.mubr.f32.gmra.mrb[0].mxu0 %v2047
      %v2508 = vpop.f32.mrb[0].mxu0
      %v2509 = vadd.f32 0.0, %v2508
      %v2510 = vpop.f32.mrb[0].mxu0
      %2511 = vmatprep.mubr.f32.mxu0 0.0
      %2512 = vmatmul.mubr.f32.gmra.mrb[0].mxu0 %v2050
      %v2513 = vpop.f32.mrb[0].mxu0
      %v2514 = vadd.f32 0.0, %v2513
      %v2515 = vpop.f32.mrb[0].mxu0
      %2516 = vmatprep.mubr.f32.mxu0 0.0
      %2517 = vmatmul.mubr.f32.gmra.mrb[0].mxu0 %v2053
      %v2518 = vpop.f32.mrb[0].mxu0
      %v2519 = vadd.f32 0.0, %v2518
      %v2520 = vpop.f32.mrb[0].mxu0
      %2521 = vmatprep.mubr.f32.mxu0 0.0
      %2522 = vmatmul.mubr.f32.gmra.mrb[0].mxu0 %v2056
      %v2523 = vpop.f32.mrb[0].mxu0
      %v2524 = vadd.f32 0.0, %v2523
      %v2525 = vpop.f32.mrb[0].mxu0
      %2526 = vmatprep.mubr.f32.mxu0 0.0
      %2527 = vmatmul.mubr.f32.gmra.mrb[0].mxu0 %v2059
      %v2528 = vpop.f32.mrb[0].mxu0
      %v2529 = vadd.f32 0.0, %v2528
      %v2530 = vpop.f32.mrb[0].mxu0
      %2531 = vmatprep.mubr.f32.mxu0 0.0
      %2532 = vmatmul.mubr.f32.gmra.mrb[0].mxu0 %v2062
      %v2533 = vpop.f32.mrb[0].mxu0
      %v2534 = vadd.f32 0.0, %v2533
      %v2535 = vpop.f32.mrb[0].mxu0
      %2536 = vmatprep.mubr.f32.mxu0 0.0
      %2537 = vmatmul.mubr.f32.gmra.mrb[0].mxu0 %v2065
      %v2538 = vpop.f32.mrb[0].mxu0
      %v2539 = vadd.f32 0.0, %v2538
      %v2540 = vpop.f32.mrb[0].mxu0
      %2541 = vmatprep.mubr.f32.mxu0 0.0
      %2542 = vmatmul.mubr.f32.gmra.mrb[0].mxu0 %v2068
      %v2543 = vpop.f32.mrb[0].mxu0
      %v2544 = vadd.f32 0.0, %v2543
      %v2545 = vpop.f32.mrb[0].mxu0
      %2546 = vmatprep.mubr.f32.mxu0 0.0
      %2547 = vmatmul.mubr.f32.gmra.mrb[0].mxu0 %v2071
      %v2548 = vpop.f32.mrb[0].mxu0
      %v2549 = vadd.f32 0.0, %v2548
      %v2550 = vpop.f32.mrb[0].mxu0
      %2551 = vmatprep.mubr.f32.mxu0 0.0
      %2552 = vmatmul.mubr.f32.gmra.mrb[0].mxu0 %v2074
      %v2553 = vpop.f32.mrb[0].mxu0
      %v2554 = vadd.f32 0.0, %v2553
      %v2555 = vpop.f32.mrb[0].mxu0
      %2556 = vmatprep.mubr.f32.mxu0 0.0
      %2557 = vmatmul.mubr.f32.gmra.mrb[0].mxu0 %v2077
      %v2558 = vpop.f32.mrb[0].mxu0
      %v2559 = vadd.f32 0.0, %v2558
      %v2560 = vpop.f32.mrb[0].mxu0
      %2561 = vmatprep.mubr.f32.mxu0 0.0
      %2562 = vmatmul.mubr.f32.gmra.mrb[0].mxu0 %v2080
      %v2563 = vpop.f32.mrb[0].mxu0
      %v2564 = vadd.f32 0.0, %v2563
      %v2565 = vpop.f32.mrb[0].mxu0
      %2566 = vmatprep.mubr.f32.mxu0 0.0
      %2567 = vmatmul.mubr.f32.gmra.mrb[0].mxu0 %v2083
      %v2568 = vpop.f32.mrb[0].mxu0
      %v2569 = vadd.f32 0.0, %v2568
      %v2570 = vpop.f32.mrb[0].mxu0
      %2571 = vmatprep.mubr.f32.mxu0 0.0
      %2572 = vmatmul.mubr.f32.gmra.mrb[0].mxu0 %v2086
      %v2573 = vpop.f32.mrb[0].mxu0
      %v2574 = vadd.f32 0.0, %v2573
      %v2575 = vpop.f32.mrb[0].mxu0
      %2576 = vmatprep.mubr.f32.mxu0 0.0
      %2577 = vmatmul.mubr.f32.gmra.mrb[0].mxu0 %v2089
      %v2578 = vpop.f32.mrb[0].mxu0
      %v2579 = vadd.f32 0.0, %v2578
      %v2580 = vpop.f32.mrb[0].mxu0
      %2581 = vmatprep.mubr.f32.mxu0 0.0
      %2582 = vmatmul.mubr.f32.gmra.mrb[0].mxu0 %v2092
      %v2583 = vpop.f32.mrb[0].mxu0
      %v2584 = vadd.f32 0.0, %v2583
      %v2585 = vpop.f32.mrb[0].mxu0
      %2586 = vmatprep.mubr.f32.mxu0 0.0
      %2587 = vmatmul.mubr.f32.gmra.mrb[0].mxu0 %v2095
      %v2588 = vpop.f32.mrb[0].mxu0
      %v2589 = vadd.f32 0.0, %v2588
      %v2590 = vpop.f32.mrb[0].mxu0
      %2591 = vmatprep.mubr.f32.mxu0 0.0
      %2592 = vmatmul.mubr.f32.gmra.mrb[0].mxu0 %v2098
      %v2593 = vpop.f32.mrb[0].mxu0
      %v2594 = vadd.f32 0.0, %v2593
      %v2595 = vpop.f32.mrb[0].mxu0
      %2596 = vmatprep.mubr.f32.mxu0 0.0
      %2597 = vmatmul.mubr.f32.gmra.mrb[0].mxu0 %v2101
      %v2598 = vpop.f32.mrb[0].mxu0
      %v2599 = vadd.f32 0.0, %v2598
      %v2600 = vpop.f32.mrb[0].mxu0
      %2601 = vmatprep.mubr.f32.mxu0 0.0
      %2602 = vmatmul.mubr.f32.gmra.mrb[0].mxu0 %v2104
      %v2603 = vpop.f32.mrb[0].mxu0
      %v2604 = vadd.f32 0.0, %v2603
      %v2605 = vpop.f32.mrb[0].mxu0
      %2606 = vmatprep.mubr.f32.mxu0 0.0
      %2607 = vmatmul.mubr.f32.gmra.mrb[0].mxu0 %v2107
      %v2608 = vpop.f32.mrb[0].mxu0
      %v2609 = vadd.f32 0.0, %v2608
      %v2610 = vpop.f32.mrb[0].mxu0
      %2611 = vmatprep.mubr.f32.mxu0 0.0
      %2612 = vmatmul.mubr.f32.gmra.mrb[0].mxu0 %v2110
      %v2613 = vpop.f32.mrb[0].mxu0
      %v2614 = vadd.f32 0.0, %v2613
      %v2615 = vpop.f32.mrb[0].mxu0
      %2616 = vmatprep.mubr.f32.mxu0 0.0
      %2617 = vmatmul.mubr.f32.gmra.mrb[0].mxu0 %v2113
      %v2618 = vpop.f32.mrb[0].mxu0
      %v2619 = vadd.f32 0.0, %v2618
      %v2620 = vpop.f32.mrb[0].mxu0
      %2621 = vmatprep.mubr.f32.mxu0 0.0
      %2622 = vmatmul.mubr.f32.gmra.mrb[0].mxu0 %v2116
      %v2623 = vpop.f32.mrb[0].mxu0
      %v2624 = vadd.f32 0.0, %v2623
      %v2625 = vpop.f32.mrb[0].mxu0
      %2626 = vmatprep.mubr.f32.mxu0 0.0
      %2627 = vmatmul.mubr.f32.gmra.mrb[0].mxu0 %v2119
      %v2628 = vpop.f32.mrb[0].mxu0
      %v2629 = vadd.f32 0.0, %v2628
      %v2630 = vpop.f32.mrb[0].mxu0
      %2631 = vmatprep.mubr.f32.mxu0 0.0
      %2632 = vmatmul.mubr.f32.gmra.mrb[0].mxu0 %v2122
      %v2633 = vpop.f32.mrb[0].mxu0
      %v2634 = vadd.f32 0.0, %v2633
      %v2635 = vpop.f32.mrb[0].mxu0
      %2636 = vmatprep.mubr.f32.mxu0 0.0
      %2637 = vmatmul.mubr.f32.gmra.mrb[0].mxu0 %v2125
      %v2638 = vpop.f32.mrb[0].mxu0
      %v2639 = vadd.f32 0.0, %v2638
      %v2640 = vpop.f32.mrb[0].mxu0
      %2641 = vmatprep.mubr.f32.mxu0 0.0
      %2642 = vmatmul.mubr.f32.gmra.mrb[0].mxu0 %v2128
      %v2643 = vpop.f32.mrb[0].mxu0
      %v2644 = vadd.f32 0.0, %v2643
      %v2645 = vpop.f32.mrb[0].mxu0
      %2646 = vmatprep.mubr.f32.mxu0 0.0
      %2647 = vmatmul.mubr.f32.gmra.mrb[0].mxu0 %v2131
      %v2648 = vpop.f32.mrb[0].mxu0
      %v2649 = vadd.f32 0.0, %v2648
      %v2650 = vpop.f32.mrb[0].mxu0
      %2651 = vmatprep.mubr.f32.mxu0 0.0
      %2652 = vmatmul.mubr.f32.gmra.mrb[0].mxu0 %v2134
      %v2653 = vpop.f32.mrb[0].mxu0
      %v2654 = vadd.f32 0.0, %v2653
      %v2655 = vpop.f32.mrb[0].mxu0
      %2656 = vmatprep.mubr.f32.mxu0 0.0
      %2657 = vmatmul.mubr.f32.gmra.mrb[0].mxu0 %v2137
      %v2658 = vpop.f32.mrb[0].mxu0
      %v2659 = vadd.f32 0.0, %v2658
      %v2660 = vpop.f32.mrb[0].mxu0
      %2661 = vmatprep.mubr.f32.mxu0 0.0
      %2662 = vmatmul.mubr.f32.gmra.mrb[0].mxu0 %v2140
      %v2663 = vpop.f32.mrb[0].mxu0
      %v2664 = vadd.f32 0.0, %v2663
      %v2665 = vpop.f32.mrb[0].mxu0
      %2666 = vmatprep.mubr.f32.mxu0 0.0
      %2667 = vmatmul.mubr.f32.gmra.mrb[0].mxu0 %v2143
      %v2668 = vpop.f32.mrb[0].mxu0
      %v2669 = vadd.f32 0.0, %v2668
      %v2670 = vpop.f32.mrb[0].mxu0
      %2671 = vmatprep.mubr.f32.mxu0 0.0
      %2672 = vmatmul.mubr.f32.gmra.mrb[0].mxu0 %v2146
      %v2673 = vpop.f32.mrb[0].mxu0
      %v2674 = vadd.f32 0.0, %v2673
      %v2675 = vpop.f32.mrb[0].mxu0
      %2676 = vmatprep.mubr.f32.mxu0 0.0
      %2677 = vmatmul.mubr.f32.gmra.mrb[0].mxu0 %v2149
      %v2678 = vpop.f32.mrb[0].mxu0
      %v2679 = vadd.f32 0.0, %v2678
      %v2680 = vpop.f32.mrb[0].mxu0
      %2681 = vmatprep.mubr.f32.mxu0 0.0
      %2682 = vmatmul.mubr.f32.gmra.mrb[0].mxu0 %v2152
      %v2683 = vpop.f32.mrb[0].mxu0
      %v2684 = vadd.f32 0.0, %v2683
      %v2685 = vpop.f32.mrb[0].mxu0
      %2686 = vmatprep.mubr.f32.mxu0 0.0
      %2687 = vmatmul.mubr.f32.gmra.mrb[0].mxu0 %v2155
      %v2688 = vpop.f32.mrb[0].mxu0
      %v2689 = vadd.f32 0.0, %v2688
      %v2690 = vpop.f32.mrb[0].mxu0
      %2691 = vmatprep.mubr.f32.mxu0 0.0
      %2692 = vmatmul.mubr.f32.gmra.mrb[0].mxu0 %v2158
      %v2693 = vpop.f32.mrb[0].mxu0
      %v2694 = vadd.f32 0.0, %v2693
      %v2695 = vpop.f32.mrb[0].mxu0
      %2696 = vmatprep.mubr.f32.mxu0 0.0
      %2697 = vmatmul.mubr.f32.gmra.mrb[0].mxu0 %v2161
      %v2698 = vpop.f32.mrb[0].mxu0
      %v2699 = vadd.f32 0.0, %v2698
      %v2700 = vpop.f32.mrb[0].mxu0
      %2701 = vmatprep.mubr.f32.mxu0 0.0
      %2702 = vmatmul.mubr.f32.gmra.mrb[0].mxu0 %v2164
      %v2703 = vpop.f32.mrb[0].mxu0
      %v2704 = vadd.f32 0.0, %v2703
      %v2705 = vpop.f32.mrb[0].mxu0
      %2706 = vmatprep.mubr.f32.mxu0 0.0
      %2707 = vmatmul.mubr.f32.gmra.mrb[0].mxu0 %v2167
      %v2708 = vpop.f32.mrb[0].mxu0
      %v2709 = vadd.f32 0.0, %v2708
      %v2710 = vpop.f32.mrb[0].mxu0
      %2711 = vmatprep.mubr.f32.mxu0 0.0
      %2712 = vmatmul.mubr.f32.gmra.mrb[0].mxu0 %v2170
      %v2713 = vpop.f32.mrb[0].mxu0
      %v2714 = vadd.f32 0.0, %v2713
      %v2715 = vpop.f32.mrb[0].mxu0
      %2716 = vmatprep.mubr.f32.mxu0 0.0
      %2717 = vmatmul.mubr.f32.gmra.mrb[0].mxu0 %v2173
      %v2718 = vpop.f32.mrb[0].mxu0
      %v2719 = vadd.f32 0.0, %v2718
      %v2720 = vpop.f32.mrb[0].mxu0
      %2721 = vmatprep.mubr.f32.mxu0 0.0
      %2722 = vmatmul.mubr.f32.gmra.mrb[0].mxu0 %v2176
      %v2723 = vpop.f32.mrb[0].mxu0
      %v2724 = vadd.f32 0.0, %v2723
      %v2725 = vpop.f32.mrb[0].mxu0
      %2726 = vmatprep.mubr.f32.mxu0 0.0
      %2727 = vmatmul.mubr.f32.gmra.mrb[0].mxu0 %v2179
      %v2728 = vpop.f32.mrb[0].mxu0
      %v2729 = vadd.f32 0.0, %v2728
      %v2730 = vpop.f32.mrb[0].mxu0
      %2731 = vmatprep.mubr.f32.mxu0 0.0
      %2732 = vmatmul.mubr.f32.gmra.mrb[0].mxu0 %v2182
      %v2733 = vpop.f32.mrb[0].mxu0
      %v2734 = vadd.f32 0.0, %v2733
      %v2735 = vpop.f32.mrb[0].mxu0
      %2736 = vmatprep.mubr.f32.mxu0 0.0
      %2737 = vmatmul.mubr.f32.gmra.mrb[0].mxu0 %v2185
      %v2738 = vpop.f32.mrb[0].mxu0
      %v2739 = vadd.f32 0.0, %v2738
      %v2740 = vpop.f32.mrb[0].mxu0
      %2741 = vmatprep.mubr.f32.mxu0 0.0
      %2742 = vmatmul.mubr.f32.gmra.mrb[0].mxu0 %v2188
      %v2743 = vpop.f32.mrb[0].mxu0
      %v2744 = vadd.f32 0.0, %v2743
      %v2745 = vpop.f32.mrb[0].mxu0
      %2746 = vmatprep.mubr.f32.mxu0 0.0
      %2747 = vmatmul.mubr.f32.gmra.mrb[0].mxu0 %v2191
      %v2748 = vpop.f32.mrb[0].mxu0
      %v2749 = vadd.f32 0.0, %v2748
      %v2750 = vpop.f32.mrb[0].mxu0
      %2751 = vmatprep.mubr.f32.mxu0 0.0
      %2752 = vmatmul.mubr.f32.gmra.mrb[0].mxu0 %v2194
      %v2753 = vpop.f32.mrb[0].mxu0
      %v2754 = vadd.f32 0.0, %v2753
      %v2755 = vpop.f32.mrb[0].mxu0
      %2756 = vmatprep.mubr.f32.mxu0 0.0
      %2757 = vmatmul.mubr.f32.gmra.mrb[0].mxu0 %v2197
      %v2758 = vpop.f32.mrb[0].mxu0
      %v2759 = vadd.f32 0.0, %v2758
      %v2760 = vpop.f32.mrb[0].mxu0
      %2761 = vmatprep.mubr.f32.mxu0 0.0
      %2762 = vmatmul.mubr.f32.gmra.mrb[0].mxu0 %v2200
      %v2763 = vpop.f32.mrb[0].mxu0
      %v2764 = vadd.f32 0.0, %v2763
      %v2765 = vpop.f32.mrb[0].mxu0
      %2766 = vmatprep.mubr.f32.mxu0 0.0
      %2767 = vmatmul.mubr.f32.gmra.mrb[0].mxu0 %v2203
      %v2768 = vpop.f32.mrb[0].mxu0
      %v2769 = vadd.f32 0.0, %v2768
      %v2770 = vpop.f32.mrb[0].mxu0
      %2771 = vmatprep.mubr.f32.mxu0 0.0
      %2772 = vmatmul.mubr.f32.gmra.mrb[0].mxu0 %v2206
      %v2773 = vpop.f32.mrb[0].mxu0
      %v2774 = vadd.f32 0.0, %v2773
      %v2775 = vpop.f32.mrb[0].mxu0
      %2776 = vmatprep.mubr.f32.mxu0 0.0
      %2777 = vmatmul.mubr.f32.gmra.mrb[0].mxu0 %v2209
      %v2778 = vpop.f32.mrb[0].mxu0
      %v2779 = vadd.f32 0.0, %v2778
      %v2780 = vpop.f32.mrb[0].mxu0
      %2781 = vmatprep.mubr.f32.mxu0 0.0
      %2782 = vmatmul.mubr.f32.gmra.mrb[0].mxu0 %v2212
      %v2783 = vpop.f32.mrb[0].mxu0
      %v2784 = vadd.f32 0.0, %v2783
      %v2785 = vpop.f32.mrb[0].mxu0
      %2786 = vmatprep.mubr.f32.mxu0 0.0
      %2787 = vmatmul.mubr.f32.gmra.mrb[0].mxu0 %v2215
      %v2788 = vpop.f32.mrb[0].mxu0
      %v2789 = vadd.f32 0.0, %v2788
      %v2790 = vpop.f32.mrb[0].mxu0
      %2791 = vmatprep.mubr.f32.mxu0 0.0
      %2792 = vmatmul.mubr.f32.gmra.mrb[0].mxu0 %v2218
      %v2793 = vpop.f32.mrb[0].mxu0
      %v2794 = vadd.f32 0.0, %v2793
      %v2795 = vpop.f32.mrb[0].mxu0
      %2796 = vmatprep.mubr.f32.mxu0 0.0
      %2797 = vmatmul.mubr.f32.gmra.mrb[0].mxu0 %v2221
      %v2798 = vpop.f32.mrb[0].mxu0
      %v2799 = vadd.f32 0.0, %v2798
      %v2800 = vpop.f32.mrb[0].mxu0
      %2801 = vmatprep.mubr.f32.mxu0 0.0
      %2802 = vmatmul.mubr.f32.gmra.mrb[0].mxu0 %v2224
      %v2803 = vpop.f32.mrb[0].mxu0
      %v2804 = vadd.f32 0.0, %v2803
      %v2805 = vpop.f32.mrb[0].mxu0
      %2806 = vmatprep.mubr.f32.mxu0 0.0
      %2807 = vmatmul.mubr.f32.gmra.mrb[0].mxu0 %v2227
      %v2808 = vpop.f32.mrb[0].mxu0
      %v2809 = vadd.f32 0.0, %v2808
      %v2810 = vpop.f32.mrb[0].mxu0
      %2811 = vmatprep.mubr.f32.mxu0 0.0
      %2812 = vmatmul.mubr.f32.gmra.mrb[0].mxu0 %v2230
      %v2813 = vpop.f32.mrb[0].mxu0
      %v2814 = vadd.f32 0.0, %v2813
      %v2815 = vpop.f32.mrb[0].mxu0
      %2816 = vmatprep.mubr.f32.mxu0 0.0
      %2817 = vmatmul.mubr.f32.gmra.mrb[0].mxu0 %v2233
      %v2818 = vpop.f32.mrb[0].mxu0
      %v2819 = vadd.f32 0.0, %v2818
      %v2820 = vpop.f32.mrb[0].mxu0
      %2821 = vmatprep.mubr.f32.mxu0 0.0
      %2822 = vmatmul.mubr.f32.gmra.mrb[0].mxu0 %v2236
      %v2823 = vpop.f32.mrb[0].mxu0
      %v2824 = vadd.f32 0.0, %v2823
      %v2825 = vpop.f32.mrb[0].mxu0
      %2826 = vmatprep.mubr.f32.mxu0 0.0
      %2827 = vmatmul.mubr.f32.gmra.mrb[0].mxu0 %v2239
      %v2828 = vpop.f32.mrb[0].mxu0
      %v2829 = vadd.f32 0.0, %v2828
      %v2830 = vpop.f32.mrb[0].mxu0
      %2831 = vmatprep.mubr.f32.mxu0 0.0
      %2832 = vmatmul.mubr.f32.gmra.mrb[0].mxu0 %v2242
      %v2833 = vpop.f32.mrb[0].mxu0
      %v2834 = vadd.f32 0.0, %v2833
      %v2835 = vpop.f32.mrb[0].mxu0
      %2836 = vmatprep.mubr.f32.mxu0 0.0
      %2837 = vmatmul.mubr.f32.gmra.mrb[0].mxu0 %v2245
      %v2838 = vpop.f32.mrb[0].mxu0
      %v2839 = vadd.f32 0.0, %v2838
      %v2840 = vpop.f32.mrb[0].mxu0
      %2841 = vmatprep.mubr.f32.mxu0 0.0
      %2842 = vmatmul.mubr.f32.gmra.mrb[0].mxu0 %v2248
      %v2843 = vpop.f32.mrb[0].mxu0
      %v2844 = vadd.f32 0.0, %v2843
      %v2845 = vpop.f32.mrb[0].mxu0
      %2846 = vmatprep.mubr.f32.mxu0 0.0
      %2847 = vmatmul.mubr.f32.gmra.mrb[0].mxu0 %v2251
      %v2848 = vpop.f32.mrb[0].mxu0
      %v2849 = vadd.f32 0.0, %v2848
      %v2850 = vpop.f32.mrb[0].mxu0
      %2851 = vmatprep.mubr.f32.mxu0 0.0
      %2852 = vmatmul.mubr.f32.gmra.mrb[0].mxu0 %v2254
      %v2853 = vpop.f32.mrb[0].mxu0
      %v2854 = vadd.f32 0.0, %v2853
      %v2855 = vpop.f32.mrb[0].mxu0
      %2856 = vmatprep.mubr.f32.mxu0 0.0
      %2857 = vmatmul.mubr.f32.gmra.mrb[0].mxu0 %v2257
      %v2858 = vpop.f32.mrb[0].mxu0
      %v2859 = vadd.f32 0.0, %v2858
      %v2860 = vpop.f32.mrb[0].mxu0
      %2861 = vmatprep.mubr.f32.mxu0 0.0
      %2862 = vmatmul.mubr.f32.gmra.mrb[0].mxu0 %v2260
      %v2863 = vpop.f32.mrb[0].mxu0
      %v2864 = vadd.f32 0.0, %v2863
      %v2865 = vpop.f32.mrb[0].mxu0
      %2866 = vmatprep.mubr.f32.mxu0 0.0
      %2867 = vmatmul.mubr.f32.gmra.mrb[0].mxu0 %v2263
      %v2868 = vpop.f32.mrb[0].mxu0
      %v2869 = vadd.f32 0.0, %v2868
      %v2870 = vpop.f32.mrb[0].mxu0
      %2871 = vmatprep.mubr.f32.mxu0 0.0
      %2872 = vmatmul.mubr.f32.gmra.mrb[0].mxu0 %v2266
      %v2873 = vpop.f32.mrb[0].mxu0
      %v2874 = vadd.f32 0.0, %v2873
      %v2875 = vpop.f32.mrb[0].mxu0
      %2876 = vmatprep.mubr.f32.mxu0 0.0
      %2877 = vmatmul.mubr.f32.gmra.mrb[0].mxu0 %v2269
      %v2878 = vpop.f32.mrb[0].mxu0
      %v2879 = vadd.f32 0.0, %v2878
      %v2880 = vpop.f32.mrb[0].mxu0
      %2881 = vmatprep.mubr.f32.mxu0 0.0
      %2882 = vmatmul.mubr.f32.gmra.mrb[0].mxu0 %v2272
      %v2883 = vpop.f32.mrb[0].mxu0
      %v2884 = vadd.f32 0.0, %v2883
      %v2885 = vpop.f32.mrb[0].mxu0
      %2886 = vmatprep.mubr.f32.mxu0 0.0
      %2887 = vmatmul.mubr.f32.gmra.mrb[0].mxu0 %v2275
      %v2888 = vpop.f32.mrb[0].mxu0
      %v2889 = vadd.f32 0.0, %v2888
      %v2890 = vpop.f32.mrb[0].mxu0
      %2891 = vmatprep.mubr.f32.mxu0 0.0
      %2892 = vmatmul.mubr.f32.gmra.mrb[0].mxu0 %v2278
      %v2893 = vpop.f32.mrb[0].mxu0
      %v2894 = vadd.f32 0.0, %v2893
      %v2895 = vpop.f32.mrb[0].mxu0
      %2896 = vmatprep.mubr.f32.mxu0 0.0
      %2897 = vmatmul.mubr.f32.gmra.mrb[0].mxu0 %v2281
      %v2898 = vpop.f32.mrb[0].mxu0
      %v2899 = vadd.f32 0.0, %v2898
      %v2900 = vpop.f32.mrb[0].mxu0
      %2901 = vmatprep.mubr.f32.mxu0 0.0
      %2902 = vmatmul.mubr.f32.gmra.mrb[0].mxu0 %v2284
      %v2903 = vpop.f32.mrb[0].mxu0
      %v2904 = vadd.f32 0.0, %v2903
      %v2905 = vpop.f32.mrb[0].mxu0
      %2906 = vmatprep.mubr.f32.mxu0 0.0
      %2907 = vmatmul.mubr.f32.gmra.mrb[0].mxu0 %v2287
      %v2908 = vpop.f32.mrb[0].mxu0
      %v2909 = vadd.f32 0.0, %v2908
      %v2910 = vpop.f32.mrb[0].mxu0
      %2911 = vmatprep.mubr.f32.mxu0 0.0
      %2912 = vmatmul.mubr.f32.gmra.mrb[0].mxu0 %v2290
      %v2913 = vpop.f32.mrb[0].mxu0
      %v2914 = vadd.f32 0.0, %v2913
      %v2915 = vpop.f32.mrb[0].mxu0
      %2916 = vmatprep.mubr.f32.mxu0 0.0
      %2917 = vmatmul.mubr.f32.gmra.mrb[0].mxu0 %v2293
      %v2918 = vpop.f32.mrb[0].mxu0
      %v2919 = vadd.f32 0.0, %v2918
      %v2920 = vpop.f32.mrb[0].mxu0
      %2921 = vmatprep.mubr.f32.mxu0 0.0
      %2922 = vmatmul.mubr.f32.gmra.mrb[0].mxu0 %v2296
      %v2923 = vpop.f32.mrb[0].mxu0
      %v2924 = vadd.f32 0.0, %v2923
      %v2925 = vpop.f32.mrb[0].mxu0
      %2926 = vmatprep.mubr.f32.mxu0 0.0
      %2927 = vmatmul.mubr.f32.gmra.mrb[0].mxu0 %v2299
      %v2928 = vpop.f32.mrb[0].mxu0
      %v2929 = vadd.f32 0.0, %v2928
      %v2930 = vpop.f32.mrb[0].mxu0
      %2931 = vmatprep.mubr.f32.mxu0 0.0
      %2932 = vmatmul.mubr.f32.gmra.mrb[0].mxu0 %v2302
      %v2933 = vpop.f32.mrb[0].mxu0
      %v2934 = vadd.f32 0.0, %v2933
      %v2935 = vpop.f32.mrb[0].mxu0
      %2936 = vmatprep.mubr.f32.mxu0 0.0
      %2937 = vmatmul.mubr.f32.gmra.mrb[0].mxu0 %v2305
      %v2938 = vpop.f32.mrb[0].mxu0
      %v2939 = vadd.f32 0.0, %v2938
      %v2940 = vpop.f32.mrb[0].mxu0
      %2941 = vmatprep.mubr.f32.mxu0 0.0
      %2942 = vmatmul.mubr.f32.gmra.mrb[0].mxu0 %v2308
      %v2943 = vpop.f32.mrb[0].mxu0
      %v2944 = vadd.f32 0.0, %v2943
      %v2945 = vpop.f32.mrb[0].mxu0
      %2946 = vmatprep.mubr.f32.mxu0 0.0
      %2947 = vmatmul.mubr.f32.gmra.mrb[0].mxu0 %v2311
      %v2948 = vpop.f32.mrb[0].mxu0
      %v2949 = vadd.f32 0.0, %v2948
      %v2950 = vpop.f32.mrb[0].mxu0
      %2951 = vmatprep.mubr.f32.mxu0 0.0
      %2952 = vmatmul.mubr.f32.gmra.mrb[0].mxu0 %v2314
      %v2953 = vpop.f32.mrb[0].mxu0
      %v2954 = vadd.f32 0.0, %v2953
      %v2955 = vpop.f32.mrb[0].mxu0
      %2956 = vmatprep.mubr.f32.mxu0 0.0
      %2957 = vmatmul.mubr.f32.gmra.mrb[0].mxu0 %v2317
      %v2958 = vpop.f32.mrb[0].mxu0
      %v2959 = vadd.f32 0.0, %v2958
      %v2960 = vpop.f32.mrb[0].mxu0
      %2961 = vmatprep.mubr.f32.mxu0 0.0
      %2962 = vmatmul.mubr.f32.gmra.mrb[0].mxu0 %v2320
      %v2963 = vpop.f32.mrb[0].mxu0
      %v2964 = vadd.f32 0.0, %v2963
      %v2965 = vpop.f32.mrb[0].mxu0
      %2966 = vmatprep.mubr.f32.mxu0 0.0
      %2967 = vmatmul.mubr.f32.gmra.mrb[0].mxu0 %v2323
      %v2968 = vpop.f32.mrb[0].mxu0
      %v2969 = vadd.f32 0.0, %v2968
      %v2970 = vpop.f32.mrb[0].mxu0
      %2971 = vmatprep.mubr.f32.mxu0 0.0
      %2972 = vmatmul.mubr.f32.gmra.mrb[0].mxu0 %v2326
      %v2973 = vpop.f32.mrb[0].mxu0
      %v2974 = vadd.f32 0.0, %v2973
      %v2975 = vpop.f32.mrb[0].mxu0
      %2976 = vmatprep.mubr.f32.mxu0 0.0
      %2977 = vmatmul.mubr.f32.gmra.mrb[0].mxu0 %v2329
      %v2978 = vpop.f32.mrb[0].mxu0
      %v2979 = vadd.f32 0.0, %v2978
      %v2980 = vpop.f32.mrb[0].mxu0
      %2981 = vmatprep.mubr.f32.mxu0 0.0
      %2982 = vmatmul.mubr.f32.gmra.mrb[0].mxu0 %v2332
      %v2983 = vpop.f32.mrb[0].mxu0
      %v2984 = vadd.f32 0.0, %v2983
      %v2985 = vpop.f32.mrb[0].mxu0
      %2986 = vmatprep.mubr.f32.mxu0 0.0
      %2987 = vmatmul.mubr.f32.gmra.mrb[0].mxu0 %v2335
      %v2988 = vpop.f32.mrb[0].mxu0
      %v2989 = vadd.f32 0.0, %v2988
      %v2990 = vpop.f32.mrb[0].mxu0
      %2991 = vmatprep.mubr.f32.mxu0 0.0
      %2992 = vmatmul.mubr.f32.gmra.mrb[0].mxu0 %v2338
      %v2993 = vpop.f32.mrb[0].mxu0
      %v2994 = vadd.f32 0.0, %v2993
      %v2995 = vpop.f32.mrb[0].mxu0
      %2996 = vmatprep.mubr.f32.mxu0 0.0
      %2997 = vmatmul.mubr.f32.gmra.mrb[0].mxu0 %v2341
      %v2998 = vpop.f32.mrb[0].mxu0
      %v2999 = vadd.f32 0.0, %v2998
      %v3000 = vpop.f32.mrb[0].mxu0
      %3001 = vmatprep.mubr.f32.mxu0 0.0
      %3002 = vmatmul.mubr.f32.gmra.mrb[0].mxu0 %v2344
      %v3003 = vpop.f32.mrb[0].mxu0
      %v3004 = vadd.f32 0.0, %v3003
      %v3005 = vpop.f32.mrb[0].mxu0
      %3006 = vmatprep.mubr.f32.mxu0 0.0
      %3007 = vmatmul.mubr.f32.gmra.mrb[0].mxu0 %v2347
      %v3008 = vpop.f32.mrb[0].mxu0
      %v3009 = vadd.f32 0.0, %v3008
      %v3010 = vpop.f32.mrb[0].mxu0
      %3011 = vmatprep.mubr.f32.mxu0 0.0
      %3012 = vmatmul.mubr.f32.gmra.mrb[0].mxu0 %v2350
      %v3013 = vpop.f32.mrb[0].mxu0
      %v3014 = vadd.f32 0.0, %v3013
      %v3015 = vpop.f32.mrb[0].mxu0
      %3016 = vmatprep.mubr.f32.mxu0 0.0
      %3017 = vmatmul.mubr.f32.gmra.mrb[0].mxu0 %v2353
      %v3018 = vpop.f32.mrb[0].mxu0
      %v3019 = vadd.f32 0.0, %v3018
      %v3020 = vpop.f32.mrb[0].mxu0
      %3021 = vmatprep.mubr.f32.mxu0 0.0
      %3022 = vmatmul.mubr.f32.gmra.mrb[0].mxu0 %v2356
      %v3023 = vpop.f32.mrb[0].mxu0
      %v3024 = vadd.f32 0.0, %v3023
      %v3025 = vpop.f32.mrb[0].mxu0
      %3026 = vmatprep.mubr.f32.mxu0 0.0
      %3027 = vmatmul.mubr.f32.gmra.mrb[0].mxu0 %v2359
      %v3028 = vpop.f32.mrb[0].mxu0
      %v3029 = vadd.f32 0.0, %v3028
      %v3030 = vpop.f32.mrb[0].mxu0
      %3031 = vmatprep.mubr.f32.mxu0 0.0
      %3032 = vmatmul.mubr.f32.gmra.mrb[0].mxu0 %v2362
      %v3033 = vpop.f32.mrb[0].mxu0
      %v3034 = vadd.f32 0.0, %v3033
      %v3035 = vpop.f32.mrb[0].mxu0
      %3036 = vmatprep.mubr.f32.mxu0 0.0
      %3037 = vmatmul.mubr.f32.gmra.mrb[0].mxu0 %v2365
      %v3038 = vpop.f32.mrb[0].mxu0
      %v3039 = vadd.f32 0.0, %v3038
      %v3040 = vpop.f32.mrb[0].mxu0
      %3041 = vmatprep.mubr.f32.mxu0 0.0
      %3042 = vmatmul.mubr.f32.gmra.mrb[0].mxu0 %v2368
      %v3043 = vpop.f32.mrb[0].mxu0
      %v3044 = vadd.f32 0.0, %v3043
      %v3045 = vpop.f32.mrb[0].mxu0
      %3046 = vmatprep.mubr.f32.mxu0 0.0
      %3047 = vmatmul.mubr.f32.gmra.mrb[0].mxu0 %v2371
      %v3048 = vpop.f32.mrb[0].mxu0
      %v3049 = vadd.f32 0.0, %v3048
      %v3050 = vpop.f32.mrb[0].mxu0
      %3051 = vmatprep.mubr.f32.mxu0 0.0
      %3052 = vmatmul.mubr.f32.gmra.mrb[0].mxu0 %v2374
      %v3053 = vpop.f32.mrb[0].mxu0
      %v3054 = vadd.f32 0.0, %v3053
      %v3055 = vpop.f32.mrb[0].mxu0
      %3056 = vmatprep.mubr.f32.mxu0 0.0
      %3057 = vmatmul.mubr.f32.gmra.mrb[0].mxu0 %v2377
      %v3058 = vpop.f32.mrb[0].mxu0
      %v3059 = vadd.f32 0.0, %v3058
      %v3060 = vpop.f32.mrb[0].mxu0
      %3061 = vmatprep.mubr.f32.mxu0 0.0
      %3062 = vmatmul.mubr.f32.gmra.mrb[0].mxu0 %v2380
      %v3063 = vpop.f32.mrb[0].mxu0
      %v3064 = vadd.f32 0.0, %v3063
      %v3065 = vpop.f32.mrb[0].mxu0
      %3066 = vmatprep.mubr.f32.mxu0 0.0
      %3067 = vmatmul.mubr.f32.gmra.mrb[0].mxu0 %v2383
      %v3068 = vpop.f32.mrb[0].mxu0
      %v3069 = vadd.f32 0.0, %v3068
      %v3070 = vpop.f32.mrb[0].mxu0
      %3071 = vmatprep.mubr.f32.mxu0 0.0
      %3072 = vmatmul.mubr.f32.gmra.mrb[0].mxu0 %v2386
      %v3073 = vpop.f32.mrb[0].mxu0
      %v3074 = vadd.f32 0.0, %v3073
      %v3075 = vpop.f32.mrb[0].mxu0
      %3076 = vmatprep.mubr.f32.mxu0 0.0
      %3077 = vmatmul.mubr.f32.gmra.mrb[0].mxu0 %v2389
      %v3078 = vpop.f32.mrb[0].mxu0
      %v3079 = vadd.f32 0.0, %v3078
      %v3080 = vpop.f32.mrb[0].mxu0
      %3081 = vmatprep.mubr.f32.mxu0 0.0
      %3082 = vmatmul.mubr.f32.gmra.mrb[0].mxu0 %v2392
      %v3083 = vpop.f32.mrb[0].mxu0
      %v3084 = vadd.f32 0.0, %v3083
      %v3085 = vpop.f32.mrb[0].mxu0
      %3086 = vmatprep.mubr.f32.mxu0 0.0
      %3087 = vmatmul.mubr.f32.gmra.mrb[0].mxu0 %v2395
      %v3088 = vpop.f32.mrb[0].mxu0
      %v3089 = vadd.f32 0.0, %v3088
      %v3090 = vpop.f32.mrb[0].mxu0
      %3091 = vmatprep.mubr.f32.mxu0 0.0
      %3092 = vmatmul.mubr.f32.gmra.mrb[0].mxu0 %v2398
      %v3093 = vpop.f32.mrb[0].mxu0
      %v3094 = vadd.f32 0.0, %v3093
      %v3095 = vpop.f32.mrb[0].mxu0
      %3096 = vmatprep.mubr.f32.mxu0 0.0
      %3097 = vmatmul.mubr.f32.gmra.mrb[0].mxu0 %v2401
      %v3098 = vpop.f32.mrb[0].mxu0
      %v3099 = vadd.f32 0.0, %v3098
      %v3100 = vpop.f32.mrb[0].mxu0
      %3101 = vmatprep.mubr.f32.mxu0 0.0
      %3102 = vmatmul.mubr.f32.gmra.mrb[0].mxu0 %v2404
      %v3103 = vpop.f32.mrb[0].mxu0
      %v3104 = vadd.f32 0.0, %v3103
      %v3105 = vpop.f32.mrb[0].mxu0
      %3106 = vmatprep.mubr.f32.mxu0 0.0
      %3107 = vmatmul.mubr.f32.gmra.mrb[0].mxu0 %v2407
      %v3108 = vpop.f32.mrb[0].mxu0
      %v3109 = vadd.f32 0.0, %v3108
      %v3110 = vpop.f32.mrb[0].mxu0
      %3111 = vmatprep.mubr.f32.mxu0 0.0
      %3112 = vmatmul.mubr.f32.gmra.mrb[0].mxu0 %v2410
      %v3113 = vpop.f32.mrb[0].mxu0
      %v3114 = vadd.f32 0.0, %v3113
      %v3115 = vpop.f32.mrb[0].mxu0
      %3116 = vdwg.mxu0
      %v3118 = vsel %vm2027, %v1895, 0
      %v3121 = vsel %vm2027, %v1896, 0
      %v3124 = vsel %vm2027, %v1897, 0
      %v3127 = vsel %vm2027, %v1898, 0
      %v3130 = vsel %vm2027, %v1899, 0
      %v3133 = vsel %vm2027, %v1900, 0
      %v3136 = vsel %vm2027, %v1901, 0
      %v3139 = vsel %vm2027, %v1902, 0
      %v3142 = vsel %vm2027, %v1903, 0
      %v3145 = vsel %vm2027, %v1904, 0
      %v3148 = vsel %vm2027, %v1905, 0
      %v3151 = vsel %vm2027, %v1906, 0
      %v3154 = vsel %vm2027, %v1907, 0
      %v3157 = vsel %vm2027, %v1908, 0
      %v3160 = vsel %vm2027, %v1909, 0
      %v3163 = vsel %vm2027, %v1910, 0
      %v3166 = vsel %vm2027, %v1911, 0
      %v3169 = vsel %vm2027, %v1912, 0
      %v3172 = vsel %vm2027, %v1913, 0
      %v3175 = vsel %vm2027, %v1914, 0
      %v3178 = vsel %vm2027, %v1915, 0
      %v3181 = vsel %vm2027, %v1916, 0
      %v3184 = vsel %vm2027, %v1917, 0
      %v3187 = vsel %vm2027, %v1918, 0
      %v3190 = vsel %vm2027, %v1919, 0
      %v3193 = vsel %vm2027, %v1920, 0
      %v3196 = vsel %vm2027, %v1921, 0
      %v3199 = vsel %vm2027, %v1922, 0
      %v3202 = vsel %vm2027, %v1923, 0
      %v3205 = vsel %vm2027, %v1924, 0
      %v3208 = vsel %vm2027, %v1925, 0
      %v3211 = vsel %vm2027, %v1926, 0
      %v3214 = vsel %vm2027, %v1927, 0
      %v3217 = vsel %vm2027, %v1928, 0
      %v3220 = vsel %vm2027, %v1929, 0
      %v3223 = vsel %vm2027, %v1930, 0
      %v3226 = vsel %vm2027, %v1931, 0
      %v3229 = vsel %vm2027, %v1932, 0
      %v3232 = vsel %vm2027, %v1933, 0
      %v3235 = vsel %vm2027, %v1934, 0
      %v3238 = vsel %vm2027, %v1935, 0
      %v3241 = vsel %vm2027, %v1936, 0
      %v3244 = vsel %vm2027, %v1937, 0
      %v3247 = vsel %vm2027, %v1938, 0
      %v3250 = vsel %vm2027, %v1939, 0
      %v3253 = vsel %vm2027, %v1940, 0
      %v3256 = vsel %vm2027, %v1941, 0
      %v3259 = vsel %vm2027, %v1942, 0
      %v3262 = vsel %vm2027, %v1943, 0
      %v3265 = vsel %vm2027, %v1944, 0
      %v3268 = vsel %vm2027, %v1945, 0
      %v3271 = vsel %vm2027, %v1946, 0
      %v3274 = vsel %vm2027, %v1947, 0
      %v3277 = vsel %vm2027, %v1948, 0
      %v3280 = vsel %vm2027, %v1949, 0
      %v3283 = vsel %vm2027, %v1950, 0
      %v3286 = vsel %vm2027, %v1951, 0
      %v3289 = vsel %vm2027, %v1952, 0
      %v3292 = vsel %vm2027, %v1953, 0
      %v3295 = vsel %vm2027, %v1954, 0
      %v3298 = vsel %vm2027, %v1955, 0
      %v3301 = vsel %vm2027, %v1956, 0
      %v3304 = vsel %vm2027, %v1957, 0
      %v3307 = vsel %vm2027, %v1958, 0
      %v3310 = vsel %vm2027, %v1959, 0
      %v3313 = vsel %vm2027, %v1960, 0
      %v3316 = vsel %vm2027, %v1961, 0
      %v3319 = vsel %vm2027, %v1962, 0
      %v3322 = vsel %vm2027, %v1963, 0
      %v3325 = vsel %vm2027, %v1964, 0
      %v3328 = vsel %vm2027, %v1965, 0
      %v3331 = vsel %vm2027, %v1966, 0
      %v3334 = vsel %vm2027, %v1967, 0
      %v3337 = vsel %vm2027, %v1968, 0
      %v3340 = vsel %vm2027, %v1969, 0
      %v3343 = vsel %vm2027, %v1970, 0
      %v3346 = vsel %vm2027, %v1971, 0
      %v3349 = vsel %vm2027, %v1972, 0
      %v3352 = vsel %vm2027, %v1973, 0
      %v3355 = vsel %vm2027, %v1974, 0
      %v3358 = vsel %vm2027, %v1975, 0
      %v3361 = vsel %vm2027, %v1976, 0
      %v3364 = vsel %vm2027, %v1977, 0
      %v3367 = vsel %vm2027, %v1978, 0
      %v3370 = vsel %vm2027, %v1979, 0
      %v3373 = vsel %vm2027, %v1980, 0
      %v3376 = vsel %vm2027, %v1981, 0
      %v3379 = vsel %vm2027, %v1982, 0
      %v3382 = vsel %vm2027, %v1983, 0
      %v3385 = vsel %vm2027, %v1984, 0
      %v3388 = vsel %vm2027, %v1985, 0
      %v3391 = vsel %vm2027, %v1986, 0
      %v3394 = vsel %vm2027, %v1987, 0
      %v3397 = vsel %vm2027, %v1988, 0
      %v3400 = vsel %vm2027, %v1989, 0
      %v3403 = vsel %vm2027, %v1990, 0
      %v3406 = vsel %vm2027, %v1991, 0
      %v3409 = vsel %vm2027, %v1992, 0
      %v3412 = vsel %vm2027, %v1993, 0
      %v3415 = vsel %vm2027, %v1994, 0
      %v3418 = vsel %vm2027, %v1995, 0
      %v3421 = vsel %vm2027, %v1996, 0
      %v3424 = vsel %vm2027, %v1997, 0
      %v3427 = vsel %vm2027, %v1998, 0
      %v3430 = vsel %vm2027, %v1999, 0
      %v3433 = vsel %vm2027, %v2000, 0
      %v3436 = vsel %vm2027, %v2001, 0
      %v3439 = vsel %vm2027, %v2002, 0
      %v3442 = vsel %vm2027, %v2003, 0
      %v3445 = vsel %vm2027, %v2004, 0
      %v3448 = vsel %vm2027, %v2005, 0
      %v3451 = vsel %vm2027, %v2006, 0
      %v3454 = vsel %vm2027, %v2007, 0
      %v3457 = vsel %vm2027, %v2008, 0
      %v3460 = vsel %vm2027, %v2009, 0
      %v3463 = vsel %vm2027, %v2010, 0
      %v3466 = vsel %vm2027, %v2011, 0
      %v3469 = vsel %vm2027, %v2012, 0
      %v3472 = vsel %vm2027, %v2013, 0
      %v3475 = vsel %vm2027, %v2014, 0
      %v3478 = vsel %vm2027, %v2015, 0
      %v3481 = vsel %vm2027, %v2016, 0
      %v3484 = vsel %vm2027, %v2017, 0
      %v3487 = vsel %vm2027, %v2018, 0
      %v3490 = vsel %vm2027, %v2019, 0
      %v3493 = vsel %vm2027, %v2020, 0
      %v3496 = vsel %vm2027, %v2021, 0
      %v3499 = vsel %vm2027, %v2022, 0
      %3501 = vmatprep.subr.mxu0 0.0
      %3502 = vmatpush1.msra.mxu0 %v2023
      %3503 = vmatprep.subr.mxu0 0.0
      %3504 = vmatpush1.msra.mxu0 %v2024
      %3505 = vmatprep.subr.mxu0 0.0
      %3506 = vmatpush1.msra.mxu0 0.0
      %3507 = vmatprep.subr.mxu0 0.0
      %3508 = vmatpush1.msra.mxu0 0.0
      %3509 = vmatprep.subr.mxu0 0.0
      %3510 = vmatpush1.msra.mxu0 0.0
      %3511 = vmatprep.subr.mxu0 0.0
      %3512 = vmatpush1.msra.mxu0 0.0
      %3513 = vmatprep.subr.mxu0 0.0
      %3514 = vmatpush1.msra.mxu0 0.0
      %3515 = vmatprep.subr.mxu0 0.0
      %3516 = vmatpush1.msra.mxu0 0.0
      %3517 = vmatprep.subr.mxu0 0.0
      %3518 = vmatpush1.msra.mxu0 0.0
      %3519 = vmatprep.subr.mxu0 0.0
      %3520 = vmatpush1.msra.mxu0 0.0
      %3521 = vmatprep.subr.mxu0 0.0
      %3522 = vmatpush1.msra.mxu0 0.0
      %3523 = vmatprep.subr.mxu0 0.0
      %3524 = vmatpush1.msra.mxu0 0.0
      %3525 = vmatprep.subr.mxu0 0.0
      %3526 = vmatpush1.msra.mxu0 0.0
      %3527 = vmatprep.subr.mxu0 0.0
      %3528 = vmatpush1.msra.mxu0 0.0
      %3529 = vmatprep.subr.mxu0 0.0
      %3530 = vmatpush1.msra.mxu0 0.0
      %3531 = vmatprep.subr.mxu0 0.0
      %3532 = vmatpush1.msra.mxu0 0.0
      %3533 = vmatprep.subr.mxu0 0.0
      %3534 = vmatpush1.msra.mxu0 0.0
      %3535 = vmatprep.subr.mxu0 0.0
      %3536 = vmatpush1.msra.mxu0 0.0
      %3537 = vmatprep.subr.mxu0 0.0
      %3538 = vmatpush1.msra.mxu0 0.0
      %3539 = vmatprep.subr.mxu0 0.0
      %3540 = vmatpush1.msra.mxu0 0.0
      %3541 = vmatprep.subr.mxu0 0.0
      %3542 = vmatpush1.msra.mxu0 0.0
      %3543 = vmatprep.subr.mxu0 0.0
      %3544 = vmatpush1.msra.mxu0 0.0
      %3545 = vmatprep.subr.mxu0 0.0
      %3546 = vmatpush1.msra.mxu0 0.0
      %3547 = vmatprep.subr.mxu0 0.0
      %3548 = vmatpush1.msra.mxu0 0.0
      %3549 = vmatprep.subr.mxu0 0.0
      %3550 = vmatpush1.msra.mxu0 0.0
      %3551 = vmatprep.subr.mxu0 0.0
      %3552 = vmatpush1.msra.mxu0 0.0
      %3553 = vmatprep.subr.mxu0 0.0
      %3554 = vmatpush1.msra.mxu0 0.0
      %3555 = vmatprep.subr.mxu0 0.0
      %3556 = vmatpush1.msra.mxu0 0.0
      %3557 = vmatprep.subr.mxu0 0.0
      %3558 = vmatpush1.msra.mxu0 0.0
      %3559 = vmatprep.subr.mxu0 0.0
      %3560 = vmatpush1.msra.mxu0 0.0
      %3561 = vmatprep.subr.mxu0 0.0
      %3562 = vmatpush1.msra.mxu0 0.0
      %3563 = vmatprep.subr.mxu0 0.0
      %3564 = vmatpush1.msra.mxu0 0.0
      %3565 = vmatprep.mubr.f32.mxu0 0.0
      %3566 = vmatmul.mubr.f32.gmra.mrb[0].mxu0 %v3118
      %v3567 = vpop.f32.mrb[0].mxu0
      %v3568 = vadd.f32 %v2479, %v3567
      %v3569 = vpop.f32.mrb[0].mxu0
      %3570 = vmatprep.mubr.f32.mxu0 0.0
      %3571 = vmatmul.mubr.f32.gmra.mrb[0].mxu0 %v3121
      %v3572 = vpop.f32.mrb[0].mxu0
      %v3573 = vadd.f32 %v2484, %v3572
      %v3574 = vpop.f32.mrb[0].mxu0
      %3575 = vmatprep.mubr.f32.mxu0 0.0
      %3576 = vmatmul.mubr.f32.gmra.mrb[0].mxu0 %v3124
      %v3577 = vpop.f32.mrb[0].mxu0
      %v3578 = vadd.f32 %v2489, %v3577
      %v3579 = vpop.f32.mrb[0].mxu0
      %3580 = vmatprep.mubr.f32.mxu0 0.0
      %3581 = vmatmul.mubr.f32.gmra.mrb[0].mxu0 %v3127
      %v3582 = vpop.f32.mrb[0].mxu0
      %v3583 = vadd.f32 %v2494, %v3582
      %v3584 = vpop.f32.mrb[0].mxu0
      %3585 = vmatprep.mubr.f32.mxu0 0.0
      %3586 = vmatmul.mubr.f32.gmra.mrb[0].mxu0 %v3130
      %v3587 = vpop.f32.mrb[0].mxu0
      %v3588 = vadd.f32 %v2499, %v3587
      %v3589 = vpop.f32.mrb[0].mxu0
      %3590 = vmatprep.mubr.f32.mxu0 0.0
      %3591 = vmatmul.mubr.f32.gmra.mrb[0].mxu0 %v3133
      %v3592 = vpop.f32.mrb[0].mxu0
      %v3593 = vadd.f32 %v2504, %v3592
      %v3594 = vpop.f32.mrb[0].mxu0
      %3595 = vmatprep.mubr.f32.mxu0 0.0
      %3596 = vmatmul.mubr.f32.gmra.mrb[0].mxu0 %v3136
      %v3597 = vpop.f32.mrb[0].mxu0
      %v3598 = vadd.f32 %v2509, %v3597
      %v3599 = vpop.f32.mrb[0].mxu0
      %3600 = vmatprep.mubr.f32.mxu0 0.0
      %3601 = vmatmul.mubr.f32.gmra.mrb[0].mxu0 %v3139
      %v3602 = vpop.f32.mrb[0].mxu0
      %v3603 = vadd.f32 %v2514, %v3602
      %v3604 = vpop.f32.mrb[0].mxu0
      %3605 = vmatprep.mubr.f32.mxu0 0.0
      %3606 = vmatmul.mubr.f32.gmra.mrb[0].mxu0 %v3142
      %v3607 = vpop.f32.mrb[0].mxu0
      %v3608 = vadd.f32 %v2519, %v3607
      %v3609 = vpop.f32.mrb[0].mxu0
      %3610 = vmatprep.mubr.f32.mxu0 0.0
      %3611 = vmatmul.mubr.f32.gmra.mrb[0].mxu0 %v3145
      %v3612 = vpop.f32.mrb[0].mxu0
      %v3613 = vadd.f32 %v2524, %v3612
      %v3614 = vpop.f32.mrb[0].mxu0
      %3615 = vmatprep.mubr.f32.mxu0 0.0
      %3616 = vmatmul.mubr.f32.gmra.mrb[0].mxu0 %v3148
      %v3617 = vpop.f32.mrb[0].mxu0
      %v3618 = vadd.f32 %v2529, %v3617
      %v3619 = vpop.f32.mrb[0].mxu0
      %3620 = vmatprep.mubr.f32.mxu0 0.0
      %3621 = vmatmul.mubr.f32.gmra.mrb[0].mxu0 %v3151
      %v3622 = vpop.f32.mrb[0].mxu0
      %v3623 = vadd.f32 %v2534, %v3622
      %v3624 = vpop.f32.mrb[0].mxu0
      %3625 = vmatprep.mubr.f32.mxu0 0.0
      %3626 = vmatmul.mubr.f32.gmra.mrb[0].mxu0 %v3154
      %v3627 = vpop.f32.mrb[0].mxu0
      %v3628 = vadd.f32 %v2539, %v3627
      %v3629 = vpop.f32.mrb[0].mxu0
      %3630 = vmatprep.mubr.f32.mxu0 0.0
      %3631 = vmatmul.mubr.f32.gmra.mrb[0].mxu0 %v3157
      %v3632 = vpop.f32.mrb[0].mxu0
      %v3633 = vadd.f32 %v2544, %v3632
      %v3634 = vpop.f32.mrb[0].mxu0
      %3635 = vmatprep.mubr.f32.mxu0 0.0
      %3636 = vmatmul.mubr.f32.gmra.mrb[0].mxu0 %v3160
      %v3637 = vpop.f32.mrb[0].mxu0
      %v3638 = vadd.f32 %v2549, %v3637
      %v3639 = vpop.f32.mrb[0].mxu0
      %3640 = vmatprep.mubr.f32.mxu0 0.0
      %3641 = vmatmul.mubr.f32.gmra.mrb[0].mxu0 %v3163
      %v3642 = vpop.f32.mrb[0].mxu0
      %v3643 = vadd.f32 %v2554, %v3642
      %v3644 = vpop.f32.mrb[0].mxu0
      %3645 = vmatprep.mubr.f32.mxu0 0.0
      %3646 = vmatmul.mubr.f32.gmra.mrb[0].mxu0 %v3166
      %v3647 = vpop.f32.mrb[0].mxu0
      %v3648 = vadd.f32 %v2559, %v3647
      %v3649 = vpop.f32.mrb[0].mxu0
      %3650 = vmatprep.mubr.f32.mxu0 0.0
      %3651 = vmatmul.mubr.f32.gmra.mrb[0].mxu0 %v3169
      %v3652 = vpop.f32.mrb[0].mxu0
      %v3653 = vadd.f32 %v2564, %v3652
      %v3654 = vpop.f32.mrb[0].mxu0
      %3655 = vmatprep.mubr.f32.mxu0 0.0
      %3656 = vmatmul.mubr.f32.gmra.mrb[0].mxu0 %v3172
      %v3657 = vpop.f32.mrb[0].mxu0
      %v3658 = vadd.f32 %v2569, %v3657
      %v3659 = vpop.f32.mrb[0].mxu0
      %3660 = vmatprep.mubr.f32.mxu0 0.0
      %3661 = vmatmul.mubr.f32.gmra.mrb[0].mxu0 %v3175
      %v3662 = vpop.f32.mrb[0].mxu0
      %v3663 = vadd.f32 %v2574, %v3662
      %v3664 = vpop.f32.mrb[0].mxu0
      %3665 = vmatprep.mubr.f32.mxu0 0.0
      %3666 = vmatmul.mubr.f32.gmra.mrb[0].mxu0 %v3178
      %v3667 = vpop.f32.mrb[0].mxu0
      %v3668 = vadd.f32 %v2579, %v3667
      %v3669 = vpop.f32.mrb[0].mxu0
      %3670 = vmatprep.mubr.f32.mxu0 0.0
      %3671 = vmatmul.mubr.f32.gmra.mrb[0].mxu0 %v3181
      %v3672 = vpop.f32.mrb[0].mxu0
      %v3673 = vadd.f32 %v2584, %v3672
      %v3674 = vpop.f32.mrb[0].mxu0
      %3675 = vmatprep.mubr.f32.mxu0 0.0
      %3676 = vmatmul.mubr.f32.gmra.mrb[0].mxu0 %v3184
      %v3677 = vpop.f32.mrb[0].mxu0
      %v3678 = vadd.f32 %v2589, %v3677
      %v3679 = vpop.f32.mrb[0].mxu0
      %3680 = vmatprep.mubr.f32.mxu0 0.0
      %3681 = vmatmul.mubr.f32.gmra.mrb[0].mxu0 %v3187
      %v3682 = vpop.f32.mrb[0].mxu0
      %v3683 = vadd.f32 %v2594, %v3682
      %v3684 = vpop.f32.mrb[0].mxu0
      %3685 = vmatprep.mubr.f32.mxu0 0.0
      %3686 = vmatmul.mubr.f32.gmra.mrb[0].mxu0 %v3190
      %v3687 = vpop.f32.mrb[0].mxu0
      %v3688 = vadd.f32 %v2599, %v3687
      %v3689 = vpop.f32.mrb[0].mxu0
      %3690 = vmatprep.mubr.f32.mxu0 0.0
      %3691 = vmatmul.mubr.f32.gmra.mrb[0].mxu0 %v3193
      %v3692 = vpop.f32.mrb[0].mxu0
      %v3693 = vadd.f32 %v2604, %v3692
      %v3694 = vpop.f32.mrb[0].mxu0
      %3695 = vmatprep.mubr.f32.mxu0 0.0
      %3696 = vmatmul.mubr.f32.gmra.mrb[0].mxu0 %v3196
      %v3697 = vpop.f32.mrb[0].mxu0
      %v3698 = vadd.f32 %v2609, %v3697
      %v3699 = vpop.f32.mrb[0].mxu0
      %3700 = vmatprep.mubr.f32.mxu0 0.0
      %3701 = vmatmul.mubr.f32.gmra.mrb[0].mxu0 %v3199
      %v3702 = vpop.f32.mrb[0].mxu0
      %v3703 = vadd.f32 %v2614, %v3702
      %v3704 = vpop.f32.mrb[0].mxu0
      %3705 = vmatprep.mubr.f32.mxu0 0.0
      %3706 = vmatmul.mubr.f32.gmra.mrb[0].mxu0 %v3202
      %v3707 = vpop.f32.mrb[0].mxu0
      %v3708 = vadd.f32 %v2619, %v3707
      %v3709 = vpop.f32.mrb[0].mxu0
      %3710 = vmatprep.mubr.f32.mxu0 0.0
      %3711 = vmatmul.mubr.f32.gmra.mrb[0].mxu0 %v3205
      %v3712 = vpop.f32.mrb[0].mxu0
      %v3713 = vadd.f32 %v2624, %v3712
      %v3714 = vpop.f32.mrb[0].mxu0
      %3715 = vmatprep.mubr.f32.mxu0 0.0
      %3716 = vmatmul.mubr.f32.gmra.mrb[0].mxu0 %v3208
      %v3717 = vpop.f32.mrb[0].mxu0
      %v3718 = vadd.f32 %v2629, %v3717
      %v3719 = vpop.f32.mrb[0].mxu0
      %3720 = vmatprep.mubr.f32.mxu0 0.0
      %3721 = vmatmul.mubr.f32.gmra.mrb[0].mxu0 %v3211
      %v3722 = vpop.f32.mrb[0].mxu0
      %v3723 = vadd.f32 %v2634, %v3722
      %v3724 = vpop.f32.mrb[0].mxu0
      %3725 = vmatprep.mubr.f32.mxu0 0.0
      %3726 = vmatmul.mubr.f32.gmra.mrb[0].mxu0 %v3214
      %v3727 = vpop.f32.mrb[0].mxu0
      %v3728 = vadd.f32 %v2639, %v3727
      %v3729 = vpop.f32.mrb[0].mxu0
      %3730 = vmatprep.mubr.f32.mxu0 0.0
      %3731 = vmatmul.mubr.f32.gmra.mrb[0].mxu0 %v3217
      %v3732 = vpop.f32.mrb[0].mxu0
      %v3733 = vadd.f32 %v2644, %v3732
      %v3734 = vpop.f32.mrb[0].mxu0
      %3735 = vmatprep.mubr.f32.mxu0 0.0
      %3736 = vmatmul.mubr.f32.gmra.mrb[0].mxu0 %v3220
      %v3737 = vpop.f32.mrb[0].mxu0
      %v3738 = vadd.f32 %v2649, %v3737
      %v3739 = vpop.f32.mrb[0].mxu0
      %3740 = vmatprep.mubr.f32.mxu0 0.0
      %3741 = vmatmul.mubr.f32.gmra.mrb[0].mxu0 %v3223
      %v3742 = vpop.f32.mrb[0].mxu0
      %v3743 = vadd.f32 %v2654, %v3742
      %v3744 = vpop.f32.mrb[0].mxu0
      %3745 = vmatprep.mubr.f32.mxu0 0.0
      %3746 = vmatmul.mubr.f32.gmra.mrb[0].mxu0 %v3226
      %v3747 = vpop.f32.mrb[0].mxu0
      %v3748 = vadd.f32 %v2659, %v3747
      %v3749 = vpop.f32.mrb[0].mxu0
      %3750 = vmatprep.mubr.f32.mxu0 0.0
      %3751 = vmatmul.mubr.f32.gmra.mrb[0].mxu0 %v3229
      %v3752 = vpop.f32.mrb[0].mxu0
      %v3753 = vadd.f32 %v2664, %v3752
      %v3754 = vpop.f32.mrb[0].mxu0
      %3755 = vmatprep.mubr.f32.mxu0 0.0
      %3756 = vmatmul.mubr.f32.gmra.mrb[0].mxu0 %v3232
      %v3757 = vpop.f32.mrb[0].mxu0
      %v3758 = vadd.f32 %v2669, %v3757
      %v3759 = vpop.f32.mrb[0].mxu0
      %3760 = vmatprep.mubr.f32.mxu0 0.0
      %3761 = vmatmul.mubr.f32.gmra.mrb[0].mxu0 %v3235
      %v3762 = vpop.f32.mrb[0].mxu0
      %v3763 = vadd.f32 %v2674, %v3762
      %v3764 = vpop.f32.mrb[0].mxu0
      %3765 = vmatprep.mubr.f32.mxu0 0.0
      %3766 = vmatmul.mubr.f32.gmra.mrb[0].mxu0 %v3238
      %v3767 = vpop.f32.mrb[0].mxu0
      %v3768 = vadd.f32 %v2679, %v3767
      %v3769 = vpop.f32.mrb[0].mxu0
      %3770 = vmatprep.mubr.f32.mxu0 0.0
      %3771 = vmatmul.mubr.f32.gmra.mrb[0].mxu0 %v3241
      %v3772 = vpop.f32.mrb[0].mxu0
      %v3773 = vadd.f32 %v2684, %v3772
      %v3774 = vpop.f32.mrb[0].mxu0
      %3775 = vmatprep.mubr.f32.mxu0 0.0
      %3776 = vmatmul.mubr.f32.gmra.mrb[0].mxu0 %v3244
      %v3777 = vpop.f32.mrb[0].mxu0
      %v3778 = vadd.f32 %v2689, %v3777
      %v3779 = vpop.f32.mrb[0].mxu0
      %3780 = vmatprep.mubr.f32.mxu0 0.0
      %3781 = vmatmul.mubr.f32.gmra.mrb[0].mxu0 %v3247
      %v3782 = vpop.f32.mrb[0].mxu0
      %v3783 = vadd.f32 %v2694, %v3782
      %v3784 = vpop.f32.mrb[0].mxu0
      %3785 = vmatprep.mubr.f32.mxu0 0.0
      %3786 = vmatmul.mubr.f32.gmra.mrb[0].mxu0 %v3250
      %v3787 = vpop.f32.mrb[0].mxu0
      %v3788 = vadd.f32 %v2699, %v3787
      %v3789 = vpop.f32.mrb[0].mxu0
      %3790 = vmatprep.mubr.f32.mxu0 0.0
      %3791 = vmatmul.mubr.f32.gmra.mrb[0].mxu0 %v3253
      %v3792 = vpop.f32.mrb[0].mxu0
      %v3793 = vadd.f32 %v2704, %v3792
      %v3794 = vpop.f32.mrb[0].mxu0
      %3795 = vmatprep.mubr.f32.mxu0 0.0
      %3796 = vmatmul.mubr.f32.gmra.mrb[0].mxu0 %v3256
      %v3797 = vpop.f32.mrb[0].mxu0
      %v3798 = vadd.f32 %v2709, %v3797
      %v3799 = vpop.f32.mrb[0].mxu0
      %3800 = vmatprep.mubr.f32.mxu0 0.0
      %3801 = vmatmul.mubr.f32.gmra.mrb[0].mxu0 %v3259
      %v3802 = vpop.f32.mrb[0].mxu0
      %v3803 = vadd.f32 %v2714, %v3802
      %v3804 = vpop.f32.mrb[0].mxu0
      %3805 = vmatprep.mubr.f32.mxu0 0.0
      %3806 = vmatmul.mubr.f32.gmra.mrb[0].mxu0 %v3262
      %v3807 = vpop.f32.mrb[0].mxu0
      %v3808 = vadd.f32 %v2719, %v3807
      %v3809 = vpop.f32.mrb[0].mxu0
      %3810 = vmatprep.mubr.f32.mxu0 0.0
      %3811 = vmatmul.mubr.f32.gmra.mrb[0].mxu0 %v3265
      %v3812 = vpop.f32.mrb[0].mxu0
      %v3813 = vadd.f32 %v2724, %v3812
      %v3814 = vpop.f32.mrb[0].mxu0
      %3815 = vmatprep.mubr.f32.mxu0 0.0
      %3816 = vmatmul.mubr.f32.gmra.mrb[0].mxu0 %v3268
      %v3817 = vpop.f32.mrb[0].mxu0
      %v3818 = vadd.f32 %v2729, %v3817
      %v3819 = vpop.f32.mrb[0].mxu0
      %3820 = vmatprep.mubr.f32.mxu0 0.0
      %3821 = vmatmul.mubr.f32.gmra.mrb[0].mxu0 %v3271
      %v3822 = vpop.f32.mrb[0].mxu0
      %v3823 = vadd.f32 %v2734, %v3822
      %v3824 = vpop.f32.mrb[0].mxu0
      %3825 = vmatprep.mubr.f32.mxu0 0.0
      %3826 = vmatmul.mubr.f32.gmra.mrb[0].mxu0 %v3274
      %v3827 = vpop.f32.mrb[0].mxu0
      %v3828 = vadd.f32 %v2739, %v3827
      %v3829 = vpop.f32.mrb[0].mxu0
      %3830 = vmatprep.mubr.f32.mxu0 0.0
      %3831 = vmatmul.mubr.f32.gmra.mrb[0].mxu0 %v3277
      %v3832 = vpop.f32.mrb[0].mxu0
      %v3833 = vadd.f32 %v2744, %v3832
      %v3834 = vpop.f32.mrb[0].mxu0
      %3835 = vmatprep.mubr.f32.mxu0 0.0
      %3836 = vmatmul.mubr.f32.gmra.mrb[0].mxu0 %v3280
      %v3837 = vpop.f32.mrb[0].mxu0
      %v3838 = vadd.f32 %v2749, %v3837
      %v3839 = vpop.f32.mrb[0].mxu0
      %3840 = vmatprep.mubr.f32.mxu0 0.0
      %3841 = vmatmul.mubr.f32.gmra.mrb[0].mxu0 %v3283
      %v3842 = vpop.f32.mrb[0].mxu0
      %v3843 = vadd.f32 %v2754, %v3842
      %v3844 = vpop.f32.mrb[0].mxu0
      %3845 = vmatprep.mubr.f32.mxu0 0.0
      %3846 = vmatmul.mubr.f32.gmra.mrb[0].mxu0 %v3286
      %v3847 = vpop.f32.mrb[0].mxu0
      %v3848 = vadd.f32 %v2759, %v3847
      %v3849 = vpop.f32.mrb[0].mxu0
      %3850 = vmatprep.mubr.f32.mxu0 0.0
      %3851 = vmatmul.mubr.f32.gmra.mrb[0].mxu0 %v3289
      %v3852 = vpop.f32.mrb[0].mxu0
      %v3853 = vadd.f32 %v2764, %v3852
      %v3854 = vpop.f32.mrb[0].mxu0
      %3855 = vmatprep.mubr.f32.mxu0 0.0
      %3856 = vmatmul.mubr.f32.gmra.mrb[0].mxu0 %v3292
      %v3857 = vpop.f32.mrb[0].mxu0
      %v3858 = vadd.f32 %v2769, %v3857
      %v3859 = vpop.f32.mrb[0].mxu0
      %3860 = vmatprep.mubr.f32.mxu0 0.0
      %3861 = vmatmul.mubr.f32.gmra.mrb[0].mxu0 %v3295
      %v3862 = vpop.f32.mrb[0].mxu0
      %v3863 = vadd.f32 %v2774, %v3862
      %v3864 = vpop.f32.mrb[0].mxu0
      %3865 = vmatprep.mubr.f32.mxu0 0.0
      %3866 = vmatmul.mubr.f32.gmra.mrb[0].mxu0 %v3298
      %v3867 = vpop.f32.mrb[0].mxu0
      %v3868 = vadd.f32 %v2779, %v3867
      %v3869 = vpop.f32.mrb[0].mxu0
      %3870 = vmatprep.mubr.f32.mxu0 0.0
      %3871 = vmatmul.mubr.f32.gmra.mrb[0].mxu0 %v3301
      %v3872 = vpop.f32.mrb[0].mxu0
      %v3873 = vadd.f32 %v2784, %v3872
      %v3874 = vpop.f32.mrb[0].mxu0
      %3875 = vmatprep.mubr.f32.mxu0 0.0
      %3876 = vmatmul.mubr.f32.gmra.mrb[0].mxu0 %v3304
      %v3877 = vpop.f32.mrb[0].mxu0
      %v3878 = vadd.f32 %v2789, %v3877
      %v3879 = vpop.f32.mrb[0].mxu0
      %3880 = vmatprep.mubr.f32.mxu0 0.0
      %3881 = vmatmul.mubr.f32.gmra.mrb[0].mxu0 %v3307
      %v3882 = vpop.f32.mrb[0].mxu0
      %v3883 = vadd.f32 %v2794, %v3882
      %v3884 = vpop.f32.mrb[0].mxu0
      %3885 = vmatprep.mubr.f32.mxu0 0.0
      %3886 = vmatmul.mubr.f32.gmra.mrb[0].mxu0 %v3310
      %v3887 = vpop.f32.mrb[0].mxu0
      %v3888 = vadd.f32 %v2799, %v3887
      %v3889 = vpop.f32.mrb[0].mxu0
      %3890 = vmatprep.mubr.f32.mxu0 0.0
      %3891 = vmatmul.mubr.f32.gmra.mrb[0].mxu0 %v3313
      %v3892 = vpop.f32.mrb[0].mxu0
      %v3893 = vadd.f32 %v2804, %v3892
      %v3894 = vpop.f32.mrb[0].mxu0
      %3895 = vmatprep.mubr.f32.mxu0 0.0
      %3896 = vmatmul.mubr.f32.gmra.mrb[0].mxu0 %v3316
      %v3897 = vpop.f32.mrb[0].mxu0
      %v3898 = vadd.f32 %v2809, %v3897
      %v3899 = vpop.f32.mrb[0].mxu0
      %3900 = vmatprep.mubr.f32.mxu0 0.0
      %3901 = vmatmul.mubr.f32.gmra.mrb[0].mxu0 %v3319
      %v3902 = vpop.f32.mrb[0].mxu0
      %v3903 = vadd.f32 %v2814, %v3902
      %v3904 = vpop.f32.mrb[0].mxu0
      %3905 = vmatprep.mubr.f32.mxu0 0.0
      %3906 = vmatmul.mubr.f32.gmra.mrb[0].mxu0 %v3322
      %v3907 = vpop.f32.mrb[0].mxu0
      %v3908 = vadd.f32 %v2819, %v3907
      %v3909 = vpop.f32.mrb[0].mxu0
      %3910 = vmatprep.mubr.f32.mxu0 0.0
      %3911 = vmatmul.mubr.f32.gmra.mrb[0].mxu0 %v3325
      %v3912 = vpop.f32.mrb[0].mxu0
      %v3913 = vadd.f32 %v2824, %v3912
      %v3914 = vpop.f32.mrb[0].mxu0
      %3915 = vmatprep.mubr.f32.mxu0 0.0
      %3916 = vmatmul.mubr.f32.gmra.mrb[0].mxu0 %v3328
      %v3917 = vpop.f32.mrb[0].mxu0
      %v3918 = vadd.f32 %v2829, %v3917
      %v3919 = vpop.f32.mrb[0].mxu0
      %3920 = vmatprep.mubr.f32.mxu0 0.0
      %3921 = vmatmul.mubr.f32.gmra.mrb[0].mxu0 %v3331
      %v3922 = vpop.f32.mrb[0].mxu0
      %v3923 = vadd.f32 %v2834, %v3922
      %v3924 = vpop.f32.mrb[0].mxu0
      %3925 = vmatprep.mubr.f32.mxu0 0.0
      %3926 = vmatmul.mubr.f32.gmra.mrb[0].mxu0 %v3334
      %v3927 = vpop.f32.mrb[0].mxu0
      %v3928 = vadd.f32 %v2839, %v3927
      %v3929 = vpop.f32.mrb[0].mxu0
      %3930 = vmatprep.mubr.f32.mxu0 0.0
      %3931 = vmatmul.mubr.f32.gmra.mrb[0].mxu0 %v3337
      %v3932 = vpop.f32.mrb[0].mxu0
      %v3933 = vadd.f32 %v2844, %v3932
      %v3934 = vpop.f32.mrb[0].mxu0
      %3935 = vmatprep.mubr.f32.mxu0 0.0
      %3936 = vmatmul.mubr.f32.gmra.mrb[0].mxu0 %v3340
      %v3937 = vpop.f32.mrb[0].mxu0
      %v3938 = vadd.f32 %v2849, %v3937
      %v3939 = vpop.f32.mrb[0].mxu0
      %3940 = vmatprep.mubr.f32.mxu0 0.0
      %3941 = vmatmul.mubr.f32.gmra.mrb[0].mxu0 %v3343
      %v3942 = vpop.f32.mrb[0].mxu0
      %v3943 = vadd.f32 %v2854, %v3942
      %v3944 = vpop.f32.mrb[0].mxu0
      %3945 = vmatprep.mubr.f32.mxu0 0.0
      %3946 = vmatmul.mubr.f32.gmra.mrb[0].mxu0 %v3346
      %v3947 = vpop.f32.mrb[0].mxu0
      %v3948 = vadd.f32 %v2859, %v3947
      %v3949 = vpop.f32.mrb[0].mxu0
      %3950 = vmatprep.mubr.f32.mxu0 0.0
      %3951 = vmatmul.mubr.f32.gmra.mrb[0].mxu0 %v3349
      %v3952 = vpop.f32.mrb[0].mxu0
      %v3953 = vadd.f32 %v2864, %v3952
      %v3954 = vpop.f32.mrb[0].mxu0
      %3955 = vmatprep.mubr.f32.mxu0 0.0
      %3956 = vmatmul.mubr.f32.gmra.mrb[0].mxu0 %v3352
      %v3957 = vpop.f32.mrb[0].mxu0
      %v3958 = vadd.f32 %v2869, %v3957
      %v3959 = vpop.f32.mrb[0].mxu0
      %3960 = vmatprep.mubr.f32.mxu0 0.0
      %3961 = vmatmul.mubr.f32.gmra.mrb[0].mxu0 %v3355
      %v3962 = vpop.f32.mrb[0].mxu0
      %v3963 = vadd.f32 %v2874, %v3962
      %v3964 = vpop.f32.mrb[0].mxu0
      %3965 = vmatprep.mubr.f32.mxu0 0.0
      %3966 = vmatmul.mubr.f32.gmra.mrb[0].mxu0 %v3358
      %v3967 = vpop.f32.mrb[0].mxu0
      %v3968 = vadd.f32 %v2879, %v3967
      %v3969 = vpop.f32.mrb[0].mxu0
      %3970 = vmatprep.mubr.f32.mxu0 0.0
      %3971 = vmatmul.mubr.f32.gmra.mrb[0].mxu0 %v3361
      %v3972 = vpop.f32.mrb[0].mxu0
      %v3973 = vadd.f32 %v2884, %v3972
      %v3974 = vpop.f32.mrb[0].mxu0
      %3975 = vmatprep.mubr.f32.mxu0 0.0
      %3976 = vmatmul.mubr.f32.gmra.mrb[0].mxu0 %v3364
      %v3977 = vpop.f32.mrb[0].mxu0
      %v3978 = vadd.f32 %v2889, %v3977
      %v3979 = vpop.f32.mrb[0].mxu0
      %3980 = vmatprep.mubr.f32.mxu0 0.0
      %3981 = vmatmul.mubr.f32.gmra.mrb[0].mxu0 %v3367
      %v3982 = vpop.f32.mrb[0].mxu0
      %v3983 = vadd.f32 %v2894, %v3982
      %v3984 = vpop.f32.mrb[0].mxu0
      %3985 = vmatprep.mubr.f32.mxu0 0.0
      %3986 = vmatmul.mubr.f32.gmra.mrb[0].mxu0 %v3370
      %v3987 = vpop.f32.mrb[0].mxu0
      %v3988 = vadd.f32 %v2899, %v3987
      %v3989 = vpop.f32.mrb[0].mxu0
      %3990 = vmatprep.mubr.f32.mxu0 0.0
      %3991 = vmatmul.mubr.f32.gmra.mrb[0].mxu0 %v3373
      %v3992 = vpop.f32.mrb[0].mxu0
      %v3993 = vadd.f32 %v2904, %v3992
      %v3994 = vpop.f32.mrb[0].mxu0
      %3995 = vmatprep.mubr.f32.mxu0 0.0
      %3996 = vmatmul.mubr.f32.gmra.mrb[0].mxu0 %v3376
      %v3997 = vpop.f32.mrb[0].mxu0
      %v3998 = vadd.f32 %v2909, %v3997
      %v3999 = vpop.f32.mrb[0].mxu0
      %4000 = vmatprep.mubr.f32.mxu0 0.0
      %4001 = vmatmul.mubr.f32.gmra.mrb[0].mxu0 %v3379
      %v4002 = vpop.f32.mrb[0].mxu0
      %v4003 = vadd.f32 %v2914, %v4002
      %v4004 = vpop.f32.mrb[0].mxu0
      %4005 = vmatprep.mubr.f32.mxu0 0.0
      %4006 = vmatmul.mubr.f32.gmra.mrb[0].mxu0 %v3382
      %v4007 = vpop.f32.mrb[0].mxu0
      %v4008 = vadd.f32 %v2919, %v4007
      %v4009 = vpop.f32.mrb[0].mxu0
      %4010 = vmatprep.mubr.f32.mxu0 0.0
      %4011 = vmatmul.mubr.f32.gmra.mrb[0].mxu0 %v3385
      %v4012 = vpop.f32.mrb[0].mxu0
      %v4013 = vadd.f32 %v2924, %v4012
      %v4014 = vpop.f32.mrb[0].mxu0
      %4015 = vmatprep.mubr.f32.mxu0 0.0
      %4016 = vmatmul.mubr.f32.gmra.mrb[0].mxu0 %v3388
      %v4017 = vpop.f32.mrb[0].mxu0
      %v4018 = vadd.f32 %v2929, %v4017
      %v4019 = vpop.f32.mrb[0].mxu0
      %4020 = vmatprep.mubr.f32.mxu0 0.0
      %4021 = vmatmul.mubr.f32.gmra.mrb[0].mxu0 %v3391
      %v4022 = vpop.f32.mrb[0].mxu0
      %v4023 = vadd.f32 %v2934, %v4022
      %v4024 = vpop.f32.mrb[0].mxu0
      %4025 = vmatprep.mubr.f32.mxu0 0.0
      %4026 = vmatmul.mubr.f32.gmra.mrb[0].mxu0 %v3394
      %v4027 = vpop.f32.mrb[0].mxu0
      %v4028 = vadd.f32 %v2939, %v4027
      %v4029 = vpop.f32.mrb[0].mxu0
      %4030 = vmatprep.mubr.f32.mxu0 0.0
      %4031 = vmatmul.mubr.f32.gmra.mrb[0].mxu0 %v3397
      %v4032 = vpop.f32.mrb[0].mxu0
      %v4033 = vadd.f32 %v2944, %v4032
      %v4034 = vpop.f32.mrb[0].mxu0
      %4035 = vmatprep.mubr.f32.mxu0 0.0
      %4036 = vmatmul.mubr.f32.gmra.mrb[0].mxu0 %v3400
      %v4037 = vpop.f32.mrb[0].mxu0
      %v4038 = vadd.f32 %v2949, %v4037
      %v4039 = vpop.f32.mrb[0].mxu0
      %4040 = vmatprep.mubr.f32.mxu0 0.0
      %4041 = vmatmul.mubr.f32.gmra.mrb[0].mxu0 %v3403
      %v4042 = vpop.f32.mrb[0].mxu0
      %v4043 = vadd.f32 %v2954, %v4042
      %v4044 = vpop.f32.mrb[0].mxu0
      %4045 = vmatprep.mubr.f32.mxu0 0.0
      %4046 = vmatmul.mubr.f32.gmra.mrb[0].mxu0 %v3406
      %v4047 = vpop.f32.mrb[0].mxu0
      %v4048 = vadd.f32 %v2959, %v4047
      %v4049 = vpop.f32.mrb[0].mxu0
      %4050 = vmatprep.mubr.f32.mxu0 0.0
      %4051 = vmatmul.mubr.f32.gmra.mrb[0].mxu0 %v3409
      %v4052 = vpop.f32.mrb[0].mxu0
      %v4053 = vadd.f32 %v2964, %v4052
      %v4054 = vpop.f32.mrb[0].mxu0
      %4055 = vmatprep.mubr.f32.mxu0 0.0
      %4056 = vmatmul.mubr.f32.gmra.mrb[0].mxu0 %v3412
      %v4057 = vpop.f32.mrb[0].mxu0
      %v4058 = vadd.f32 %v2969, %v4057
      %v4059 = vpop.f32.mrb[0].mxu0
      %4060 = vmatprep.mubr.f32.mxu0 0.0
      %4061 = vmatmul.mubr.f32.gmra.mrb[0].mxu0 %v3415
      %v4062 = vpop.f32.mrb[0].mxu0
      %v4063 = vadd.f32 %v2974, %v4062
      %v4064 = vpop.f32.mrb[0].mxu0
      %4065 = vmatprep.mubr.f32.mxu0 0.0
      %4066 = vmatmul.mubr.f32.gmra.mrb[0].mxu0 %v3418
      %v4067 = vpop.f32.mrb[0].mxu0
      %v4068 = vadd.f32 %v2979, %v4067
      %v4069 = vpop.f32.mrb[0].mxu0
      %4070 = vmatprep.mubr.f32.mxu0 0.0
      %4071 = vmatmul.mubr.f32.gmra.mrb[0].mxu0 %v3421
      %v4072 = vpop.f32.mrb[0].mxu0
      %v4073 = vadd.f32 %v2984, %v4072
      %v4074 = vpop.f32.mrb[0].mxu0
      %4075 = vmatprep.mubr.f32.mxu0 0.0
      %4076 = vmatmul.mubr.f32.gmra.mrb[0].mxu0 %v3424
      %v4077 = vpop.f32.mrb[0].mxu0
      %v4078 = vadd.f32 %v2989, %v4077
      %v4079 = vpop.f32.mrb[0].mxu0
      %4080 = vmatprep.mubr.f32.mxu0 0.0
      %4081 = vmatmul.mubr.f32.gmra.mrb[0].mxu0 %v3427
      %v4082 = vpop.f32.mrb[0].mxu0
      %v4083 = vadd.f32 %v2994, %v4082
      %v4084 = vpop.f32.mrb[0].mxu0
      %4085 = vmatprep.mubr.f32.mxu0 0.0
      %4086 = vmatmul.mubr.f32.gmra.mrb[0].mxu0 %v3430
      %v4087 = vpop.f32.mrb[0].mxu0
      %v4088 = vadd.f32 %v2999, %v4087
      %v4089 = vpop.f32.mrb[0].mxu0
      %4090 = vmatprep.mubr.f32.mxu0 0.0
      %4091 = vmatmul.mubr.f32.gmra.mrb[0].mxu0 %v3433
      %v4092 = vpop.f32.mrb[0].mxu0
      %v4093 = vadd.f32 %v3004, %v4092
      %v4094 = vpop.f32.mrb[0].mxu0
      %4095 = vmatprep.mubr.f32.mxu0 0.0
      %4096 = vmatmul.mubr.f32.gmra.mrb[0].mxu0 %v3436
      %v4097 = vpop.f32.mrb[0].mxu0
      %v4098 = vadd.f32 %v3009, %v4097
      %v4099 = vpop.f32.mrb[0].mxu0
      %4100 = vmatprep.mubr.f32.mxu0 0.0
      %4101 = vmatmul.mubr.f32.gmra.mrb[0].mxu0 %v3439
      %v4102 = vpop.f32.mrb[0].mxu0
      %v4103 = vadd.f32 %v3014, %v4102
      %v4104 = vpop.f32.mrb[0].mxu0
      %4105 = vmatprep.mubr.f32.mxu0 0.0
      %4106 = vmatmul.mubr.f32.gmra.mrb[0].mxu0 %v3442
      %v4107 = vpop.f32.mrb[0].mxu0
      %v4108 = vadd.f32 %v3019, %v4107
      %v4109 = vpop.f32.mrb[0].mxu0
      %4110 = vmatprep.mubr.f32.mxu0 0.0
      %4111 = vmatmul.mubr.f32.gmra.mrb[0].mxu0 %v3445
      %v4112 = vpop.f32.mrb[0].mxu0
      %v4113 = vadd.f32 %v3024, %v4112
      %v4114 = vpop.f32.mrb[0].mxu0
      %4115 = vmatprep.mubr.f32.mxu0 0.0
      %4116 = vmatmul.mubr.f32.gmra.mrb[0].mxu0 %v3448
      %v4117 = vpop.f32.mrb[0].mxu0
      %v4118 = vadd.f32 %v3029, %v4117
      %v4119 = vpop.f32.mrb[0].mxu0
      %4120 = vmatprep.mubr.f32.mxu0 0.0
      %4121 = vmatmul.mubr.f32.gmra.mrb[0].mxu0 %v3451
      %v4122 = vpop.f32.mrb[0].mxu0
      %v4123 = vadd.f32 %v3034, %v4122
      %v4124 = vpop.f32.mrb[0].mxu0
      %4125 = vmatprep.mubr.f32.mxu0 0.0
      %4126 = vmatmul.mubr.f32.gmra.mrb[0].mxu0 %v3454
      %v4127 = vpop.f32.mrb[0].mxu0
      %v4128 = vadd.f32 %v3039, %v4127
      %v4129 = vpop.f32.mrb[0].mxu0
      %4130 = vmatprep.mubr.f32.mxu0 0.0
      %4131 = vmatmul.mubr.f32.gmra.mrb[0].mxu0 %v3457
      %v4132 = vpop.f32.mrb[0].mxu0
      %v4133 = vadd.f32 %v3044, %v4132
      %v4134 = vpop.f32.mrb[0].mxu0
      %4135 = vmatprep.mubr.f32.mxu0 0.0
      %4136 = vmatmul.mubr.f32.gmra.mrb[0].mxu0 %v3460
      %v4137 = vpop.f32.mrb[0].mxu0
      %v4138 = vadd.f32 %v3049, %v4137
      %v4139 = vpop.f32.mrb[0].mxu0
      %4140 = vmatprep.mubr.f32.mxu0 0.0
      %4141 = vmatmul.mubr.f32.gmra.mrb[0].mxu0 %v3463
      %v4142 = vpop.f32.mrb[0].mxu0
      %v4143 = vadd.f32 %v3054, %v4142
      %v4144 = vpop.f32.mrb[0].mxu0
      %4145 = vmatprep.mubr.f32.mxu0 0.0
      %4146 = vmatmul.mubr.f32.gmra.mrb[0].mxu0 %v3466
      %v4147 = vpop.f32.mrb[0].mxu0
      %v4148 = vadd.f32 %v3059, %v4147
      %v4149 = vpop.f32.mrb[0].mxu0
      %4150 = vmatprep.mubr.f32.mxu0 0.0
      %4151 = vmatmul.mubr.f32.gmra.mrb[0].mxu0 %v3469
      %v4152 = vpop.f32.mrb[0].mxu0
      %v4153 = vadd.f32 %v3064, %v4152
      %v4154 = vpop.f32.mrb[0].mxu0
      %4155 = vmatprep.mubr.f32.mxu0 0.0
      %4156 = vmatmul.mubr.f32.gmra.mrb[0].mxu0 %v3472
      %v4157 = vpop.f32.mrb[0].mxu0
      %v4158 = vadd.f32 %v3069, %v4157
      %v4159 = vpop.f32.mrb[0].mxu0
      %4160 = vmatprep.mubr.f32.mxu0 0.0
      %4161 = vmatmul.mubr.f32.gmra.mrb[0].mxu0 %v3475
      %v4162 = vpop.f32.mrb[0].mxu0
      %v4163 = vadd.f32 %v3074, %v4162
      %v4164 = vpop.f32.mrb[0].mxu0
      %4165 = vmatprep.mubr.f32.mxu0 0.0
      %4166 = vmatmul.mubr.f32.gmra.mrb[0].mxu0 %v3478
      %v4167 = vpop.f32.mrb[0].mxu0
      %v4168 = vadd.f32 %v3079, %v4167
      %v4169 = vpop.f32.mrb[0].mxu0
      %4170 = vmatprep.mubr.f32.mxu0 0.0
      %4171 = vmatmul.mubr.f32.gmra.mrb[0].mxu0 %v3481
      %v4172 = vpop.f32.mrb[0].mxu0
      %v4173 = vadd.f32 %v3084, %v4172
      %v4174 = vpop.f32.mrb[0].mxu0
      %4175 = vmatprep.mubr.f32.mxu0 0.0
      %4176 = vmatmul.mubr.f32.gmra.mrb[0].mxu0 %v3484
      %v4177 = vpop.f32.mrb[0].mxu0
      %v4178 = vadd.f32 %v3089, %v4177
      %v4179 = vpop.f32.mrb[0].mxu0
      %4180 = vmatprep.mubr.f32.mxu0 0.0
      %4181 = vmatmul.mubr.f32.gmra.mrb[0].mxu0 %v3487
      %v4182 = vpop.f32.mrb[0].mxu0
      %v4183 = vadd.f32 %v3094, %v4182
      %v4184 = vpop.f32.mrb[0].mxu0
      %4185 = vmatprep.mubr.f32.mxu0 0.0
      %4186 = vmatmul.mubr.f32.gmra.mrb[0].mxu0 %v3490
      %v4187 = vpop.f32.mrb[0].mxu0
      %v4188 = vadd.f32 %v3099, %v4187
      %v4189 = vpop.f32.mrb[0].mxu0
      %4190 = vmatprep.mubr.f32.mxu0 0.0
      %4191 = vmatmul.mubr.f32.gmra.mrb[0].mxu0 %v3493
      %v4192 = vpop.f32.mrb[0].mxu0
      %v4193 = vadd.f32 %v3104, %v4192
      %v4194 = vpop.f32.mrb[0].mxu0
      %4195 = vmatprep.mubr.f32.mxu0 0.0
      %4196 = vmatmul.mubr.f32.gmra.mrb[0].mxu0 %v3496
      %v4197 = vpop.f32.mrb[0].mxu0
      %v4198 = vadd.f32 %v3109, %v4197
      %v4199 = vpop.f32.mrb[0].mxu0
      %4200 = vmatprep.mubr.f32.mxu0 0.0
      %4201 = vmatmul.mubr.f32.gmra.mrb[0].mxu0 %v3499
      %v4202 = vpop.f32.mrb[0].mxu0
      %v4203 = vadd.f32 %v3114, %v4202
      %v4204 = vpop.f32.mrb[0].mxu0
      %4205 = vdwg.mxu0
      %vm4206 = vcmask 261120
      %v4207 = vsel %vm4206, %v3568, -inf
      %v4208 = vrot.slane %v4207, 4
      %v4209 = vmax.f32 %v4207, %v4208
      %v4210 = vrot.slane %v4209, 2
      %v4211 = vmax.f32 %v4209, %v4210
      %v4212 = vrot.slane %v4211, 1
      %v4213 = vmax.f32 %v4211, %v4212
      %v4214 = vsel %vm4206, %v3573, -inf
      %v4215 = vrot.slane %v4214, 4
      %v4216 = vmax.f32 %v4214, %v4215
      %v4217 = vrot.slane %v4216, 2
      %v4218 = vmax.f32 %v4216, %v4217
      %v4219 = vrot.slane %v4218, 1
      %v4220 = vmax.f32 %v4218, %v4219
      %v4221 = vsel %vm4206, %v3578, -inf
      %v4222 = vrot.slane %v4221, 4
      %v4223 = vmax.f32 %v4221, %v4222
      %v4224 = vrot.slane %v4223, 2
      %v4225 = vmax.f32 %v4223, %v4224
      %v4226 = vrot.slane %v4225, 1
      %v4227 = vmax.f32 %v4225, %v4226
      %v4228 = vsel %vm4206, %v3583, -inf
      %v4229 = vrot.slane %v4228, 4
      %v4230 = vmax.f32 %v4228, %v4229
      %v4231 = vrot.slane %v4230, 2
      %v4232 = vmax.f32 %v4230, %v4231
      %v4233 = vrot.slane %v4232, 1
      %v4234 = vmax.f32 %v4232, %v4233
      %v4235 = vsel %vm4206, %v3588, -inf
      %v4236 = vrot.slane %v4235, 4
      %v4237 = vmax.f32 %v4235, %v4236
      %v4238 = vrot.slane %v4237, 2
      %v4239 = vmax.f32 %v4237, %v4238
      %v4240 = vrot.slane %v4239, 1
      %v4241 = vmax.f32 %v4239, %v4240
      %v4242 = vsel %vm4206, %v3593, -inf
      %v4243 = vrot.slane %v4242, 4
      %v4244 = vmax.f32 %v4242, %v4243
      %v4245 = vrot.slane %v4244, 2
      %v4246 = vmax.f32 %v4244, %v4245
      %v4247 = vrot.slane %v4246, 1
      %v4248 = vmax.f32 %v4246, %v4247
      %v4249 = vsel %vm4206, %v3598, -inf
      %v4250 = vrot.slane %v4249, 4
      %v4251 = vmax.f32 %v4249, %v4250
      %v4252 = vrot.slane %v4251, 2
      %v4253 = vmax.f32 %v4251, %v4252
      %v4254 = vrot.slane %v4253, 1
      %v4255 = vmax.f32 %v4253, %v4254
      %v4256 = vsel %vm4206, %v3603, -inf
      %v4257 = vrot.slane %v4256, 4
      %v4258 = vmax.f32 %v4256, %v4257
      %v4259 = vrot.slane %v4258, 2
      %v4260 = vmax.f32 %v4258, %v4259
      %v4261 = vrot.slane %v4260, 1
      %v4262 = vmax.f32 %v4260, %v4261
      %v4263 = vsel %vm4206, %v3608, -inf
      %v4264 = vrot.slane %v4263, 4
      %v4265 = vmax.f32 %v4263, %v4264
      %v4266 = vrot.slane %v4265, 2
      %v4267 = vmax.f32 %v4265, %v4266
      %v4268 = vrot.slane %v4267, 1
      %v4269 = vmax.f32 %v4267, %v4268
      %v4270 = vsel %vm4206, %v3613, -inf
      %v4271 = vrot.slane %v4270, 4
      %v4272 = vmax.f32 %v4270, %v4271
      %v4273 = vrot.slane %v4272, 2
      %v4274 = vmax.f32 %v4272, %v4273
      %v4275 = vrot.slane %v4274, 1
      %v4276 = vmax.f32 %v4274, %v4275
      %v4277 = vsel %vm4206, %v3618, -inf
      %v4278 = vrot.slane %v4277, 4
      %v4279 = vmax.f32 %v4277, %v4278
      %v4280 = vrot.slane %v4279, 2
      %v4281 = vmax.f32 %v4279, %v4280
      %v4282 = vrot.slane %v4281, 1
      %v4283 = vmax.f32 %v4281, %v4282
      %v4284 = vsel %vm4206, %v3623, -inf
      %v4285 = vrot.slane %v4284, 4
      %v4286 = vmax.f32 %v4284, %v4285
      %v4287 = vrot.slane %v4286, 2
      %v4288 = vmax.f32 %v4286, %v4287
      %v4289 = vrot.slane %v4288, 1
      %v4290 = vmax.f32 %v4288, %v4289
      %v4291 = vsel %vm4206, %v3628, -inf
      %v4292 = vrot.slane %v4291, 4
      %v4293 = vmax.f32 %v4291, %v4292
      %v4294 = vrot.slane %v4293, 2
      %v4295 = vmax.f32 %v4293, %v4294
      %v4296 = vrot.slane %v4295, 1
      %v4297 = vmax.f32 %v4295, %v4296
      %v4298 = vsel %vm4206, %v3633, -inf
      %v4299 = vrot.slane %v4298, 4
      %v4300 = vmax.f32 %v4298, %v4299
      %v4301 = vrot.slane %v4300, 2
      %v4302 = vmax.f32 %v4300, %v4301
      %v4303 = vrot.slane %v4302, 1
      %v4304 = vmax.f32 %v4302, %v4303
      %v4305 = vsel %vm4206, %v3638, -inf
      %v4306 = vrot.slane %v4305, 4
      %v4307 = vmax.f32 %v4305, %v4306
      %v4308 = vrot.slane %v4307, 2
      %v4309 = vmax.f32 %v4307, %v4308
      %v4310 = vrot.slane %v4309, 1
      %v4311 = vmax.f32 %v4309, %v4310
      %v4312 = vsel %vm4206, %v3643, -inf
      %v4313 = vrot.slane %v4312, 4
      %v4314 = vmax.f32 %v4312, %v4313
      %v4315 = vrot.slane %v4314, 2
      %v4316 = vmax.f32 %v4314, %v4315
      %v4317 = vrot.slane %v4316, 1
      %v4318 = vmax.f32 %v4316, %v4317
      %v4319 = vsel %vm4206, %v3648, -inf
      %v4320 = vrot.slane %v4319, 4
      %v4321 = vmax.f32 %v4319, %v4320
      %v4322 = vrot.slane %v4321, 2
      %v4323 = vmax.f32 %v4321, %v4322
      %v4324 = vrot.slane %v4323, 1
      %v4325 = vmax.f32 %v4323, %v4324
      %v4326 = vsel %vm4206, %v3653, -inf
      %v4327 = vrot.slane %v4326, 4
      %v4328 = vmax.f32 %v4326, %v4327
      %v4329 = vrot.slane %v4328, 2
      %v4330 = vmax.f32 %v4328, %v4329
      %v4331 = vrot.slane %v4330, 1
      %v4332 = vmax.f32 %v4330, %v4331
      %v4333 = vsel %vm4206, %v3658, -inf
      %v4334 = vrot.slane %v4333, 4
      %v4335 = vmax.f32 %v4333, %v4334
      %v4336 = vrot.slane %v4335, 2
      %v4337 = vmax.f32 %v4335, %v4336
      %v4338 = vrot.slane %v4337, 1
      %v4339 = vmax.f32 %v4337, %v4338
      %v4340 = vsel %vm4206, %v3663, -inf
      %v4341 = vrot.slane %v4340, 4
      %v4342 = vmax.f32 %v4340, %v4341
      %v4343 = vrot.slane %v4342, 2
      %v4344 = vmax.f32 %v4342, %v4343
      %v4345 = vrot.slane %v4344, 1
      %v4346 = vmax.f32 %v4344, %v4345
      %v4347 = vsel %vm4206, %v3668, -inf
      %v4348 = vrot.slane %v4347, 4
      %v4349 = vmax.f32 %v4347, %v4348
      %v4350 = vrot.slane %v4349, 2
      %v4351 = vmax.f32 %v4349, %v4350
      %v4352 = vrot.slane %v4351, 1
      %v4353 = vmax.f32 %v4351, %v4352
      %v4354 = vsel %vm4206, %v3673, -inf
      %v4355 = vrot.slane %v4354, 4
      %v4356 = vmax.f32 %v4354, %v4355
      %v4357 = vrot.slane %v4356, 2
      %v4358 = vmax.f32 %v4356, %v4357
      %v4359 = vrot.slane %v4358, 1
      %v4360 = vmax.f32 %v4358, %v4359
      %v4361 = vsel %vm4206, %v3678, -inf
      %v4362 = vrot.slane %v4361, 4
      %v4363 = vmax.f32 %v4361, %v4362
      %v4364 = vrot.slane %v4363, 2
      %v4365 = vmax.f32 %v4363, %v4364
      %v4366 = vrot.slane %v4365, 1
      %v4367 = vmax.f32 %v4365, %v4366
      %v4368 = vsel %vm4206, %v3683, -inf
      %v4369 = vrot.slane %v4368, 4
      %v4370 = vmax.f32 %v4368, %v4369
      %v4371 = vrot.slane %v4370, 2
      %v4372 = vmax.f32 %v4370, %v4371
      %v4373 = vrot.slane %v4372, 1
      %v4374 = vmax.f32 %v4372, %v4373
      %v4375 = vsel %vm4206, %v3688, -inf
      %v4376 = vrot.slane %v4375, 4
      %v4377 = vmax.f32 %v4375, %v4376
      %v4378 = vrot.slane %v4377, 2
      %v4379 = vmax.f32 %v4377, %v4378
      %v4380 = vrot.slane %v4379, 1
      %v4381 = vmax.f32 %v4379, %v4380
      %v4382 = vsel %vm4206, %v3693, -inf
      %v4383 = vrot.slane %v4382, 4
      %v4384 = vmax.f32 %v4382, %v4383
      %v4385 = vrot.slane %v4384, 2
      %v4386 = vmax.f32 %v4384, %v4385
      %v4387 = vrot.slane %v4386, 1
      %v4388 = vmax.f32 %v4386, %v4387
      %v4389 = vsel %vm4206, %v3698, -inf
      %v4390 = vrot.slane %v4389, 4
      %v4391 = vmax.f32 %v4389, %v4390
      %v4392 = vrot.slane %v4391, 2
      %v4393 = vmax.f32 %v4391, %v4392
      %v4394 = vrot.slane %v4393, 1
      %v4395 = vmax.f32 %v4393, %v4394
      %v4396 = vsel %vm4206, %v3703, -inf
      %v4397 = vrot.slane %v4396, 4
      %v4398 = vmax.f32 %v4396, %v4397
      %v4399 = vrot.slane %v4398, 2
      %v4400 = vmax.f32 %v4398, %v4399
      %v4401 = vrot.slane %v4400, 1
      %v4402 = vmax.f32 %v4400, %v4401
      %v4403 = vsel %vm4206, %v3708, -inf
      %v4404 = vrot.slane %v4403, 4
      %v4405 = vmax.f32 %v4403, %v4404
      %v4406 = vrot.slane %v4405, 2
      %v4407 = vmax.f32 %v4405, %v4406
      %v4408 = vrot.slane %v4407, 1
      %v4409 = vmax.f32 %v4407, %v4408
      %v4410 = vsel %vm4206, %v3713, -inf
      %v4411 = vrot.slane %v4410, 4
      %v4412 = vmax.f32 %v4410, %v4411
      %v4413 = vrot.slane %v4412, 2
      %v4414 = vmax.f32 %v4412, %v4413
      %v4415 = vrot.slane %v4414, 1
      %v4416 = vmax.f32 %v4414, %v4415
      %v4417 = vsel %vm4206, %v3718, -inf
      %v4418 = vrot.slane %v4417, 4
      %v4419 = vmax.f32 %v4417, %v4418
      %v4420 = vrot.slane %v4419, 2
      %v4421 = vmax.f32 %v4419, %v4420
      %v4422 = vrot.slane %v4421, 1
      %v4423 = vmax.f32 %v4421, %v4422
      %v4424 = vsel %vm4206, %v3723, -inf
      %v4425 = vrot.slane %v4424, 4
      %v4426 = vmax.f32 %v4424, %v4425
      %v4427 = vrot.slane %v4426, 2
      %v4428 = vmax.f32 %v4426, %v4427
      %v4429 = vrot.slane %v4428, 1
      %v4430 = vmax.f32 %v4428, %v4429
      %v4431 = vsel %vm4206, %v3728, -inf
      %v4432 = vrot.slane %v4431, 4
      %v4433 = vmax.f32 %v4431, %v4432
      %v4434 = vrot.slane %v4433, 2
      %v4435 = vmax.f32 %v4433, %v4434
      %v4436 = vrot.slane %v4435, 1
      %v4437 = vmax.f32 %v4435, %v4436
      %v4438 = vsel %vm4206, %v3733, -inf
      %v4439 = vrot.slane %v4438, 4
      %v4440 = vmax.f32 %v4438, %v4439
      %v4441 = vrot.slane %v4440, 2
      %v4442 = vmax.f32 %v4440, %v4441
      %v4443 = vrot.slane %v4442, 1
      %v4444 = vmax.f32 %v4442, %v4443
      %v4445 = vsel %vm4206, %v3738, -inf
      %v4446 = vrot.slane %v4445, 4
      %v4447 = vmax.f32 %v4445, %v4446
      %v4448 = vrot.slane %v4447, 2
      %v4449 = vmax.f32 %v4447, %v4448
      %v4450 = vrot.slane %v4449, 1
      %v4451 = vmax.f32 %v4449, %v4450
      %v4452 = vsel %vm4206, %v3743, -inf
      %v4453 = vrot.slane %v4452, 4
      %v4454 = vmax.f32 %v4452, %v4453
      %v4455 = vrot.slane %v4454, 2
      %v4456 = vmax.f32 %v4454, %v4455
      %v4457 = vrot.slane %v4456, 1
      %v4458 = vmax.f32 %v4456, %v4457
      %v4459 = vsel %vm4206, %v3748, -inf
      %v4460 = vrot.slane %v4459, 4
      %v4461 = vmax.f32 %v4459, %v4460
      %v4462 = vrot.slane %v4461, 2
      %v4463 = vmax.f32 %v4461, %v4462
      %v4464 = vrot.slane %v4463, 1
      %v4465 = vmax.f32 %v4463, %v4464
      %v4466 = vsel %vm4206, %v3753, -inf
      %v4467 = vrot.slane %v4466, 4
      %v4468 = vmax.f32 %v4466, %v4467
      %v4469 = vrot.slane %v4468, 2
      %v4470 = vmax.f32 %v4468, %v4469
      %v4471 = vrot.slane %v4470, 1
      %v4472 = vmax.f32 %v4470, %v4471
      %v4473 = vsel %vm4206, %v3758, -inf
      %v4474 = vrot.slane %v4473, 4
      %v4475 = vmax.f32 %v4473, %v4474
      %v4476 = vrot.slane %v4475, 2
      %v4477 = vmax.f32 %v4475, %v4476
      %v4478 = vrot.slane %v4477, 1
      %v4479 = vmax.f32 %v4477, %v4478
      %v4480 = vsel %vm4206, %v3763, -inf
      %v4481 = vrot.slane %v4480, 4
      %v4482 = vmax.f32 %v4480, %v4481
      %v4483 = vrot.slane %v4482, 2
      %v4484 = vmax.f32 %v4482, %v4483
      %v4485 = vrot.slane %v4484, 1
      %v4486 = vmax.f32 %v4484, %v4485
      %v4487 = vsel %vm4206, %v3768, -inf
      %v4488 = vrot.slane %v4487, 4
      %v4489 = vmax.f32 %v4487, %v4488
      %v4490 = vrot.slane %v4489, 2
      %v4491 = vmax.f32 %v4489, %v4490
      %v4492 = vrot.slane %v4491, 1
      %v4493 = vmax.f32 %v4491, %v4492
      %v4494 = vsel %vm4206, %v3773, -inf
      %v4495 = vrot.slane %v4494, 4
      %v4496 = vmax.f32 %v4494, %v4495
      %v4497 = vrot.slane %v4496, 2
      %v4498 = vmax.f32 %v4496, %v4497
      %v4499 = vrot.slane %v4498, 1
      %v4500 = vmax.f32 %v4498, %v4499
      %v4501 = vsel %vm4206, %v3778, -inf
      %v4502 = vrot.slane %v4501, 4
      %v4503 = vmax.f32 %v4501, %v4502
      %v4504 = vrot.slane %v4503, 2
      %v4505 = vmax.f32 %v4503, %v4504
      %v4506 = vrot.slane %v4505, 1
      %v4507 = vmax.f32 %v4505, %v4506
      %v4508 = vsel %vm4206, %v3783, -inf
      %v4509 = vrot.slane %v4508, 4
      %v4510 = vmax.f32 %v4508, %v4509
      %v4511 = vrot.slane %v4510, 2
      %v4512 = vmax.f32 %v4510, %v4511
      %v4513 = vrot.slane %v4512, 1
      %v4514 = vmax.f32 %v4512, %v4513
      %v4515 = vsel %vm4206, %v3788, -inf
      %v4516 = vrot.slane %v4515, 4
      %v4517 = vmax.f32 %v4515, %v4516
      %v4518 = vrot.slane %v4517, 2
      %v4519 = vmax.f32 %v4517, %v4518
      %v4520 = vrot.slane %v4519, 1
      %v4521 = vmax.f32 %v4519, %v4520
      %v4522 = vsel %vm4206, %v3793, -inf
      %v4523 = vrot.slane %v4522, 4
      %v4524 = vmax.f32 %v4522, %v4523
      %v4525 = vrot.slane %v4524, 2
      %v4526 = vmax.f32 %v4524, %v4525
      %v4527 = vrot.slane %v4526, 1
      %v4528 = vmax.f32 %v4526, %v4527
      %v4529 = vsel %vm4206, %v3798, -inf
      %v4530 = vrot.slane %v4529, 4
      %v4531 = vmax.f32 %v4529, %v4530
      %v4532 = vrot.slane %v4531, 2
      %v4533 = vmax.f32 %v4531, %v4532
      %v4534 = vrot.slane %v4533, 1
      %v4535 = vmax.f32 %v4533, %v4534
      %v4536 = vsel %vm4206, %v3803, -inf
      %v4537 = vrot.slane %v4536, 4
      %v4538 = vmax.f32 %v4536, %v4537
      %v4539 = vrot.slane %v4538, 2
      %v4540 = vmax.f32 %v4538, %v4539
      %v4541 = vrot.slane %v4540, 1
      %v4542 = vmax.f32 %v4540, %v4541
      %v4543 = vsel %vm4206, %v3808, -inf
      %v4544 = vrot.slane %v4543, 4
      %v4545 = vmax.f32 %v4543, %v4544
      %v4546 = vrot.slane %v4545, 2
      %v4547 = vmax.f32 %v4545, %v4546
      %v4548 = vrot.slane %v4547, 1
      %v4549 = vmax.f32 %v4547, %v4548
      %v4550 = vsel %vm4206, %v3813, -inf
      %v4551 = vrot.slane %v4550, 4
      %v4552 = vmax.f32 %v4550, %v4551
      %v4553 = vrot.slane %v4552, 2
      %v4554 = vmax.f32 %v4552, %v4553
      %v4555 = vrot.slane %v4554, 1
      %v4556 = vmax.f32 %v4554, %v4555
      %v4557 = vsel %vm4206, %v3818, -inf
      %v4558 = vrot.slane %v4557, 4
      %v4559 = vmax.f32 %v4557, %v4558
      %v4560 = vrot.slane %v4559, 2
      %v4561 = vmax.f32 %v4559, %v4560
      %v4562 = vrot.slane %v4561, 1
      %v4563 = vmax.f32 %v4561, %v4562
      %v4564 = vsel %vm4206, %v3823, -inf
      %v4565 = vrot.slane %v4564, 4
      %v4566 = vmax.f32 %v4564, %v4565
      %v4567 = vrot.slane %v4566, 2
      %v4568 = vmax.f32 %v4566, %v4567
      %v4569 = vrot.slane %v4568, 1
      %v4570 = vmax.f32 %v4568, %v4569
      %v4571 = vsel %vm4206, %v3828, -inf
      %v4572 = vrot.slane %v4571, 4
      %v4573 = vmax.f32 %v4571, %v4572
      %v4574 = vrot.slane %v4573, 2
      %v4575 = vmax.f32 %v4573, %v4574
      %v4576 = vrot.slane %v4575, 1
      %v4577 = vmax.f32 %v4575, %v4576
      %v4578 = vsel %vm4206, %v3833, -inf
      %v4579 = vrot.slane %v4578, 4
      %v4580 = vmax.f32 %v4578, %v4579
      %v4581 = vrot.slane %v4580, 2
      %v4582 = vmax.f32 %v4580, %v4581
      %v4583 = vrot.slane %v4582, 1
      %v4584 = vmax.f32 %v4582, %v4583
      %v4585 = vsel %vm4206, %v3838, -inf
      %v4586 = vrot.slane %v4585, 4
      %v4587 = vmax.f32 %v4585, %v4586
      %v4588 = vrot.slane %v4587, 2
      %v4589 = vmax.f32 %v4587, %v4588
      %v4590 = vrot.slane %v4589, 1
      %v4591 = vmax.f32 %v4589, %v4590
      %v4592 = vsel %vm4206, %v3843, -inf
      %v4593 = vrot.slane %v4592, 4
      %v4594 = vmax.f32 %v4592, %v4593
      %v4595 = vrot.slane %v4594, 2
      %v4596 = vmax.f32 %v4594, %v4595
      %v4597 = vrot.slane %v4596, 1
      %v4598 = vmax.f32 %v4596, %v4597
      %v4599 = vsel %vm4206, %v3848, -inf
      %v4600 = vrot.slane %v4599, 4
      %v4601 = vmax.f32 %v4599, %v4600
      %v4602 = vrot.slane %v4601, 2
      %v4603 = vmax.f32 %v4601, %v4602
      %v4604 = vrot.slane %v4603, 1
      %v4605 = vmax.f32 %v4603, %v4604
      %v4606 = vsel %vm4206, %v3853, -inf
      %v4607 = vrot.slane %v4606, 4
      %v4608 = vmax.f32 %v4606, %v4607
      %v4609 = vrot.slane %v4608, 2
      %v4610 = vmax.f32 %v4608, %v4609
      %v4611 = vrot.slane %v4610, 1
      %v4612 = vmax.f32 %v4610, %v4611
      %v4613 = vsel %vm4206, %v3858, -inf
      %v4614 = vrot.slane %v4613, 4
      %v4615 = vmax.f32 %v4613, %v4614
      %v4616 = vrot.slane %v4615, 2
      %v4617 = vmax.f32 %v4615, %v4616
      %v4618 = vrot.slane %v4617, 1
      %v4619 = vmax.f32 %v4617, %v4618
      %v4620 = vsel %vm4206, %v3863, -inf
      %v4621 = vrot.slane %v4620, 4
      %v4622 = vmax.f32 %v4620, %v4621
      %v4623 = vrot.slane %v4622, 2
      %v4624 = vmax.f32 %v4622, %v4623
      %v4625 = vrot.slane %v4624, 1
      %v4626 = vmax.f32 %v4624, %v4625
      %v4627 = vsel %vm4206, %v3868, -inf
      %v4628 = vrot.slane %v4627, 4
      %v4629 = vmax.f32 %v4627, %v4628
      %v4630 = vrot.slane %v4629, 2
      %v4631 = vmax.f32 %v4629, %v4630
      %v4632 = vrot.slane %v4631, 1
      %v4633 = vmax.f32 %v4631, %v4632
      %v4634 = vsel %vm4206, %v3873, -inf
      %v4635 = vrot.slane %v4634, 4
      %v4636 = vmax.f32 %v4634, %v4635
      %v4637 = vrot.slane %v4636, 2
      %v4638 = vmax.f32 %v4636, %v4637
      %v4639 = vrot.slane %v4638, 1
      %v4640 = vmax.f32 %v4638, %v4639
      %v4641 = vsel %vm4206, %v3878, -inf
      %v4642 = vrot.slane %v4641, 4
      %v4643 = vmax.f32 %v4641, %v4642
      %v4644 = vrot.slane %v4643, 2
      %v4645 = vmax.f32 %v4643, %v4644
      %v4646 = vrot.slane %v4645, 1
      %v4647 = vmax.f32 %v4645, %v4646
      %v4648 = vsel %vm4206, %v3883, -inf
      %v4649 = vrot.slane %v4648, 4
      %v4650 = vmax.f32 %v4648, %v4649
      %v4651 = vrot.slane %v4650, 2
      %v4652 = vmax.f32 %v4650, %v4651
      %v4653 = vrot.slane %v4652, 1
      %v4654 = vmax.f32 %v4652, %v4653
      %v4655 = vsel %vm4206, %v3888, -inf
      %v4656 = vrot.slane %v4655, 4
      %v4657 = vmax.f32 %v4655, %v4656
      %v4658 = vrot.slane %v4657, 2
      %v4659 = vmax.f32 %v4657, %v4658
      %v4660 = vrot.slane %v4659, 1
      %v4661 = vmax.f32 %v4659, %v4660
      %v4662 = vsel %vm4206, %v3893, -inf
      %v4663 = vrot.slane %v4662, 4
      %v4664 = vmax.f32 %v4662, %v4663
      %v4665 = vrot.slane %v4664, 2
      %v4666 = vmax.f32 %v4664, %v4665
      %v4667 = vrot.slane %v4666, 1
      %v4668 = vmax.f32 %v4666, %v4667
      %v4669 = vsel %vm4206, %v3898, -inf
      %v4670 = vrot.slane %v4669, 4
      %v4671 = vmax.f32 %v4669, %v4670
      %v4672 = vrot.slane %v4671, 2
      %v4673 = vmax.f32 %v4671, %v4672
      %v4674 = vrot.slane %v4673, 1
      %v4675 = vmax.f32 %v4673, %v4674
      %v4676 = vsel %vm4206, %v3903, -inf
      %v4677 = vrot.slane %v4676, 4
      %v4678 = vmax.f32 %v4676, %v4677
      %v4679 = vrot.slane %v4678, 2
      %v4680 = vmax.f32 %v4678, %v4679
      %v4681 = vrot.slane %v4680, 1
      %v4682 = vmax.f32 %v4680, %v4681
      %v4683 = vsel %vm4206, %v3908, -inf
      %v4684 = vrot.slane %v4683, 4
      %v4685 = vmax.f32 %v4683, %v4684
      %v4686 = vrot.slane %v4685, 2
      %v4687 = vmax.f32 %v4685, %v4686
      %v4688 = vrot.slane %v4687, 1
      %v4689 = vmax.f32 %v4687, %v4688
      %v4690 = vsel %vm4206, %v3913, -inf
      %v4691 = vrot.slane %v4690, 4
      %v4692 = vmax.f32 %v4690, %v4691
      %v4693 = vrot.slane %v4692, 2
      %v4694 = vmax.f32 %v4692, %v4693
      %v4695 = vrot.slane %v4694, 1
      %v4696 = vmax.f32 %v4694, %v4695
      %v4697 = vsel %vm4206, %v3918, -inf
      %v4698 = vrot.slane %v4697, 4
      %v4699 = vmax.f32 %v4697, %v4698
      %v4700 = vrot.slane %v4699, 2
      %v4701 = vmax.f32 %v4699, %v4700
      %v4702 = vrot.slane %v4701, 1
      %v4703 = vmax.f32 %v4701, %v4702
      %v4704 = vsel %vm4206, %v3923, -inf
      %v4705 = vrot.slane %v4704, 4
      %v4706 = vmax.f32 %v4704, %v4705
      %v4707 = vrot.slane %v4706, 2
      %v4708 = vmax.f32 %v4706, %v4707
      %v4709 = vrot.slane %v4708, 1
      %v4710 = vmax.f32 %v4708, %v4709
      %v4711 = vsel %vm4206, %v3928, -inf
      %v4712 = vrot.slane %v4711, 4
      %v4713 = vmax.f32 %v4711, %v4712
      %v4714 = vrot.slane %v4713, 2
      %v4715 = vmax.f32 %v4713, %v4714
      %v4716 = vrot.slane %v4715, 1
      %v4717 = vmax.f32 %v4715, %v4716
      %v4718 = vsel %vm4206, %v3933, -inf
      %v4719 = vrot.slane %v4718, 4
      %v4720 = vmax.f32 %v4718, %v4719
      %v4721 = vrot.slane %v4720, 2
      %v4722 = vmax.f32 %v4720, %v4721
      %v4723 = vrot.slane %v4722, 1
      %v4724 = vmax.f32 %v4722, %v4723
      %v4725 = vsel %vm4206, %v3938, -inf
      %v4726 = vrot.slane %v4725, 4
      %v4727 = vmax.f32 %v4725, %v4726
      %v4728 = vrot.slane %v4727, 2
      %v4729 = vmax.f32 %v4727, %v4728
      %v4730 = vrot.slane %v4729, 1
      %v4731 = vmax.f32 %v4729, %v4730
      %v4732 = vsel %vm4206, %v3943, -inf
      %v4733 = vrot.slane %v4732, 4
      %v4734 = vmax.f32 %v4732, %v4733
      %v4735 = vrot.slane %v4734, 2
      %v4736 = vmax.f32 %v4734, %v4735
      %v4737 = vrot.slane %v4736, 1
      %v4738 = vmax.f32 %v4736, %v4737
      %v4739 = vsel %vm4206, %v3948, -inf
      %v4740 = vrot.slane %v4739, 4
      %v4741 = vmax.f32 %v4739, %v4740
      %v4742 = vrot.slane %v4741, 2
      %v4743 = vmax.f32 %v4741, %v4742
      %v4744 = vrot.slane %v4743, 1
      %v4745 = vmax.f32 %v4743, %v4744
      %v4746 = vsel %vm4206, %v3953, -inf
      %v4747 = vrot.slane %v4746, 4
      %v4748 = vmax.f32 %v4746, %v4747
      %v4749 = vrot.slane %v4748, 2
      %v4750 = vmax.f32 %v4748, %v4749
      %v4751 = vrot.slane %v4750, 1
      %v4752 = vmax.f32 %v4750, %v4751
      %v4753 = vsel %vm4206, %v3958, -inf
      %v4754 = vrot.slane %v4753, 4
      %v4755 = vmax.f32 %v4753, %v4754
      %v4756 = vrot.slane %v4755, 2
      %v4757 = vmax.f32 %v4755, %v4756
      %v4758 = vrot.slane %v4757, 1
      %v4759 = vmax.f32 %v4757, %v4758
      %v4760 = vsel %vm4206, %v3963, -inf
      %v4761 = vrot.slane %v4760, 4
      %v4762 = vmax.f32 %v4760, %v4761
      %v4763 = vrot.slane %v4762, 2
      %v4764 = vmax.f32 %v4762, %v4763
      %v4765 = vrot.slane %v4764, 1
      %v4766 = vmax.f32 %v4764, %v4765
      %v4767 = vsel %vm4206, %v3968, -inf
      %v4768 = vrot.slane %v4767, 4
      %v4769 = vmax.f32 %v4767, %v4768
      %v4770 = vrot.slane %v4769, 2
      %v4771 = vmax.f32 %v4769, %v4770
      %v4772 = vrot.slane %v4771, 1
      %v4773 = vmax.f32 %v4771, %v4772
      %v4774 = vsel %vm4206, %v3973, -inf
      %v4775 = vrot.slane %v4774, 4
      %v4776 = vmax.f32 %v4774, %v4775
      %v4777 = vrot.slane %v4776, 2
      %v4778 = vmax.f32 %v4776, %v4777
      %v4779 = vrot.slane %v4778, 1
      %v4780 = vmax.f32 %v4778, %v4779
      %v4781 = vsel %vm4206, %v3978, -inf
      %v4782 = vrot.slane %v4781, 4
      %v4783 = vmax.f32 %v4781, %v4782
      %v4784 = vrot.slane %v4783, 2
      %v4785 = vmax.f32 %v4783, %v4784
      %v4786 = vrot.slane %v4785, 1
      %v4787 = vmax.f32 %v4785, %v4786
      %v4788 = vsel %vm4206, %v3983, -inf
      %v4789 = vrot.slane %v4788, 4
      %v4790 = vmax.f32 %v4788, %v4789
      %v4791 = vrot.slane %v4790, 2
      %v4792 = vmax.f32 %v4790, %v4791
      %v4793 = vrot.slane %v4792, 1
      %v4794 = vmax.f32 %v4792, %v4793
      %v4795 = vsel %vm4206, %v3988, -inf
      %v4796 = vrot.slane %v4795, 4
      %v4797 = vmax.f32 %v4795, %v4796
      %v4798 = vrot.slane %v4797, 2
      %v4799 = vmax.f32 %v4797, %v4798
      %v4800 = vrot.slane %v4799, 1
      %v4801 = vmax.f32 %v4799, %v4800
      %v4802 = vsel %vm4206, %v3993, -inf
      %v4803 = vrot.slane %v4802, 4
      %v4804 = vmax.f32 %v4802, %v4803
      %v4805 = vrot.slane %v4804, 2
      %v4806 = vmax.f32 %v4804, %v4805
      %v4807 = vrot.slane %v4806, 1
      %v4808 = vmax.f32 %v4806, %v4807
      %v4809 = vsel %vm4206, %v3998, -inf
      %v4810 = vrot.slane %v4809, 4
      %v4811 = vmax.f32 %v4809, %v4810
      %v4812 = vrot.slane %v4811, 2
      %v4813 = vmax.f32 %v4811, %v4812
      %v4814 = vrot.slane %v4813, 1
      %v4815 = vmax.f32 %v4813, %v4814
      %v4816 = vsel %vm4206, %v4003, -inf
      %v4817 = vrot.slane %v4816, 4
      %v4818 = vmax.f32 %v4816, %v4817
      %v4819 = vrot.slane %v4818, 2
      %v4820 = vmax.f32 %v4818, %v4819
      %v4821 = vrot.slane %v4820, 1
      %v4822 = vmax.f32 %v4820, %v4821
      %v4823 = vsel %vm4206, %v4008, -inf
      %v4824 = vrot.slane %v4823, 4
      %v4825 = vmax.f32 %v4823, %v4824
      %v4826 = vrot.slane %v4825, 2
      %v4827 = vmax.f32 %v4825, %v4826
      %v4828 = vrot.slane %v4827, 1
      %v4829 = vmax.f32 %v4827, %v4828
      %v4830 = vsel %vm4206, %v4013, -inf
      %v4831 = vrot.slane %v4830, 4
      %v4832 = vmax.f32 %v4830, %v4831
      %v4833 = vrot.slane %v4832, 2
      %v4834 = vmax.f32 %v4832, %v4833
      %v4835 = vrot.slane %v4834, 1
      %v4836 = vmax.f32 %v4834, %v4835
      %v4837 = vsel %vm4206, %v4018, -inf
      %v4838 = vrot.slane %v4837, 4
      %v4839 = vmax.f32 %v4837, %v4838
      %v4840 = vrot.slane %v4839, 2
      %v4841 = vmax.f32 %v4839, %v4840
      %v4842 = vrot.slane %v4841, 1
      %v4843 = vmax.f32 %v4841, %v4842
      %v4844 = vsel %vm4206, %v4023, -inf
      %v4845 = vrot.slane %v4844, 4
      %v4846 = vmax.f32 %v4844, %v4845
      %v4847 = vrot.slane %v4846, 2
      %v4848 = vmax.f32 %v4846, %v4847
      %v4849 = vrot.slane %v4848, 1
      %v4850 = vmax.f32 %v4848, %v4849
      %v4851 = vsel %vm4206, %v4028, -inf
      %v4852 = vrot.slane %v4851, 4
      %v4853 = vmax.f32 %v4851, %v4852
      %v4854 = vrot.slane %v4853, 2
      %v4855 = vmax.f32 %v4853, %v4854
      %v4856 = vrot.slane %v4855, 1
      %v4857 = vmax.f32 %v4855, %v4856
      %v4858 = vsel %vm4206, %v4033, -inf
      %v4859 = vrot.slane %v4858, 4
      %v4860 = vmax.f32 %v4858, %v4859
      %v4861 = vrot.slane %v4860, 2
      %v4862 = vmax.f32 %v4860, %v4861
      %v4863 = vrot.slane %v4862, 1
      %v4864 = vmax.f32 %v4862, %v4863
      %v4865 = vsel %vm4206, %v4038, -inf
      %v4866 = vrot.slane %v4865, 4
      %v4867 = vmax.f32 %v4865, %v4866
      %v4868 = vrot.slane %v4867, 2
      %v4869 = vmax.f32 %v4867, %v4868
      %v4870 = vrot.slane %v4869, 1
      %v4871 = vmax.f32 %v4869, %v4870
      %v4872 = vsel %vm4206, %v4043, -inf
      %v4873 = vrot.slane %v4872, 4
      %v4874 = vmax.f32 %v4872, %v4873
      %v4875 = vrot.slane %v4874, 2
      %v4876 = vmax.f32 %v4874, %v4875
      %v4877 = vrot.slane %v4876, 1
      %v4878 = vmax.f32 %v4876, %v4877
      %v4879 = vsel %vm4206, %v4048, -inf
      %v4880 = vrot.slane %v4879, 4
      %v4881 = vmax.f32 %v4879, %v4880
      %v4882 = vrot.slane %v4881, 2
      %v4883 = vmax.f32 %v4881, %v4882
      %v4884 = vrot.slane %v4883, 1
      %v4885 = vmax.f32 %v4883, %v4884
      %v4886 = vsel %vm4206, %v4053, -inf
      %v4887 = vrot.slane %v4886, 4
      %v4888 = vmax.f32 %v4886, %v4887
      %v4889 = vrot.slane %v4888, 2
      %v4890 = vmax.f32 %v4888, %v4889
      %v4891 = vrot.slane %v4890, 1
      %v4892 = vmax.f32 %v4890, %v4891
      %v4893 = vsel %vm4206, %v4058, -inf
      %v4894 = vrot.slane %v4893, 4
      %v4895 = vmax.f32 %v4893, %v4894
      %v4896 = vrot.slane %v4895, 2
      %v4897 = vmax.f32 %v4895, %v4896
      %v4898 = vrot.slane %v4897, 1
      %v4899 = vmax.f32 %v4897, %v4898
      %v4900 = vsel %vm4206, %v4063, -inf
      %v4901 = vrot.slane %v4900, 4
      %v4902 = vmax.f32 %v4900, %v4901
      %v4903 = vrot.slane %v4902, 2
      %v4904 = vmax.f32 %v4902, %v4903
      %v4905 = vrot.slane %v4904, 1
      %v4906 = vmax.f32 %v4904, %v4905
      %v4907 = vsel %vm4206, %v4068, -inf
      %v4908 = vrot.slane %v4907, 4
      %v4909 = vmax.f32 %v4907, %v4908
      %v4910 = vrot.slane %v4909, 2
      %v4911 = vmax.f32 %v4909, %v4910
      %v4912 = vrot.slane %v4911, 1
      %v4913 = vmax.f32 %v4911, %v4912
      %v4914 = vsel %vm4206, %v4073, -inf
      %v4915 = vrot.slane %v4914, 4
      %v4916 = vmax.f32 %v4914, %v4915
      %v4917 = vrot.slane %v4916, 2
      %v4918 = vmax.f32 %v4916, %v4917
      %v4919 = vrot.slane %v4918, 1
      %v4920 = vmax.f32 %v4918, %v4919
      %v4921 = vsel %vm4206, %v4078, -inf
      %v4922 = vrot.slane %v4921, 4
      %v4923 = vmax.f32 %v4921, %v4922
      %v4924 = vrot.slane %v4923, 2
      %v4925 = vmax.f32 %v4923, %v4924
      %v4926 = vrot.slane %v4925, 1
      %v4927 = vmax.f32 %v4925, %v4926
      %v4928 = vsel %vm4206, %v4083, -inf
      %v4929 = vrot.slane %v4928, 4
      %v4930 = vmax.f32 %v4928, %v4929
      %v4931 = vrot.slane %v4930, 2
      %v4932 = vmax.f32 %v4930, %v4931
      %v4933 = vrot.slane %v4932, 1
      %v4934 = vmax.f32 %v4932, %v4933
      %v4935 = vsel %vm4206, %v4088, -inf
      %v4936 = vrot.slane %v4935, 4
      %v4937 = vmax.f32 %v4935, %v4936
      %v4938 = vrot.slane %v4937, 2
      %v4939 = vmax.f32 %v4937, %v4938
      %v4940 = vrot.slane %v4939, 1
      %v4941 = vmax.f32 %v4939, %v4940
      %v4942 = vsel %vm4206, %v4093, -inf
      %v4943 = vrot.slane %v4942, 4
      %v4944 = vmax.f32 %v4942, %v4943
      %v4945 = vrot.slane %v4944, 2
      %v4946 = vmax.f32 %v4944, %v4945
      %v4947 = vrot.slane %v4946, 1
      %v4948 = vmax.f32 %v4946, %v4947
      %v4949 = vsel %vm4206, %v4098, -inf
      %v4950 = vrot.slane %v4949, 4
      %v4951 = vmax.f32 %v4949, %v4950
      %v4952 = vrot.slane %v4951, 2
      %v4953 = vmax.f32 %v4951, %v4952
      %v4954 = vrot.slane %v4953, 1
      %v4955 = vmax.f32 %v4953, %v4954
      %v4956 = vsel %vm4206, %v4103, -inf
      %v4957 = vrot.slane %v4956, 4
      %v4958 = vmax.f32 %v4956, %v4957
      %v4959 = vrot.slane %v4958, 2
      %v4960 = vmax.f32 %v4958, %v4959
      %v4961 = vrot.slane %v4960, 1
      %v4962 = vmax.f32 %v4960, %v4961
      %v4963 = vsel %vm4206, %v4108, -inf
      %v4964 = vrot.slane %v4963, 4
      %v4965 = vmax.f32 %v4963, %v4964
      %v4966 = vrot.slane %v4965, 2
      %v4967 = vmax.f32 %v4965, %v4966
      %v4968 = vrot.slane %v4967, 1
      %v4969 = vmax.f32 %v4967, %v4968
      %v4970 = vsel %vm4206, %v4113, -inf
      %v4971 = vrot.slane %v4970, 4
      %v4972 = vmax.f32 %v4970, %v4971
      %v4973 = vrot.slane %v4972, 2
      %v4974 = vmax.f32 %v4972, %v4973
      %v4975 = vrot.slane %v4974, 1
      %v4976 = vmax.f32 %v4974, %v4975
      %v4977 = vsel %vm4206, %v4118, -inf
      %v4978 = vrot.slane %v4977, 4
      %v4979 = vmax.f32 %v4977, %v4978
      %v4980 = vrot.slane %v4979, 2
      %v4981 = vmax.f32 %v4979, %v4980
      %v4982 = vrot.slane %v4981, 1
      %v4983 = vmax.f32 %v4981, %v4982
      %v4984 = vsel %vm4206, %v4123, -inf
      %v4985 = vrot.slane %v4984, 4
      %v4986 = vmax.f32 %v4984, %v4985
      %v4987 = vrot.slane %v4986, 2
      %v4988 = vmax.f32 %v4986, %v4987
      %v4989 = vrot.slane %v4988, 1
      %v4990 = vmax.f32 %v4988, %v4989
      %v4991 = vsel %vm4206, %v4128, -inf
      %v4992 = vrot.slane %v4991, 4
      %v4993 = vmax.f32 %v4991, %v4992
      %v4994 = vrot.slane %v4993, 2
      %v4995 = vmax.f32 %v4993, %v4994
      %v4996 = vrot.slane %v4995, 1
      %v4997 = vmax.f32 %v4995, %v4996
      %v4998 = vsel %vm4206, %v4133, -inf
      %v4999 = vrot.slane %v4998, 4
      %v5000 = vmax.f32 %v4998, %v4999
      %v5001 = vrot.slane %v5000, 2
      %v5002 = vmax.f32 %v5000, %v5001
      %v5003 = vrot.slane %v5002, 1
      %v5004 = vmax.f32 %v5002, %v5003
      %v5005 = vsel %vm4206, %v4138, -inf
      %v5006 = vrot.slane %v5005, 4
      %v5007 = vmax.f32 %v5005, %v5006
      %v5008 = vrot.slane %v5007, 2
      %v5009 = vmax.f32 %v5007, %v5008
      %v5010 = vrot.slane %v5009, 1
      %v5011 = vmax.f32 %v5009, %v5010
      %v5012 = vsel %vm4206, %v4143, -inf
      %v5013 = vrot.slane %v5012, 4
      %v5014 = vmax.f32 %v5012, %v5013
      %v5015 = vrot.slane %v5014, 2
      %v5016 = vmax.f32 %v5014, %v5015
      %v5017 = vrot.slane %v5016, 1
      %v5018 = vmax.f32 %v5016, %v5017
      %v5019 = vsel %vm4206, %v4148, -inf
      %v5020 = vrot.slane %v5019, 4
      %v5021 = vmax.f32 %v5019, %v5020
      %v5022 = vrot.slane %v5021, 2
      %v5023 = vmax.f32 %v5021, %v5022
      %v5024 = vrot.slane %v5023, 1
      %v5025 = vmax.f32 %v5023, %v5024
      %v5026 = vsel %vm4206, %v4153, -inf
      %v5027 = vrot.slane %v5026, 4
      %v5028 = vmax.f32 %v5026, %v5027
      %v5029 = vrot.slane %v5028, 2
      %v5030 = vmax.f32 %v5028, %v5029
      %v5031 = vrot.slane %v5030, 1
      %v5032 = vmax.f32 %v5030, %v5031
      %v5033 = vsel %vm4206, %v4158, -inf
      %v5034 = vrot.slane %v5033, 4
      %v5035 = vmax.f32 %v5033, %v5034
      %v5036 = vrot.slane %v5035, 2
      %v5037 = vmax.f32 %v5035, %v5036
      %v5038 = vrot.slane %v5037, 1
      %v5039 = vmax.f32 %v5037, %v5038
      %v5040 = vsel %vm4206, %v4163, -inf
      %v5041 = vrot.slane %v5040, 4
      %v5042 = vmax.f32 %v5040, %v5041
      %v5043 = vrot.slane %v5042, 2
      %v5044 = vmax.f32 %v5042, %v5043
      %v5045 = vrot.slane %v5044, 1
      %v5046 = vmax.f32 %v5044, %v5045
      %v5047 = vsel %vm4206, %v4168, -inf
      %v5048 = vrot.slane %v5047, 4
      %v5049 = vmax.f32 %v5047, %v5048
      %v5050 = vrot.slane %v5049, 2
      %v5051 = vmax.f32 %v5049, %v5050
      %v5052 = vrot.slane %v5051, 1
      %v5053 = vmax.f32 %v5051, %v5052
      %v5054 = vsel %vm4206, %v4173, -inf
      %v5055 = vrot.slane %v5054, 4
      %v5056 = vmax.f32 %v5054, %v5055
      %v5057 = vrot.slane %v5056, 2
      %v5058 = vmax.f32 %v5056, %v5057
      %v5059 = vrot.slane %v5058, 1
      %v5060 = vmax.f32 %v5058, %v5059
      %v5061 = vsel %vm4206, %v4178, -inf
      %v5062 = vrot.slane %v5061, 4
      %v5063 = vmax.f32 %v5061, %v5062
      %v5064 = vrot.slane %v5063, 2
      %v5065 = vmax.f32 %v5063, %v5064
      %v5066 = vrot.slane %v5065, 1
      %v5067 = vmax.f32 %v5065, %v5066
      %v5068 = vsel %vm4206, %v4183, -inf
      %v5069 = vrot.slane %v5068, 4
      %v5070 = vmax.f32 %v5068, %v5069
      %v5071 = vrot.slane %v5070, 2
      %v5072 = vmax.f32 %v5070, %v5071
      %v5073 = vrot.slane %v5072, 1
      %v5074 = vmax.f32 %v5072, %v5073
      %v5075 = vsel %vm4206, %v4188, -inf
      %v5076 = vrot.slane %v5075, 4
      %v5077 = vmax.f32 %v5075, %v5076
      %v5078 = vrot.slane %v5077, 2
      %v5079 = vmax.f32 %v5077, %v5078
      %v5080 = vrot.slane %v5079, 1
      %v5081 = vmax.f32 %v5079, %v5080
      %v5082 = vsel %vm4206, %v4193, -inf
      %v5083 = vrot.slane %v5082, 4
      %v5084 = vmax.f32 %v5082, %v5083
      %v5085 = vrot.slane %v5084, 2
      %v5086 = vmax.f32 %v5084, %v5085
      %v5087 = vrot.slane %v5086, 1
      %v5088 = vmax.f32 %v5086, %v5087
      %v5089 = vsel %vm4206, %v4198, -inf
      %v5090 = vrot.slane %v5089, 4
      %v5091 = vmax.f32 %v5089, %v5090
      %v5092 = vrot.slane %v5091, 2
      %v5093 = vmax.f32 %v5091, %v5092
      %v5094 = vrot.slane %v5093, 1
      %v5095 = vmax.f32 %v5093, %v5094
      %v5096 = vsel %vm4206, %v4203, -inf
      %v5097 = vrot.slane %v5096, 4
      %v5098 = vmax.f32 %v5096, %v5097
      %v5099 = vrot.slane %v5098, 2
      %v5100 = vmax.f32 %v5098, %v5099
      %v5101 = vrot.slane %v5100, 1
      %v5102 = vmax.f32 %v5100, %v5101
      %v5103 = vsub.f32 %v3568, %v4213
      %v5104 = vsub.f32 %v3573, %v4220
      %v5105 = vsub.f32 %v3578, %v4227
      %v5106 = vsub.f32 %v3583, %v4234
      %v5107 = vsub.f32 %v3588, %v4241
      %v5108 = vsub.f32 %v3593, %v4248
      %v5109 = vsub.f32 %v3598, %v4255
      %v5110 = vsub.f32 %v3603, %v4262
      %v5111 = vsub.f32 %v3608, %v4269
      %v5112 = vsub.f32 %v3613, %v4276
      %v5113 = vsub.f32 %v3618, %v4283
      %v5114 = vsub.f32 %v3623, %v4290
      %v5115 = vsub.f32 %v3628, %v4297
      %v5116 = vsub.f32 %v3633, %v4304
      %v5117 = vsub.f32 %v3638, %v4311
      %v5118 = vsub.f32 %v3643, %v4318
      %v5119 = vsub.f32 %v3648, %v4325
      %v5120 = vsub.f32 %v3653, %v4332
      %v5121 = vsub.f32 %v3658, %v4339
      %v5122 = vsub.f32 %v3663, %v4346
      %v5123 = vsub.f32 %v3668, %v4353
      %v5124 = vsub.f32 %v3673, %v4360
      %v5125 = vsub.f32 %v3678, %v4367
      %v5126 = vsub.f32 %v3683, %v4374
      %v5127 = vsub.f32 %v3688, %v4381
      %v5128 = vsub.f32 %v3693, %v4388
      %v5129 = vsub.f32 %v3698, %v4395
      %v5130 = vsub.f32 %v3703, %v4402
      %v5131 = vsub.f32 %v3708, %v4409
      %v5132 = vsub.f32 %v3713, %v4416
      %v5133 = vsub.f32 %v3718, %v4423
      %v5134 = vsub.f32 %v3723, %v4430
      %v5135 = vsub.f32 %v3728, %v4437
      %v5136 = vsub.f32 %v3733, %v4444
      %v5137 = vsub.f32 %v3738, %v4451
      %v5138 = vsub.f32 %v3743, %v4458
      %v5139 = vsub.f32 %v3748, %v4465
      %v5140 = vsub.f32 %v3753, %v4472
      %v5141 = vsub.f32 %v3758, %v4479
      %v5142 = vsub.f32 %v3763, %v4486
      %v5143 = vsub.f32 %v3768, %v4493
      %v5144 = vsub.f32 %v3773, %v4500
      %v5145 = vsub.f32 %v3778, %v4507
      %v5146 = vsub.f32 %v3783, %v4514
      %v5147 = vsub.f32 %v3788, %v4521
      %v5148 = vsub.f32 %v3793, %v4528
      %v5149 = vsub.f32 %v3798, %v4535
      %v5150 = vsub.f32 %v3803, %v4542
      %v5151 = vsub.f32 %v3808, %v4549
      %v5152 = vsub.f32 %v3813, %v4556
      %v5153 = vsub.f32 %v3818, %v4563
      %v5154 = vsub.f32 %v3823, %v4570
      %v5155 = vsub.f32 %v3828, %v4577
      %v5156 = vsub.f32 %v3833, %v4584
      %v5157 = vsub.f32 %v3838, %v4591
      %v5158 = vsub.f32 %v3843, %v4598
      %v5159 = vsub.f32 %v3848, %v4605
      %v5160 = vsub.f32 %v3853, %v4612
      %v5161 = vsub.f32 %v3858, %v4619
      %v5162 = vsub.f32 %v3863, %v4626
      %v5163 = vsub.f32 %v3868, %v4633
      %v5164 = vsub.f32 %v3873, %v4640
      %v5165 = vsub.f32 %v3878, %v4647
      %v5166 = vsub.f32 %v3883, %v4654
      %v5167 = vsub.f32 %v3888, %v4661
      %v5168 = vsub.f32 %v3893, %v4668
      %v5169 = vsub.f32 %v3898, %v4675
      %v5170 = vsub.f32 %v3903, %v4682
      %v5171 = vsub.f32 %v3908, %v4689
      %v5172 = vsub.f32 %v3913, %v4696
      %v5173 = vsub.f32 %v3918, %v4703
      %v5174 = vsub.f32 %v3923, %v4710
      %v5175 = vsub.f32 %v3928, %v4717
      %v5176 = vsub.f32 %v3933, %v4724
      %v5177 = vsub.f32 %v3938, %v4731
      %v5178 = vsub.f32 %v3943, %v4738
      %v5179 = vsub.f32 %v3948, %v4745
      %v5180 = vsub.f32 %v3953, %v4752
      %v5181 = vsub.f32 %v3958, %v4759
      %v5182 = vsub.f32 %v3963, %v4766
      %v5183 = vsub.f32 %v3968, %v4773
      %v5184 = vsub.f32 %v3973, %v4780
      %v5185 = vsub.f32 %v3978, %v4787
      %v5186 = vsub.f32 %v3983, %v4794
      %v5187 = vsub.f32 %v3988, %v4801
      %v5188 = vsub.f32 %v3993, %v4808
      %v5189 = vsub.f32 %v3998, %v4815
      %v5190 = vsub.f32 %v4003, %v4822
      %v5191 = vsub.f32 %v4008, %v4829
      %v5192 = vsub.f32 %v4013, %v4836
      %v5193 = vsub.f32 %v4018, %v4843
      %v5194 = vsub.f32 %v4023, %v4850
      %v5195 = vsub.f32 %v4028, %v4857
      %v5196 = vsub.f32 %v4033, %v4864
      %v5197 = vsub.f32 %v4038, %v4871
      %v5198 = vsub.f32 %v4043, %v4878
      %v5199 = vsub.f32 %v4048, %v4885
      %v5200 = vsub.f32 %v4053, %v4892
      %v5201 = vsub.f32 %v4058, %v4899
      %v5202 = vsub.f32 %v4063, %v4906
      %v5203 = vsub.f32 %v4068, %v4913
      %v5204 = vsub.f32 %v4073, %v4920
      %v5205 = vsub.f32 %v4078, %v4927
      %v5206 = vsub.f32 %v4083, %v4934
      %v5207 = vsub.f32 %v4088, %v4941
      %v5208 = vsub.f32 %v4093, %v4948
      %v5209 = vsub.f32 %v4098, %v4955
      %v5210 = vsub.f32 %v4103, %v4962
      %v5211 = vsub.f32 %v4108, %v4969
      %v5212 = vsub.f32 %v4113, %v4976
      %v5213 = vsub.f32 %v4118, %v4983
      %v5214 = vsub.f32 %v4123, %v4990
      %v5215 = vsub.f32 %v4128, %v4997
      %v5216 = vsub.f32 %v4133, %v5004
      %v5217 = vsub.f32 %v4138, %v5011
      %v5218 = vsub.f32 %v4143, %v5018
      %v5219 = vsub.f32 %v4148, %v5025
      %v5220 = vsub.f32 %v4153, %v5032
      %v5221 = vsub.f32 %v4158, %v5039
      %v5222 = vsub.f32 %v4163, %v5046
      %v5223 = vsub.f32 %v4168, %v5053
      %v5224 = vsub.f32 %v4173, %v5060
      %v5225 = vsub.f32 %v4178, %v5067
      %v5226 = vsub.f32 %v4183, %v5074
      %v5227 = vsub.f32 %v4188, %v5081
      %v5228 = vsub.f32 %v4193, %v5088
      %v5229 = vsub.f32 %v4198, %v5095
      %v5230 = vsub.f32 %v4203, %v5102
      %v5231 = vmul.f32 %v5103, 1.442695
      %v5232 = vpow.pop %v5231
      %v5233 = vmul.f32 %v5104, 1.442695
      %v5234 = vpow.pop %v5233
      %v5235 = vmul.f32 %v5105, 1.442695
      %v5236 = vpow.pop %v5235
      %v5237 = vmul.f32 %v5106, 1.442695
      %v5238 = vpow.pop %v5237
      %v5239 = vmul.f32 %v5107, 1.442695
      %v5240 = vpow.pop %v5239
      %v5241 = vmul.f32 %v5108, 1.442695
      %v5242 = vpow.pop %v5241
      %v5243 = vmul.f32 %v5109, 1.442695
      %v5244 = vpow.pop %v5243
      %v5245 = vmul.f32 %v5110, 1.442695
      %v5246 = vpow.pop %v5245
      %v5247 = vmul.f32 %v5111, 1.442695
      %v5248 = vpow.pop %v5247
      %v5249 = vmul.f32 %v5112, 1.442695
      %v5250 = vpow.pop %v5249
      %v5251 = vmul.f32 %v5113, 1.442695
      %v5252 = vpow.pop %v5251
      %v5253 = vmul.f32 %v5114, 1.442695
      %v5254 = vpow.pop %v5253
      %v5255 = vmul.f32 %v5115, 1.442695
      %v5256 = vpow.pop %v5255
      %v5257 = vmul.f32 %v5116, 1.442695
      %v5258 = vpow.pop %v5257
      %v5259 = vmul.f32 %v5117, 1.442695
      %v5260 = vpow.pop %v5259
      %v5261 = vmul.f32 %v5118, 1.442695
      %v5262 = vpow.pop %v5261
      %v5263 = vmul.f32 %v5119, 1.442695
      %v5264 = vpow.pop %v5263
      %v5265 = vmul.f32 %v5120, 1.442695
      %v5266 = vpow.pop %v5265
      %v5267 = vmul.f32 %v5121, 1.442695
      %v5268 = vpow.pop %v5267
      %v5269 = vmul.f32 %v5122, 1.442695
      %v5270 = vpow.pop %v5269
      %v5271 = vmul.f32 %v5123, 1.442695
      %v5272 = vpow.pop %v5271
      %v5273 = vmul.f32 %v5124, 1.442695
      %v5274 = vpow.pop %v5273
      %v5275 = vmul.f32 %v5125, 1.442695
      %v5276 = vpow.pop %v5275
      %v5277 = vmul.f32 %v5126, 1.442695
      %v5278 = vpow.pop %v5277
      %v5279 = vmul.f32 %v5127, 1.442695
      %v5280 = vpow.pop %v5279
      %v5281 = vmul.f32 %v5128, 1.442695
      %v5282 = vpow.pop %v5281
      %v5283 = vmul.f32 %v5129, 1.442695
      %v5284 = vpow.pop %v5283
      %v5285 = vmul.f32 %v5130, 1.442695
      %v5286 = vpow.pop %v5285
      %v5287 = vmul.f32 %v5131, 1.442695
      %v5288 = vpow.pop %v5287
      %v5289 = vmul.f32 %v5132, 1.442695
      %v5290 = vpow.pop %v5289
      %v5291 = vmul.f32 %v5133, 1.442695
      %v5292 = vpow.pop %v5291
      %v5293 = vmul.f32 %v5134, 1.442695
      %v5294 = vpow.pop %v5293
      %v5295 = vmul.f32 %v5135, 1.442695
      %v5296 = vpow.pop %v5295
      %v5297 = vmul.f32 %v5136, 1.442695
      %v5298 = vpow.pop %v5297
      %v5299 = vmul.f32 %v5137, 1.442695
      %v5300 = vpow.pop %v5299
      %v5301 = vmul.f32 %v5138, 1.442695
      %v5302 = vpow.pop %v5301
      %v5303 = vmul.f32 %v5139, 1.442695
      %v5304 = vpow.pop %v5303
      %v5305 = vmul.f32 %v5140, 1.442695
      %v5306 = vpow.pop %v5305
      %v5307 = vmul.f32 %v5141, 1.442695
      %v5308 = vpow.pop %v5307
      %v5309 = vmul.f32 %v5142, 1.442695
      %v5310 = vpow.pop %v5309
      %v5311 = vmul.f32 %v5143, 1.442695
      %v5312 = vpow.pop %v5311
      %v5313 = vmul.f32 %v5144, 1.442695
      %v5314 = vpow.pop %v5313
      %v5315 = vmul.f32 %v5145, 1.442695
      %v5316 = vpow.pop %v5315
      %v5317 = vmul.f32 %v5146, 1.442695
      %v5318 = vpow.pop %v5317
      %v5319 = vmul.f32 %v5147, 1.442695
      %v5320 = vpow.pop %v5319
      %v5321 = vmul.f32 %v5148, 1.442695
      %v5322 = vpow.pop %v5321
      %v5323 = vmul.f32 %v5149, 1.442695
      %v5324 = vpow.pop %v5323
      %v5325 = vmul.f32 %v5150, 1.442695
      %v5326 = vpow.pop %v5325
      %v5327 = vmul.f32 %v5151, 1.442695
      %v5328 = vpow.pop %v5327
      %v5329 = vmul.f32 %v5152, 1.442695
      %v5330 = vpow.pop %v5329
      %v5331 = vmul.f32 %v5153, 1.442695
      %v5332 = vpow.pop %v5331
      %v5333 = vmul.f32 %v5154, 1.442695
      %v5334 = vpow.pop %v5333
      %v5335 = vmul.f32 %v5155, 1.442695
      %v5336 = vpow.pop %v5335
      %v5337 = vmul.f32 %v5156, 1.442695
      %v5338 = vpow.pop %v5337
      %v5339 = vmul.f32 %v5157, 1.442695
      %v5340 = vpow.pop %v5339
      %v5341 = vmul.f32 %v5158, 1.442695
      %v5342 = vpow.pop %v5341
      %v5343 = vmul.f32 %v5159, 1.442695
      %v5344 = vpow.pop %v5343
      %v5345 = vmul.f32 %v5160, 1.442695
      %v5346 = vpow.pop %v5345
      %v5347 = vmul.f32 %v5161, 1.442695
      %v5348 = vpow.pop %v5347
      %v5349 = vmul.f32 %v5162, 1.442695
      %v5350 = vpow.pop %v5349
      %v5351 = vmul.f32 %v5163, 1.442695
      %v5352 = vpow.pop %v5351
      %v5353 = vmul.f32 %v5164, 1.442695
      %v5354 = vpow.pop %v5353
      %v5355 = vmul.f32 %v5165, 1.442695
      %v5356 = vpow.pop %v5355
      %v5357 = vmul.f32 %v5166, 1.442695
      %v5358 = vpow.pop %v5357
      %v5359 = vmul.f32 %v5167, 1.442695
      %v5360 = vpow.pop %v5359
      %v5361 = vmul.f32 %v5168, 1.442695
      %v5362 = vpow.pop %v5361
      %v5363 = vmul.f32 %v5169, 1.442695
      %v5364 = vpow.pop %v5363
      %v5365 = vmul.f32 %v5170, 1.442695
      %v5366 = vpow.pop %v5365
      %v5367 = vmul.f32 %v5171, 1.442695
      %v5368 = vpow.pop %v5367
      %v5369 = vmul.f32 %v5172, 1.442695
      %v5370 = vpow.pop %v5369
      %v5371 = vmul.f32 %v5173, 1.442695
      %v5372 = vpow.pop %v5371
      %v5373 = vmul.f32 %v5174, 1.442695
      %v5374 = vpow.pop %v5373
      %v5375 = vmul.f32 %v5175, 1.442695
      %v5376 = vpow.pop %v5375
      %v5377 = vmul.f32 %v5176, 1.442695
      %v5378 = vpow.pop %v5377
      %v5379 = vmul.f32 %v5177, 1.442695
      %v5380 = vpow.pop %v5379
      %v5381 = vmul.f32 %v5178, 1.442695
      %v5382 = vpow.pop %v5381
      %v5383 = vmul.f32 %v5179, 1.442695
      %v5384 = vpow.pop %v5383
      %v5385 = vmul.f32 %v5180, 1.442695
      %v5386 = vpow.pop %v5385
      %v5387 = vmul.f32 %v5181, 1.442695
      %v5388 = vpow.pop %v5387
      %v5389 = vmul.f32 %v5182, 1.442695
      %v5390 = vpow.pop %v5389
      %v5391 = vmul.f32 %v5183, 1.442695
      %v5392 = vpow.pop %v5391
      %v5393 = vmul.f32 %v5184, 1.442695
      %v5394 = vpow.pop %v5393
      %v5395 = vmul.f32 %v5185, 1.442695
      %v5396 = vpow.pop %v5395
      %v5397 = vmul.f32 %v5186, 1.442695
      %v5398 = vpow.pop %v5397
      %v5399 = vmul.f32 %v5187, 1.442695
      %v5400 = vpow.pop %v5399
      %v5401 = vmul.f32 %v5188, 1.442695
      %v5402 = vpow.pop %v5401
      %v5403 = vmul.f32 %v5189, 1.442695
      %v5404 = vpow.pop %v5403
      %v5405 = vmul.f32 %v5190, 1.442695
      %v5406 = vpow.pop %v5405
      %v5407 = vmul.f32 %v5191, 1.442695
      %v5408 = vpow.pop %v5407
      %v5409 = vmul.f32 %v5192, 1.442695
      %v5410 = vpow.pop %v5409
      %v5411 = vmul.f32 %v5193, 1.442695
      %v5412 = vpow.pop %v5411
      %v5413 = vmul.f32 %v5194, 1.442695
      %v5414 = vpow.pop %v5413
      %v5415 = vmul.f32 %v5195, 1.442695
      %v5416 = vpow.pop %v5415
      %v5417 = vmul.f32 %v5196, 1.442695
      %v5418 = vpow.pop %v5417
      %v5419 = vmul.f32 %v5197, 1.442695
      %v5420 = vpow.pop %v5419
      %v5421 = vmul.f32 %v5198, 1.442695
      %v5422 = vpow.pop %v5421
      %v5423 = vmul.f32 %v5199, 1.442695
      %v5424 = vpow.pop %v5423
      %v5425 = vmul.f32 %v5200, 1.442695
      %v5426 = vpow.pop %v5425
      %v5427 = vmul.f32 %v5201, 1.442695
      %v5428 = vpow.pop %v5427
      %v5429 = vmul.f32 %v5202, 1.442695
      %v5430 = vpow.pop %v5429
      %v5431 = vmul.f32 %v5203, 1.442695
      %v5432 = vpow.pop %v5431
      %v5433 = vmul.f32 %v5204, 1.442695
      %v5434 = vpow.pop %v5433
      %v5435 = vmul.f32 %v5205, 1.442695
      %v5436 = vpow.pop %v5435
      %v5437 = vmul.f32 %v5206, 1.442695
      %v5438 = vpow.pop %v5437
      %v5439 = vmul.f32 %v5207, 1.442695
      %v5440 = vpow.pop %v5439
      %v5441 = vmul.f32 %v5208, 1.442695
      %v5442 = vpow.pop %v5441
      %v5443 = vmul.f32 %v5209, 1.442695
      %v5444 = vpow.pop %v5443
      %v5445 = vmul.f32 %v5210, 1.442695
      %v5446 = vpow.pop %v5445
      %v5447 = vmul.f32 %v5211, 1.442695
      %v5448 = vpow.pop %v5447
      %v5449 = vmul.f32 %v5212, 1.442695
      %v5450 = vpow.pop %v5449
      %v5451 = vmul.f32 %v5213, 1.442695
      %v5452 = vpow.pop %v5451
      %v5453 = vmul.f32 %v5214, 1.442695
      %v5454 = vpow.pop %v5453
      %v5455 = vmul.f32 %v5215, 1.442695
      %v5456 = vpow.pop %v5455
      %v5457 = vmul.f32 %v5216, 1.442695
      %v5458 = vpow.pop %v5457
      %v5459 = vmul.f32 %v5217, 1.442695
      %v5460 = vpow.pop %v5459
      %v5461 = vmul.f32 %v5218, 1.442695
      %v5462 = vpow.pop %v5461
      %v5463 = vmul.f32 %v5219, 1.442695
      %v5464 = vpow.pop %v5463
      %v5465 = vmul.f32 %v5220, 1.442695
      %v5466 = vpow.pop %v5465
      %v5467 = vmul.f32 %v5221, 1.442695
      %v5468 = vpow.pop %v5467
      %v5469 = vmul.f32 %v5222, 1.442695
      %v5470 = vpow.pop %v5469
      %v5471 = vmul.f32 %v5223, 1.442695
      %v5472 = vpow.pop %v5471
      %v5473 = vmul.f32 %v5224, 1.442695
      %v5474 = vpow.pop %v5473
      %v5475 = vmul.f32 %v5225, 1.442695
      %v5476 = vpow.pop %v5475
      %v5477 = vmul.f32 %v5226, 1.442695
      %v5478 = vpow.pop %v5477
      %v5479 = vmul.f32 %v5227, 1.442695
      %v5480 = vpow.pop %v5479
      %v5481 = vmul.f32 %v5228, 1.442695
      %v5482 = vpow.pop %v5481
      %v5483 = vmul.f32 %v5229, 1.442695
      %v5484 = vpow.pop %v5483
      %v5485 = vmul.f32 %v5230, 1.442695
      %v5486 = vpow.pop %v5485
      %v5487 = vsel %vm4206, %v5232, 0.0
      %v5488 = vrot.slane %v5487, 4
      %v5489 = vadd.f32 %v5487, %v5488
      %v5490 = vrot.slane %v5489, 2
      %v5491 = vadd.f32 %v5489, %v5490
      %v5492 = vrot.slane %v5491, 1
      %v5493 = vadd.f32 %v5491, %v5492
      %v5494 = vsel %vm4206, %v5234, 0.0
      %v5495 = vrot.slane %v5494, 4
      %v5496 = vadd.f32 %v5494, %v5495
      %v5497 = vrot.slane %v5496, 2
      %v5498 = vadd.f32 %v5496, %v5497
      %v5499 = vrot.slane %v5498, 1
      %v5500 = vadd.f32 %v5498, %v5499
      %v5501 = vsel %vm4206, %v5236, 0.0
      %v5502 = vrot.slane %v5501, 4
      %v5503 = vadd.f32 %v5501, %v5502
      %v5504 = vrot.slane %v5503, 2
      %v5505 = vadd.f32 %v5503, %v5504
      %v5506 = vrot.slane %v5505, 1
      %v5507 = vadd.f32 %v5505, %v5506
      %v5508 = vsel %vm4206, %v5238, 0.0
      %v5509 = vrot.slane %v5508, 4
      %v5510 = vadd.f32 %v5508, %v5509
      %v5511 = vrot.slane %v5510, 2
      %v5512 = vadd.f32 %v5510, %v5511
      %v5513 = vrot.slane %v5512, 1
      %v5514 = vadd.f32 %v5512, %v5513
      %v5515 = vsel %vm4206, %v5240, 0.0
      %v5516 = vrot.slane %v5515, 4
      %v5517 = vadd.f32 %v5515, %v5516
      %v5518 = vrot.slane %v5517, 2
      %v5519 = vadd.f32 %v5517, %v5518
      %v5520 = vrot.slane %v5519, 1
      %v5521 = vadd.f32 %v5519, %v5520
      %v5522 = vsel %vm4206, %v5242, 0.0
      %v5523 = vrot.slane %v5522, 4
      %v5524 = vadd.f32 %v5522, %v5523
      %v5525 = vrot.slane %v5524, 2
      %v5526 = vadd.f32 %v5524, %v5525
      %v5527 = vrot.slane %v5526, 1
      %v5528 = vadd.f32 %v5526, %v5527
      %v5529 = vsel %vm4206, %v5244, 0.0
      %v5530 = vrot.slane %v5529, 4
      %v5531 = vadd.f32 %v5529, %v5530
      %v5532 = vrot.slane %v5531, 2
      %v5533 = vadd.f32 %v5531, %v5532
      %v5534 = vrot.slane %v5533, 1
      %v5535 = vadd.f32 %v5533, %v5534
      %v5536 = vsel %vm4206, %v5246, 0.0
      %v5537 = vrot.slane %v5536, 4
      %v5538 = vadd.f32 %v5536, %v5537
      %v5539 = vrot.slane %v5538, 2
      %v5540 = vadd.f32 %v5538, %v5539
      %v5541 = vrot.slane %v5540, 1
      %v5542 = vadd.f32 %v5540, %v5541
      %v5543 = vsel %vm4206, %v5248, 0.0
      %v5544 = vrot.slane %v5543, 4
      %v5545 = vadd.f32 %v5543, %v5544
      %v5546 = vrot.slane %v5545, 2
      %v5547 = vadd.f32 %v5545, %v5546
      %v5548 = vrot.slane %v5547, 1
      %v5549 = vadd.f32 %v5547, %v5548
      %v5550 = vsel %vm4206, %v5250, 0.0
      %v5551 = vrot.slane %v5550, 4
      %v5552 = vadd.f32 %v5550, %v5551
      %v5553 = vrot.slane %v5552, 2
      %v5554 = vadd.f32 %v5552, %v5553
      %v5555 = vrot.slane %v5554, 1
      %v5556 = vadd.f32 %v5554, %v5555
      %v5557 = vsel %vm4206, %v5252, 0.0
      %v5558 = vrot.slane %v5557, 4
      %v5559 = vadd.f32 %v5557, %v5558
      %v5560 = vrot.slane %v5559, 2
      %v5561 = vadd.f32 %v5559, %v5560
      %v5562 = vrot.slane %v5561, 1
      %v5563 = vadd.f32 %v5561, %v5562
      %v5564 = vsel %vm4206, %v5254, 0.0
      %v5565 = vrot.slane %v5564, 4
      %v5566 = vadd.f32 %v5564, %v5565
      %v5567 = vrot.slane %v5566, 2
      %v5568 = vadd.f32 %v5566, %v5567
      %v5569 = vrot.slane %v5568, 1
      %v5570 = vadd.f32 %v5568, %v5569
      %v5571 = vsel %vm4206, %v5256, 0.0
      %v5572 = vrot.slane %v5571, 4
      %v5573 = vadd.f32 %v5571, %v5572
      %v5574 = vrot.slane %v5573, 2
      %v5575 = vadd.f32 %v5573, %v5574
      %v5576 = vrot.slane %v5575, 1
      %v5577 = vadd.f32 %v5575, %v5576
      %v5578 = vsel %vm4206, %v5258, 0.0
      %v5579 = vrot.slane %v5578, 4
      %v5580 = vadd.f32 %v5578, %v5579
      %v5581 = vrot.slane %v5580, 2
      %v5582 = vadd.f32 %v5580, %v5581
      %v5583 = vrot.slane %v5582, 1
      %v5584 = vadd.f32 %v5582, %v5583
      %v5585 = vsel %vm4206, %v5260, 0.0
      %v5586 = vrot.slane %v5585, 4
      %v5587 = vadd.f32 %v5585, %v5586
      %v5588 = vrot.slane %v5587, 2
      %v5589 = vadd.f32 %v5587, %v5588
      %v5590 = vrot.slane %v5589, 1
      %v5591 = vadd.f32 %v5589, %v5590
      %v5592 = vsel %vm4206, %v5262, 0.0
      %v5593 = vrot.slane %v5592, 4
      %v5594 = vadd.f32 %v5592, %v5593
      %v5595 = vrot.slane %v5594, 2
      %v5596 = vadd.f32 %v5594, %v5595
      %v5597 = vrot.slane %v5596, 1
      %v5598 = vadd.f32 %v5596, %v5597
      %v5599 = vsel %vm4206, %v5264, 0.0
      %v5600 = vrot.slane %v5599, 4
      %v5601 = vadd.f32 %v5599, %v5600
      %v5602 = vrot.slane %v5601, 2
      %v5603 = vadd.f32 %v5601, %v5602
      %v5604 = vrot.slane %v5603, 1
      %v5605 = vadd.f32 %v5603, %v5604
      %v5606 = vsel %vm4206, %v5266, 0.0
      %v5607 = vrot.slane %v5606, 4
      %v5608 = vadd.f32 %v5606, %v5607
      %v5609 = vrot.slane %v5608, 2
      %v5610 = vadd.f32 %v5608, %v5609
      %v5611 = vrot.slane %v5610, 1
      %v5612 = vadd.f32 %v5610, %v5611
      %v5613 = vsel %vm4206, %v5268, 0.0
      %v5614 = vrot.slane %v5613, 4
      %v5615 = vadd.f32 %v5613, %v5614
      %v5616 = vrot.slane %v5615, 2
      %v5617 = vadd.f32 %v5615, %v5616
      %v5618 = vrot.slane %v5617, 1
      %v5619 = vadd.f32 %v5617, %v5618
      %v5620 = vsel %vm4206, %v5270, 0.0
      %v5621 = vrot.slane %v5620, 4
      %v5622 = vadd.f32 %v5620, %v5621
      %v5623 = vrot.slane %v5622, 2
      %v5624 = vadd.f32 %v5622, %v5623
      %v5625 = vrot.slane %v5624, 1
      %v5626 = vadd.f32 %v5624, %v5625
      %v5627 = vsel %vm4206, %v5272, 0.0
      %v5628 = vrot.slane %v5627, 4
      %v5629 = vadd.f32 %v5627, %v5628
      %v5630 = vrot.slane %v5629, 2
      %v5631 = vadd.f32 %v5629, %v5630
      %v5632 = vrot.slane %v5631, 1
      %v5633 = vadd.f32 %v5631, %v5632
      %v5634 = vsel %vm4206, %v5274, 0.0
      %v5635 = vrot.slane %v5634, 4
      %v5636 = vadd.f32 %v5634, %v5635
      %v5637 = vrot.slane %v5636, 2
      %v5638 = vadd.f32 %v5636, %v5637
      %v5639 = vrot.slane %v5638, 1
      %v5640 = vadd.f32 %v5638, %v5639
      %v5641 = vsel %vm4206, %v5276, 0.0
      %v5642 = vrot.slane %v5641, 4
      %v5643 = vadd.f32 %v5641, %v5642
      %v5644 = vrot.slane %v5643, 2
      %v5645 = vadd.f32 %v5643, %v5644
      %v5646 = vrot.slane %v5645, 1
      %v5647 = vadd.f32 %v5645, %v5646
      %v5648 = vsel %vm4206, %v5278, 0.0
      %v5649 = vrot.slane %v5648, 4
      %v5650 = vadd.f32 %v5648, %v5649
      %v5651 = vrot.slane %v5650, 2
      %v5652 = vadd.f32 %v5650, %v5651
      %v5653 = vrot.slane %v5652, 1
      %v5654 = vadd.f32 %v5652, %v5653
      %v5655 = vsel %vm4206, %v5280, 0.0
      %v5656 = vrot.slane %v5655, 4
      %v5657 = vadd.f32 %v5655, %v5656
      %v5658 = vrot.slane %v5657, 2
      %v5659 = vadd.f32 %v5657, %v5658
      %v5660 = vrot.slane %v5659, 1
      %v5661 = vadd.f32 %v5659, %v5660
      %v5662 = vsel %vm4206, %v5282, 0.0
      %v5663 = vrot.slane %v5662, 4
      %v5664 = vadd.f32 %v5662, %v5663
      %v5665 = vrot.slane %v5664, 2
      %v5666 = vadd.f32 %v5664, %v5665
      %v5667 = vrot.slane %v5666, 1
      %v5668 = vadd.f32 %v5666, %v5667
      %v5669 = vsel %vm4206, %v5284, 0.0
      %v5670 = vrot.slane %v5669, 4
      %v5671 = vadd.f32 %v5669, %v5670
      %v5672 = vrot.slane %v5671, 2
      %v5673 = vadd.f32 %v5671, %v5672
      %v5674 = vrot.slane %v5673, 1
      %v5675 = vadd.f32 %v5673, %v5674
      %v5676 = vsel %vm4206, %v5286, 0.0
      %v5677 = vrot.slane %v5676, 4
      %v5678 = vadd.f32 %v5676, %v5677
      %v5679 = vrot.slane %v5678, 2
      %v5680 = vadd.f32 %v5678, %v5679
      %v5681 = vrot.slane %v5680, 1
      %v5682 = vadd.f32 %v5680, %v5681
      %v5683 = vsel %vm4206, %v5288, 0.0
      %v5684 = vrot.slane %v5683, 4
      %v5685 = vadd.f32 %v5683, %v5684
      %v5686 = vrot.slane %v5685, 2
      %v5687 = vadd.f32 %v5685, %v5686
      %v5688 = vrot.slane %v5687, 1
      %v5689 = vadd.f32 %v5687, %v5688
      %v5690 = vsel %vm4206, %v5290, 0.0
      %v5691 = vrot.slane %v5690, 4
      %v5692 = vadd.f32 %v5690, %v5691
      %v5693 = vrot.slane %v5692, 2
      %v5694 = vadd.f32 %v5692, %v5693
      %v5695 = vrot.slane %v5694, 1
      %v5696 = vadd.f32 %v5694, %v5695
      %v5697 = vsel %vm4206, %v5292, 0.0
      %v5698 = vrot.slane %v5697, 4
      %v5699 = vadd.f32 %v5697, %v5698
      %v5700 = vrot.slane %v5699, 2
      %v5701 = vadd.f32 %v5699, %v5700
      %v5702 = vrot.slane %v5701, 1
      %v5703 = vadd.f32 %v5701, %v5702
      %v5704 = vsel %vm4206, %v5294, 0.0
      %v5705 = vrot.slane %v5704, 4
      %v5706 = vadd.f32 %v5704, %v5705
      %v5707 = vrot.slane %v5706, 2
      %v5708 = vadd.f32 %v5706, %v5707
      %v5709 = vrot.slane %v5708, 1
      %v5710 = vadd.f32 %v5708, %v5709
      %v5711 = vsel %vm4206, %v5296, 0.0
      %v5712 = vrot.slane %v5711, 4
      %v5713 = vadd.f32 %v5711, %v5712
      %v5714 = vrot.slane %v5713, 2
      %v5715 = vadd.f32 %v5713, %v5714
      %v5716 = vrot.slane %v5715, 1
      %v5717 = vadd.f32 %v5715, %v5716
      %v5718 = vsel %vm4206, %v5298, 0.0
      %v5719 = vrot.slane %v5718, 4
      %v5720 = vadd.f32 %v5718, %v5719
      %v5721 = vrot.slane %v5720, 2
      %v5722 = vadd.f32 %v5720, %v5721
      %v5723 = vrot.slane %v5722, 1
      %v5724 = vadd.f32 %v5722, %v5723
      %v5725 = vsel %vm4206, %v5300, 0.0
      %v5726 = vrot.slane %v5725, 4
      %v5727 = vadd.f32 %v5725, %v5726
      %v5728 = vrot.slane %v5727, 2
      %v5729 = vadd.f32 %v5727, %v5728
      %v5730 = vrot.slane %v5729, 1
      %v5731 = vadd.f32 %v5729, %v5730
      %v5732 = vsel %vm4206, %v5302, 0.0
      %v5733 = vrot.slane %v5732, 4
      %v5734 = vadd.f32 %v5732, %v5733
      %v5735 = vrot.slane %v5734, 2
      %v5736 = vadd.f32 %v5734, %v5735
      %v5737 = vrot.slane %v5736, 1
      %v5738 = vadd.f32 %v5736, %v5737
      %v5739 = vsel %vm4206, %v5304, 0.0
      %v5740 = vrot.slane %v5739, 4
      %v5741 = vadd.f32 %v5739, %v5740
      %v5742 = vrot.slane %v5741, 2
      %v5743 = vadd.f32 %v5741, %v5742
      %v5744 = vrot.slane %v5743, 1
      %v5745 = vadd.f32 %v5743, %v5744
      %v5746 = vsel %vm4206, %v5306, 0.0
      %v5747 = vrot.slane %v5746, 4
      %v5748 = vadd.f32 %v5746, %v5747
      %v5749 = vrot.slane %v5748, 2
      %v5750 = vadd.f32 %v5748, %v5749
      %v5751 = vrot.slane %v5750, 1
      %v5752 = vadd.f32 %v5750, %v5751
      %v5753 = vsel %vm4206, %v5308, 0.0
      %v5754 = vrot.slane %v5753, 4
      %v5755 = vadd.f32 %v5753, %v5754
      %v5756 = vrot.slane %v5755, 2
      %v5757 = vadd.f32 %v5755, %v5756
      %v5758 = vrot.slane %v5757, 1
      %v5759 = vadd.f32 %v5757, %v5758
      %v5760 = vsel %vm4206, %v5310, 0.0
      %v5761 = vrot.slane %v5760, 4
      %v5762 = vadd.f32 %v5760, %v5761
      %v5763 = vrot.slane %v5762, 2
      %v5764 = vadd.f32 %v5762, %v5763
      %v5765 = vrot.slane %v5764, 1
      %v5766 = vadd.f32 %v5764, %v5765
      %v5767 = vsel %vm4206, %v5312, 0.0
      %v5768 = vrot.slane %v5767, 4
      %v5769 = vadd.f32 %v5767, %v5768
      %v5770 = vrot.slane %v5769, 2
      %v5771 = vadd.f32 %v5769, %v5770
      %v5772 = vrot.slane %v5771, 1
      %v5773 = vadd.f32 %v5771, %v5772
      %v5774 = vsel %vm4206, %v5314, 0.0
      %v5775 = vrot.slane %v5774, 4
      %v5776 = vadd.f32 %v5774, %v5775
      %v5777 = vrot.slane %v5776, 2
      %v5778 = vadd.f32 %v5776, %v5777
      %v5779 = vrot.slane %v5778, 1
      %v5780 = vadd.f32 %v5778, %v5779
      %v5781 = vsel %vm4206, %v5316, 0.0
      %v5782 = vrot.slane %v5781, 4
      %v5783 = vadd.f32 %v5781, %v5782
      %v5784 = vrot.slane %v5783, 2
      %v5785 = vadd.f32 %v5783, %v5784
      %v5786 = vrot.slane %v5785, 1
      %v5787 = vadd.f32 %v5785, %v5786
      %v5788 = vsel %vm4206, %v5318, 0.0
      %v5789 = vrot.slane %v5788, 4
      %v5790 = vadd.f32 %v5788, %v5789
      %v5791 = vrot.slane %v5790, 2
      %v5792 = vadd.f32 %v5790, %v5791
      %v5793 = vrot.slane %v5792, 1
      %v5794 = vadd.f32 %v5792, %v5793
      %v5795 = vsel %vm4206, %v5320, 0.0
      %v5796 = vrot.slane %v5795, 4
      %v5797 = vadd.f32 %v5795, %v5796
      %v5798 = vrot.slane %v5797, 2
      %v5799 = vadd.f32 %v5797, %v5798
      %v5800 = vrot.slane %v5799, 1
      %v5801 = vadd.f32 %v5799, %v5800
      %v5802 = vsel %vm4206, %v5322, 0.0
      %v5803 = vrot.slane %v5802, 4
      %v5804 = vadd.f32 %v5802, %v5803
      %v5805 = vrot.slane %v5804, 2
      %v5806 = vadd.f32 %v5804, %v5805
      %v5807 = vrot.slane %v5806, 1
      %v5808 = vadd.f32 %v5806, %v5807
      %v5809 = vsel %vm4206, %v5324, 0.0
      %v5810 = vrot.slane %v5809, 4
      %v5811 = vadd.f32 %v5809, %v5810
      %v5812 = vrot.slane %v5811, 2
      %v5813 = vadd.f32 %v5811, %v5812
      %v5814 = vrot.slane %v5813, 1
      %v5815 = vadd.f32 %v5813, %v5814
      %v5816 = vsel %vm4206, %v5326, 0.0
      %v5817 = vrot.slane %v5816, 4
      %v5818 = vadd.f32 %v5816, %v5817
      %v5819 = vrot.slane %v5818, 2
      %v5820 = vadd.f32 %v5818, %v5819
      %v5821 = vrot.slane %v5820, 1
      %v5822 = vadd.f32 %v5820, %v5821
      %v5823 = vsel %vm4206, %v5328, 0.0
      %v5824 = vrot.slane %v5823, 4
      %v5825 = vadd.f32 %v5823, %v5824
      %v5826 = vrot.slane %v5825, 2
      %v5827 = vadd.f32 %v5825, %v5826
      %v5828 = vrot.slane %v5827, 1
      %v5829 = vadd.f32 %v5827, %v5828
      %v5830 = vsel %vm4206, %v5330, 0.0
      %v5831 = vrot.slane %v5830, 4
      %v5832 = vadd.f32 %v5830, %v5831
      %v5833 = vrot.slane %v5832, 2
      %v5834 = vadd.f32 %v5832, %v5833
      %v5835 = vrot.slane %v5834, 1
      %v5836 = vadd.f32 %v5834, %v5835
      %v5837 = vsel %vm4206, %v5332, 0.0
      %v5838 = vrot.slane %v5837, 4
      %v5839 = vadd.f32 %v5837, %v5838
      %v5840 = vrot.slane %v5839, 2
      %v5841 = vadd.f32 %v5839, %v5840
      %v5842 = vrot.slane %v5841, 1
      %v5843 = vadd.f32 %v5841, %v5842
      %v5844 = vsel %vm4206, %v5334, 0.0
      %v5845 = vrot.slane %v5844, 4
      %v5846 = vadd.f32 %v5844, %v5845
      %v5847 = vrot.slane %v5846, 2
      %v5848 = vadd.f32 %v5846, %v5847
      %v5849 = vrot.slane %v5848, 1
      %v5850 = vadd.f32 %v5848, %v5849
      %v5851 = vsel %vm4206, %v5336, 0.0
      %v5852 = vrot.slane %v5851, 4
      %v5853 = vadd.f32 %v5851, %v5852
      %v5854 = vrot.slane %v5853, 2
      %v5855 = vadd.f32 %v5853, %v5854
      %v5856 = vrot.slane %v5855, 1
      %v5857 = vadd.f32 %v5855, %v5856
      %v5858 = vsel %vm4206, %v5338, 0.0
      %v5859 = vrot.slane %v5858, 4
      %v5860 = vadd.f32 %v5858, %v5859
      %v5861 = vrot.slane %v5860, 2
      %v5862 = vadd.f32 %v5860, %v5861
      %v5863 = vrot.slane %v5862, 1
      %v5864 = vadd.f32 %v5862, %v5863
      %v5865 = vsel %vm4206, %v5340, 0.0
      %v5866 = vrot.slane %v5865, 4
      %v5867 = vadd.f32 %v5865, %v5866
      %v5868 = vrot.slane %v5867, 2
      %v5869 = vadd.f32 %v5867, %v5868
      %v5870 = vrot.slane %v5869, 1
      %v5871 = vadd.f32 %v5869, %v5870
      %v5872 = vsel %vm4206, %v5342, 0.0
      %v5873 = vrot.slane %v5872, 4
      %v5874 = vadd.f32 %v5872, %v5873
      %v5875 = vrot.slane %v5874, 2
      %v5876 = vadd.f32 %v5874, %v5875
      %v5877 = vrot.slane %v5876, 1
      %v5878 = vadd.f32 %v5876, %v5877
      %v5879 = vsel %vm4206, %v5344, 0.0
      %v5880 = vrot.slane %v5879, 4
      %v5881 = vadd.f32 %v5879, %v5880
      %v5882 = vrot.slane %v5881, 2
      %v5883 = vadd.f32 %v5881, %v5882
      %v5884 = vrot.slane %v5883, 1
      %v5885 = vadd.f32 %v5883, %v5884
      %v5886 = vsel %vm4206, %v5346, 0.0
      %v5887 = vrot.slane %v5886, 4
      %v5888 = vadd.f32 %v5886, %v5887
      %v5889 = vrot.slane %v5888, 2
      %v5890 = vadd.f32 %v5888, %v5889
      %v5891 = vrot.slane %v5890, 1
      %v5892 = vadd.f32 %v5890, %v5891
      %v5893 = vsel %vm4206, %v5348, 0.0
      %v5894 = vrot.slane %v5893, 4
      %v5895 = vadd.f32 %v5893, %v5894
      %v5896 = vrot.slane %v5895, 2
      %v5897 = vadd.f32 %v5895, %v5896
      %v5898 = vrot.slane %v5897, 1
      %v5899 = vadd.f32 %v5897, %v5898
      %v5900 = vsel %vm4206, %v5350, 0.0
      %v5901 = vrot.slane %v5900, 4
      %v5902 = vadd.f32 %v5900, %v5901
      %v5903 = vrot.slane %v5902, 2
      %v5904 = vadd.f32 %v5902, %v5903
      %v5905 = vrot.slane %v5904, 1
      %v5906 = vadd.f32 %v5904, %v5905
      %v5907 = vsel %vm4206, %v5352, 0.0
      %v5908 = vrot.slane %v5907, 4
      %v5909 = vadd.f32 %v5907, %v5908
      %v5910 = vrot.slane %v5909, 2
      %v5911 = vadd.f32 %v5909, %v5910
      %v5912 = vrot.slane %v5911, 1
      %v5913 = vadd.f32 %v5911, %v5912
      %v5914 = vsel %vm4206, %v5354, 0.0
      %v5915 = vrot.slane %v5914, 4
      %v5916 = vadd.f32 %v5914, %v5915
      %v5917 = vrot.slane %v5916, 2
      %v5918 = vadd.f32 %v5916, %v5917
      %v5919 = vrot.slane %v5918, 1
      %v5920 = vadd.f32 %v5918, %v5919
      %v5921 = vsel %vm4206, %v5356, 0.0
      %v5922 = vrot.slane %v5921, 4
      %v5923 = vadd.f32 %v5921, %v5922
      %v5924 = vrot.slane %v5923, 2
      %v5925 = vadd.f32 %v5923, %v5924
      %v5926 = vrot.slane %v5925, 1
      %v5927 = vadd.f32 %v5925, %v5926
      %v5928 = vsel %vm4206, %v5358, 0.0
      %v5929 = vrot.slane %v5928, 4
      %v5930 = vadd.f32 %v5928, %v5929
      %v5931 = vrot.slane %v5930, 2
      %v5932 = vadd.f32 %v5930, %v5931
      %v5933 = vrot.slane %v5932, 1
      %v5934 = vadd.f32 %v5932, %v5933
      %v5935 = vsel %vm4206, %v5360, 0.0
      %v5936 = vrot.slane %v5935, 4
      %v5937 = vadd.f32 %v5935, %v5936
      %v5938 = vrot.slane %v5937, 2
      %v5939 = vadd.f32 %v5937, %v5938
      %v5940 = vrot.slane %v5939, 1
      %v5941 = vadd.f32 %v5939, %v5940
      %v5942 = vsel %vm4206, %v5362, 0.0
      %v5943 = vrot.slane %v5942, 4
      %v5944 = vadd.f32 %v5942, %v5943
      %v5945 = vrot.slane %v5944, 2
      %v5946 = vadd.f32 %v5944, %v5945
      %v5947 = vrot.slane %v5946, 1
      %v5948 = vadd.f32 %v5946, %v5947
      %v5949 = vsel %vm4206, %v5364, 0.0
      %v5950 = vrot.slane %v5949, 4
      %v5951 = vadd.f32 %v5949, %v5950
      %v5952 = vrot.slane %v5951, 2
      %v5953 = vadd.f32 %v5951, %v5952
      %v5954 = vrot.slane %v5953, 1
      %v5955 = vadd.f32 %v5953, %v5954
      %v5956 = vsel %vm4206, %v5366, 0.0
      %v5957 = vrot.slane %v5956, 4
      %v5958 = vadd.f32 %v5956, %v5957
      %v5959 = vrot.slane %v5958, 2
      %v5960 = vadd.f32 %v5958, %v5959
      %v5961 = vrot.slane %v5960, 1
      %v5962 = vadd.f32 %v5960, %v5961
      %v5963 = vsel %vm4206, %v5368, 0.0
      %v5964 = vrot.slane %v5963, 4
      %v5965 = vadd.f32 %v5963, %v5964
      %v5966 = vrot.slane %v5965, 2
      %v5967 = vadd.f32 %v5965, %v5966
      %v5968 = vrot.slane %v5967, 1
      %v5969 = vadd.f32 %v5967, %v5968
      %v5970 = vsel %vm4206, %v5370, 0.0
      %v5971 = vrot.slane %v5970, 4
      %v5972 = vadd.f32 %v5970, %v5971
      %v5973 = vrot.slane %v5972, 2
      %v5974 = vadd.f32 %v5972, %v5973
      %v5975 = vrot.slane %v5974, 1
      %v5976 = vadd.f32 %v5974, %v5975
      %v5977 = vsel %vm4206, %v5372, 0.0
      %v5978 = vrot.slane %v5977, 4
      %v5979 = vadd.f32 %v5977, %v5978
      %v5980 = vrot.slane %v5979, 2
      %v5981 = vadd.f32 %v5979, %v5980
      %v5982 = vrot.slane %v5981, 1
      %v5983 = vadd.f32 %v5981, %v5982
      %v5984 = vsel %vm4206, %v5374, 0.0
      %v5985 = vrot.slane %v5984, 4
      %v5986 = vadd.f32 %v5984, %v5985
      %v5987 = vrot.slane %v5986, 2
      %v5988 = vadd.f32 %v5986, %v5987
      %v5989 = vrot.slane %v5988, 1
      %v5990 = vadd.f32 %v5988, %v5989
      %v5991 = vsel %vm4206, %v5376, 0.0
      %v5992 = vrot.slane %v5991, 4
      %v5993 = vadd.f32 %v5991, %v5992
      %v5994 = vrot.slane %v5993, 2
      %v5995 = vadd.f32 %v5993, %v5994
      %v5996 = vrot.slane %v5995, 1
      %v5997 = vadd.f32 %v5995, %v5996
      %v5998 = vsel %vm4206, %v5378, 0.0
      %v5999 = vrot.slane %v5998, 4
      %v6000 = vadd.f32 %v5998, %v5999
      %v6001 = vrot.slane %v6000, 2
      %v6002 = vadd.f32 %v6000, %v6001
      %v6003 = vrot.slane %v6002, 1
      %v6004 = vadd.f32 %v6002, %v6003
      %v6005 = vsel %vm4206, %v5380, 0.0
      %v6006 = vrot.slane %v6005, 4
      %v6007 = vadd.f32 %v6005, %v6006
      %v6008 = vrot.slane %v6007, 2
      %v6009 = vadd.f32 %v6007, %v6008
      %v6010 = vrot.slane %v6009, 1
      %v6011 = vadd.f32 %v6009, %v6010
      %v6012 = vsel %vm4206, %v5382, 0.0
      %v6013 = vrot.slane %v6012, 4
      %v6014 = vadd.f32 %v6012, %v6013
      %v6015 = vrot.slane %v6014, 2
      %v6016 = vadd.f32 %v6014, %v6015
      %v6017 = vrot.slane %v6016, 1
      %v6018 = vadd.f32 %v6016, %v6017
      %v6019 = vsel %vm4206, %v5384, 0.0
      %v6020 = vrot.slane %v6019, 4
      %v6021 = vadd.f32 %v6019, %v6020
      %v6022 = vrot.slane %v6021, 2
      %v6023 = vadd.f32 %v6021, %v6022
      %v6024 = vrot.slane %v6023, 1
      %v6025 = vadd.f32 %v6023, %v6024
      %v6026 = vsel %vm4206, %v5386, 0.0
      %v6027 = vrot.slane %v6026, 4
      %v6028 = vadd.f32 %v6026, %v6027
      %v6029 = vrot.slane %v6028, 2
      %v6030 = vadd.f32 %v6028, %v6029
      %v6031 = vrot.slane %v6030, 1
      %v6032 = vadd.f32 %v6030, %v6031
      %v6033 = vsel %vm4206, %v5388, 0.0
      %v6034 = vrot.slane %v6033, 4
      %v6035 = vadd.f32 %v6033, %v6034
      %v6036 = vrot.slane %v6035, 2
      %v6037 = vadd.f32 %v6035, %v6036
      %v6038 = vrot.slane %v6037, 1
      %v6039 = vadd.f32 %v6037, %v6038
      %v6040 = vsel %vm4206, %v5390, 0.0
      %v6041 = vrot.slane %v6040, 4
      %v6042 = vadd.f32 %v6040, %v6041
      %v6043 = vrot.slane %v6042, 2
      %v6044 = vadd.f32 %v6042, %v6043
      %v6045 = vrot.slane %v6044, 1
      %v6046 = vadd.f32 %v6044, %v6045
      %v6047 = vsel %vm4206, %v5392, 0.0
      %v6048 = vrot.slane %v6047, 4
      %v6049 = vadd.f32 %v6047, %v6048
      %v6050 = vrot.slane %v6049, 2
      %v6051 = vadd.f32 %v6049, %v6050
      %v6052 = vrot.slane %v6051, 1
      %v6053 = vadd.f32 %v6051, %v6052
      %v6054 = vsel %vm4206, %v5394, 0.0
      %v6055 = vrot.slane %v6054, 4
      %v6056 = vadd.f32 %v6054, %v6055
      %v6057 = vrot.slane %v6056, 2
      %v6058 = vadd.f32 %v6056, %v6057
      %v6059 = vrot.slane %v6058, 1
      %v6060 = vadd.f32 %v6058, %v6059
      %v6061 = vsel %vm4206, %v5396, 0.0
      %v6062 = vrot.slane %v6061, 4
      %v6063 = vadd.f32 %v6061, %v6062
      %v6064 = vrot.slane %v6063, 2
      %v6065 = vadd.f32 %v6063, %v6064
      %v6066 = vrot.slane %v6065, 1
      %v6067 = vadd.f32 %v6065, %v6066
      %v6068 = vsel %vm4206, %v5398, 0.0
      %v6069 = vrot.slane %v6068, 4
      %v6070 = vadd.f32 %v6068, %v6069
      %v6071 = vrot.slane %v6070, 2
      %v6072 = vadd.f32 %v6070, %v6071
      %v6073 = vrot.slane %v6072, 1
      %v6074 = vadd.f32 %v6072, %v6073
      %v6075 = vsel %vm4206, %v5400, 0.0
      %v6076 = vrot.slane %v6075, 4
      %v6077 = vadd.f32 %v6075, %v6076
      %v6078 = vrot.slane %v6077, 2
      %v6079 = vadd.f32 %v6077, %v6078
      %v6080 = vrot.slane %v6079, 1
      %v6081 = vadd.f32 %v6079, %v6080
      %v6082 = vsel %vm4206, %v5402, 0.0
      %v6083 = vrot.slane %v6082, 4
      %v6084 = vadd.f32 %v6082, %v6083
      %v6085 = vrot.slane %v6084, 2
      %v6086 = vadd.f32 %v6084, %v6085
      %v6087 = vrot.slane %v6086, 1
      %v6088 = vadd.f32 %v6086, %v6087
      %v6089 = vsel %vm4206, %v5404, 0.0
      %v6090 = vrot.slane %v6089, 4
      %v6091 = vadd.f32 %v6089, %v6090
      %v6092 = vrot.slane %v6091, 2
      %v6093 = vadd.f32 %v6091, %v6092
      %v6094 = vrot.slane %v6093, 1
      %v6095 = vadd.f32 %v6093, %v6094
      %v6096 = vsel %vm4206, %v5406, 0.0
      %v6097 = vrot.slane %v6096, 4
      %v6098 = vadd.f32 %v6096, %v6097
      %v6099 = vrot.slane %v6098, 2
      %v6100 = vadd.f32 %v6098, %v6099
      %v6101 = vrot.slane %v6100, 1
      %v6102 = vadd.f32 %v6100, %v6101
      %v6103 = vsel %vm4206, %v5408, 0.0
      %v6104 = vrot.slane %v6103, 4
      %v6105 = vadd.f32 %v6103, %v6104
      %v6106 = vrot.slane %v6105, 2
      %v6107 = vadd.f32 %v6105, %v6106
      %v6108 = vrot.slane %v6107, 1
      %v6109 = vadd.f32 %v6107, %v6108
      %v6110 = vsel %vm4206, %v5410, 0.0
      %v6111 = vrot.slane %v6110, 4
      %v6112 = vadd.f32 %v6110, %v6111
      %v6113 = vrot.slane %v6112, 2
      %v6114 = vadd.f32 %v6112, %v6113
      %v6115 = vrot.slane %v6114, 1
      %v6116 = vadd.f32 %v6114, %v6115
      %v6117 = vsel %vm4206, %v5412, 0.0
      %v6118 = vrot.slane %v6117, 4
      %v6119 = vadd.f32 %v6117, %v6118
      %v6120 = vrot.slane %v6119, 2
      %v6121 = vadd.f32 %v6119, %v6120
      %v6122 = vrot.slane %v6121, 1
      %v6123 = vadd.f32 %v6121, %v6122
      %v6124 = vsel %vm4206, %v5414, 0.0
      %v6125 = vrot.slane %v6124, 4
      %v6126 = vadd.f32 %v6124, %v6125
      %v6127 = vrot.slane %v6126, 2
      %v6128 = vadd.f32 %v6126, %v6127
      %v6129 = vrot.slane %v6128, 1
      %v6130 = vadd.f32 %v6128, %v6129
      %v6131 = vsel %vm4206, %v5416, 0.0
      %v6132 = vrot.slane %v6131, 4
      %v6133 = vadd.f32 %v6131, %v6132
      %v6134 = vrot.slane %v6133, 2
      %v6135 = vadd.f32 %v6133, %v6134
      %v6136 = vrot.slane %v6135, 1
      %v6137 = vadd.f32 %v6135, %v6136
      %v6138 = vsel %vm4206, %v5418, 0.0
      %v6139 = vrot.slane %v6138, 4
      %v6140 = vadd.f32 %v6138, %v6139
      %v6141 = vrot.slane %v6140, 2
      %v6142 = vadd.f32 %v6140, %v6141
      %v6143 = vrot.slane %v6142, 1
      %v6144 = vadd.f32 %v6142, %v6143
      %v6145 = vsel %vm4206, %v5420, 0.0
      %v6146 = vrot.slane %v6145, 4
      %v6147 = vadd.f32 %v6145, %v6146
      %v6148 = vrot.slane %v6147, 2
      %v6149 = vadd.f32 %v6147, %v6148
      %v6150 = vrot.slane %v6149, 1
      %v6151 = vadd.f32 %v6149, %v6150
      %v6152 = vsel %vm4206, %v5422, 0.0
      %v6153 = vrot.slane %v6152, 4
      %v6154 = vadd.f32 %v6152, %v6153
      %v6155 = vrot.slane %v6154, 2
      %v6156 = vadd.f32 %v6154, %v6155
      %v6157 = vrot.slane %v6156, 1
      %v6158 = vadd.f32 %v6156, %v6157
      %v6159 = vsel %vm4206, %v5424, 0.0
      %v6160 = vrot.slane %v6159, 4
      %v6161 = vadd.f32 %v6159, %v6160
      %v6162 = vrot.slane %v6161, 2
      %v6163 = vadd.f32 %v6161, %v6162
      %v6164 = vrot.slane %v6163, 1
      %v6165 = vadd.f32 %v6163, %v6164
      %v6166 = vsel %vm4206, %v5426, 0.0
      %v6167 = vrot.slane %v6166, 4
      %v6168 = vadd.f32 %v6166, %v6167
      %v6169 = vrot.slane %v6168, 2
      %v6170 = vadd.f32 %v6168, %v6169
      %v6171 = vrot.slane %v6170, 1
      %v6172 = vadd.f32 %v6170, %v6171
      %v6173 = vsel %vm4206, %v5428, 0.0
      %v6174 = vrot.slane %v6173, 4
      %v6175 = vadd.f32 %v6173, %v6174
      %v6176 = vrot.slane %v6175, 2
      %v6177 = vadd.f32 %v6175, %v6176
      %v6178 = vrot.slane %v6177, 1
      %v6179 = vadd.f32 %v6177, %v6178
      %v6180 = vsel %vm4206, %v5430, 0.0
      %v6181 = vrot.slane %v6180, 4
      %v6182 = vadd.f32 %v6180, %v6181
      %v6183 = vrot.slane %v6182, 2
      %v6184 = vadd.f32 %v6182, %v6183
      %v6185 = vrot.slane %v6184, 1
      %v6186 = vadd.f32 %v6184, %v6185
      %v6187 = vsel %vm4206, %v5432, 0.0
      %v6188 = vrot.slane %v6187, 4
      %v6189 = vadd.f32 %v6187, %v6188
      %v6190 = vrot.slane %v6189, 2
      %v6191 = vadd.f32 %v6189, %v6190
      %v6192 = vrot.slane %v6191, 1
      %v6193 = vadd.f32 %v6191, %v6192
      %v6194 = vsel %vm4206, %v5434, 0.0
      %v6195 = vrot.slane %v6194, 4
      %v6196 = vadd.f32 %v6194, %v6195
      %v6197 = vrot.slane %v6196, 2
      %v6198 = vadd.f32 %v6196, %v6197
      %v6199 = vrot.slane %v6198, 1
      %v6200 = vadd.f32 %v6198, %v6199
      %v6201 = vsel %vm4206, %v5436, 0.0
      %v6202 = vrot.slane %v6201, 4
      %v6203 = vadd.f32 %v6201, %v6202
      %v6204 = vrot.slane %v6203, 2
      %v6205 = vadd.f32 %v6203, %v6204
      %v6206 = vrot.slane %v6205, 1
      %v6207 = vadd.f32 %v6205, %v6206
      %v6208 = vsel %vm4206, %v5438, 0.0
      %v6209 = vrot.slane %v6208, 4
      %v6210 = vadd.f32 %v6208, %v6209
      %v6211 = vrot.slane %v6210, 2
      %v6212 = vadd.f32 %v6210, %v6211
      %v6213 = vrot.slane %v6212, 1
      %v6214 = vadd.f32 %v6212, %v6213
      %v6215 = vsel %vm4206, %v5440, 0.0
      %v6216 = vrot.slane %v6215, 4
      %v6217 = vadd.f32 %v6215, %v6216
      %v6218 = vrot.slane %v6217, 2
      %v6219 = vadd.f32 %v6217, %v6218
      %v6220 = vrot.slane %v6219, 1
      %v6221 = vadd.f32 %v6219, %v6220
      %v6222 = vsel %vm4206, %v5442, 0.0
      %v6223 = vrot.slane %v6222, 4
      %v6224 = vadd.f32 %v6222, %v6223
      %v6225 = vrot.slane %v6224, 2
      %v6226 = vadd.f32 %v6224, %v6225
      %v6227 = vrot.slane %v6226, 1
      %v6228 = vadd.f32 %v6226, %v6227
      %v6229 = vsel %vm4206, %v5444, 0.0
      %v6230 = vrot.slane %v6229, 4
      %v6231 = vadd.f32 %v6229, %v6230
      %v6232 = vrot.slane %v6231, 2
      %v6233 = vadd.f32 %v6231, %v6232
      %v6234 = vrot.slane %v6233, 1
      %v6235 = vadd.f32 %v6233, %v6234
      %v6236 = vsel %vm4206, %v5446, 0.0
      %v6237 = vrot.slane %v6236, 4
      %v6238 = vadd.f32 %v6236, %v6237
      %v6239 = vrot.slane %v6238, 2
      %v6240 = vadd.f32 %v6238, %v6239
      %v6241 = vrot.slane %v6240, 1
      %v6242 = vadd.f32 %v6240, %v6241
      %v6243 = vsel %vm4206, %v5448, 0.0
      %v6244 = vrot.slane %v6243, 4
      %v6245 = vadd.f32 %v6243, %v6244
      %v6246 = vrot.slane %v6245, 2
      %v6247 = vadd.f32 %v6245, %v6246
      %v6248 = vrot.slane %v6247, 1
      %v6249 = vadd.f32 %v6247, %v6248
      %v6250 = vsel %vm4206, %v5450, 0.0
      %v6251 = vrot.slane %v6250, 4
      %v6252 = vadd.f32 %v6250, %v6251
      %v6253 = vrot.slane %v6252, 2
      %v6254 = vadd.f32 %v6252, %v6253
      %v6255 = vrot.slane %v6254, 1
      %v6256 = vadd.f32 %v6254, %v6255
      %v6257 = vsel %vm4206, %v5452, 0.0
      %v6258 = vrot.slane %v6257, 4
      %v6259 = vadd.f32 %v6257, %v6258
      %v6260 = vrot.slane %v6259, 2
      %v6261 = vadd.f32 %v6259, %v6260
      %v6262 = vrot.slane %v6261, 1
      %v6263 = vadd.f32 %v6261, %v6262
      %v6264 = vsel %vm4206, %v5454, 0.0
      %v6265 = vrot.slane %v6264, 4
      %v6266 = vadd.f32 %v6264, %v6265
      %v6267 = vrot.slane %v6266, 2
      %v6268 = vadd.f32 %v6266, %v6267
      %v6269 = vrot.slane %v6268, 1
      %v6270 = vadd.f32 %v6268, %v6269
      %v6271 = vsel %vm4206, %v5456, 0.0
      %v6272 = vrot.slane %v6271, 4
      %v6273 = vadd.f32 %v6271, %v6272
      %v6274 = vrot.slane %v6273, 2
      %v6275 = vadd.f32 %v6273, %v6274
      %v6276 = vrot.slane %v6275, 1
      %v6277 = vadd.f32 %v6275, %v6276
      %v6278 = vsel %vm4206, %v5458, 0.0
      %v6279 = vrot.slane %v6278, 4
      %v6280 = vadd.f32 %v6278, %v6279
      %v6281 = vrot.slane %v6280, 2
      %v6282 = vadd.f32 %v6280, %v6281
      %v6283 = vrot.slane %v6282, 1
      %v6284 = vadd.f32 %v6282, %v6283
      %v6285 = vsel %vm4206, %v5460, 0.0
      %v6286 = vrot.slane %v6285, 4
      %v6287 = vadd.f32 %v6285, %v6286
      %v6288 = vrot.slane %v6287, 2
      %v6289 = vadd.f32 %v6287, %v6288
      %v6290 = vrot.slane %v6289, 1
      %v6291 = vadd.f32 %v6289, %v6290
      %v6292 = vsel %vm4206, %v5462, 0.0
      %v6293 = vrot.slane %v6292, 4
      %v6294 = vadd.f32 %v6292, %v6293
      %v6295 = vrot.slane %v6294, 2
      %v6296 = vadd.f32 %v6294, %v6295
      %v6297 = vrot.slane %v6296, 1
      %v6298 = vadd.f32 %v6296, %v6297
      %v6299 = vsel %vm4206, %v5464, 0.0
      %v6300 = vrot.slane %v6299, 4
      %v6301 = vadd.f32 %v6299, %v6300
      %v6302 = vrot.slane %v6301, 2
      %v6303 = vadd.f32 %v6301, %v6302
      %v6304 = vrot.slane %v6303, 1
      %v6305 = vadd.f32 %v6303, %v6304
      %v6306 = vsel %vm4206, %v5466, 0.0
      %v6307 = vrot.slane %v6306, 4
      %v6308 = vadd.f32 %v6306, %v6307
      %v6309 = vrot.slane %v6308, 2
      %v6310 = vadd.f32 %v6308, %v6309
      %v6311 = vrot.slane %v6310, 1
      %v6312 = vadd.f32 %v6310, %v6311
      %v6313 = vsel %vm4206, %v5468, 0.0
      %v6314 = vrot.slane %v6313, 4
      %v6315 = vadd.f32 %v6313, %v6314
      %v6316 = vrot.slane %v6315, 2
      %v6317 = vadd.f32 %v6315, %v6316
      %v6318 = vrot.slane %v6317, 1
      %v6319 = vadd.f32 %v6317, %v6318
      %v6320 = vsel %vm4206, %v5470, 0.0
      %v6321 = vrot.slane %v6320, 4
      %v6322 = vadd.f32 %v6320, %v6321
      %v6323 = vrot.slane %v6322, 2
      %v6324 = vadd.f32 %v6322, %v6323
      %v6325 = vrot.slane %v6324, 1
      %v6326 = vadd.f32 %v6324, %v6325
      %v6327 = vsel %vm4206, %v5472, 0.0
      %v6328 = vrot.slane %v6327, 4
      %v6329 = vadd.f32 %v6327, %v6328
      %v6330 = vrot.slane %v6329, 2
      %v6331 = vadd.f32 %v6329, %v6330
      %v6332 = vrot.slane %v6331, 1
      %v6333 = vadd.f32 %v6331, %v6332
      %v6334 = vsel %vm4206, %v5474, 0.0
      %v6335 = vrot.slane %v6334, 4
      %v6336 = vadd.f32 %v6334, %v6335
      %v6337 = vrot.slane %v6336, 2
      %v6338 = vadd.f32 %v6336, %v6337
      %v6339 = vrot.slane %v6338, 1
      %v6340 = vadd.f32 %v6338, %v6339
      %v6341 = vsel %vm4206, %v5476, 0.0
      %v6342 = vrot.slane %v6341, 4
      %v6343 = vadd.f32 %v6341, %v6342
      %v6344 = vrot.slane %v6343, 2
      %v6345 = vadd.f32 %v6343, %v6344
      %v6346 = vrot.slane %v6345, 1
      %v6347 = vadd.f32 %v6345, %v6346
      %v6348 = vsel %vm4206, %v5478, 0.0
      %v6349 = vrot.slane %v6348, 4
      %v6350 = vadd.f32 %v6348, %v6349
      %v6351 = vrot.slane %v6350, 2
      %v6352 = vadd.f32 %v6350, %v6351
      %v6353 = vrot.slane %v6352, 1
      %v6354 = vadd.f32 %v6352, %v6353
      %v6355 = vsel %vm4206, %v5480, 0.0
      %v6356 = vrot.slane %v6355, 4
      %v6357 = vadd.f32 %v6355, %v6356
      %v6358 = vrot.slane %v6357, 2
      %v6359 = vadd.f32 %v6357, %v6358
      %v6360 = vrot.slane %v6359, 1
      %v6361 = vadd.f32 %v6359, %v6360
      %v6362 = vsel %vm4206, %v5482, 0.0
      %v6363 = vrot.slane %v6362, 4
      %v6364 = vadd.f32 %v6362, %v6363
      %v6365 = vrot.slane %v6364, 2
      %v6366 = vadd.f32 %v6364, %v6365
      %v6367 = vrot.slane %v6366, 1
      %v6368 = vadd.f32 %v6366, %v6367
      %v6369 = vsel %vm4206, %v5484, 0.0
      %v6370 = vrot.slane %v6369, 4
      %v6371 = vadd.f32 %v6369, %v6370
      %v6372 = vrot.slane %v6371, 2
      %v6373 = vadd.f32 %v6371, %v6372
      %v6374 = vrot.slane %v6373, 1
      %v6375 = vadd.f32 %v6373, %v6374
      %v6376 = vsel %vm4206, %v5486, 0.0
      %v6377 = vrot.slane %v6376, 4
      %v6378 = vadd.f32 %v6376, %v6377
      %v6379 = vrot.slane %v6378, 2
      %v6380 = vadd.f32 %v6378, %v6379
      %v6381 = vrot.slane %v6380, 1
      %v6382 = vadd.f32 %v6380, %v6381
      %v6383 = vrcp.pop %v5493
      %v6384 = vmul.f32 %v5232, %v6383
      %v6385 = vrcp.pop %v5500
      %v6386 = vmul.f32 %v5234, %v6385
      %v6387 = vrcp.pop %v5507
      %v6388 = vmul.f32 %v5236, %v6387
      %v6389 = vrcp.pop %v5514
      %v6390 = vmul.f32 %v5238, %v6389
      %v6391 = vrcp.pop %v5521
      %v6392 = vmul.f32 %v5240, %v6391
      %v6393 = vrcp.pop %v5528
      %v6394 = vmul.f32 %v5242, %v6393
      %v6395 = vrcp.pop %v5535
      %v6396 = vmul.f32 %v5244, %v6395
      %v6397 = vrcp.pop %v5542
      %v6398 = vmul.f32 %v5246, %v6397
      %v6399 = vrcp.pop %v5549
      %v6400 = vmul.f32 %v5248, %v6399
      %v6401 = vrcp.pop %v5556
      %v6402 = vmul.f32 %v5250, %v6401
      %v6403 = vrcp.pop %v5563
      %v6404 = vmul.f32 %v5252, %v6403
      %v6405 = vrcp.pop %v5570
      %v6406 = vmul.f32 %v5254, %v6405
      %v6407 = vrcp.pop %v5577
      %v6408 = vmul.f32 %v5256, %v6407
      %v6409 = vrcp.pop %v5584
      %v6410 = vmul.f32 %v5258, %v6409
      %v6411 = vrcp.pop %v5591
      %v6412 = vmul.f32 %v5260, %v6411
      %v6413 = vrcp.pop %v5598
      %v6414 = vmul.f32 %v5262, %v6413
      %v6415 = vrcp.pop %v5605
      %v6416 = vmul.f32 %v5264, %v6415
      %v6417 = vrcp.pop %v5612
      %v6418 = vmul.f32 %v5266, %v6417
      %v6419 = vrcp.pop %v5619
      %v6420 = vmul.f32 %v5268, %v6419
      %v6421 = vrcp.pop %v5626
      %v6422 = vmul.f32 %v5270, %v6421
      %v6423 = vrcp.pop %v5633
      %v6424 = vmul.f32 %v5272, %v6423
      %v6425 = vrcp.pop %v5640
      %v6426 = vmul.f32 %v5274, %v6425
      %v6427 = vrcp.pop %v5647
      %v6428 = vmul.f32 %v5276, %v6427
      %v6429 = vrcp.pop %v5654
      %v6430 = vmul.f32 %v5278, %v6429
      %v6431 = vrcp.pop %v5661
      %v6432 = vmul.f32 %v5280, %v6431
      %v6433 = vrcp.pop %v5668
      %v6434 = vmul.f32 %v5282, %v6433
      %v6435 = vrcp.pop %v5675
      %v6436 = vmul.f32 %v5284, %v6435
      %v6437 = vrcp.pop %v5682
      %v6438 = vmul.f32 %v5286, %v6437
      %v6439 = vrcp.pop %v5689
      %v6440 = vmul.f32 %v5288, %v6439
      %v6441 = vrcp.pop %v5696
      %v6442 = vmul.f32 %v5290, %v6441
      %v6443 = vrcp.pop %v5703
      %v6444 = vmul.f32 %v5292, %v6443
      %v6445 = vrcp.pop %v5710
      %v6446 = vmul.f32 %v5294, %v6445
      %v6447 = vrcp.pop %v5717
      %v6448 = vmul.f32 %v5296, %v6447
      %v6449 = vrcp.pop %v5724
      %v6450 = vmul.f32 %v5298, %v6449
      %v6451 = vrcp.pop %v5731
      %v6452 = vmul.f32 %v5300, %v6451
      %v6453 = vrcp.pop %v5738
      %v6454 = vmul.f32 %v5302, %v6453
      %v6455 = vrcp.pop %v5745
      %v6456 = vmul.f32 %v5304, %v6455
      %v6457 = vrcp.pop %v5752
      %v6458 = vmul.f32 %v5306, %v6457
      %v6459 = vrcp.pop %v5759
      %v6460 = vmul.f32 %v5308, %v6459
      %v6461 = vrcp.pop %v5766
      %v6462 = vmul.f32 %v5310, %v6461
      %v6463 = vrcp.pop %v5773
      %v6464 = vmul.f32 %v5312, %v6463
      %v6465 = vrcp.pop %v5780
      %v6466 = vmul.f32 %v5314, %v6465
      %v6467 = vrcp.pop %v5787
      %v6468 = vmul.f32 %v5316, %v6467
      %v6469 = vrcp.pop %v5794
      %v6470 = vmul.f32 %v5318, %v6469
      %v6471 = vrcp.pop %v5801
      %v6472 = vmul.f32 %v5320, %v6471
      %v6473 = vrcp.pop %v5808
      %v6474 = vmul.f32 %v5322, %v6473
      %v6475 = vrcp.pop %v5815
      %v6476 = vmul.f32 %v5324, %v6475
      %v6477 = vrcp.pop %v5822
      %v6478 = vmul.f32 %v5326, %v6477
      %v6479 = vrcp.pop %v5829
      %v6480 = vmul.f32 %v5328, %v6479
      %v6481 = vrcp.pop %v5836
      %v6482 = vmul.f32 %v5330, %v6481
      %v6483 = vrcp.pop %v5843
      %v6484 = vmul.f32 %v5332, %v6483
      %v6485 = vrcp.pop %v5850
      %v6486 = vmul.f32 %v5334, %v6485
      %v6487 = vrcp.pop %v5857
      %v6488 = vmul.f32 %v5336, %v6487
      %v6489 = vrcp.pop %v5864
      %v6490 = vmul.f32 %v5338, %v6489
      %v6491 = vrcp.pop %v5871
      %v6492 = vmul.f32 %v5340, %v6491
      %v6493 = vrcp.pop %v5878
      %v6494 = vmul.f32 %v5342, %v6493
      %v6495 = vrcp.pop %v5885
      %v6496 = vmul.f32 %v5344, %v6495
      %v6497 = vrcp.pop %v5892
      %v6498 = vmul.f32 %v5346, %v6497
      %v6499 = vrcp.pop %v5899
      %v6500 = vmul.f32 %v5348, %v6499
      %v6501 = vrcp.pop %v5906
      %v6502 = vmul.f32 %v5350, %v6501
      %v6503 = vrcp.pop %v5913
      %v6504 = vmul.f32 %v5352, %v6503
      %v6505 = vrcp.pop %v5920
      %v6506 = vmul.f32 %v5354, %v6505
      %v6507 = vrcp.pop %v5927
      %v6508 = vmul.f32 %v5356, %v6507
      %v6509 = vrcp.pop %v5934
      %v6510 = vmul.f32 %v5358, %v6509
      %v6511 = vrcp.pop %v5941
      %v6512 = vmul.f32 %v5360, %v6511
      %v6513 = vrcp.pop %v5948
      %v6514 = vmul.f32 %v5362, %v6513
      %v6515 = vrcp.pop %v5955
      %v6516 = vmul.f32 %v5364, %v6515
      %v6517 = vrcp.pop %v5962
      %v6518 = vmul.f32 %v5366, %v6517
      %v6519 = vrcp.pop %v5969
      %v6520 = vmul.f32 %v5368, %v6519
      %v6521 = vrcp.pop %v5976
      %v6522 = vmul.f32 %v5370, %v6521
      %v6523 = vrcp.pop %v5983
      %v6524 = vmul.f32 %v5372, %v6523
      %v6525 = vrcp.pop %v5990
      %v6526 = vmul.f32 %v5374, %v6525
      %v6527 = vrcp.pop %v5997
      %v6528 = vmul.f32 %v5376, %v6527
      %v6529 = vrcp.pop %v6004
      %v6530 = vmul.f32 %v5378, %v6529
      %v6531 = vrcp.pop %v6011
      %v6532 = vmul.f32 %v5380, %v6531
      %v6533 = vrcp.pop %v6018
      %v6534 = vmul.f32 %v5382, %v6533
      %v6535 = vrcp.pop %v6025
      %v6536 = vmul.f32 %v5384, %v6535
      %v6537 = vrcp.pop %v6032
      %v6538 = vmul.f32 %v5386, %v6537
      %v6539 = vrcp.pop %v6039
      %v6540 = vmul.f32 %v5388, %v6539
      %v6541 = vrcp.pop %v6046
      %v6542 = vmul.f32 %v5390, %v6541
      %v6543 = vrcp.pop %v6053
      %v6544 = vmul.f32 %v5392, %v6543
      %v6545 = vrcp.pop %v6060
      %v6546 = vmul.f32 %v5394, %v6545
      %v6547 = vrcp.pop %v6067
      %v6548 = vmul.f32 %v5396, %v6547
      %v6549 = vrcp.pop %v6074
      %v6550 = vmul.f32 %v5398, %v6549
      %v6551 = vrcp.pop %v6081
      %v6552 = vmul.f32 %v5400, %v6551
      %v6553 = vrcp.pop %v6088
      %v6554 = vmul.f32 %v5402, %v6553
      %v6555 = vrcp.pop %v6095
      %v6556 = vmul.f32 %v5404, %v6555
      %v6557 = vrcp.pop %v6102
      %v6558 = vmul.f32 %v5406, %v6557
      %v6559 = vrcp.pop %v6109
      %v6560 = vmul.f32 %v5408, %v6559
      %v6561 = vrcp.pop %v6116
      %v6562 = vmul.f32 %v5410, %v6561
      %v6563 = vrcp.pop %v6123
      %v6564 = vmul.f32 %v5412, %v6563
      %v6565 = vrcp.pop %v6130
      %v6566 = vmul.f32 %v5414, %v6565
      %v6567 = vrcp.pop %v6137
      %v6568 = vmul.f32 %v5416, %v6567
      %v6569 = vrcp.pop %v6144
      %v6570 = vmul.f32 %v5418, %v6569
      %v6571 = vrcp.pop %v6151
      %v6572 = vmul.f32 %v5420, %v6571
      %v6573 = vrcp.pop %v6158
      %v6574 = vmul.f32 %v5422, %v6573
      %v6575 = vrcp.pop %v6165
      %v6576 = vmul.f32 %v5424, %v6575
      %v6577 = vrcp.pop %v6172
      %v6578 = vmul.f32 %v5426, %v6577
      %v6579 = vrcp.pop %v6179
      %v6580 = vmul.f32 %v5428, %v6579
      %v6581 = vrcp.pop %v6186
      %v6582 = vmul.f32 %v5430, %v6581
      %v6583 = vrcp.pop %v6193
      %v6584 = vmul.f32 %v5432, %v6583
      %v6585 = vrcp.pop %v6200
      %v6586 = vmul.f32 %v5434, %v6585
      %v6587 = vrcp.pop %v6207
      %v6588 = vmul.f32 %v5436, %v6587
      %v6589 = vrcp.pop %v6214
      %v6590 = vmul.f32 %v5438, %v6589
      %v6591 = vrcp.pop %v6221
      %v6592 = vmul.f32 %v5440, %v6591
      %v6593 = vrcp.pop %v6228
      %v6594 = vmul.f32 %v5442, %v6593
      %v6595 = vrcp.pop %v6235
      %v6596 = vmul.f32 %v5444, %v6595
      %v6597 = vrcp.pop %v6242
      %v6598 = vmul.f32 %v5446, %v6597
      %v6599 = vrcp.pop %v6249
      %v6600 = vmul.f32 %v5448, %v6599
      %v6601 = vrcp.pop %v6256
      %v6602 = vmul.f32 %v5450, %v6601
      %v6603 = vrcp.pop %v6263
      %v6604 = vmul.f32 %v5452, %v6603
      %v6605 = vrcp.pop %v6270
      %v6606 = vmul.f32 %v5454, %v6605
      %v6607 = vrcp.pop %v6277
      %v6608 = vmul.f32 %v5456, %v6607
      %v6609 = vrcp.pop %v6284
      %v6610 = vmul.f32 %v5458, %v6609
      %v6611 = vrcp.pop %v6291
      %v6612 = vmul.f32 %v5460, %v6611
      %v6613 = vrcp.pop %v6298
      %v6614 = vmul.f32 %v5462, %v6613
      %v6615 = vrcp.pop %v6305
      %v6616 = vmul.f32 %v5464, %v6615
      %v6617 = vrcp.pop %v6312
      %v6618 = vmul.f32 %v5466, %v6617
      %v6619 = vrcp.pop %v6319
      %v6620 = vmul.f32 %v5468, %v6619
      %v6621 = vrcp.pop %v6326
      %v6622 = vmul.f32 %v5470, %v6621
      %v6623 = vrcp.pop %v6333
      %v6624 = vmul.f32 %v5472, %v6623
      %v6625 = vrcp.pop %v6340
      %v6626 = vmul.f32 %v5474, %v6625
      %v6627 = vrcp.pop %v6347
      %v6628 = vmul.f32 %v5476, %v6627
      %v6629 = vrcp.pop %v6354
      %v6630 = vmul.f32 %v5478, %v6629
      %v6631 = vrcp.pop %v6361
      %v6632 = vmul.f32 %v5480, %v6631
      %v6633 = vrcp.pop %v6368
      %v6634 = vmul.f32 %v5482, %v6633
      %v6635 = vrcp.pop %v6375
      %v6636 = vmul.f32 %v5484, %v6635
      %v6637 = vrcp.pop %v6382
      %v6638 = vmul.f32 %v5486, %v6637
      %v6639 = vmul.f32 %v1895, %v6384
      %v6640 = vmul.f32 %v1896, %v6386
      %v6641 = vmul.f32 %v1897, %v6388
      %v6642 = vmul.f32 %v1898, %v6390
      %v6643 = vmul.f32 %v1899, %v6392
      %v6644 = vmul.f32 %v1900, %v6394
      %v6645 = vmul.f32 %v1901, %v6396
      %v6646 = vmul.f32 %v1902, %v6398
      %v6647 = vmul.f32 %v1903, %v6400
      %v6648 = vmul.f32 %v1904, %v6402
      %v6649 = vmul.f32 %v1905, %v6404
      %v6650 = vmul.f32 %v1906, %v6406
      %v6651 = vmul.f32 %v1907, %v6408
      %v6652 = vmul.f32 %v1908, %v6410
      %v6653 = vmul.f32 %v1909, %v6412
      %v6654 = vmul.f32 %v1910, %v6414
      %v6655 = vmul.f32 %v1911, %v6416
      %v6656 = vmul.f32 %v1912, %v6418
      %v6657 = vmul.f32 %v1913, %v6420
      %v6658 = vmul.f32 %v1914, %v6422
      %v6659 = vmul.f32 %v1915, %v6424
      %v6660 = vmul.f32 %v1916, %v6426
      %v6661 = vmul.f32 %v1917, %v6428
      %v6662 = vmul.f32 %v1918, %v6430
      %v6663 = vmul.f32 %v1919, %v6432
      %v6664 = vmul.f32 %v1920, %v6434
      %v6665 = vmul.f32 %v1921, %v6436
      %v6666 = vmul.f32 %v1922, %v6438
      %v6667 = vmul.f32 %v1923, %v6440
      %v6668 = vmul.f32 %v1924, %v6442
      %v6669 = vmul.f32 %v1925, %v6444
      %v6670 = vmul.f32 %v1926, %v6446
      %v6671 = vmul.f32 %v1927, %v6448
      %v6672 = vmul.f32 %v1928, %v6450
      %v6673 = vmul.f32 %v1929, %v6452
      %v6674 = vmul.f32 %v1930, %v6454
      %v6675 = vmul.f32 %v1931, %v6456
      %v6676 = vmul.f32 %v1932, %v6458
      %v6677 = vmul.f32 %v1933, %v6460
      %v6678 = vmul.f32 %v1934, %v6462
      %v6679 = vmul.f32 %v1935, %v6464
      %v6680 = vmul.f32 %v1936, %v6466
      %v6681 = vmul.f32 %v1937, %v6468
      %v6682 = vmul.f32 %v1938, %v6470
      %v6683 = vmul.f32 %v1939, %v6472
      %v6684 = vmul.f32 %v1940, %v6474
      %v6685 = vmul.f32 %v1941, %v6476
      %v6686 = vmul.f32 %v1942, %v6478
      %v6687 = vmul.f32 %v1943, %v6480
      %v6688 = vmul.f32 %v1944, %v6482
      %v6689 = vmul.f32 %v1945, %v6484
      %v6690 = vmul.f32 %v1946, %v6486
      %v6691 = vmul.f32 %v1947, %v6488
      %v6692 = vmul.f32 %v1948, %v6490
      %v6693 = vmul.f32 %v1949, %v6492
      %v6694 = vmul.f32 %v1950, %v6494
      %v6695 = vmul.f32 %v1951, %v6496
      %v6696 = vmul.f32 %v1952, %v6498
      %v6697 = vmul.f32 %v1953, %v6500
      %v6698 = vmul.f32 %v1954, %v6502
      %v6699 = vmul.f32 %v1955, %v6504
      %v6700 = vmul.f32 %v1956, %v6506
      %v6701 = vmul.f32 %v1957, %v6508
      %v6702 = vmul.f32 %v1958, %v6510
      %v6703 = vmul.f32 %v1959, %v6512
      %v6704 = vmul.f32 %v1960, %v6514
      %v6705 = vmul.f32 %v1961, %v6516
      %v6706 = vmul.f32 %v1962, %v6518
      %v6707 = vmul.f32 %v1963, %v6520
      %v6708 = vmul.f32 %v1964, %v6522
      %v6709 = vmul.f32 %v1965, %v6524
      %v6710 = vmul.f32 %v1966, %v6526
      %v6711 = vmul.f32 %v1967, %v6528
      %v6712 = vmul.f32 %v1968, %v6530
      %v6713 = vmul.f32 %v1969, %v6532
      %v6714 = vmul.f32 %v1970, %v6534
      %v6715 = vmul.f32 %v1971, %v6536
      %v6716 = vmul.f32 %v1972, %v6538
      %v6717 = vmul.f32 %v1973, %v6540
      %v6718 = vmul.f32 %v1974, %v6542
      %v6719 = vmul.f32 %v1975, %v6544
      %v6720 = vmul.f32 %v1976, %v6546
      %v6721 = vmul.f32 %v1977, %v6548
      %v6722 = vmul.f32 %v1978, %v6550
      %v6723 = vmul.f32 %v1979, %v6552
      %v6724 = vmul.f32 %v1980, %v6554
      %v6725 = vmul.f32 %v1981, %v6556
      %v6726 = vmul.f32 %v1982, %v6558
      %v6727 = vmul.f32 %v1983, %v6560
      %v6728 = vmul.f32 %v1984, %v6562
      %v6729 = vmul.f32 %v1985, %v6564
      %v6730 = vmul.f32 %v1986, %v6566
      %v6731 = vmul.f32 %v1987, %v6568
      %v6732 = vmul.f32 %v1988, %v6570
      %v6733 = vmul.f32 %v1989, %v6572
      %v6734 = vmul.f32 %v1990, %v6574
      %v6735 = vmul.f32 %v1991, %v6576
      %v6736 = vmul.f32 %v1992, %v6578
      %v6737 = vmul.f32 %v1993, %v6580
      %v6738 = vmul.f32 %v1994, %v6582
      %v6739 = vmul.f32 %v1995, %v6584
      %v6740 = vmul.f32 %v1996, %v6586
      %v6741 = vmul.f32 %v1997, %v6588
      %v6742 = vmul.f32 %v1998, %v6590
      %v6743 = vmul.f32 %v1999, %v6592
      %v6744 = vmul.f32 %v2000, %v6594
      %v6745 = vmul.f32 %v2001, %v6596
      %v6746 = vmul.f32 %v2002, %v6598
      %v6747 = vmul.f32 %v2003, %v6600
      %v6748 = vmul.f32 %v2004, %v6602
      %v6749 = vmul.f32 %v2005, %v6604
      %v6750 = vmul.f32 %v2006, %v6606
      %v6751 = vmul.f32 %v2007, %v6608
      %v6752 = vmul.f32 %v2008, %v6610
      %v6753 = vmul.f32 %v2009, %v6612
      %v6754 = vmul.f32 %v2010, %v6614
      %v6755 = vmul.f32 %v2011, %v6616
      %v6756 = vmul.f32 %v2012, %v6618
      %v6757 = vmul.f32 %v2013, %v6620
      %v6758 = vmul.f32 %v2014, %v6622
      %v6759 = vmul.f32 %v2015, %v6624
      %v6760 = vmul.f32 %v2016, %v6626
      %v6761 = vmul.f32 %v2017, %v6628
      %v6762 = vmul.f32 %v2018, %v6630
      %v6763 = vmul.f32 %v2019, %v6632
      %v6764 = vmul.f32 %v2020, %v6634
      %v6765 = vmul.f32 %v2021, %v6636
      %v6766 = vmul.f32 %v2022, %v6638
      %v6767 = vsel %vm2027, %v6639, 0.0
      %v6768 = vrot.slane %v6767, 4
      %v6769 = vadd.f32 %v6767, %v6768
      %v6770 = vrot.slane %v6769, 2
      %v6771 = vadd.f32 %v6769, %v6770
      %v6772 = vrot.slane %v6771, 1
      %v6773 = vadd.f32 %v6771, %v6772
      %v6774 = vsel %vm2027, %v6640, 0.0
      %v6775 = vrot.slane %v6774, 4
      %v6776 = vadd.f32 %v6774, %v6775
      %v6777 = vrot.slane %v6776, 2
      %v6778 = vadd.f32 %v6776, %v6777
      %v6779 = vrot.slane %v6778, 1
      %v6780 = vadd.f32 %v6778, %v6779
      %v6781 = vsel %vm2027, %v6641, 0.0
      %v6782 = vrot.slane %v6781, 4
      %v6783 = vadd.f32 %v6781, %v6782
      %v6784 = vrot.slane %v6783, 2
      %v6785 = vadd.f32 %v6783, %v6784
      %v6786 = vrot.slane %v6785, 1
      %v6787 = vadd.f32 %v6785, %v6786
      %v6788 = vsel %vm2027, %v6642, 0.0
      %v6789 = vrot.slane %v6788, 4
      %v6790 = vadd.f32 %v6788, %v6789
      %v6791 = vrot.slane %v6790, 2
      %v6792 = vadd.f32 %v6790, %v6791
      %v6793 = vrot.slane %v6792, 1
      %v6794 = vadd.f32 %v6792, %v6793
      %v6795 = vsel %vm2027, %v6643, 0.0
      %v6796 = vrot.slane %v6795, 4
      %v6797 = vadd.f32 %v6795, %v6796
      %v6798 = vrot.slane %v6797, 2
      %v6799 = vadd.f32 %v6797, %v6798
      %v6800 = vrot.slane %v6799, 1
      %v6801 = vadd.f32 %v6799, %v6800
      %v6802 = vsel %vm2027, %v6644, 0.0
      %v6803 = vrot.slane %v6802, 4
      %v6804 = vadd.f32 %v6802, %v6803
      %v6805 = vrot.slane %v6804, 2
      %v6806 = vadd.f32 %v6804, %v6805
      %v6807 = vrot.slane %v6806, 1
      %v6808 = vadd.f32 %v6806, %v6807
      %v6809 = vsel %vm2027, %v6645, 0.0
      %v6810 = vrot.slane %v6809, 4
      %v6811 = vadd.f32 %v6809, %v6810
      %v6812 = vrot.slane %v6811, 2
      %v6813 = vadd.f32 %v6811, %v6812
      %v6814 = vrot.slane %v6813, 1
      %v6815 = vadd.f32 %v6813, %v6814
      %v6816 = vsel %vm2027, %v6646, 0.0
      %v6817 = vrot.slane %v6816, 4
      %v6818 = vadd.f32 %v6816, %v6817
      %v6819 = vrot.slane %v6818, 2
      %v6820 = vadd.f32 %v6818, %v6819
      %v6821 = vrot.slane %v6820, 1
      %v6822 = vadd.f32 %v6820, %v6821
      %v6823 = vsel %vm2027, %v6647, 0.0
      %v6824 = vrot.slane %v6823, 4
      %v6825 = vadd.f32 %v6823, %v6824
      %v6826 = vrot.slane %v6825, 2
      %v6827 = vadd.f32 %v6825, %v6826
      %v6828 = vrot.slane %v6827, 1
      %v6829 = vadd.f32 %v6827, %v6828
      %v6830 = vsel %vm2027, %v6648, 0.0
      %v6831 = vrot.slane %v6830, 4
      %v6832 = vadd.f32 %v6830, %v6831
      %v6833 = vrot.slane %v6832, 2
      %v6834 = vadd.f32 %v6832, %v6833
      %v6835 = vrot.slane %v6834, 1
      %v6836 = vadd.f32 %v6834, %v6835
      %v6837 = vsel %vm2027, %v6649, 0.0
      %v6838 = vrot.slane %v6837, 4
      %v6839 = vadd.f32 %v6837, %v6838
      %v6840 = vrot.slane %v6839, 2
      %v6841 = vadd.f32 %v6839, %v6840
      %v6842 = vrot.slane %v6841, 1
      %v6843 = vadd.f32 %v6841, %v6842
      %v6844 = vsel %vm2027, %v6650, 0.0
      %v6845 = vrot.slane %v6844, 4
      %v6846 = vadd.f32 %v6844, %v6845
      %v6847 = vrot.slane %v6846, 2
      %v6848 = vadd.f32 %v6846, %v6847
      %v6849 = vrot.slane %v6848, 1
      %v6850 = vadd.f32 %v6848, %v6849
      %v6851 = vsel %vm2027, %v6651, 0.0
      %v6852 = vrot.slane %v6851, 4
      %v6853 = vadd.f32 %v6851, %v6852
      %v6854 = vrot.slane %v6853, 2
      %v6855 = vadd.f32 %v6853, %v6854
      %v6856 = vrot.slane %v6855, 1
      %v6857 = vadd.f32 %v6855, %v6856
      %v6858 = vsel %vm2027, %v6652, 0.0
      %v6859 = vrot.slane %v6858, 4
      %v6860 = vadd.f32 %v6858, %v6859
      %v6861 = vrot.slane %v6860, 2
      %v6862 = vadd.f32 %v6860, %v6861
      %v6863 = vrot.slane %v6862, 1
      %v6864 = vadd.f32 %v6862, %v6863
      %v6865 = vsel %vm2027, %v6653, 0.0
      %v6866 = vrot.slane %v6865, 4
      %v6867 = vadd.f32 %v6865, %v6866
      %v6868 = vrot.slane %v6867, 2
      %v6869 = vadd.f32 %v6867, %v6868
      %v6870 = vrot.slane %v6869, 1
      %v6871 = vadd.f32 %v6869, %v6870
      %v6872 = vsel %vm2027, %v6654, 0.0
      %v6873 = vrot.slane %v6872, 4
      %v6874 = vadd.f32 %v6872, %v6873
      %v6875 = vrot.slane %v6874, 2
      %v6876 = vadd.f32 %v6874, %v6875
      %v6877 = vrot.slane %v6876, 1
      %v6878 = vadd.f32 %v6876, %v6877
      %v6879 = vsel %vm2027, %v6655, 0.0
      %v6880 = vrot.slane %v6879, 4
      %v6881 = vadd.f32 %v6879, %v6880
      %v6882 = vrot.slane %v6881, 2
      %v6883 = vadd.f32 %v6881, %v6882
      %v6884 = vrot.slane %v6883, 1
      %v6885 = vadd.f32 %v6883, %v6884
      %v6886 = vsel %vm2027, %v6656, 0.0
      %v6887 = vrot.slane %v6886, 4
      %v6888 = vadd.f32 %v6886, %v6887
      %v6889 = vrot.slane %v6888, 2
      %v6890 = vadd.f32 %v6888, %v6889
      %v6891 = vrot.slane %v6890, 1
      %v6892 = vadd.f32 %v6890, %v6891
      %v6893 = vsel %vm2027, %v6657, 0.0
      %v6894 = vrot.slane %v6893, 4
      %v6895 = vadd.f32 %v6893, %v6894
      %v6896 = vrot.slane %v6895, 2
      %v6897 = vadd.f32 %v6895, %v6896
      %v6898 = vrot.slane %v6897, 1
      %v6899 = vadd.f32 %v6897, %v6898
      %v6900 = vsel %vm2027, %v6658, 0.0
      %v6901 = vrot.slane %v6900, 4
      %v6902 = vadd.f32 %v6900, %v6901
      %v6903 = vrot.slane %v6902, 2
      %v6904 = vadd.f32 %v6902, %v6903
      %v6905 = vrot.slane %v6904, 1
      %v6906 = vadd.f32 %v6904, %v6905
      %v6907 = vsel %vm2027, %v6659, 0.0
      %v6908 = vrot.slane %v6907, 4
      %v6909 = vadd.f32 %v6907, %v6908
      %v6910 = vrot.slane %v6909, 2
      %v6911 = vadd.f32 %v6909, %v6910
      %v6912 = vrot.slane %v6911, 1
      %v6913 = vadd.f32 %v6911, %v6912
      %v6914 = vsel %vm2027, %v6660, 0.0
      %v6915 = vrot.slane %v6914, 4
      %v6916 = vadd.f32 %v6914, %v6915
      %v6917 = vrot.slane %v6916, 2
      %v6918 = vadd.f32 %v6916, %v6917
      %v6919 = vrot.slane %v6918, 1
      %v6920 = vadd.f32 %v6918, %v6919
      %v6921 = vsel %vm2027, %v6661, 0.0
      %v6922 = vrot.slane %v6921, 4
      %v6923 = vadd.f32 %v6921, %v6922
      %v6924 = vrot.slane %v6923, 2
      %v6925 = vadd.f32 %v6923, %v6924
      %v6926 = vrot.slane %v6925, 1
      %v6927 = vadd.f32 %v6925, %v6926
      %v6928 = vsel %vm2027, %v6662, 0.0
      %v6929 = vrot.slane %v6928, 4
      %v6930 = vadd.f32 %v6928, %v6929
      %v6931 = vrot.slane %v6930, 2
      %v6932 = vadd.f32 %v6930, %v6931
      %v6933 = vrot.slane %v6932, 1
      %v6934 = vadd.f32 %v6932, %v6933
      %v6935 = vsel %vm2027, %v6663, 0.0
      %v6936 = vrot.slane %v6935, 4
      %v6937 = vadd.f32 %v6935, %v6936
      %v6938 = vrot.slane %v6937, 2
      %v6939 = vadd.f32 %v6937, %v6938
      %v6940 = vrot.slane %v6939, 1
      %v6941 = vadd.f32 %v6939, %v6940
      %v6942 = vsel %vm2027, %v6664, 0.0
      %v6943 = vrot.slane %v6942, 4
      %v6944 = vadd.f32 %v6942, %v6943
      %v6945 = vrot.slane %v6944, 2
      %v6946 = vadd.f32 %v6944, %v6945
      %v6947 = vrot.slane %v6946, 1
      %v6948 = vadd.f32 %v6946, %v6947
      %v6949 = vsel %vm2027, %v6665, 0.0
      %v6950 = vrot.slane %v6949, 4
      %v6951 = vadd.f32 %v6949, %v6950
      %v6952 = vrot.slane %v6951, 2
      %v6953 = vadd.f32 %v6951, %v6952
      %v6954 = vrot.slane %v6953, 1
      %v6955 = vadd.f32 %v6953, %v6954
      %v6956 = vsel %vm2027, %v6666, 0.0
      %v6957 = vrot.slane %v6956, 4
      %v6958 = vadd.f32 %v6956, %v6957
      %v6959 = vrot.slane %v6958, 2
      %v6960 = vadd.f32 %v6958, %v6959
      %v6961 = vrot.slane %v6960, 1
      %v6962 = vadd.f32 %v6960, %v6961
      %v6963 = vsel %vm2027, %v6667, 0.0
      %v6964 = vrot.slane %v6963, 4
      %v6965 = vadd.f32 %v6963, %v6964
      %v6966 = vrot.slane %v6965, 2
      %v6967 = vadd.f32 %v6965, %v6966
      %v6968 = vrot.slane %v6967, 1
      %v6969 = vadd.f32 %v6967, %v6968
      %v6970 = vsel %vm2027, %v6668, 0.0
      %v6971 = vrot.slane %v6970, 4
      %v6972 = vadd.f32 %v6970, %v6971
      %v6973 = vrot.slane %v6972, 2
      %v6974 = vadd.f32 %v6972, %v6973
      %v6975 = vrot.slane %v6974, 1
      %v6976 = vadd.f32 %v6974, %v6975
      %v6977 = vsel %vm2027, %v6669, 0.0
      %v6978 = vrot.slane %v6977, 4
      %v6979 = vadd.f32 %v6977, %v6978
      %v6980 = vrot.slane %v6979, 2
      %v6981 = vadd.f32 %v6979, %v6980
      %v6982 = vrot.slane %v6981, 1
      %v6983 = vadd.f32 %v6981, %v6982
      %v6984 = vsel %vm2027, %v6670, 0.0
      %v6985 = vrot.slane %v6984, 4
      %v6986 = vadd.f32 %v6984, %v6985
      %v6987 = vrot.slane %v6986, 2
      %v6988 = vadd.f32 %v6986, %v6987
      %v6989 = vrot.slane %v6988, 1
      %v6990 = vadd.f32 %v6988, %v6989
      %v6991 = vsel %vm2027, %v6671, 0.0
      %v6992 = vrot.slane %v6991, 4
      %v6993 = vadd.f32 %v6991, %v6992
      %v6994 = vrot.slane %v6993, 2
      %v6995 = vadd.f32 %v6993, %v6994
      %v6996 = vrot.slane %v6995, 1
      %v6997 = vadd.f32 %v6995, %v6996
      %v6998 = vsel %vm2027, %v6672, 0.0
      %v6999 = vrot.slane %v6998, 4
      %v7000 = vadd.f32 %v6998, %v6999
      %v7001 = vrot.slane %v7000, 2
      %v7002 = vadd.f32 %v7000, %v7001
      %v7003 = vrot.slane %v7002, 1
      %v7004 = vadd.f32 %v7002, %v7003
      %v7005 = vsel %vm2027, %v6673, 0.0
      %v7006 = vrot.slane %v7005, 4
      %v7007 = vadd.f32 %v7005, %v7006
      %v7008 = vrot.slane %v7007, 2
      %v7009 = vadd.f32 %v7007, %v7008
      %v7010 = vrot.slane %v7009, 1
      %v7011 = vadd.f32 %v7009, %v7010
      %v7012 = vsel %vm2027, %v6674, 0.0
      %v7013 = vrot.slane %v7012, 4
      %v7014 = vadd.f32 %v7012, %v7013
      %v7015 = vrot.slane %v7014, 2
      %v7016 = vadd.f32 %v7014, %v7015
      %v7017 = vrot.slane %v7016, 1
      %v7018 = vadd.f32 %v7016, %v7017
      %v7019 = vsel %vm2027, %v6675, 0.0
      %v7020 = vrot.slane %v7019, 4
      %v7021 = vadd.f32 %v7019, %v7020
      %v7022 = vrot.slane %v7021, 2
      %v7023 = vadd.f32 %v7021, %v7022
      %v7024 = vrot.slane %v7023, 1
      %v7025 = vadd.f32 %v7023, %v7024
      %v7026 = vsel %vm2027, %v6676, 0.0
      %v7027 = vrot.slane %v7026, 4
      %v7028 = vadd.f32 %v7026, %v7027
      %v7029 = vrot.slane %v7028, 2
      %v7030 = vadd.f32 %v7028, %v7029
      %v7031 = vrot.slane %v7030, 1
      %v7032 = vadd.f32 %v7030, %v7031
      %v7033 = vsel %vm2027, %v6677, 0.0
      %v7034 = vrot.slane %v7033, 4
      %v7035 = vadd.f32 %v7033, %v7034
      %v7036 = vrot.slane %v7035, 2
      %v7037 = vadd.f32 %v7035, %v7036
      %v7038 = vrot.slane %v7037, 1
      %v7039 = vadd.f32 %v7037, %v7038
      %v7040 = vsel %vm2027, %v6678, 0.0
      %v7041 = vrot.slane %v7040, 4
      %v7042 = vadd.f32 %v7040, %v7041
      %v7043 = vrot.slane %v7042, 2
      %v7044 = vadd.f32 %v7042, %v7043
      %v7045 = vrot.slane %v7044, 1
      %v7046 = vadd.f32 %v7044, %v7045
      %v7047 = vsel %vm2027, %v6679, 0.0
      %v7048 = vrot.slane %v7047, 4
      %v7049 = vadd.f32 %v7047, %v7048
      %v7050 = vrot.slane %v7049, 2
      %v7051 = vadd.f32 %v7049, %v7050
      %v7052 = vrot.slane %v7051, 1
      %v7053 = vadd.f32 %v7051, %v7052
      %v7054 = vsel %vm2027, %v6680, 0.0
      %v7055 = vrot.slane %v7054, 4
      %v7056 = vadd.f32 %v7054, %v7055
      %v7057 = vrot.slane %v7056, 2
      %v7058 = vadd.f32 %v7056, %v7057
      %v7059 = vrot.slane %v7058, 1
      %v7060 = vadd.f32 %v7058, %v7059
      %v7061 = vsel %vm2027, %v6681, 0.0
      %v7062 = vrot.slane %v7061, 4
      %v7063 = vadd.f32 %v7061, %v7062
      %v7064 = vrot.slane %v7063, 2
      %v7065 = vadd.f32 %v7063, %v7064
      %v7066 = vrot.slane %v7065, 1
      %v7067 = vadd.f32 %v7065, %v7066
      %v7068 = vsel %vm2027, %v6682, 0.0
      %v7069 = vrot.slane %v7068, 4
      %v7070 = vadd.f32 %v7068, %v7069
      %v7071 = vrot.slane %v7070, 2
      %v7072 = vadd.f32 %v7070, %v7071
      %v7073 = vrot.slane %v7072, 1
      %v7074 = vadd.f32 %v7072, %v7073
      %v7075 = vsel %vm2027, %v6683, 0.0
      %v7076 = vrot.slane %v7075, 4
      %v7077 = vadd.f32 %v7075, %v7076
      %v7078 = vrot.slane %v7077, 2
      %v7079 = vadd.f32 %v7077, %v7078
      %v7080 = vrot.slane %v7079, 1
      %v7081 = vadd.f32 %v7079, %v7080
      %v7082 = vsel %vm2027, %v6684, 0.0
      %v7083 = vrot.slane %v7082, 4
      %v7084 = vadd.f32 %v7082, %v7083
      %v7085 = vrot.slane %v7084, 2
      %v7086 = vadd.f32 %v7084, %v7085
      %v7087 = vrot.slane %v7086, 1
      %v7088 = vadd.f32 %v7086, %v7087
      %v7089 = vsel %vm2027, %v6685, 0.0
      %v7090 = vrot.slane %v7089, 4
      %v7091 = vadd.f32 %v7089, %v7090
      %v7092 = vrot.slane %v7091, 2
      %v7093 = vadd.f32 %v7091, %v7092
      %v7094 = vrot.slane %v7093, 1
      %v7095 = vadd.f32 %v7093, %v7094
      %v7096 = vsel %vm2027, %v6686, 0.0
      %v7097 = vrot.slane %v7096, 4
      %v7098 = vadd.f32 %v7096, %v7097
      %v7099 = vrot.slane %v7098, 2
      %v7100 = vadd.f32 %v7098, %v7099
      %v7101 = vrot.slane %v7100, 1
      %v7102 = vadd.f32 %v7100, %v7101
      %v7103 = vsel %vm2027, %v6687, 0.0
      %v7104 = vrot.slane %v7103, 4
      %v7105 = vadd.f32 %v7103, %v7104
      %v7106 = vrot.slane %v7105, 2
      %v7107 = vadd.f32 %v7105, %v7106
      %v7108 = vrot.slane %v7107, 1
      %v7109 = vadd.f32 %v7107, %v7108
      %v7110 = vsel %vm2027, %v6688, 0.0
      %v7111 = vrot.slane %v7110, 4
      %v7112 = vadd.f32 %v7110, %v7111
      %v7113 = vrot.slane %v7112, 2
      %v7114 = vadd.f32 %v7112, %v7113
      %v7115 = vrot.slane %v7114, 1
      %v7116 = vadd.f32 %v7114, %v7115
      %v7117 = vsel %vm2027, %v6689, 0.0
      %v7118 = vrot.slane %v7117, 4
      %v7119 = vadd.f32 %v7117, %v7118
      %v7120 = vrot.slane %v7119, 2
      %v7121 = vadd.f32 %v7119, %v7120
      %v7122 = vrot.slane %v7121, 1
      %v7123 = vadd.f32 %v7121, %v7122
      %v7124 = vsel %vm2027, %v6690, 0.0
      %v7125 = vrot.slane %v7124, 4
      %v7126 = vadd.f32 %v7124, %v7125
      %v7127 = vrot.slane %v7126, 2
      %v7128 = vadd.f32 %v7126, %v7127
      %v7129 = vrot.slane %v7128, 1
      %v7130 = vadd.f32 %v7128, %v7129
      %v7131 = vsel %vm2027, %v6691, 0.0
      %v7132 = vrot.slane %v7131, 4
      %v7133 = vadd.f32 %v7131, %v7132
      %v7134 = vrot.slane %v7133, 2
      %v7135 = vadd.f32 %v7133, %v7134
      %v7136 = vrot.slane %v7135, 1
      %v7137 = vadd.f32 %v7135, %v7136
      %v7138 = vsel %vm2027, %v6692, 0.0
      %v7139 = vrot.slane %v7138, 4
      %v7140 = vadd.f32 %v7138, %v7139
      %v7141 = vrot.slane %v7140, 2
      %v7142 = vadd.f32 %v7140, %v7141
      %v7143 = vrot.slane %v7142, 1
      %v7144 = vadd.f32 %v7142, %v7143
      %v7145 = vsel %vm2027, %v6693, 0.0
      %v7146 = vrot.slane %v7145, 4
      %v7147 = vadd.f32 %v7145, %v7146
      %v7148 = vrot.slane %v7147, 2
      %v7149 = vadd.f32 %v7147, %v7148
      %v7150 = vrot.slane %v7149, 1
      %v7151 = vadd.f32 %v7149, %v7150
      %v7152 = vsel %vm2027, %v6694, 0.0
      %v7153 = vrot.slane %v7152, 4
      %v7154 = vadd.f32 %v7152, %v7153
      %v7155 = vrot.slane %v7154, 2
      %v7156 = vadd.f32 %v7154, %v7155
      %v7157 = vrot.slane %v7156, 1
      %v7158 = vadd.f32 %v7156, %v7157
      %v7159 = vsel %vm2027, %v6695, 0.0
      %v7160 = vrot.slane %v7159, 4
      %v7161 = vadd.f32 %v7159, %v7160
      %v7162 = vrot.slane %v7161, 2
      %v7163 = vadd.f32 %v7161, %v7162
      %v7164 = vrot.slane %v7163, 1
      %v7165 = vadd.f32 %v7163, %v7164
      %v7166 = vsel %vm2027, %v6696, 0.0
      %v7167 = vrot.slane %v7166, 4
      %v7168 = vadd.f32 %v7166, %v7167
      %v7169 = vrot.slane %v7168, 2
      %v7170 = vadd.f32 %v7168, %v7169
      %v7171 = vrot.slane %v7170, 1
      %v7172 = vadd.f32 %v7170, %v7171
      %v7173 = vsel %vm2027, %v6697, 0.0
      %v7174 = vrot.slane %v7173, 4
      %v7175 = vadd.f32 %v7173, %v7174
      %v7176 = vrot.slane %v7175, 2
      %v7177 = vadd.f32 %v7175, %v7176
      %v7178 = vrot.slane %v7177, 1
      %v7179 = vadd.f32 %v7177, %v7178
      %v7180 = vsel %vm2027, %v6698, 0.0
      %v7181 = vrot.slane %v7180, 4
      %v7182 = vadd.f32 %v7180, %v7181
      %v7183 = vrot.slane %v7182, 2
      %v7184 = vadd.f32 %v7182, %v7183
      %v7185 = vrot.slane %v7184, 1
      %v7186 = vadd.f32 %v7184, %v7185
      %v7187 = vsel %vm2027, %v6699, 0.0
      %v7188 = vrot.slane %v7187, 4
      %v7189 = vadd.f32 %v7187, %v7188
      %v7190 = vrot.slane %v7189, 2
      %v7191 = vadd.f32 %v7189, %v7190
      %v7192 = vrot.slane %v7191, 1
      %v7193 = vadd.f32 %v7191, %v7192
      %v7194 = vsel %vm2027, %v6700, 0.0
      %v7195 = vrot.slane %v7194, 4
      %v7196 = vadd.f32 %v7194, %v7195
      %v7197 = vrot.slane %v7196, 2
      %v7198 = vadd.f32 %v7196, %v7197
      %v7199 = vrot.slane %v7198, 1
      %v7200 = vadd.f32 %v7198, %v7199
      %v7201 = vsel %vm2027, %v6701, 0.0
      %v7202 = vrot.slane %v7201, 4
      %v7203 = vadd.f32 %v7201, %v7202
      %v7204 = vrot.slane %v7203, 2
      %v7205 = vadd.f32 %v7203, %v7204
      %v7206 = vrot.slane %v7205, 1
      %v7207 = vadd.f32 %v7205, %v7206
      %v7208 = vsel %vm2027, %v6702, 0.0
      %v7209 = vrot.slane %v7208, 4
      %v7210 = vadd.f32 %v7208, %v7209
      %v7211 = vrot.slane %v7210, 2
      %v7212 = vadd.f32 %v7210, %v7211
      %v7213 = vrot.slane %v7212, 1
      %v7214 = vadd.f32 %v7212, %v7213
      %v7215 = vsel %vm2027, %v6703, 0.0
      %v7216 = vrot.slane %v7215, 4
      %v7217 = vadd.f32 %v7215, %v7216
      %v7218 = vrot.slane %v7217, 2
      %v7219 = vadd.f32 %v7217, %v7218
      %v7220 = vrot.slane %v7219, 1
      %v7221 = vadd.f32 %v7219, %v7220
      %v7222 = vsel %vm2027, %v6704, 0.0
      %v7223 = vrot.slane %v7222, 4
      %v7224 = vadd.f32 %v7222, %v7223
      %v7225 = vrot.slane %v7224, 2
      %v7226 = vadd.f32 %v7224, %v7225
      %v7227 = vrot.slane %v7226, 1
      %v7228 = vadd.f32 %v7226, %v7227
      %v7229 = vsel %vm2027, %v6705, 0.0
      %v7230 = vrot.slane %v7229, 4
      %v7231 = vadd.f32 %v7229, %v7230
      %v7232 = vrot.slane %v7231, 2
      %v7233 = vadd.f32 %v7231, %v7232
      %v7234 = vrot.slane %v7233, 1
      %v7235 = vadd.f32 %v7233, %v7234
      %v7236 = vsel %vm2027, %v6706, 0.0
      %v7237 = vrot.slane %v7236, 4
      %v7238 = vadd.f32 %v7236, %v7237
      %v7239 = vrot.slane %v7238, 2
      %v7240 = vadd.f32 %v7238, %v7239
      %v7241 = vrot.slane %v7240, 1
      %v7242 = vadd.f32 %v7240, %v7241
      %v7243 = vsel %vm2027, %v6707, 0.0
      %v7244 = vrot.slane %v7243, 4
      %v7245 = vadd.f32 %v7243, %v7244
      %v7246 = vrot.slane %v7245, 2
      %v7247 = vadd.f32 %v7245, %v7246
      %v7248 = vrot.slane %v7247, 1
      %v7249 = vadd.f32 %v7247, %v7248
      %v7250 = vsel %vm2027, %v6708, 0.0
      %v7251 = vrot.slane %v7250, 4
      %v7252 = vadd.f32 %v7250, %v7251
      %v7253 = vrot.slane %v7252, 2
      %v7254 = vadd.f32 %v7252, %v7253
      %v7255 = vrot.slane %v7254, 1
      %v7256 = vadd.f32 %v7254, %v7255
      %v7257 = vsel %vm2027, %v6709, 0.0
      %v7258 = vrot.slane %v7257, 4
      %v7259 = vadd.f32 %v7257, %v7258
      %v7260 = vrot.slane %v7259, 2
      %v7261 = vadd.f32 %v7259, %v7260
      %v7262 = vrot.slane %v7261, 1
      %v7263 = vadd.f32 %v7261, %v7262
      %v7264 = vsel %vm2027, %v6710, 0.0
      %v7265 = vrot.slane %v7264, 4
      %v7266 = vadd.f32 %v7264, %v7265
      %v7267 = vrot.slane %v7266, 2
      %v7268 = vadd.f32 %v7266, %v7267
      %v7269 = vrot.slane %v7268, 1
      %v7270 = vadd.f32 %v7268, %v7269
      %v7271 = vsel %vm2027, %v6711, 0.0
      %v7272 = vrot.slane %v7271, 4
      %v7273 = vadd.f32 %v7271, %v7272
      %v7274 = vrot.slane %v7273, 2
      %v7275 = vadd.f32 %v7273, %v7274
      %v7276 = vrot.slane %v7275, 1
      %v7277 = vadd.f32 %v7275, %v7276
      %v7278 = vsel %vm2027, %v6712, 0.0
      %v7279 = vrot.slane %v7278, 4
      %v7280 = vadd.f32 %v7278, %v7279
      %v7281 = vrot.slane %v7280, 2
      %v7282 = vadd.f32 %v7280, %v7281
      %v7283 = vrot.slane %v7282, 1
      %v7284 = vadd.f32 %v7282, %v7283
      %v7285 = vsel %vm2027, %v6713, 0.0
      %v7286 = vrot.slane %v7285, 4
      %v7287 = vadd.f32 %v7285, %v7286
      %v7288 = vrot.slane %v7287, 2
      %v7289 = vadd.f32 %v7287, %v7288
      %v7290 = vrot.slane %v7289, 1
      %v7291 = vadd.f32 %v7289, %v7290
      %v7292 = vsel %vm2027, %v6714, 0.0
      %v7293 = vrot.slane %v7292, 4
      %v7294 = vadd.f32 %v7292, %v7293
      %v7295 = vrot.slane %v7294, 2
      %v7296 = vadd.f32 %v7294, %v7295
      %v7297 = vrot.slane %v7296, 1
      %v7298 = vadd.f32 %v7296, %v7297
      %v7299 = vsel %vm2027, %v6715, 0.0
      %v7300 = vrot.slane %v7299, 4
      %v7301 = vadd.f32 %v7299, %v7300
      %v7302 = vrot.slane %v7301, 2
      %v7303 = vadd.f32 %v7301, %v7302
      %v7304 = vrot.slane %v7303, 1
      %v7305 = vadd.f32 %v7303, %v7304
      %v7306 = vsel %vm2027, %v6716, 0.0
      %v7307 = vrot.slane %v7306, 4
      %v7308 = vadd.f32 %v7306, %v7307
      %v7309 = vrot.slane %v7308, 2
      %v7310 = vadd.f32 %v7308, %v7309
      %v7311 = vrot.slane %v7310, 1
      %v7312 = vadd.f32 %v7310, %v7311
      %v7313 = vsel %vm2027, %v6717, 0.0
      %v7314 = vrot.slane %v7313, 4
      %v7315 = vadd.f32 %v7313, %v7314
      %v7316 = vrot.slane %v7315, 2
      %v7317 = vadd.f32 %v7315, %v7316
      %v7318 = vrot.slane %v7317, 1
      %v7319 = vadd.f32 %v7317, %v7318
      %v7320 = vsel %vm2027, %v6718, 0.0
      %v7321 = vrot.slane %v7320, 4
      %v7322 = vadd.f32 %v7320, %v7321
      %v7323 = vrot.slane %v7322, 2
      %v7324 = vadd.f32 %v7322, %v7323
      %v7325 = vrot.slane %v7324, 1
      %v7326 = vadd.f32 %v7324, %v7325
      %v7327 = vsel %vm2027, %v6719, 0.0
      %v7328 = vrot.slane %v7327, 4
      %v7329 = vadd.f32 %v7327, %v7328
      %v7330 = vrot.slane %v7329, 2
      %v7331 = vadd.f32 %v7329, %v7330
      %v7332 = vrot.slane %v7331, 1
      %v7333 = vadd.f32 %v7331, %v7332
      %v7334 = vsel %vm2027, %v6720, 0.0
      %v7335 = vrot.slane %v7334, 4
      %v7336 = vadd.f32 %v7334, %v7335
      %v7337 = vrot.slane %v7336, 2
      %v7338 = vadd.f32 %v7336, %v7337
      %v7339 = vrot.slane %v7338, 1
      %v7340 = vadd.f32 %v7338, %v7339
      %v7341 = vsel %vm2027, %v6721, 0.0
      %v7342 = vrot.slane %v7341, 4
      %v7343 = vadd.f32 %v7341, %v7342
      %v7344 = vrot.slane %v7343, 2
      %v7345 = vadd.f32 %v7343, %v7344
      %v7346 = vrot.slane %v7345, 1
      %v7347 = vadd.f32 %v7345, %v7346
      %v7348 = vsel %vm2027, %v6722, 0.0
      %v7349 = vrot.slane %v7348, 4
      %v7350 = vadd.f32 %v7348, %v7349
      %v7351 = vrot.slane %v7350, 2
      %v7352 = vadd.f32 %v7350, %v7351
      %v7353 = vrot.slane %v7352, 1
      %v7354 = vadd.f32 %v7352, %v7353
      %v7355 = vsel %vm2027, %v6723, 0.0
      %v7356 = vrot.slane %v7355, 4
      %v7357 = vadd.f32 %v7355, %v7356
      %v7358 = vrot.slane %v7357, 2
      %v7359 = vadd.f32 %v7357, %v7358
      %v7360 = vrot.slane %v7359, 1
      %v7361 = vadd.f32 %v7359, %v7360
      %v7362 = vsel %vm2027, %v6724, 0.0
      %v7363 = vrot.slane %v7362, 4
      %v7364 = vadd.f32 %v7362, %v7363
      %v7365 = vrot.slane %v7364, 2
      %v7366 = vadd.f32 %v7364, %v7365
      %v7367 = vrot.slane %v7366, 1
      %v7368 = vadd.f32 %v7366, %v7367
      %v7369 = vsel %vm2027, %v6725, 0.0
      %v7370 = vrot.slane %v7369, 4
      %v7371 = vadd.f32 %v7369, %v7370
      %v7372 = vrot.slane %v7371, 2
      %v7373 = vadd.f32 %v7371, %v7372
      %v7374 = vrot.slane %v7373, 1
      %v7375 = vadd.f32 %v7373, %v7374
      %v7376 = vsel %vm2027, %v6726, 0.0
      %v7377 = vrot.slane %v7376, 4
      %v7378 = vadd.f32 %v7376, %v7377
      %v7379 = vrot.slane %v7378, 2
      %v7380 = vadd.f32 %v7378, %v7379
      %v7381 = vrot.slane %v7380, 1
      %v7382 = vadd.f32 %v7380, %v7381
      %v7383 = vsel %vm2027, %v6727, 0.0
      %v7384 = vrot.slane %v7383, 4
      %v7385 = vadd.f32 %v7383, %v7384
      %v7386 = vrot.slane %v7385, 2
      %v7387 = vadd.f32 %v7385, %v7386
      %v7388 = vrot.slane %v7387, 1
      %v7389 = vadd.f32 %v7387, %v7388
      %v7390 = vsel %vm2027, %v6728, 0.0
      %v7391 = vrot.slane %v7390, 4
      %v7392 = vadd.f32 %v7390, %v7391
      %v7393 = vrot.slane %v7392, 2
      %v7394 = vadd.f32 %v7392, %v7393
      %v7395 = vrot.slane %v7394, 1
      %v7396 = vadd.f32 %v7394, %v7395
      %v7397 = vsel %vm2027, %v6729, 0.0
      %v7398 = vrot.slane %v7397, 4
      %v7399 = vadd.f32 %v7397, %v7398
      %v7400 = vrot.slane %v7399, 2
      %v7401 = vadd.f32 %v7399, %v7400
      %v7402 = vrot.slane %v7401, 1
      %v7403 = vadd.f32 %v7401, %v7402
      %v7404 = vsel %vm2027, %v6730, 0.0
      %v7405 = vrot.slane %v7404, 4
      %v7406 = vadd.f32 %v7404, %v7405
      %v7407 = vrot.slane %v7406, 2
      %v7408 = vadd.f32 %v7406, %v7407
      %v7409 = vrot.slane %v7408, 1
      %v7410 = vadd.f32 %v7408, %v7409
      %v7411 = vsel %vm2027, %v6731, 0.0
      %v7412 = vrot.slane %v7411, 4
      %v7413 = vadd.f32 %v7411, %v7412
      %v7414 = vrot.slane %v7413, 2
      %v7415 = vadd.f32 %v7413, %v7414
      %v7416 = vrot.slane %v7415, 1
      %v7417 = vadd.f32 %v7415, %v7416
      %v7418 = vsel %vm2027, %v6732, 0.0
      %v7419 = vrot.slane %v7418, 4
      %v7420 = vadd.f32 %v7418, %v7419
      %v7421 = vrot.slane %v7420, 2
      %v7422 = vadd.f32 %v7420, %v7421
      %v7423 = vrot.slane %v7422, 1
      %v7424 = vadd.f32 %v7422, %v7423
      %v7425 = vsel %vm2027, %v6733, 0.0
      %v7426 = vrot.slane %v7425, 4
      %v7427 = vadd.f32 %v7425, %v7426
      %v7428 = vrot.slane %v7427, 2
      %v7429 = vadd.f32 %v7427, %v7428
      %v7430 = vrot.slane %v7429, 1
      %v7431 = vadd.f32 %v7429, %v7430
      %v7432 = vsel %vm2027, %v6734, 0.0
      %v7433 = vrot.slane %v7432, 4
      %v7434 = vadd.f32 %v7432, %v7433
      %v7435 = vrot.slane %v7434, 2
      %v7436 = vadd.f32 %v7434, %v7435
      %v7437 = vrot.slane %v7436, 1
      %v7438 = vadd.f32 %v7436, %v7437
      %v7439 = vsel %vm2027, %v6735, 0.0
      %v7440 = vrot.slane %v7439, 4
      %v7441 = vadd.f32 %v7439, %v7440
      %v7442 = vrot.slane %v7441, 2
      %v7443 = vadd.f32 %v7441, %v7442
      %v7444 = vrot.slane %v7443, 1
      %v7445 = vadd.f32 %v7443, %v7444
      %v7446 = vsel %vm2027, %v6736, 0.0
      %v7447 = vrot.slane %v7446, 4
      %v7448 = vadd.f32 %v7446, %v7447
      %v7449 = vrot.slane %v7448, 2
      %v7450 = vadd.f32 %v7448, %v7449
      %v7451 = vrot.slane %v7450, 1
      %v7452 = vadd.f32 %v7450, %v7451
      %v7453 = vsel %vm2027, %v6737, 0.0
      %v7454 = vrot.slane %v7453, 4
      %v7455 = vadd.f32 %v7453, %v7454
      %v7456 = vrot.slane %v7455, 2
      %v7457 = vadd.f32 %v7455, %v7456
      %v7458 = vrot.slane %v7457, 1
      %v7459 = vadd.f32 %v7457, %v7458
      %v7460 = vsel %vm2027, %v6738, 0.0
      %v7461 = vrot.slane %v7460, 4
      %v7462 = vadd.f32 %v7460, %v7461
      %v7463 = vrot.slane %v7462, 2
      %v7464 = vadd.f32 %v7462, %v7463
      %v7465 = vrot.slane %v7464, 1
      %v7466 = vadd.f32 %v7464, %v7465
      %v7467 = vsel %vm2027, %v6739, 0.0
      %v7468 = vrot.slane %v7467, 4
      %v7469 = vadd.f32 %v7467, %v7468
      %v7470 = vrot.slane %v7469, 2
      %v7471 = vadd.f32 %v7469, %v7470
      %v7472 = vrot.slane %v7471, 1
      %v7473 = vadd.f32 %v7471, %v7472
      %v7474 = vsel %vm2027, %v6740, 0.0
      %v7475 = vrot.slane %v7474, 4
      %v7476 = vadd.f32 %v7474, %v7475
      %v7477 = vrot.slane %v7476, 2
      %v7478 = vadd.f32 %v7476, %v7477
      %v7479 = vrot.slane %v7478, 1
      %v7480 = vadd.f32 %v7478, %v7479
      %v7481 = vsel %vm2027, %v6741, 0.0
      %v7482 = vrot.slane %v7481, 4
      %v7483 = vadd.f32 %v7481, %v7482
      %v7484 = vrot.slane %v7483, 2
      %v7485 = vadd.f32 %v7483, %v7484
      %v7486 = vrot.slane %v7485, 1
      %v7487 = vadd.f32 %v7485, %v7486
      %v7488 = vsel %vm2027, %v6742, 0.0
      %v7489 = vrot.slane %v7488, 4
      %v7490 = vadd.f32 %v7488, %v7489
      %v7491 = vrot.slane %v7490, 2
      %v7492 = vadd.f32 %v7490, %v7491
      %v7493 = vrot.slane %v7492, 1
      %v7494 = vadd.f32 %v7492, %v7493
      %v7495 = vsel %vm2027, %v6743, 0.0
      %v7496 = vrot.slane %v7495, 4
      %v7497 = vadd.f32 %v7495, %v7496
      %v7498 = vrot.slane %v7497, 2
      %v7499 = vadd.f32 %v7497, %v7498
      %v7500 = vrot.slane %v7499, 1
      %v7501 = vadd.f32 %v7499, %v7500
      %v7502 = vsel %vm2027, %v6744, 0.0
      %v7503 = vrot.slane %v7502, 4
      %v7504 = vadd.f32 %v7502, %v7503
      %v7505 = vrot.slane %v7504, 2
      %v7506 = vadd.f32 %v7504, %v7505
      %v7507 = vrot.slane %v7506, 1
      %v7508 = vadd.f32 %v7506, %v7507
      %v7509 = vsel %vm2027, %v6745, 0.0
      %v7510 = vrot.slane %v7509, 4
      %v7511 = vadd.f32 %v7509, %v7510
      %v7512 = vrot.slane %v7511, 2
      %v7513 = vadd.f32 %v7511, %v7512
      %v7514 = vrot.slane %v7513, 1
      %v7515 = vadd.f32 %v7513, %v7514
      %v7516 = vsel %vm2027, %v6746, 0.0
      %v7517 = vrot.slane %v7516, 4
      %v7518 = vadd.f32 %v7516, %v7517
      %v7519 = vrot.slane %v7518, 2
      %v7520 = vadd.f32 %v7518, %v7519
      %v7521 = vrot.slane %v7520, 1
      %v7522 = vadd.f32 %v7520, %v7521
      %v7523 = vsel %vm2027, %v6747, 0.0
      %v7524 = vrot.slane %v7523, 4
      %v7525 = vadd.f32 %v7523, %v7524
      %v7526 = vrot.slane %v7525, 2
      %v7527 = vadd.f32 %v7525, %v7526
      %v7528 = vrot.slane %v7527, 1
      %v7529 = vadd.f32 %v7527, %v7528
      %v7530 = vsel %vm2027, %v6748, 0.0
      %v7531 = vrot.slane %v7530, 4
      %v7532 = vadd.f32 %v7530, %v7531
      %v7533 = vrot.slane %v7532, 2
      %v7534 = vadd.f32 %v7532, %v7533
      %v7535 = vrot.slane %v7534, 1
      %v7536 = vadd.f32 %v7534, %v7535
      %v7537 = vsel %vm2027, %v6749, 0.0
      %v7538 = vrot.slane %v7537, 4
      %v7539 = vadd.f32 %v7537, %v7538
      %v7540 = vrot.slane %v7539, 2
      %v7541 = vadd.f32 %v7539, %v7540
      %v7542 = vrot.slane %v7541, 1
      %v7543 = vadd.f32 %v7541, %v7542
      %v7544 = vsel %vm2027, %v6750, 0.0
      %v7545 = vrot.slane %v7544, 4
      %v7546 = vadd.f32 %v7544, %v7545
      %v7547 = vrot.slane %v7546, 2
      %v7548 = vadd.f32 %v7546, %v7547
      %v7549 = vrot.slane %v7548, 1
      %v7550 = vadd.f32 %v7548, %v7549
      %v7551 = vsel %vm2027, %v6751, 0.0
      %v7552 = vrot.slane %v7551, 4
      %v7553 = vadd.f32 %v7551, %v7552
      %v7554 = vrot.slane %v7553, 2
      %v7555 = vadd.f32 %v7553, %v7554
      %v7556 = vrot.slane %v7555, 1
      %v7557 = vadd.f32 %v7555, %v7556
      %v7558 = vsel %vm2027, %v6752, 0.0
      %v7559 = vrot.slane %v7558, 4
      %v7560 = vadd.f32 %v7558, %v7559
      %v7561 = vrot.slane %v7560, 2
      %v7562 = vadd.f32 %v7560, %v7561
      %v7563 = vrot.slane %v7562, 1
      %v7564 = vadd.f32 %v7562, %v7563
      %v7565 = vsel %vm2027, %v6753, 0.0
      %v7566 = vrot.slane %v7565, 4
      %v7567 = vadd.f32 %v7565, %v7566
      %v7568 = vrot.slane %v7567, 2
      %v7569 = vadd.f32 %v7567, %v7568
      %v7570 = vrot.slane %v7569, 1
      %v7571 = vadd.f32 %v7569, %v7570
      %v7572 = vsel %vm2027, %v6754, 0.0
      %v7573 = vrot.slane %v7572, 4
      %v7574 = vadd.f32 %v7572, %v7573
      %v7575 = vrot.slane %v7574, 2
      %v7576 = vadd.f32 %v7574, %v7575
      %v7577 = vrot.slane %v7576, 1
      %v7578 = vadd.f32 %v7576, %v7577
      %v7579 = vsel %vm2027, %v6755, 0.0
      %v7580 = vrot.slane %v7579, 4
      %v7581 = vadd.f32 %v7579, %v7580
      %v7582 = vrot.slane %v7581, 2
      %v7583 = vadd.f32 %v7581, %v7582
      %v7584 = vrot.slane %v7583, 1
      %v7585 = vadd.f32 %v7583, %v7584
      %v7586 = vsel %vm2027, %v6756, 0.0
      %v7587 = vrot.slane %v7586, 4
      %v7588 = vadd.f32 %v7586, %v7587
      %v7589 = vrot.slane %v7588, 2
      %v7590 = vadd.f32 %v7588, %v7589
      %v7591 = vrot.slane %v7590, 1
      %v7592 = vadd.f32 %v7590, %v7591
      %v7593 = vsel %vm2027, %v6757, 0.0
      %v7594 = vrot.slane %v7593, 4
      %v7595 = vadd.f32 %v7593, %v7594
      %v7596 = vrot.slane %v7595, 2
      %v7597 = vadd.f32 %v7595, %v7596
      %v7598 = vrot.slane %v7597, 1
      %v7599 = vadd.f32 %v7597, %v7598
      %v7600 = vsel %vm2027, %v6758, 0.0
      %v7601 = vrot.slane %v7600, 4
      %v7602 = vadd.f32 %v7600, %v7601
      %v7603 = vrot.slane %v7602, 2
      %v7604 = vadd.f32 %v7602, %v7603
      %v7605 = vrot.slane %v7604, 1
      %v7606 = vadd.f32 %v7604, %v7605
      %v7607 = vsel %vm2027, %v6759, 0.0
      %v7608 = vrot.slane %v7607, 4
      %v7609 = vadd.f32 %v7607, %v7608
      %v7610 = vrot.slane %v7609, 2
      %v7611 = vadd.f32 %v7609, %v7610
      %v7612 = vrot.slane %v7611, 1
      %v7613 = vadd.f32 %v7611, %v7612
      %v7614 = vsel %vm2027, %v6760, 0.0
      %v7615 = vrot.slane %v7614, 4
      %v7616 = vadd.f32 %v7614, %v7615
      %v7617 = vrot.slane %v7616, 2
      %v7618 = vadd.f32 %v7616, %v7617
      %v7619 = vrot.slane %v7618, 1
      %v7620 = vadd.f32 %v7618, %v7619
      %v7621 = vsel %vm2027, %v6761, 0.0
      %v7622 = vrot.slane %v7621, 4
      %v7623 = vadd.f32 %v7621, %v7622
      %v7624 = vrot.slane %v7623, 2
      %v7625 = vadd.f32 %v7623, %v7624
      %v7626 = vrot.slane %v7625, 1
      %v7627 = vadd.f32 %v7625, %v7626
      %v7628 = vsel %vm2027, %v6762, 0.0
      %v7629 = vrot.slane %v7628, 4
      %v7630 = vadd.f32 %v7628, %v7629
      %v7631 = vrot.slane %v7630, 2
      %v7632 = vadd.f32 %v7630, %v7631
      %v7633 = vrot.slane %v7632, 1
      %v7634 = vadd.f32 %v7632, %v7633
      %v7635 = vsel %vm2027, %v6763, 0.0
      %v7636 = vrot.slane %v7635, 4
      %v7637 = vadd.f32 %v7635, %v7636
      %v7638 = vrot.slane %v7637, 2
      %v7639 = vadd.f32 %v7637, %v7638
      %v7640 = vrot.slane %v7639, 1
      %v7641 = vadd.f32 %v7639, %v7640
      %v7642 = vsel %vm2027, %v6764, 0.0
      %v7643 = vrot.slane %v7642, 4
      %v7644 = vadd.f32 %v7642, %v7643
      %v7645 = vrot.slane %v7644, 2
      %v7646 = vadd.f32 %v7644, %v7645
      %v7647 = vrot.slane %v7646, 1
      %v7648 = vadd.f32 %v7646, %v7647
      %v7649 = vsel %vm2027, %v6765, 0.0
      %v7650 = vrot.slane %v7649, 4
      %v7651 = vadd.f32 %v7649, %v7650
      %v7652 = vrot.slane %v7651, 2
      %v7653 = vadd.f32 %v7651, %v7652
      %v7654 = vrot.slane %v7653, 1
      %v7655 = vadd.f32 %v7653, %v7654
      %v7656 = vsel %vm2027, %v6766, 0.0
      %v7657 = vrot.slane %v7656, 4
      %v7658 = vadd.f32 %v7656, %v7657
      %v7659 = vrot.slane %v7658, 2
      %v7660 = vadd.f32 %v7658, %v7659
      %v7661 = vrot.slane %v7660, 1
      %v7662 = vadd.f32 %v7660, %v7661
      %7791 = vrot.lane.b32.xlu0 %v6384, 112
      %v7792 = vpop.permute.xlu0 %7791
      %7793 = vrot.lane.b32.xlu0 %v6386, 112
      %v7794 = vpop.permute.xlu0 %7793
      %7795 = vrot.lane.b32.xlu0 %v6388, 112
      %v7796 = vpop.permute.xlu0 %7795
      %7797 = vrot.lane.b32.xlu0 %v6390, 112
      %v7798 = vpop.permute.xlu0 %7797
      %7799 = vrot.lane.b32.xlu0 %v6392, 112
      %v7800 = vpop.permute.xlu0 %7799
      %7801 = vrot.lane.b32.xlu0 %v6394, 112
      %v7802 = vpop.permute.xlu0 %7801
      %7803 = vrot.lane.b32.xlu0 %v6396, 112
      %v7804 = vpop.permute.xlu0 %7803
      %7805 = vrot.lane.b32.xlu0 %v6398, 112
      %v7806 = vpop.permute.xlu0 %7805
      %7807 = vrot.lane.b32.xlu0 %v6400, 112
      %v7808 = vpop.permute.xlu0 %7807
      %7809 = vrot.lane.b32.xlu0 %v6402, 112
      %v7810 = vpop.permute.xlu0 %7809
      %7811 = vrot.lane.b32.xlu0 %v6404, 112
      %v7812 = vpop.permute.xlu0 %7811
      %7813 = vrot.lane.b32.xlu0 %v6406, 112
      %v7814 = vpop.permute.xlu0 %7813
      %7815 = vrot.lane.b32.xlu0 %v6408, 112
      %v7816 = vpop.permute.xlu0 %7815
      %7817 = vrot.lane.b32.xlu0 %v6410, 112
      %v7818 = vpop.permute.xlu0 %7817
      %7819 = vrot.lane.b32.xlu0 %v6412, 112
      %v7820 = vpop.permute.xlu0 %7819
      %7821 = vrot.lane.b32.xlu0 %v6414, 112
      %v7822 = vpop.permute.xlu0 %7821
      %7823 = vrot.lane.b32.xlu0 %v6416, 112
      %v7824 = vpop.permute.xlu0 %7823
      %7825 = vrot.lane.b32.xlu0 %v6418, 112
      %v7826 = vpop.permute.xlu0 %7825
      %7827 = vrot.lane.b32.xlu0 %v6420, 112
      %v7828 = vpop.permute.xlu0 %7827
      %7829 = vrot.lane.b32.xlu0 %v6422, 112
      %v7830 = vpop.permute.xlu0 %7829
      %7831 = vrot.lane.b32.xlu0 %v6424, 112
      %v7832 = vpop.permute.xlu0 %7831
      %7833 = vrot.lane.b32.xlu0 %v6426, 112
      %v7834 = vpop.permute.xlu0 %7833
      %7835 = vrot.lane.b32.xlu0 %v6428, 112
      %v7836 = vpop.permute.xlu0 %7835
      %7837 = vrot.lane.b32.xlu0 %v6430, 112
      %v7838 = vpop.permute.xlu0 %7837
      %7839 = vrot.lane.b32.xlu0 %v6432, 112
      %v7840 = vpop.permute.xlu0 %7839
      %7841 = vrot.lane.b32.xlu0 %v6434, 112
      %v7842 = vpop.permute.xlu0 %7841
      %7843 = vrot.lane.b32.xlu0 %v6436, 112
      %v7844 = vpop.permute.xlu0 %7843
      %7845 = vrot.lane.b32.xlu0 %v6438, 112
      %v7846 = vpop.permute.xlu0 %7845
      %7847 = vrot.lane.b32.xlu0 %v6440, 112
      %v7848 = vpop.permute.xlu0 %7847
      %7849 = vrot.lane.b32.xlu0 %v6442, 112
      %v7850 = vpop.permute.xlu0 %7849
      %7851 = vrot.lane.b32.xlu0 %v6444, 112
      %v7852 = vpop.permute.xlu0 %7851
      %7853 = vrot.lane.b32.xlu0 %v6446, 112
      %v7854 = vpop.permute.xlu0 %7853
      %7855 = vrot.lane.b32.xlu0 %v6448, 112
      %v7856 = vpop.permute.xlu0 %7855
      %7857 = vrot.lane.b32.xlu0 %v6450, 112
      %v7858 = vpop.permute.xlu0 %7857
      %7859 = vrot.lane.b32.xlu0 %v6452, 112
      %v7860 = vpop.permute.xlu0 %7859
      %7861 = vrot.lane.b32.xlu0 %v6454, 112
      %v7862 = vpop.permute.xlu0 %7861
      %7863 = vrot.lane.b32.xlu0 %v6456, 112
      %v7864 = vpop.permute.xlu0 %7863
      %7865 = vrot.lane.b32.xlu0 %v6458, 112
      %v7866 = vpop.permute.xlu0 %7865
      %7867 = vrot.lane.b32.xlu0 %v6460, 112
      %v7868 = vpop.permute.xlu0 %7867
      %7869 = vrot.lane.b32.xlu0 %v6462, 112
      %v7870 = vpop.permute.xlu0 %7869
      %7871 = vrot.lane.b32.xlu0 %v6464, 112
      %v7872 = vpop.permute.xlu0 %7871
      %7873 = vrot.lane.b32.xlu0 %v6466, 112
      %v7874 = vpop.permute.xlu0 %7873
      %7875 = vrot.lane.b32.xlu0 %v6468, 112
      %v7876 = vpop.permute.xlu0 %7875
      %7877 = vrot.lane.b32.xlu0 %v6470, 112
      %v7878 = vpop.permute.xlu0 %7877
      %7879 = vrot.lane.b32.xlu0 %v6472, 112
      %v7880 = vpop.permute.xlu0 %7879
      %7881 = vrot.lane.b32.xlu0 %v6474, 112
      %v7882 = vpop.permute.xlu0 %7881
      %7883 = vrot.lane.b32.xlu0 %v6476, 112
      %v7884 = vpop.permute.xlu0 %7883
      %7885 = vrot.lane.b32.xlu0 %v6478, 112
      %v7886 = vpop.permute.xlu0 %7885
      %7887 = vrot.lane.b32.xlu0 %v6480, 112
      %v7888 = vpop.permute.xlu0 %7887
      %7889 = vrot.lane.b32.xlu0 %v6482, 112
      %v7890 = vpop.permute.xlu0 %7889
      %7891 = vrot.lane.b32.xlu0 %v6484, 112
      %v7892 = vpop.permute.xlu0 %7891
      %7893 = vrot.lane.b32.xlu0 %v6486, 112
      %v7894 = vpop.permute.xlu0 %7893
      %7895 = vrot.lane.b32.xlu0 %v6488, 112
      %v7896 = vpop.permute.xlu0 %7895
      %7897 = vrot.lane.b32.xlu0 %v6490, 112
      %v7898 = vpop.permute.xlu0 %7897
      %7899 = vrot.lane.b32.xlu0 %v6492, 112
      %v7900 = vpop.permute.xlu0 %7899
      %7901 = vrot.lane.b32.xlu0 %v6494, 112
      %v7902 = vpop.permute.xlu0 %7901
      %7903 = vrot.lane.b32.xlu0 %v6496, 112
      %v7904 = vpop.permute.xlu0 %7903
      %7905 = vrot.lane.b32.xlu0 %v6498, 112
      %v7906 = vpop.permute.xlu0 %7905
      %7907 = vrot.lane.b32.xlu0 %v6500, 112
      %v7908 = vpop.permute.xlu0 %7907
      %7909 = vrot.lane.b32.xlu0 %v6502, 112
      %v7910 = vpop.permute.xlu0 %7909
      %7911 = vrot.lane.b32.xlu0 %v6504, 112
      %v7912 = vpop.permute.xlu0 %7911
      %7913 = vrot.lane.b32.xlu0 %v6506, 112
      %v7914 = vpop.permute.xlu0 %7913
      %7915 = vrot.lane.b32.xlu0 %v6508, 112
      %v7916 = vpop.permute.xlu0 %7915
      %7917 = vrot.lane.b32.xlu0 %v6510, 112
      %v7918 = vpop.permute.xlu0 %7917
      %7919 = vrot.lane.b32.xlu0 %v6512, 112
      %v7920 = vpop.permute.xlu0 %7919
      %7921 = vrot.lane.b32.xlu0 %v6514, 112
      %v7922 = vpop.permute.xlu0 %7921
      %7923 = vrot.lane.b32.xlu0 %v6516, 112
      %v7924 = vpop.permute.xlu0 %7923
      %7925 = vrot.lane.b32.xlu0 %v6518, 112
      %v7926 = vpop.permute.xlu0 %7925
      %7927 = vrot.lane.b32.xlu0 %v6520, 112
      %v7928 = vpop.permute.xlu0 %7927
      %7929 = vrot.lane.b32.xlu0 %v6522, 112
      %v7930 = vpop.permute.xlu0 %7929
      %7931 = vrot.lane.b32.xlu0 %v6524, 112
      %v7932 = vpop.permute.xlu0 %7931
      %7933 = vrot.lane.b32.xlu0 %v6526, 112
      %v7934 = vpop.permute.xlu0 %7933
      %7935 = vrot.lane.b32.xlu0 %v6528, 112
      %v7936 = vpop.permute.xlu0 %7935
      %7937 = vrot.lane.b32.xlu0 %v6530, 112
      %v7938 = vpop.permute.xlu0 %7937
      %7939 = vrot.lane.b32.xlu0 %v6532, 112
      %v7940 = vpop.permute.xlu0 %7939
      %7941 = vrot.lane.b32.xlu0 %v6534, 112
      %v7942 = vpop.permute.xlu0 %7941
      %7943 = vrot.lane.b32.xlu0 %v6536, 112
      %v7944 = vpop.permute.xlu0 %7943
      %7945 = vrot.lane.b32.xlu0 %v6538, 112
      %v7946 = vpop.permute.xlu0 %7945
      %7947 = vrot.lane.b32.xlu0 %v6540, 112
      %v7948 = vpop.permute.xlu0 %7947
      %7949 = vrot.lane.b32.xlu0 %v6542, 112
      %v7950 = vpop.permute.xlu0 %7949
      %7951 = vrot.lane.b32.xlu0 %v6544, 112
      %v7952 = vpop.permute.xlu0 %7951
      %7953 = vrot.lane.b32.xlu0 %v6546, 112
      %v7954 = vpop.permute.xlu0 %7953
      %7955 = vrot.lane.b32.xlu0 %v6548, 112
      %v7956 = vpop.permute.xlu0 %7955
      %7957 = vrot.lane.b32.xlu0 %v6550, 112
      %v7958 = vpop.permute.xlu0 %7957
      %7959 = vrot.lane.b32.xlu0 %v6552, 112
      %v7960 = vpop.permute.xlu0 %7959
      %7961 = vrot.lane.b32.xlu0 %v6554, 112
      %v7962 = vpop.permute.xlu0 %7961
      %7963 = vrot.lane.b32.xlu0 %v6556, 112
      %v7964 = vpop.permute.xlu0 %7963
      %7965 = vrot.lane.b32.xlu0 %v6558, 112
      %v7966 = vpop.permute.xlu0 %7965
      %7967 = vrot.lane.b32.xlu0 %v6560, 112
      %v7968 = vpop.permute.xlu0 %7967
      %7969 = vrot.lane.b32.xlu0 %v6562, 112
      %v7970 = vpop.permute.xlu0 %7969
      %7971 = vrot.lane.b32.xlu0 %v6564, 112
      %v7972 = vpop.permute.xlu0 %7971
      %7973 = vrot.lane.b32.xlu0 %v6566, 112
      %v7974 = vpop.permute.xlu0 %7973
      %7975 = vrot.lane.b32.xlu0 %v6568, 112
      %v7976 = vpop.permute.xlu0 %7975
      %7977 = vrot.lane.b32.xlu0 %v6570, 112
      %v7978 = vpop.permute.xlu0 %7977
      %7979 = vrot.lane.b32.xlu0 %v6572, 112
      %v7980 = vpop.permute.xlu0 %7979
      %7981 = vrot.lane.b32.xlu0 %v6574, 112
      %v7982 = vpop.permute.xlu0 %7981
      %7983 = vrot.lane.b32.xlu0 %v6576, 112
      %v7984 = vpop.permute.xlu0 %7983
      %7985 = vrot.lane.b32.xlu0 %v6578, 112
      %v7986 = vpop.permute.xlu0 %7985
      %7987 = vrot.lane.b32.xlu0 %v6580, 112
      %v7988 = vpop.permute.xlu0 %7987
      %7989 = vrot.lane.b32.xlu0 %v6582, 112
      %v7990 = vpop.permute.xlu0 %7989
      %7991 = vrot.lane.b32.xlu0 %v6584, 112
      %v7992 = vpop.permute.xlu0 %7991
      %7993 = vrot.lane.b32.xlu0 %v6586, 112
      %v7994 = vpop.permute.xlu0 %7993
      %7995 = vrot.lane.b32.xlu0 %v6588, 112
      %v7996 = vpop.permute.xlu0 %7995
      %7997 = vrot.lane.b32.xlu0 %v6590, 112
      %v7998 = vpop.permute.xlu0 %7997
      %7999 = vrot.lane.b32.xlu0 %v6592, 112
      %v8000 = vpop.permute.xlu0 %7999
      %8001 = vrot.lane.b32.xlu0 %v6594, 112
      %v8002 = vpop.permute.xlu0 %8001
      %8003 = vrot.lane.b32.xlu0 %v6596, 112
      %v8004 = vpop.permute.xlu0 %8003
      %8005 = vrot.lane.b32.xlu0 %v6598, 112
      %v8006 = vpop.permute.xlu0 %8005
      %8007 = vrot.lane.b32.xlu0 %v6600, 112
      %v8008 = vpop.permute.xlu0 %8007
      %8009 = vrot.lane.b32.xlu0 %v6602, 112
      %v8010 = vpop.permute.xlu0 %8009
      %8011 = vrot.lane.b32.xlu0 %v6604, 112
      %v8012 = vpop.permute.xlu0 %8011
      %8013 = vrot.lane.b32.xlu0 %v6606, 112
      %v8014 = vpop.permute.xlu0 %8013
      %8015 = vrot.lane.b32.xlu0 %v6608, 112
      %v8016 = vpop.permute.xlu0 %8015
      %8017 = vrot.lane.b32.xlu0 %v6610, 112
      %v8018 = vpop.permute.xlu0 %8017
      %8019 = vrot.lane.b32.xlu0 %v6612, 112
      %v8020 = vpop.permute.xlu0 %8019
      %8021 = vrot.lane.b32.xlu0 %v6614, 112
      %v8022 = vpop.permute.xlu0 %8021
      %8023 = vrot.lane.b32.xlu0 %v6616, 112
      %v8024 = vpop.permute.xlu0 %8023
      %8025 = vrot.lane.b32.xlu0 %v6618, 112
      %v8026 = vpop.permute.xlu0 %8025
      %8027 = vrot.lane.b32.xlu0 %v6620, 112
      %v8028 = vpop.permute.xlu0 %8027
      %8029 = vrot.lane.b32.xlu0 %v6622, 112
      %v8030 = vpop.permute.xlu0 %8029
      %8031 = vrot.lane.b32.xlu0 %v6624, 112
      %v8032 = vpop.permute.xlu0 %8031
      %8033 = vrot.lane.b32.xlu0 %v6626, 112
      %v8034 = vpop.permute.xlu0 %8033
      %8035 = vrot.lane.b32.xlu0 %v6628, 112
      %v8036 = vpop.permute.xlu0 %8035
      %8037 = vrot.lane.b32.xlu0 %v6630, 112
      %v8038 = vpop.permute.xlu0 %8037
      %8039 = vrot.lane.b32.xlu0 %v6632, 112
      %v8040 = vpop.permute.xlu0 %8039
      %8041 = vrot.lane.b32.xlu0 %v6634, 112
      %v8042 = vpop.permute.xlu0 %8041
      %8043 = vrot.lane.b32.xlu0 %v6636, 112
      %v8044 = vpop.permute.xlu0 %8043
      %8045 = vrot.lane.b32.xlu0 %v6638, 112
      %v8046 = vpop.permute.xlu0 %8045
      %v8175 = vmul.f32 %v1767, %v7792
      %v8176 = vmul.f32 %v1768, %v7794
      %v8177 = vmul.f32 %v1769, %v7796
      %v8178 = vmul.f32 %v1770, %v7798
      %v8179 = vmul.f32 %v1771, %v7800
      %v8180 = vmul.f32 %v1772, %v7802
      %v8181 = vmul.f32 %v1773, %v7804
      %v8182 = vmul.f32 %v1774, %v7806
      %v8183 = vmul.f32 %v1775, %v7808
      %v8184 = vmul.f32 %v1776, %v7810
      %v8185 = vmul.f32 %v1777, %v7812
      %v8186 = vmul.f32 %v1778, %v7814
      %v8187 = vmul.f32 %v1779, %v7816
      %v8188 = vmul.f32 %v1780, %v7818
      %v8189 = vmul.f32 %v1781, %v7820
      %v8190 = vmul.f32 %v1782, %v7822
      %v8191 = vmul.f32 %v1783, %v7824
      %v8192 = vmul.f32 %v1784, %v7826
      %v8193 = vmul.f32 %v1785, %v7828
      %v8194 = vmul.f32 %v1786, %v7830
      %v8195 = vmul.f32 %v1787, %v7832
      %v8196 = vmul.f32 %v1788, %v7834
      %v8197 = vmul.f32 %v1789, %v7836
      %v8198 = vmul.f32 %v1790, %v7838
      %v8199 = vmul.f32 %v1791, %v7840
      %v8200 = vmul.f32 %v1792, %v7842
      %v8201 = vmul.f32 %v1793, %v7844
      %v8202 = vmul.f32 %v1794, %v7846
      %v8203 = vmul.f32 %v1795, %v7848
      %v8204 = vmul.f32 %v1796, %v7850
      %v8205 = vmul.f32 %v1797, %v7852
      %v8206 = vmul.f32 %v1798, %v7854
      %v8207 = vmul.f32 %v1799, %v7856
      %v8208 = vmul.f32 %v1800, %v7858
      %v8209 = vmul.f32 %v1801, %v7860
      %v8210 = vmul.f32 %v1802, %v7862
      %v8211 = vmul.f32 %v1803, %v7864
      %v8212 = vmul.f32 %v1804, %v7866
      %v8213 = vmul.f32 %v1805, %v7868
      %v8214 = vmul.f32 %v1806, %v7870
      %v8215 = vmul.f32 %v1807, %v7872
      %v8216 = vmul.f32 %v1808, %v7874
      %v8217 = vmul.f32 %v1809, %v7876
      %v8218 = vmul.f32 %v1810, %v7878
      %v8219 = vmul.f32 %v1811, %v7880
      %v8220 = vmul.f32 %v1812, %v7882
      %v8221 = vmul.f32 %v1813, %v7884
      %v8222 = vmul.f32 %v1814, %v7886
      %v8223 = vmul.f32 %v1815, %v7888
      %v8224 = vmul.f32 %v1816, %v7890
      %v8225 = vmul.f32 %v1817, %v7892
      %v8226 = vmul.f32 %v1818, %v7894
      %v8227 = vmul.f32 %v1819, %v7896
      %v8228 = vmul.f32 %v1820, %v7898
      %v8229 = vmul.f32 %v1821, %v7900
      %v8230 = vmul.f32 %v1822, %v7902
      %v8231 = vmul.f32 %v1823, %v7904
      %v8232 = vmul.f32 %v1824, %v7906
      %v8233 = vmul.f32 %v1825, %v7908
      %v8234 = vmul.f32 %v1826, %v7910
      %v8235 = vmul.f32 %v1827, %v7912
      %v8236 = vmul.f32 %v1828, %v7914
      %v8237 = vmul.f32 %v1829, %v7916
      %v8238 = vmul.f32 %v1830, %v7918
      %v8239 = vmul.f32 %v1831, %v7920
      %v8240 = vmul.f32 %v1832, %v7922
      %v8241 = vmul.f32 %v1833, %v7924
      %v8242 = vmul.f32 %v1834, %v7926
      %v8243 = vmul.f32 %v1835, %v7928
      %v8244 = vmul.f32 %v1836, %v7930
      %v8245 = vmul.f32 %v1837, %v7932
      %v8246 = vmul.f32 %v1838, %v7934
      %v8247 = vmul.f32 %v1839, %v7936
      %v8248 = vmul.f32 %v1840, %v7938
      %v8249 = vmul.f32 %v1841, %v7940
      %v8250 = vmul.f32 %v1842, %v7942
      %v8251 = vmul.f32 %v1843, %v7944
      %v8252 = vmul.f32 %v1844, %v7946
      %v8253 = vmul.f32 %v1845, %v7948
      %v8254 = vmul.f32 %v1846, %v7950
      %v8255 = vmul.f32 %v1847, %v7952
      %v8256 = vmul.f32 %v1848, %v7954
      %v8257 = vmul.f32 %v1849, %v7956
      %v8258 = vmul.f32 %v1850, %v7958
      %v8259 = vmul.f32 %v1851, %v7960
      %v8260 = vmul.f32 %v1852, %v7962
      %v8261 = vmul.f32 %v1853, %v7964
      %v8262 = vmul.f32 %v1854, %v7966
      %v8263 = vmul.f32 %v1855, %v7968
      %v8264 = vmul.f32 %v1856, %v7970
      %v8265 = vmul.f32 %v1857, %v7972
      %v8266 = vmul.f32 %v1858, %v7974
      %v8267 = vmul.f32 %v1859, %v7976
      %v8268 = vmul.f32 %v1860, %v7978
      %v8269 = vmul.f32 %v1861, %v7980
      %v8270 = vmul.f32 %v1862, %v7982
      %v8271 = vmul.f32 %v1863, %v7984
      %v8272 = vmul.f32 %v1864, %v7986
      %v8273 = vmul.f32 %v1865, %v7988
      %v8274 = vmul.f32 %v1866, %v7990
      %v8275 = vmul.f32 %v1867, %v7992
      %v8276 = vmul.f32 %v1868, %v7994
      %v8277 = vmul.f32 %v1869, %v7996
      %v8278 = vmul.f32 %v1870, %v7998
      %v8279 = vmul.f32 %v1871, %v8000
      %v8280 = vmul.f32 %v1872, %v8002
      %v8281 = vmul.f32 %v1873, %v8004
      %v8282 = vmul.f32 %v1874, %v8006
      %v8283 = vmul.f32 %v1875, %v8008
      %v8284 = vmul.f32 %v1876, %v8010
      %v8285 = vmul.f32 %v1877, %v8012
      %v8286 = vmul.f32 %v1878, %v8014
      %v8287 = vmul.f32 %v1879, %v8016
      %v8288 = vmul.f32 %v1880, %v8018
      %v8289 = vmul.f32 %v1881, %v8020
      %v8290 = vmul.f32 %v1882, %v8022
      %v8291 = vmul.f32 %v1883, %v8024
      %v8292 = vmul.f32 %v1884, %v8026
      %v8293 = vmul.f32 %v1885, %v8028
      %v8294 = vmul.f32 %v1886, %v8030
      %v8295 = vmul.f32 %v1887, %v8032
      %v8296 = vmul.f32 %v1888, %v8034
      %v8297 = vmul.f32 %v1889, %v8036
      %v8298 = vmul.f32 %v1890, %v8038
      %v8299 = vmul.f32 %v1891, %v8040
      %v8300 = vmul.f32 %v1892, %v8042
      %v8301 = vmul.f32 %v1893, %v8044
      %v8302 = vmul.f32 %v1894, %v8046
      %v8303 = vsel %vm2027, %v8175, 0.0
      %v8304 = vrot.slane %v8303, 4
      %v8305 = vadd.f32 %v8303, %v8304
      %v8306 = vrot.slane %v8305, 2
      %v8307 = vadd.f32 %v8305, %v8306
      %v8308 = vrot.slane %v8307, 1
      %v8309 = vadd.f32 %v8307, %v8308
      %v8310 = vsel %vm2027, %v8176, 0.0
      %v8311 = vrot.slane %v8310, 4
      %v8312 = vadd.f32 %v8310, %v8311
      %v8313 = vrot.slane %v8312, 2
      %v8314 = vadd.f32 %v8312, %v8313
      %v8315 = vrot.slane %v8314, 1
      %v8316 = vadd.f32 %v8314, %v8315
      %v8317 = vsel %vm2027, %v8177, 0.0
      %v8318 = vrot.slane %v8317, 4
      %v8319 = vadd.f32 %v8317, %v8318
      %v8320 = vrot.slane %v8319, 2
      %v8321 = vadd.f32 %v8319, %v8320
      %v8322 = vrot.slane %v8321, 1
      %v8323 = vadd.f32 %v8321, %v8322
      %v8324 = vsel %vm2027, %v8178, 0.0
      %v8325 = vrot.slane %v8324, 4
      %v8326 = vadd.f32 %v8324, %v8325
      %v8327 = vrot.slane %v8326, 2
      %v8328 = vadd.f32 %v8326, %v8327
      %v8329 = vrot.slane %v8328, 1
      %v8330 = vadd.f32 %v8328, %v8329
      %v8331 = vsel %vm2027, %v8179, 0.0
      %v8332 = vrot.slane %v8331, 4
      %v8333 = vadd.f32 %v8331, %v8332
      %v8334 = vrot.slane %v8333, 2
      %v8335 = vadd.f32 %v8333, %v8334
      %v8336 = vrot.slane %v8335, 1
      %v8337 = vadd.f32 %v8335, %v8336
      %v8338 = vsel %vm2027, %v8180, 0.0
      %v8339 = vrot.slane %v8338, 4
      %v8340 = vadd.f32 %v8338, %v8339
      %v8341 = vrot.slane %v8340, 2
      %v8342 = vadd.f32 %v8340, %v8341
      %v8343 = vrot.slane %v8342, 1
      %v8344 = vadd.f32 %v8342, %v8343
      %v8345 = vsel %vm2027, %v8181, 0.0
      %v8346 = vrot.slane %v8345, 4
      %v8347 = vadd.f32 %v8345, %v8346
      %v8348 = vrot.slane %v8347, 2
      %v8349 = vadd.f32 %v8347, %v8348
      %v8350 = vrot.slane %v8349, 1
      %v8351 = vadd.f32 %v8349, %v8350
      %v8352 = vsel %vm2027, %v8182, 0.0
      %v8353 = vrot.slane %v8352, 4
      %v8354 = vadd.f32 %v8352, %v8353
      %v8355 = vrot.slane %v8354, 2
      %v8356 = vadd.f32 %v8354, %v8355
      %v8357 = vrot.slane %v8356, 1
      %v8358 = vadd.f32 %v8356, %v8357
      %v8359 = vsel %vm2027, %v8183, 0.0
      %v8360 = vrot.slane %v8359, 4
      %v8361 = vadd.f32 %v8359, %v8360
      %v8362 = vrot.slane %v8361, 2
      %v8363 = vadd.f32 %v8361, %v8362
      %v8364 = vrot.slane %v8363, 1
      %v8365 = vadd.f32 %v8363, %v8364
      %v8366 = vsel %vm2027, %v8184, 0.0
      %v8367 = vrot.slane %v8366, 4
      %v8368 = vadd.f32 %v8366, %v8367
      %v8369 = vrot.slane %v8368, 2
      %v8370 = vadd.f32 %v8368, %v8369
      %v8371 = vrot.slane %v8370, 1
      %v8372 = vadd.f32 %v8370, %v8371
      %v8373 = vsel %vm2027, %v8185, 0.0
      %v8374 = vrot.slane %v8373, 4
      %v8375 = vadd.f32 %v8373, %v8374
      %v8376 = vrot.slane %v8375, 2
      %v8377 = vadd.f32 %v8375, %v8376
      %v8378 = vrot.slane %v8377, 1
      %v8379 = vadd.f32 %v8377, %v8378
      %v8380 = vsel %vm2027, %v8186, 0.0
      %v8381 = vrot.slane %v8380, 4
      %v8382 = vadd.f32 %v8380, %v8381
      %v8383 = vrot.slane %v8382, 2
      %v8384 = vadd.f32 %v8382, %v8383
      %v8385 = vrot.slane %v8384, 1
      %v8386 = vadd.f32 %v8384, %v8385
      %v8387 = vsel %vm2027, %v8187, 0.0
      %v8388 = vrot.slane %v8387, 4
      %v8389 = vadd.f32 %v8387, %v8388
      %v8390 = vrot.slane %v8389, 2
      %v8391 = vadd.f32 %v8389, %v8390
      %v8392 = vrot.slane %v8391, 1
      %v8393 = vadd.f32 %v8391, %v8392
      %v8394 = vsel %vm2027, %v8188, 0.0
      %v8395 = vrot.slane %v8394, 4
      %v8396 = vadd.f32 %v8394, %v8395
      %v8397 = vrot.slane %v8396, 2
      %v8398 = vadd.f32 %v8396, %v8397
      %v8399 = vrot.slane %v8398, 1
      %v8400 = vadd.f32 %v8398, %v8399
      %v8401 = vsel %vm2027, %v8189, 0.0
      %v8402 = vrot.slane %v8401, 4
      %v8403 = vadd.f32 %v8401, %v8402
      %v8404 = vrot.slane %v8403, 2
      %v8405 = vadd.f32 %v8403, %v8404
      %v8406 = vrot.slane %v8405, 1
      %v8407 = vadd.f32 %v8405, %v8406
      %v8408 = vsel %vm2027, %v8190, 0.0
      %v8409 = vrot.slane %v8408, 4
      %v8410 = vadd.f32 %v8408, %v8409
      %v8411 = vrot.slane %v8410, 2
      %v8412 = vadd.f32 %v8410, %v8411
      %v8413 = vrot.slane %v8412, 1
      %v8414 = vadd.f32 %v8412, %v8413
      %v8415 = vsel %vm2027, %v8191, 0.0
      %v8416 = vrot.slane %v8415, 4
      %v8417 = vadd.f32 %v8415, %v8416
      %v8418 = vrot.slane %v8417, 2
      %v8419 = vadd.f32 %v8417, %v8418
      %v8420 = vrot.slane %v8419, 1
      %v8421 = vadd.f32 %v8419, %v8420
      %v8422 = vsel %vm2027, %v8192, 0.0
      %v8423 = vrot.slane %v8422, 4
      %v8424 = vadd.f32 %v8422, %v8423
      %v8425 = vrot.slane %v8424, 2
      %v8426 = vadd.f32 %v8424, %v8425
      %v8427 = vrot.slane %v8426, 1
      %v8428 = vadd.f32 %v8426, %v8427
      %v8429 = vsel %vm2027, %v8193, 0.0
      %v8430 = vrot.slane %v8429, 4
      %v8431 = vadd.f32 %v8429, %v8430
      %v8432 = vrot.slane %v8431, 2
      %v8433 = vadd.f32 %v8431, %v8432
      %v8434 = vrot.slane %v8433, 1
      %v8435 = vadd.f32 %v8433, %v8434
      %v8436 = vsel %vm2027, %v8194, 0.0
      %v8437 = vrot.slane %v8436, 4
      %v8438 = vadd.f32 %v8436, %v8437
      %v8439 = vrot.slane %v8438, 2
      %v8440 = vadd.f32 %v8438, %v8439
      %v8441 = vrot.slane %v8440, 1
      %v8442 = vadd.f32 %v8440, %v8441
      %v8443 = vsel %vm2027, %v8195, 0.0
      %v8444 = vrot.slane %v8443, 4
      %v8445 = vadd.f32 %v8443, %v8444
      %v8446 = vrot.slane %v8445, 2
      %v8447 = vadd.f32 %v8445, %v8446
      %v8448 = vrot.slane %v8447, 1
      %v8449 = vadd.f32 %v8447, %v8448
      %v8450 = vsel %vm2027, %v8196, 0.0
      %v8451 = vrot.slane %v8450, 4
      %v8452 = vadd.f32 %v8450, %v8451
      %v8453 = vrot.slane %v8452, 2
      %v8454 = vadd.f32 %v8452, %v8453
      %v8455 = vrot.slane %v8454, 1
      %v8456 = vadd.f32 %v8454, %v8455
      %v8457 = vsel %vm2027, %v8197, 0.0
      %v8458 = vrot.slane %v8457, 4
      %v8459 = vadd.f32 %v8457, %v8458
      %v8460 = vrot.slane %v8459, 2
      %v8461 = vadd.f32 %v8459, %v8460
      %v8462 = vrot.slane %v8461, 1
      %v8463 = vadd.f32 %v8461, %v8462
      %v8464 = vsel %vm2027, %v8198, 0.0
      %v8465 = vrot.slane %v8464, 4
      %v8466 = vadd.f32 %v8464, %v8465
      %v8467 = vrot.slane %v8466, 2
      %v8468 = vadd.f32 %v8466, %v8467
      %v8469 = vrot.slane %v8468, 1
      %v8470 = vadd.f32 %v8468, %v8469
      %v8471 = vsel %vm2027, %v8199, 0.0
      %v8472 = vrot.slane %v8471, 4
      %v8473 = vadd.f32 %v8471, %v8472
      %v8474 = vrot.slane %v8473, 2
      %v8475 = vadd.f32 %v8473, %v8474
      %v8476 = vrot.slane %v8475, 1
      %v8477 = vadd.f32 %v8475, %v8476
      %v8478 = vsel %vm2027, %v8200, 0.0
      %v8479 = vrot.slane %v8478, 4
      %v8480 = vadd.f32 %v8478, %v8479
      %v8481 = vrot.slane %v8480, 2
      %v8482 = vadd.f32 %v8480, %v8481
      %v8483 = vrot.slane %v8482, 1
      %v8484 = vadd.f32 %v8482, %v8483
      %v8485 = vsel %vm2027, %v8201, 0.0
      %v8486 = vrot.slane %v8485, 4
      %v8487 = vadd.f32 %v8485, %v8486
      %v8488 = vrot.slane %v8487, 2
      %v8489 = vadd.f32 %v8487, %v8488
      %v8490 = vrot.slane %v8489, 1
      %v8491 = vadd.f32 %v8489, %v8490
      %v8492 = vsel %vm2027, %v8202, 0.0
      %v8493 = vrot.slane %v8492, 4
      %v8494 = vadd.f32 %v8492, %v8493
      %v8495 = vrot.slane %v8494, 2
      %v8496 = vadd.f32 %v8494, %v8495
      %v8497 = vrot.slane %v8496, 1
      %v8498 = vadd.f32 %v8496, %v8497
      %v8499 = vsel %vm2027, %v8203, 0.0
      %v8500 = vrot.slane %v8499, 4
      %v8501 = vadd.f32 %v8499, %v8500
      %v8502 = vrot.slane %v8501, 2
      %v8503 = vadd.f32 %v8501, %v8502
      %v8504 = vrot.slane %v8503, 1
      %v8505 = vadd.f32 %v8503, %v8504
      %v8506 = vsel %vm2027, %v8204, 0.0
      %v8507 = vrot.slane %v8506, 4
      %v8508 = vadd.f32 %v8506, %v8507
      %v8509 = vrot.slane %v8508, 2
      %v8510 = vadd.f32 %v8508, %v8509
      %v8511 = vrot.slane %v8510, 1
      %v8512 = vadd.f32 %v8510, %v8511
      %v8513 = vsel %vm2027, %v8205, 0.0
      %v8514 = vrot.slane %v8513, 4
      %v8515 = vadd.f32 %v8513, %v8514
      %v8516 = vrot.slane %v8515, 2
      %v8517 = vadd.f32 %v8515, %v8516
      %v8518 = vrot.slane %v8517, 1
      %v8519 = vadd.f32 %v8517, %v8518
      %v8520 = vsel %vm2027, %v8206, 0.0
      %v8521 = vrot.slane %v8520, 4
      %v8522 = vadd.f32 %v8520, %v8521
      %v8523 = vrot.slane %v8522, 2
      %v8524 = vadd.f32 %v8522, %v8523
      %v8525 = vrot.slane %v8524, 1
      %v8526 = vadd.f32 %v8524, %v8525
      %v8527 = vsel %vm2027, %v8207, 0.0
      %v8528 = vrot.slane %v8527, 4
      %v8529 = vadd.f32 %v8527, %v8528
      %v8530 = vrot.slane %v8529, 2
      %v8531 = vadd.f32 %v8529, %v8530
      %v8532 = vrot.slane %v8531, 1
      %v8533 = vadd.f32 %v8531, %v8532
      %v8534 = vsel %vm2027, %v8208, 0.0
      %v8535 = vrot.slane %v8534, 4
      %v8536 = vadd.f32 %v8534, %v8535
      %v8537 = vrot.slane %v8536, 2
      %v8538 = vadd.f32 %v8536, %v8537
      %v8539 = vrot.slane %v8538, 1
      %v8540 = vadd.f32 %v8538, %v8539
      %v8541 = vsel %vm2027, %v8209, 0.0
      %v8542 = vrot.slane %v8541, 4
      %v8543 = vadd.f32 %v8541, %v8542
      %v8544 = vrot.slane %v8543, 2
      %v8545 = vadd.f32 %v8543, %v8544
      %v8546 = vrot.slane %v8545, 1
      %v8547 = vadd.f32 %v8545, %v8546
      %v8548 = vsel %vm2027, %v8210, 0.0
      %v8549 = vrot.slane %v8548, 4
      %v8550 = vadd.f32 %v8548, %v8549
      %v8551 = vrot.slane %v8550, 2
      %v8552 = vadd.f32 %v8550, %v8551
      %v8553 = vrot.slane %v8552, 1
      %v8554 = vadd.f32 %v8552, %v8553
      %v8555 = vsel %vm2027, %v8211, 0.0
      %v8556 = vrot.slane %v8555, 4
      %v8557 = vadd.f32 %v8555, %v8556
      %v8558 = vrot.slane %v8557, 2
      %v8559 = vadd.f32 %v8557, %v8558
      %v8560 = vrot.slane %v8559, 1
      %v8561 = vadd.f32 %v8559, %v8560
      %v8562 = vsel %vm2027, %v8212, 0.0
      %v8563 = vrot.slane %v8562, 4
      %v8564 = vadd.f32 %v8562, %v8563
      %v8565 = vrot.slane %v8564, 2
      %v8566 = vadd.f32 %v8564, %v8565
      %v8567 = vrot.slane %v8566, 1
      %v8568 = vadd.f32 %v8566, %v8567
      %v8569 = vsel %vm2027, %v8213, 0.0
      %v8570 = vrot.slane %v8569, 4
      %v8571 = vadd.f32 %v8569, %v8570
      %v8572 = vrot.slane %v8571, 2
      %v8573 = vadd.f32 %v8571, %v8572
      %v8574 = vrot.slane %v8573, 1
      %v8575 = vadd.f32 %v8573, %v8574
      %v8576 = vsel %vm2027, %v8214, 0.0
      %v8577 = vrot.slane %v8576, 4
      %v8578 = vadd.f32 %v8576, %v8577
      %v8579 = vrot.slane %v8578, 2
      %v8580 = vadd.f32 %v8578, %v8579
      %v8581 = vrot.slane %v8580, 1
      %v8582 = vadd.f32 %v8580, %v8581
      %v8583 = vsel %vm2027, %v8215, 0.0
      %v8584 = vrot.slane %v8583, 4
      %v8585 = vadd.f32 %v8583, %v8584
      %v8586 = vrot.slane %v8585, 2
      %v8587 = vadd.f32 %v8585, %v8586
      %v8588 = vrot.slane %v8587, 1
      %v8589 = vadd.f32 %v8587, %v8588
      %v8590 = vsel %vm2027, %v8216, 0.0
      %v8591 = vrot.slane %v8590, 4
      %v8592 = vadd.f32 %v8590, %v8591
      %v8593 = vrot.slane %v8592, 2
      %v8594 = vadd.f32 %v8592, %v8593
      %v8595 = vrot.slane %v8594, 1
      %v8596 = vadd.f32 %v8594, %v8595
      %v8597 = vsel %vm2027, %v8217, 0.0
      %v8598 = vrot.slane %v8597, 4
      %v8599 = vadd.f32 %v8597, %v8598
      %v8600 = vrot.slane %v8599, 2
      %v8601 = vadd.f32 %v8599, %v8600
      %v8602 = vrot.slane %v8601, 1
      %v8603 = vadd.f32 %v8601, %v8602
      %v8604 = vsel %vm2027, %v8218, 0.0
      %v8605 = vrot.slane %v8604, 4
      %v8606 = vadd.f32 %v8604, %v8605
      %v8607 = vrot.slane %v8606, 2
      %v8608 = vadd.f32 %v8606, %v8607
      %v8609 = vrot.slane %v8608, 1
      %v8610 = vadd.f32 %v8608, %v8609
      %v8611 = vsel %vm2027, %v8219, 0.0
      %v8612 = vrot.slane %v8611, 4
      %v8613 = vadd.f32 %v8611, %v8612
      %v8614 = vrot.slane %v8613, 2
      %v8615 = vadd.f32 %v8613, %v8614
      %v8616 = vrot.slane %v8615, 1
      %v8617 = vadd.f32 %v8615, %v8616
      %v8618 = vsel %vm2027, %v8220, 0.0
      %v8619 = vrot.slane %v8618, 4
      %v8620 = vadd.f32 %v8618, %v8619
      %v8621 = vrot.slane %v8620, 2
      %v8622 = vadd.f32 %v8620, %v8621
      %v8623 = vrot.slane %v8622, 1
      %v8624 = vadd.f32 %v8622, %v8623
      %v8625 = vsel %vm2027, %v8221, 0.0
      %v8626 = vrot.slane %v8625, 4
      %v8627 = vadd.f32 %v8625, %v8626
      %v8628 = vrot.slane %v8627, 2
      %v8629 = vadd.f32 %v8627, %v8628
      %v8630 = vrot.slane %v8629, 1
      %v8631 = vadd.f32 %v8629, %v8630
      %v8632 = vsel %vm2027, %v8222, 0.0
      %v8633 = vrot.slane %v8632, 4
      %v8634 = vadd.f32 %v8632, %v8633
      %v8635 = vrot.slane %v8634, 2
      %v8636 = vadd.f32 %v8634, %v8635
      %v8637 = vrot.slane %v8636, 1
      %v8638 = vadd.f32 %v8636, %v8637
      %v8639 = vsel %vm2027, %v8223, 0.0
      %v8640 = vrot.slane %v8639, 4
      %v8641 = vadd.f32 %v8639, %v8640
      %v8642 = vrot.slane %v8641, 2
      %v8643 = vadd.f32 %v8641, %v8642
      %v8644 = vrot.slane %v8643, 1
      %v8645 = vadd.f32 %v8643, %v8644
      %v8646 = vsel %vm2027, %v8224, 0.0
      %v8647 = vrot.slane %v8646, 4
      %v8648 = vadd.f32 %v8646, %v8647
      %v8649 = vrot.slane %v8648, 2
      %v8650 = vadd.f32 %v8648, %v8649
      %v8651 = vrot.slane %v8650, 1
      %v8652 = vadd.f32 %v8650, %v8651
      %v8653 = vsel %vm2027, %v8225, 0.0
      %v8654 = vrot.slane %v8653, 4
      %v8655 = vadd.f32 %v8653, %v8654
      %v8656 = vrot.slane %v8655, 2
      %v8657 = vadd.f32 %v8655, %v8656
      %v8658 = vrot.slane %v8657, 1
      %v8659 = vadd.f32 %v8657, %v8658
      %v8660 = vsel %vm2027, %v8226, 0.0
      %v8661 = vrot.slane %v8660, 4
      %v8662 = vadd.f32 %v8660, %v8661
      %v8663 = vrot.slane %v8662, 2
      %v8664 = vadd.f32 %v8662, %v8663
      %v8665 = vrot.slane %v8664, 1
      %v8666 = vadd.f32 %v8664, %v8665
      %v8667 = vsel %vm2027, %v8227, 0.0
      %v8668 = vrot.slane %v8667, 4
      %v8669 = vadd.f32 %v8667, %v8668
      %v8670 = vrot.slane %v8669, 2
      %v8671 = vadd.f32 %v8669, %v8670
      %v8672 = vrot.slane %v8671, 1
      %v8673 = vadd.f32 %v8671, %v8672
      %v8674 = vsel %vm2027, %v8228, 0.0
      %v8675 = vrot.slane %v8674, 4
      %v8676 = vadd.f32 %v8674, %v8675
      %v8677 = vrot.slane %v8676, 2
      %v8678 = vadd.f32 %v8676, %v8677
      %v8679 = vrot.slane %v8678, 1
      %v8680 = vadd.f32 %v8678, %v8679
      %v8681 = vsel %vm2027, %v8229, 0.0
      %v8682 = vrot.slane %v8681, 4
      %v8683 = vadd.f32 %v8681, %v8682
      %v8684 = vrot.slane %v8683, 2
      %v8685 = vadd.f32 %v8683, %v8684
      %v8686 = vrot.slane %v8685, 1
      %v8687 = vadd.f32 %v8685, %v8686
      %v8688 = vsel %vm2027, %v8230, 0.0
      %v8689 = vrot.slane %v8688, 4
      %v8690 = vadd.f32 %v8688, %v8689
      %v8691 = vrot.slane %v8690, 2
      %v8692 = vadd.f32 %v8690, %v8691
      %v8693 = vrot.slane %v8692, 1
      %v8694 = vadd.f32 %v8692, %v8693
      %v8695 = vsel %vm2027, %v8231, 0.0
      %v8696 = vrot.slane %v8695, 4
      %v8697 = vadd.f32 %v8695, %v8696
      %v8698 = vrot.slane %v8697, 2
      %v8699 = vadd.f32 %v8697, %v8698
      %v8700 = vrot.slane %v8699, 1
      %v8701 = vadd.f32 %v8699, %v8700
      %v8702 = vsel %vm2027, %v8232, 0.0
      %v8703 = vrot.slane %v8702, 4
      %v8704 = vadd.f32 %v8702, %v8703
      %v8705 = vrot.slane %v8704, 2
      %v8706 = vadd.f32 %v8704, %v8705
      %v8707 = vrot.slane %v8706, 1
      %v8708 = vadd.f32 %v8706, %v8707
      %v8709 = vsel %vm2027, %v8233, 0.0
      %v8710 = vrot.slane %v8709, 4
      %v8711 = vadd.f32 %v8709, %v8710
      %v8712 = vrot.slane %v8711, 2
      %v8713 = vadd.f32 %v8711, %v8712
      %v8714 = vrot.slane %v8713, 1
      %v8715 = vadd.f32 %v8713, %v8714
      %v8716 = vsel %vm2027, %v8234, 0.0
      %v8717 = vrot.slane %v8716, 4
      %v8718 = vadd.f32 %v8716, %v8717
      %v8719 = vrot.slane %v8718, 2
      %v8720 = vadd.f32 %v8718, %v8719
      %v8721 = vrot.slane %v8720, 1
      %v8722 = vadd.f32 %v8720, %v8721
      %v8723 = vsel %vm2027, %v8235, 0.0
      %v8724 = vrot.slane %v8723, 4
      %v8725 = vadd.f32 %v8723, %v8724
      %v8726 = vrot.slane %v8725, 2
      %v8727 = vadd.f32 %v8725, %v8726
      %v8728 = vrot.slane %v8727, 1
      %v8729 = vadd.f32 %v8727, %v8728
      %v8730 = vsel %vm2027, %v8236, 0.0
      %v8731 = vrot.slane %v8730, 4
      %v8732 = vadd.f32 %v8730, %v8731
      %v8733 = vrot.slane %v8732, 2
      %v8734 = vadd.f32 %v8732, %v8733
      %v8735 = vrot.slane %v8734, 1
      %v8736 = vadd.f32 %v8734, %v8735
      %v8737 = vsel %vm2027, %v8237, 0.0
      %v8738 = vrot.slane %v8737, 4
      %v8739 = vadd.f32 %v8737, %v8738
      %v8740 = vrot.slane %v8739, 2
      %v8741 = vadd.f32 %v8739, %v8740
      %v8742 = vrot.slane %v8741, 1
      %v8743 = vadd.f32 %v8741, %v8742
      %v8744 = vsel %vm2027, %v8238, 0.0
      %v8745 = vrot.slane %v8744, 4
      %v8746 = vadd.f32 %v8744, %v8745
      %v8747 = vrot.slane %v8746, 2
      %v8748 = vadd.f32 %v8746, %v8747
      %v8749 = vrot.slane %v8748, 1
      %v8750 = vadd.f32 %v8748, %v8749
      %v8751 = vsel %vm2027, %v8239, 0.0
      %v8752 = vrot.slane %v8751, 4
      %v8753 = vadd.f32 %v8751, %v8752
      %v8754 = vrot.slane %v8753, 2
      %v8755 = vadd.f32 %v8753, %v8754
      %v8756 = vrot.slane %v8755, 1
      %v8757 = vadd.f32 %v8755, %v8756
      %v8758 = vsel %vm2027, %v8240, 0.0
      %v8759 = vrot.slane %v8758, 4
      %v8760 = vadd.f32 %v8758, %v8759
      %v8761 = vrot.slane %v8760, 2
      %v8762 = vadd.f32 %v8760, %v8761
      %v8763 = vrot.slane %v8762, 1
      %v8764 = vadd.f32 %v8762, %v8763
      %v8765 = vsel %vm2027, %v8241, 0.0
      %v8766 = vrot.slane %v8765, 4
      %v8767 = vadd.f32 %v8765, %v8766
      %v8768 = vrot.slane %v8767, 2
      %v8769 = vadd.f32 %v8767, %v8768
      %v8770 = vrot.slane %v8769, 1
      %v8771 = vadd.f32 %v8769, %v8770
      %v8772 = vsel %vm2027, %v8242, 0.0
      %v8773 = vrot.slane %v8772, 4
      %v8774 = vadd.f32 %v8772, %v8773
      %v8775 = vrot.slane %v8774, 2
      %v8776 = vadd.f32 %v8774, %v8775
      %v8777 = vrot.slane %v8776, 1
      %v8778 = vadd.f32 %v8776, %v8777
      %v8779 = vsel %vm2027, %v8243, 0.0
      %v8780 = vrot.slane %v8779, 4
      %v8781 = vadd.f32 %v8779, %v8780
      %v8782 = vrot.slane %v8781, 2
      %v8783 = vadd.f32 %v8781, %v8782
      %v8784 = vrot.slane %v8783, 1
      %v8785 = vadd.f32 %v8783, %v8784
      %v8786 = vsel %vm2027, %v8244, 0.0
      %v8787 = vrot.slane %v8786, 4
      %v8788 = vadd.f32 %v8786, %v8787
      %v8789 = vrot.slane %v8788, 2
      %v8790 = vadd.f32 %v8788, %v8789
      %v8791 = vrot.slane %v8790, 1
      %v8792 = vadd.f32 %v8790, %v8791
      %v8793 = vsel %vm2027, %v8245, 0.0
      %v8794 = vrot.slane %v8793, 4
      %v8795 = vadd.f32 %v8793, %v8794
      %v8796 = vrot.slane %v8795, 2
      %v8797 = vadd.f32 %v8795, %v8796
      %v8798 = vrot.slane %v8797, 1
      %v8799 = vadd.f32 %v8797, %v8798
      %v8800 = vsel %vm2027, %v8246, 0.0
      %v8801 = vrot.slane %v8800, 4
      %v8802 = vadd.f32 %v8800, %v8801
      %v8803 = vrot.slane %v8802, 2
      %v8804 = vadd.f32 %v8802, %v8803
      %v8805 = vrot.slane %v8804, 1
      %v8806 = vadd.f32 %v8804, %v8805
      %v8807 = vsel %vm2027, %v8247, 0.0
      %v8808 = vrot.slane %v8807, 4
      %v8809 = vadd.f32 %v8807, %v8808
      %v8810 = vrot.slane %v8809, 2
      %v8811 = vadd.f32 %v8809, %v8810
      %v8812 = vrot.slane %v8811, 1
      %v8813 = vadd.f32 %v8811, %v8812
      %v8814 = vsel %vm2027, %v8248, 0.0
      %v8815 = vrot.slane %v8814, 4
      %v8816 = vadd.f32 %v8814, %v8815
      %v8817 = vrot.slane %v8816, 2
      %v8818 = vadd.f32 %v8816, %v8817
      %v8819 = vrot.slane %v8818, 1
      %v8820 = vadd.f32 %v8818, %v8819
      %v8821 = vsel %vm2027, %v8249, 0.0
      %v8822 = vrot.slane %v8821, 4
      %v8823 = vadd.f32 %v8821, %v8822
      %v8824 = vrot.slane %v8823, 2
      %v8825 = vadd.f32 %v8823, %v8824
      %v8826 = vrot.slane %v8825, 1
      %v8827 = vadd.f32 %v8825, %v8826
      %v8828 = vsel %vm2027, %v8250, 0.0
      %v8829 = vrot.slane %v8828, 4
      %v8830 = vadd.f32 %v8828, %v8829
      %v8831 = vrot.slane %v8830, 2
      %v8832 = vadd.f32 %v8830, %v8831
      %v8833 = vrot.slane %v8832, 1
      %v8834 = vadd.f32 %v8832, %v8833
      %v8835 = vsel %vm2027, %v8251, 0.0
      %v8836 = vrot.slane %v8835, 4
      %v8837 = vadd.f32 %v8835, %v8836
      %v8838 = vrot.slane %v8837, 2
      %v8839 = vadd.f32 %v8837, %v8838
      %v8840 = vrot.slane %v8839, 1
      %v8841 = vadd.f32 %v8839, %v8840
      %v8842 = vsel %vm2027, %v8252, 0.0
      %v8843 = vrot.slane %v8842, 4
      %v8844 = vadd.f32 %v8842, %v8843
      %v8845 = vrot.slane %v8844, 2
      %v8846 = vadd.f32 %v8844, %v8845
      %v8847 = vrot.slane %v8846, 1
      %v8848 = vadd.f32 %v8846, %v8847
      %v8849 = vsel %vm2027, %v8253, 0.0
      %v8850 = vrot.slane %v8849, 4
      %v8851 = vadd.f32 %v8849, %v8850
      %v8852 = vrot.slane %v8851, 2
      %v8853 = vadd.f32 %v8851, %v8852
      %v8854 = vrot.slane %v8853, 1
      %v8855 = vadd.f32 %v8853, %v8854
      %v8856 = vsel %vm2027, %v8254, 0.0
      %v8857 = vrot.slane %v8856, 4
      %v8858 = vadd.f32 %v8856, %v8857
      %v8859 = vrot.slane %v8858, 2
      %v8860 = vadd.f32 %v8858, %v8859
      %v8861 = vrot.slane %v8860, 1
      %v8862 = vadd.f32 %v8860, %v8861
      %v8863 = vsel %vm2027, %v8255, 0.0
      %v8864 = vrot.slane %v8863, 4
      %v8865 = vadd.f32 %v8863, %v8864
      %v8866 = vrot.slane %v8865, 2
      %v8867 = vadd.f32 %v8865, %v8866
      %v8868 = vrot.slane %v8867, 1
      %v8869 = vadd.f32 %v8867, %v8868
      %v8870 = vsel %vm2027, %v8256, 0.0
      %v8871 = vrot.slane %v8870, 4
      %v8872 = vadd.f32 %v8870, %v8871
      %v8873 = vrot.slane %v8872, 2
      %v8874 = vadd.f32 %v8872, %v8873
      %v8875 = vrot.slane %v8874, 1
      %v8876 = vadd.f32 %v8874, %v8875
      %v8877 = vsel %vm2027, %v8257, 0.0
      %v8878 = vrot.slane %v8877, 4
      %v8879 = vadd.f32 %v8877, %v8878
      %v8880 = vrot.slane %v8879, 2
      %v8881 = vadd.f32 %v8879, %v8880
      %v8882 = vrot.slane %v8881, 1
      %v8883 = vadd.f32 %v8881, %v8882
      %v8884 = vsel %vm2027, %v8258, 0.0
      %v8885 = vrot.slane %v8884, 4
      %v8886 = vadd.f32 %v8884, %v8885
      %v8887 = vrot.slane %v8886, 2
      %v8888 = vadd.f32 %v8886, %v8887
      %v8889 = vrot.slane %v8888, 1
      %v8890 = vadd.f32 %v8888, %v8889
      %v8891 = vsel %vm2027, %v8259, 0.0
      %v8892 = vrot.slane %v8891, 4
      %v8893 = vadd.f32 %v8891, %v8892
      %v8894 = vrot.slane %v8893, 2
      %v8895 = vadd.f32 %v8893, %v8894
      %v8896 = vrot.slane %v8895, 1
      %v8897 = vadd.f32 %v8895, %v8896
      %v8898 = vsel %vm2027, %v8260, 0.0
      %v8899 = vrot.slane %v8898, 4
      %v8900 = vadd.f32 %v8898, %v8899
      %v8901 = vrot.slane %v8900, 2
      %v8902 = vadd.f32 %v8900, %v8901
      %v8903 = vrot.slane %v8902, 1
      %v8904 = vadd.f32 %v8902, %v8903
      %v8905 = vsel %vm2027, %v8261, 0.0
      %v8906 = vrot.slane %v8905, 4
      %v8907 = vadd.f32 %v8905, %v8906
      %v8908 = vrot.slane %v8907, 2
      %v8909 = vadd.f32 %v8907, %v8908
      %v8910 = vrot.slane %v8909, 1
      %v8911 = vadd.f32 %v8909, %v8910
      %v8912 = vsel %vm2027, %v8262, 0.0
      %v8913 = vrot.slane %v8912, 4
      %v8914 = vadd.f32 %v8912, %v8913
      %v8915 = vrot.slane %v8914, 2
      %v8916 = vadd.f32 %v8914, %v8915
      %v8917 = vrot.slane %v8916, 1
      %v8918 = vadd.f32 %v8916, %v8917
      %v8919 = vsel %vm2027, %v8263, 0.0
      %v8920 = vrot.slane %v8919, 4
      %v8921 = vadd.f32 %v8919, %v8920
      %v8922 = vrot.slane %v8921, 2
      %v8923 = vadd.f32 %v8921, %v8922
      %v8924 = vrot.slane %v8923, 1
      %v8925 = vadd.f32 %v8923, %v8924
      %v8926 = vsel %vm2027, %v8264, 0.0
      %v8927 = vrot.slane %v8926, 4
      %v8928 = vadd.f32 %v8926, %v8927
      %v8929 = vrot.slane %v8928, 2
      %v8930 = vadd.f32 %v8928, %v8929
      %v8931 = vrot.slane %v8930, 1
      %v8932 = vadd.f32 %v8930, %v8931
      %v8933 = vsel %vm2027, %v8265, 0.0
      %v8934 = vrot.slane %v8933, 4
      %v8935 = vadd.f32 %v8933, %v8934
      %v8936 = vrot.slane %v8935, 2
      %v8937 = vadd.f32 %v8935, %v8936
      %v8938 = vrot.slane %v8937, 1
      %v8939 = vadd.f32 %v8937, %v8938
      %v8940 = vsel %vm2027, %v8266, 0.0
      %v8941 = vrot.slane %v8940, 4
      %v8942 = vadd.f32 %v8940, %v8941
      %v8943 = vrot.slane %v8942, 2
      %v8944 = vadd.f32 %v8942, %v8943
      %v8945 = vrot.slane %v8944, 1
      %v8946 = vadd.f32 %v8944, %v8945
      %v8947 = vsel %vm2027, %v8267, 0.0
      %v8948 = vrot.slane %v8947, 4
      %v8949 = vadd.f32 %v8947, %v8948
      %v8950 = vrot.slane %v8949, 2
      %v8951 = vadd.f32 %v8949, %v8950
      %v8952 = vrot.slane %v8951, 1
      %v8953 = vadd.f32 %v8951, %v8952
      %v8954 = vsel %vm2027, %v8268, 0.0
      %v8955 = vrot.slane %v8954, 4
      %v8956 = vadd.f32 %v8954, %v8955
      %v8957 = vrot.slane %v8956, 2
      %v8958 = vadd.f32 %v8956, %v8957
      %v8959 = vrot.slane %v8958, 1
      %v8960 = vadd.f32 %v8958, %v8959
      %v8961 = vsel %vm2027, %v8269, 0.0
      %v8962 = vrot.slane %v8961, 4
      %v8963 = vadd.f32 %v8961, %v8962
      %v8964 = vrot.slane %v8963, 2
      %v8965 = vadd.f32 %v8963, %v8964
      %v8966 = vrot.slane %v8965, 1
      %v8967 = vadd.f32 %v8965, %v8966
      %v8968 = vsel %vm2027, %v8270, 0.0
      %v8969 = vrot.slane %v8968, 4
      %v8970 = vadd.f32 %v8968, %v8969
      %v8971 = vrot.slane %v8970, 2
      %v8972 = vadd.f32 %v8970, %v8971
      %v8973 = vrot.slane %v8972, 1
      %v8974 = vadd.f32 %v8972, %v8973
      %v8975 = vsel %vm2027, %v8271, 0.0
      %v8976 = vrot.slane %v8975, 4
      %v8977 = vadd.f32 %v8975, %v8976
      %v8978 = vrot.slane %v8977, 2
      %v8979 = vadd.f32 %v8977, %v8978
      %v8980 = vrot.slane %v8979, 1
      %v8981 = vadd.f32 %v8979, %v8980
      %v8982 = vsel %vm2027, %v8272, 0.0
      %v8983 = vrot.slane %v8982, 4
      %v8984 = vadd.f32 %v8982, %v8983
      %v8985 = vrot.slane %v8984, 2
      %v8986 = vadd.f32 %v8984, %v8985
      %v8987 = vrot.slane %v8986, 1
      %v8988 = vadd.f32 %v8986, %v8987
      %v8989 = vsel %vm2027, %v8273, 0.0
      %v8990 = vrot.slane %v8989, 4
      %v8991 = vadd.f32 %v8989, %v8990
      %v8992 = vrot.slane %v8991, 2
      %v8993 = vadd.f32 %v8991, %v8992
      %v8994 = vrot.slane %v8993, 1
      %v8995 = vadd.f32 %v8993, %v8994
      %v8996 = vsel %vm2027, %v8274, 0.0
      %v8997 = vrot.slane %v8996, 4
      %v8998 = vadd.f32 %v8996, %v8997
      %v8999 = vrot.slane %v8998, 2
      %v9000 = vadd.f32 %v8998, %v8999
      %v9001 = vrot.slane %v9000, 1
      %v9002 = vadd.f32 %v9000, %v9001
      %v9003 = vsel %vm2027, %v8275, 0.0
      %v9004 = vrot.slane %v9003, 4
      %v9005 = vadd.f32 %v9003, %v9004
      %v9006 = vrot.slane %v9005, 2
      %v9007 = vadd.f32 %v9005, %v9006
      %v9008 = vrot.slane %v9007, 1
      %v9009 = vadd.f32 %v9007, %v9008
      %v9010 = vsel %vm2027, %v8276, 0.0
      %v9011 = vrot.slane %v9010, 4
      %v9012 = vadd.f32 %v9010, %v9011
      %v9013 = vrot.slane %v9012, 2
      %v9014 = vadd.f32 %v9012, %v9013
      %v9015 = vrot.slane %v9014, 1
      %v9016 = vadd.f32 %v9014, %v9015
      %v9017 = vsel %vm2027, %v8277, 0.0
      %v9018 = vrot.slane %v9017, 4
      %v9019 = vadd.f32 %v9017, %v9018
      %v9020 = vrot.slane %v9019, 2
      %v9021 = vadd.f32 %v9019, %v9020
      %v9022 = vrot.slane %v9021, 1
      %v9023 = vadd.f32 %v9021, %v9022
      %v9024 = vsel %vm2027, %v8278, 0.0
      %v9025 = vrot.slane %v9024, 4
      %v9026 = vadd.f32 %v9024, %v9025
      %v9027 = vrot.slane %v9026, 2
      %v9028 = vadd.f32 %v9026, %v9027
      %v9029 = vrot.slane %v9028, 1
      %v9030 = vadd.f32 %v9028, %v9029
      %v9031 = vsel %vm2027, %v8279, 0.0
      %v9032 = vrot.slane %v9031, 4
      %v9033 = vadd.f32 %v9031, %v9032
      %v9034 = vrot.slane %v9033, 2
      %v9035 = vadd.f32 %v9033, %v9034
      %v9036 = vrot.slane %v9035, 1
      %v9037 = vadd.f32 %v9035, %v9036
      %v9038 = vsel %vm2027, %v8280, 0.0
      %v9039 = vrot.slane %v9038, 4
      %v9040 = vadd.f32 %v9038, %v9039
      %v9041 = vrot.slane %v9040, 2
      %v9042 = vadd.f32 %v9040, %v9041
      %v9043 = vrot.slane %v9042, 1
      %v9044 = vadd.f32 %v9042, %v9043
      %v9045 = vsel %vm2027, %v8281, 0.0
      %v9046 = vrot.slane %v9045, 4
      %v9047 = vadd.f32 %v9045, %v9046
      %v9048 = vrot.slane %v9047, 2
      %v9049 = vadd.f32 %v9047, %v9048
      %v9050 = vrot.slane %v9049, 1
      %v9051 = vadd.f32 %v9049, %v9050
      %v9052 = vsel %vm2027, %v8282, 0.0
      %v9053 = vrot.slane %v9052, 4
      %v9054 = vadd.f32 %v9052, %v9053
      %v9055 = vrot.slane %v9054, 2
      %v9056 = vadd.f32 %v9054, %v9055
      %v9057 = vrot.slane %v9056, 1
      %v9058 = vadd.f32 %v9056, %v9057
      %v9059 = vsel %vm2027, %v8283, 0.0
      %v9060 = vrot.slane %v9059, 4
      %v9061 = vadd.f32 %v9059, %v9060
      %v9062 = vrot.slane %v9061, 2
      %v9063 = vadd.f32 %v9061, %v9062
      %v9064 = vrot.slane %v9063, 1
      %v9065 = vadd.f32 %v9063, %v9064
      %v9066 = vsel %vm2027, %v8284, 0.0
      %v9067 = vrot.slane %v9066, 4
      %v9068 = vadd.f32 %v9066, %v9067
      %v9069 = vrot.slane %v9068, 2
      %v9070 = vadd.f32 %v9068, %v9069
      %v9071 = vrot.slane %v9070, 1
      %v9072 = vadd.f32 %v9070, %v9071
      %v9073 = vsel %vm2027, %v8285, 0.0
      %v9074 = vrot.slane %v9073, 4
      %v9075 = vadd.f32 %v9073, %v9074
      %v9076 = vrot.slane %v9075, 2
      %v9077 = vadd.f32 %v9075, %v9076
      %v9078 = vrot.slane %v9077, 1
      %v9079 = vadd.f32 %v9077, %v9078
      %v9080 = vsel %vm2027, %v8286, 0.0
      %v9081 = vrot.slane %v9080, 4
      %v9082 = vadd.f32 %v9080, %v9081
      %v9083 = vrot.slane %v9082, 2
      %v9084 = vadd.f32 %v9082, %v9083
      %v9085 = vrot.slane %v9084, 1
      %v9086 = vadd.f32 %v9084, %v9085
      %v9087 = vsel %vm2027, %v8287, 0.0
      %v9088 = vrot.slane %v9087, 4
      %v9089 = vadd.f32 %v9087, %v9088
      %v9090 = vrot.slane %v9089, 2
      %v9091 = vadd.f32 %v9089, %v9090
      %v9092 = vrot.slane %v9091, 1
      %v9093 = vadd.f32 %v9091, %v9092
      %v9094 = vsel %vm2027, %v8288, 0.0
      %v9095 = vrot.slane %v9094, 4
      %v9096 = vadd.f32 %v9094, %v9095
      %v9097 = vrot.slane %v9096, 2
      %v9098 = vadd.f32 %v9096, %v9097
      %v9099 = vrot.slane %v9098, 1
      %v9100 = vadd.f32 %v9098, %v9099
      %v9101 = vsel %vm2027, %v8289, 0.0
      %v9102 = vrot.slane %v9101, 4
      %v9103 = vadd.f32 %v9101, %v9102
      %v9104 = vrot.slane %v9103, 2
      %v9105 = vadd.f32 %v9103, %v9104
      %v9106 = vrot.slane %v9105, 1
      %v9107 = vadd.f32 %v9105, %v9106
      %v9108 = vsel %vm2027, %v8290, 0.0
      %v9109 = vrot.slane %v9108, 4
      %v9110 = vadd.f32 %v9108, %v9109
      %v9111 = vrot.slane %v9110, 2
      %v9112 = vadd.f32 %v9110, %v9111
      %v9113 = vrot.slane %v9112, 1
      %v9114 = vadd.f32 %v9112, %v9113
      %v9115 = vsel %vm2027, %v8291, 0.0
      %v9116 = vrot.slane %v9115, 4
      %v9117 = vadd.f32 %v9115, %v9116
      %v9118 = vrot.slane %v9117, 2
      %v9119 = vadd.f32 %v9117, %v9118
      %v9120 = vrot.slane %v9119, 1
      %v9121 = vadd.f32 %v9119, %v9120
      %v9122 = vsel %vm2027, %v8292, 0.0
      %v9123 = vrot.slane %v9122, 4
      %v9124 = vadd.f32 %v9122, %v9123
      %v9125 = vrot.slane %v9124, 2
      %v9126 = vadd.f32 %v9124, %v9125
      %v9127 = vrot.slane %v9126, 1
      %v9128 = vadd.f32 %v9126, %v9127
      %v9129 = vsel %vm2027, %v8293, 0.0
      %v9130 = vrot.slane %v9129, 4
      %v9131 = vadd.f32 %v9129, %v9130
      %v9132 = vrot.slane %v9131, 2
      %v9133 = vadd.f32 %v9131, %v9132
      %v9134 = vrot.slane %v9133, 1
      %v9135 = vadd.f32 %v9133, %v9134
      %v9136 = vsel %vm2027, %v8294, 0.0
      %v9137 = vrot.slane %v9136, 4
      %v9138 = vadd.f32 %v9136, %v9137
      %v9139 = vrot.slane %v9138, 2
      %v9140 = vadd.f32 %v9138, %v9139
      %v9141 = vrot.slane %v9140, 1
      %v9142 = vadd.f32 %v9140, %v9141
      %v9143 = vsel %vm2027, %v8295, 0.0
      %v9144 = vrot.slane %v9143, 4
      %v9145 = vadd.f32 %v9143, %v9144
      %v9146 = vrot.slane %v9145, 2
      %v9147 = vadd.f32 %v9145, %v9146
      %v9148 = vrot.slane %v9147, 1
      %v9149 = vadd.f32 %v9147, %v9148
      %v9150 = vsel %vm2027, %v8296, 0.0
      %v9151 = vrot.slane %v9150, 4
      %v9152 = vadd.f32 %v9150, %v9151
      %v9153 = vrot.slane %v9152, 2
      %v9154 = vadd.f32 %v9152, %v9153
      %v9155 = vrot.slane %v9154, 1
      %v9156 = vadd.f32 %v9154, %v9155
      %v9157 = vsel %vm2027, %v8297, 0.0
      %v9158 = vrot.slane %v9157, 4
      %v9159 = vadd.f32 %v9157, %v9158
      %v9160 = vrot.slane %v9159, 2
      %v9161 = vadd.f32 %v9159, %v9160
      %v9162 = vrot.slane %v9161, 1
      %v9163 = vadd.f32 %v9161, %v9162
      %v9164 = vsel %vm2027, %v8298, 0.0
      %v9165 = vrot.slane %v9164, 4
      %v9166 = vadd.f32 %v9164, %v9165
      %v9167 = vrot.slane %v9166, 2
      %v9168 = vadd.f32 %v9166, %v9167
      %v9169 = vrot.slane %v9168, 1
      %v9170 = vadd.f32 %v9168, %v9169
      %v9171 = vsel %vm2027, %v8299, 0.0
      %v9172 = vrot.slane %v9171, 4
      %v9173 = vadd.f32 %v9171, %v9172
      %v9174 = vrot.slane %v9173, 2
      %v9175 = vadd.f32 %v9173, %v9174
      %v9176 = vrot.slane %v9175, 1
      %v9177 = vadd.f32 %v9175, %v9176
      %v9178 = vsel %vm2027, %v8300, 0.0
      %v9179 = vrot.slane %v9178, 4
      %v9180 = vadd.f32 %v9178, %v9179
      %v9181 = vrot.slane %v9180, 2
      %v9182 = vadd.f32 %v9180, %v9181
      %v9183 = vrot.slane %v9182, 1
      %v9184 = vadd.f32 %v9182, %v9183
      %v9185 = vsel %vm2027, %v8301, 0.0
      %v9186 = vrot.slane %v9185, 4
      %v9187 = vadd.f32 %v9185, %v9186
      %v9188 = vrot.slane %v9187, 2
      %v9189 = vadd.f32 %v9187, %v9188
      %v9190 = vrot.slane %v9189, 1
      %v9191 = vadd.f32 %v9189, %v9190
      %v9192 = vsel %vm2027, %v8302, 0.0
      %v9193 = vrot.slane %v9192, 4
      %v9194 = vadd.f32 %v9192, %v9193
      %v9195 = vrot.slane %v9194, 2
      %v9196 = vadd.f32 %v9194, %v9195
      %v9197 = vrot.slane %v9196, 1
      %v9198 = vadd.f32 %v9196, %v9197
      %v9199 = vld [vmem:[%s8] sm:$0xff]
      %v9200 = vld [vmem:[%s8 + $0x8] sm:$0xff]
      %v9201 = vld [vmem:[%s9] sm:$0xff]
      %v9202 = vld [vmem:[%s9 + $0x8] sm:$0xff]
      %vm9331 = vcmask 1041409
      %v9332 = vsel %vm9331, %v8316, %v8309
      %vm9333 = vcmask 1042434
      %v9334 = vsel %vm9333, %v8323, %v9332
      %vm9335 = vcmask 1043459
      %v9336 = vsel %vm9335, %v8330, %v9334
      %vm9337 = vcmask 1044484
      %v9338 = vsel %vm9337, %v8337, %v9336
      %vm9339 = vcmask 1045509
      %v9340 = vsel %vm9339, %v8344, %v9338
      %vm9341 = vcmask 1046534
      %v9342 = vsel %vm9341, %v8351, %v9340
      %vm9343 = vcmask 1047559
      %v9344 = vsel %vm9343, %v8358, %v9342
      %v9345 = vsel %vm9331, %v8372, %v8365
      %v9346 = vsel %vm9333, %v8379, %v9345
      %v9347 = vsel %vm9335, %v8386, %v9346
      %v9348 = vsel %vm9337, %v8393, %v9347
      %v9349 = vsel %vm9339, %v8400, %v9348
      %v9350 = vsel %vm9341, %v8407, %v9349
      %v9351 = vsel %vm9343, %v8414, %v9350
      %v9352 = vsel %vm9331, %v8428, %v8421
      %v9353 = vsel %vm9333, %v8435, %v9352
      %v9354 = vsel %vm9335, %v8442, %v9353
      %v9355 = vsel %vm9337, %v8449, %v9354
      %v9356 = vsel %vm9339, %v8456, %v9355
      %v9357 = vsel %vm9341, %v8463, %v9356
      %v9358 = vsel %vm9343, %v8470, %v9357
      %v9359 = vsel %vm9331, %v8484, %v8477
      %v9360 = vsel %vm9333, %v8491, %v9359
      %v9361 = vsel %vm9335, %v8498, %v9360
      %v9362 = vsel %vm9337, %v8505, %v9361
      %v9363 = vsel %vm9339, %v8512, %v9362
      %v9364 = vsel %vm9341, %v8519, %v9363
      %v9365 = vsel %vm9343, %v8526, %v9364
      %v9366 = vsel %vm9331, %v8540, %v8533
      %v9367 = vsel %vm9333, %v8547, %v9366
      %v9368 = vsel %vm9335, %v8554, %v9367
      %v9369 = vsel %vm9337, %v8561, %v9368
      %v9370 = vsel %vm9339, %v8568, %v9369
      %v9371 = vsel %vm9341, %v8575, %v9370
      %v9372 = vsel %vm9343, %v8582, %v9371
      %v9373 = vsel %vm9331, %v8596, %v8589
      %v9374 = vsel %vm9333, %v8603, %v9373
      %v9375 = vsel %vm9335, %v8610, %v9374
      %v9376 = vsel %vm9337, %v8617, %v9375
      %v9377 = vsel %vm9339, %v8624, %v9376
      %v9378 = vsel %vm9341, %v8631, %v9377
      %v9379 = vsel %vm9343, %v8638, %v9378
      %v9380 = vsel %vm9331, %v8652, %v8645
      %v9381 = vsel %vm9333, %v8659, %v9380
      %v9382 = vsel %vm9335, %v8666, %v9381
      %v9383 = vsel %vm9337, %v8673, %v9382
      %v9384 = vsel %vm9339, %v8680, %v9383
      %v9385 = vsel %vm9341, %v8687, %v9384
      %v9386 = vsel %vm9343, %v8694, %v9385
      %v9387 = vsel %vm9331, %v8708, %v8701
      %v9388 = vsel %vm9333, %v8715, %v9387
      %v9389 = vsel %vm9335, %v8722, %v9388
      %v9390 = vsel %vm9337, %v8729, %v9389
      %v9391 = vsel %vm9339, %v8736, %v9390
      %v9392 = vsel %vm9341, %v8743, %v9391
      %v9393 = vsel %vm9343, %v8750, %v9392
      %v9394 = vsel %vm9331, %v8764, %v8757
      %v9395 = vsel %vm9333, %v8771, %v9394
      %v9396 = vsel %vm9335, %v8778, %v9395
      %v9397 = vsel %vm9337, %v8785, %v9396
      %v9398 = vsel %vm9339, %v8792, %v9397
      %v9399 = vsel %vm9341, %v8799, %v9398
      %v9400 = vsel %vm9343, %v8806, %v9399
      %v9401 = vsel %vm9331, %v8820, %v8813
      %v9402 = vsel %vm9333, %v8827, %v9401
      %v9403 = vsel %vm9335, %v8834, %v9402
      %v9404 = vsel %vm9337, %v8841, %v9403
      %v9405 = vsel %vm9339, %v8848, %v9404
      %v9406 = vsel %vm9341, %v8855, %v9405
      %v9407 = vsel %vm9343, %v8862, %v9406
      %v9408 = vsel %vm9331, %v8876, %v8869
      %v9409 = vsel %vm9333, %v8883, %v9408
      %v9410 = vsel %vm9335, %v8890, %v9409
      %v9411 = vsel %vm9337, %v8897, %v9410
      %v9412 = vsel %vm9339, %v8904, %v9411
      %v9413 = vsel %vm9341, %v8911, %v9412
      %v9414 = vsel %vm9343, %v8918, %v9413
      %v9415 = vsel %vm9331, %v8932, %v8925
      %v9416 = vsel %vm9333, %v8939, %v9415
      %v9417 = vsel %vm9335, %v8946, %v9416
      %v9418 = vsel %vm9337, %v8953, %v9417
      %v9419 = vsel %vm9339, %v8960, %v9418
      %v9420 = vsel %vm9341, %v8967, %v9419
      %v9421 = vsel %vm9343, %v8974, %v9420
      %v9422 = vsel %vm9331, %v8988, %v8981
      %v9423 = vsel %vm9333, %v8995, %v9422
      %v9424 = vsel %vm9335, %v9002, %v9423
      %v9425 = vsel %vm9337, %v9009, %v9424
      %v9426 = vsel %vm9339, %v9016, %v9425
      %v9427 = vsel %vm9341, %v9023, %v9426
      %v9428 = vsel %vm9343, %v9030, %v9427
      %v9429 = vsel %vm9331, %v9044, %v9037
      %v9430 = vsel %vm9333, %v9051, %v9429
      %v9431 = vsel %vm9335, %v9058, %v9430
      %v9432 = vsel %vm9337, %v9065, %v9431
      %v9433 = vsel %vm9339, %v9072, %v9432
      %v9434 = vsel %vm9341, %v9079, %v9433
      %v9435 = vsel %vm9343, %v9086, %v9434
      %v9436 = vsel %vm9331, %v9100, %v9093
      %v9437 = vsel %vm9333, %v9107, %v9436
      %v9438 = vsel %vm9335, %v9114, %v9437
      %v9439 = vsel %vm9337, %v9121, %v9438
      %v9440 = vsel %vm9339, %v9128, %v9439
      %v9441 = vsel %vm9341, %v9135, %v9440
      %v9442 = vsel %vm9343, %v9142, %v9441
      %v9443 = vsel %vm9331, %v9156, %v9149
      %v9444 = vsel %vm9333, %v9163, %v9443
      %v9445 = vsel %vm9335, %v9170, %v9444
      %v9446 = vsel %vm9337, %v9177, %v9445
      %v9447 = vsel %vm9339, %v9184, %v9446
      %v9448 = vsel %vm9341, %v9191, %v9447
      %v9449 = vsel %vm9343, %v9198, %v9448
      %v9450 = vsel %vm2027, %v9344, 0
      %v9452 = vsel %vm2027, %v9351, 0
      %v9454 = vsel %vm2027, %v9358, 0
      %v9456 = vsel %vm2027, %v9365, 0
      %v9458 = vsel %vm2027, %v9372, 0
      %v9460 = vsel %vm2027, %v9379, 0
      %v9462 = vsel %vm2027, %v9386, 0
      %v9464 = vsel %vm2027, %v9393, 0
      %v9466 = vsel %vm2027, %v9400, 0
      %v9468 = vsel %vm2027, %v9407, 0
      %v9470 = vsel %vm2027, %v9414, 0
      %v9472 = vsel %vm2027, %v9421, 0
      %v9474 = vsel %vm2027, %v9428, 0
      %v9476 = vsel %vm2027, %v9435, 0
      %v9478 = vsel %vm2027, %v9442, 0
      %v9480 = vsel %vm2027, %v9449, 0
      %9482 = vmatprep.subr.mxu0 0.0
      %9483 = vmatpush1.msra.mxu0 %v9201
      %9484 = vmatprep.subr.mxu0 0.0
      %9485 = vmatpush1.msra.mxu0 %v9202
      %9486 = vmatprep.subr.mxu0 0.0
      %9487 = vmatpush1.msra.mxu0 0.0
      %9488 = vmatprep.subr.mxu0 0.0
      %9489 = vmatpush1.msra.mxu0 0.0
      %9490 = vmatprep.subr.mxu0 0.0
      %9491 = vmatpush1.msra.mxu0 0.0
      %9492 = vmatprep.subr.mxu0 0.0
      %9493 = vmatpush1.msra.mxu0 0.0
      %9494 = vmatprep.subr.mxu0 0.0
      %9495 = vmatpush1.msra.mxu0 0.0
      %9496 = vmatprep.subr.mxu0 0.0
      %9497 = vmatpush1.msra.mxu0 0.0
      %9498 = vmatprep.subr.mxu0 0.0
      %9499 = vmatpush1.msra.mxu0 0.0
      %9500 = vmatprep.subr.mxu0 0.0
      %9501 = vmatpush1.msra.mxu0 0.0
      %9502 = vmatprep.subr.mxu0 0.0
      %9503 = vmatpush1.msra.mxu0 0.0
      %9504 = vmatprep.subr.mxu0 0.0
      %9505 = vmatpush1.msra.mxu0 0.0
      %9506 = vmatprep.subr.mxu0 0.0
      %9507 = vmatpush1.msra.mxu0 0.0
      %9508 = vmatprep.subr.mxu0 0.0
      %9509 = vmatpush1.msra.mxu0 0.0
      %9510 = vmatprep.subr.mxu0 0.0
      %9511 = vmatpush1.msra.mxu0 0.0
      %9512 = vmatprep.subr.mxu0 0.0
      %9513 = vmatpush1.msra.mxu0 0.0
      %9514 = vmatprep.subr.mxu0 0.0
      %9515 = vmatpush1.msra.mxu0 0.0
      %9516 = vmatprep.subr.mxu0 0.0
      %9517 = vmatpush1.msra.mxu0 0.0
      %9518 = vmatprep.subr.mxu0 0.0
      %9519 = vmatpush1.msra.mxu0 0.0
      %9520 = vmatprep.subr.mxu0 0.0
      %9521 = vmatpush1.msra.mxu0 0.0
      %9522 = vmatprep.subr.mxu0 0.0
      %9523 = vmatpush1.msra.mxu0 0.0
      %9524 = vmatprep.subr.mxu0 0.0
      %9525 = vmatpush1.msra.mxu0 0.0
      %9526 = vmatprep.subr.mxu0 0.0
      %9527 = vmatpush1.msra.mxu0 0.0
      %9528 = vmatprep.subr.mxu0 0.0
      %9529 = vmatpush1.msra.mxu0 0.0
      %9530 = vmatprep.subr.mxu0 0.0
      %9531 = vmatpush1.msra.mxu0 0.0
      %9532 = vmatprep.subr.mxu0 0.0
      %9533 = vmatpush1.msra.mxu0 0.0
      %9534 = vmatprep.subr.mxu0 0.0
      %9535 = vmatpush1.msra.mxu0 0.0
      %9536 = vmatprep.subr.mxu0 0.0
      %9537 = vmatpush1.msra.mxu0 0.0
      %9538 = vmatprep.subr.mxu0 0.0
      %9539 = vmatpush1.msra.mxu0 0.0
      %9540 = vmatprep.subr.mxu0 0.0
      %9541 = vmatpush1.msra.mxu0 0.0
      %9542 = vmatprep.subr.mxu0 0.0
      %9543 = vmatpush1.msra.mxu0 0.0
      %9544 = vmatprep.subr.mxu0 0.0
      %9545 = vmatpush1.msra.mxu0 0.0
      %9546 = vmatprep.mubr.f32.mxu0 0.0
      %9547 = vmatmul.mubr.f32.gmra.mrb[0].mxu0 %v9450
      %v9548 = vpop.f32.mrb[0].mxu0
      %v9549 = vadd.f32 0.0, %v9548
      %v9550 = vpop.f32.mrb[0].mxu0
      %9551 = vmatprep.mubr.f32.mxu0 0.0
      %9552 = vmatmul.mubr.f32.gmra.mrb[0].mxu0 %v9452
      %v9553 = vpop.f32.mrb[0].mxu0
      %v9554 = vadd.f32 0.0, %v9553
      %v9555 = vpop.f32.mrb[0].mxu0
      %9556 = vmatprep.mubr.f32.mxu0 0.0
      %9557 = vmatmul.mubr.f32.gmra.mrb[0].mxu0 %v9454
      %v9558 = vpop.f32.mrb[0].mxu0
      %v9559 = vadd.f32 0.0, %v9558
      %v9560 = vpop.f32.mrb[0].mxu0
      %9561 = vmatprep.mubr.f32.mxu0 0.0
      %9562 = vmatmul.mubr.f32.gmra.mrb[0].mxu0 %v9456
      %v9563 = vpop.f32.mrb[0].mxu0
      %v9564 = vadd.f32 0.0, %v9563
      %v9565 = vpop.f32.mrb[0].mxu0
      %9566 = vmatprep.mubr.f32.mxu0 0.0
      %9567 = vmatmul.mubr.f32.gmra.mrb[0].mxu0 %v9458
      %v9568 = vpop.f32.mrb[0].mxu0
      %v9569 = vadd.f32 0.0, %v9568
      %v9570 = vpop.f32.mrb[0].mxu0
      %9571 = vmatprep.mubr.f32.mxu0 0.0
      %9572 = vmatmul.mubr.f32.gmra.mrb[0].mxu0 %v9460
      %v9573 = vpop.f32.mrb[0].mxu0
      %v9574 = vadd.f32 0.0, %v9573
      %v9575 = vpop.f32.mrb[0].mxu0
      %9576 = vmatprep.mubr.f32.mxu0 0.0
      %9577 = vmatmul.mubr.f32.gmra.mrb[0].mxu0 %v9462
      %v9578 = vpop.f32.mrb[0].mxu0
      %v9579 = vadd.f32 0.0, %v9578
      %v9580 = vpop.f32.mrb[0].mxu0
      %9581 = vmatprep.mubr.f32.mxu0 0.0
      %9582 = vmatmul.mubr.f32.gmra.mrb[0].mxu0 %v9464
      %v9583 = vpop.f32.mrb[0].mxu0
      %v9584 = vadd.f32 0.0, %v9583
      %v9585 = vpop.f32.mrb[0].mxu0
      %9586 = vmatprep.mubr.f32.mxu0 0.0
      %9587 = vmatmul.mubr.f32.gmra.mrb[0].mxu0 %v9466
      %v9588 = vpop.f32.mrb[0].mxu0
      %v9589 = vadd.f32 0.0, %v9588
      %v9590 = vpop.f32.mrb[0].mxu0
      %9591 = vmatprep.mubr.f32.mxu0 0.0
      %9592 = vmatmul.mubr.f32.gmra.mrb[0].mxu0 %v9468
      %v9593 = vpop.f32.mrb[0].mxu0
      %v9594 = vadd.f32 0.0, %v9593
      %v9595 = vpop.f32.mrb[0].mxu0
      %9596 = vmatprep.mubr.f32.mxu0 0.0
      %9597 = vmatmul.mubr.f32.gmra.mrb[0].mxu0 %v9470
      %v9598 = vpop.f32.mrb[0].mxu0
      %v9599 = vadd.f32 0.0, %v9598
      %v9600 = vpop.f32.mrb[0].mxu0
      %9601 = vmatprep.mubr.f32.mxu0 0.0
      %9602 = vmatmul.mubr.f32.gmra.mrb[0].mxu0 %v9472
      %v9603 = vpop.f32.mrb[0].mxu0
      %v9604 = vadd.f32 0.0, %v9603
      %v9605 = vpop.f32.mrb[0].mxu0
      %9606 = vmatprep.mubr.f32.mxu0 0.0
      %9607 = vmatmul.mubr.f32.gmra.mrb[0].mxu0 %v9474
      %v9608 = vpop.f32.mrb[0].mxu0
      %v9609 = vadd.f32 0.0, %v9608
      %v9610 = vpop.f32.mrb[0].mxu0
      %9611 = vmatprep.mubr.f32.mxu0 0.0
      %9612 = vmatmul.mubr.f32.gmra.mrb[0].mxu0 %v9476
      %v9613 = vpop.f32.mrb[0].mxu0
      %v9614 = vadd.f32 0.0, %v9613
      %v9615 = vpop.f32.mrb[0].mxu0
      %9616 = vmatprep.mubr.f32.mxu0 0.0
      %9617 = vmatmul.mubr.f32.gmra.mrb[0].mxu0 %v9478
      %v9618 = vpop.f32.mrb[0].mxu0
      %v9619 = vadd.f32 0.0, %v9618
      %v9620 = vpop.f32.mrb[0].mxu0
      %9621 = vmatprep.mubr.f32.mxu0 0.0
      %9622 = vmatmul.mubr.f32.gmra.mrb[0].mxu0 %v9480
      %v9623 = vpop.f32.mrb[0].mxu0
      %v9624 = vadd.f32 0.0, %v9623
      %v9625 = vpop.f32.mrb[0].mxu0
      %9626 = vdwg.mxu0
      %v9755 = vsel %vm9331, %v6780, %v6773
      %v9756 = vsel %vm9333, %v6787, %v9755
      %v9757 = vsel %vm9335, %v6794, %v9756
      %v9758 = vsel %vm9337, %v6801, %v9757
      %v9759 = vsel %vm9339, %v6808, %v9758
      %v9760 = vsel %vm9341, %v6815, %v9759
      %v9761 = vsel %vm9343, %v6822, %v9760
      %v9762 = vsel %vm9331, %v6836, %v6829
      %v9763 = vsel %vm9333, %v6843, %v9762
      %v9764 = vsel %vm9335, %v6850, %v9763
      %v9765 = vsel %vm9337, %v6857, %v9764
      %v9766 = vsel %vm9339, %v6864, %v9765
      %v9767 = vsel %vm9341, %v6871, %v9766
      %v9768 = vsel %vm9343, %v6878, %v9767
      %v9769 = vsel %vm9331, %v6892, %v6885
      %v9770 = vsel %vm9333, %v6899, %v9769
      %v9771 = vsel %vm9335, %v6906, %v9770
      %v9772 = vsel %vm9337, %v6913, %v9771
      %v9773 = vsel %vm9339, %v6920, %v9772
      %v9774 = vsel %vm9341, %v6927, %v9773
      %v9775 = vsel %vm9343, %v6934, %v9774
      %v9776 = vsel %vm9331, %v6948, %v6941
      %v9777 = vsel %vm9333, %v6955, %v9776
      %v9778 = vsel %vm9335, %v6962, %v9777
      %v9779 = vsel %vm9337, %v6969, %v9778
      %v9780 = vsel %vm9339, %v6976, %v9779
      %v9781 = vsel %vm9341, %v6983, %v9780
      %v9782 = vsel %vm9343, %v6990, %v9781
      %v9783 = vsel %vm9331, %v7004, %v6997
      %v9784 = vsel %vm9333, %v7011, %v9783
      %v9785 = vsel %vm9335, %v7018, %v9784
      %v9786 = vsel %vm9337, %v7025, %v9785
      %v9787 = vsel %vm9339, %v7032, %v9786
      %v9788 = vsel %vm9341, %v7039, %v9787
      %v9789 = vsel %vm9343, %v7046, %v9788
      %v9790 = vsel %vm9331, %v7060, %v7053
      %v9791 = vsel %vm9333, %v7067, %v9790
      %v9792 = vsel %vm9335, %v7074, %v9791
      %v9793 = vsel %vm9337, %v7081, %v9792
      %v9794 = vsel %vm9339, %v7088, %v9793
      %v9795 = vsel %vm9341, %v7095, %v9794
      %v9796 = vsel %vm9343, %v7102, %v9795
      %v9797 = vsel %vm9331, %v7116, %v7109
      %v9798 = vsel %vm9333, %v7123, %v9797
      %v9799 = vsel %vm9335, %v7130, %v9798
      %v9800 = vsel %vm9337, %v7137, %v9799
      %v9801 = vsel %vm9339, %v7144, %v9800
      %v9802 = vsel %vm9341, %v7151, %v9801
      %v9803 = vsel %vm9343, %v7158, %v9802
      %v9804 = vsel %vm9331, %v7172, %v7165
      %v9805 = vsel %vm9333, %v7179, %v9804
      %v9806 = vsel %vm9335, %v7186, %v9805
      %v9807 = vsel %vm9337, %v7193, %v9806
      %v9808 = vsel %vm9339, %v7200, %v9807
      %v9809 = vsel %vm9341, %v7207, %v9808
      %v9810 = vsel %vm9343, %v7214, %v9809
      %v9811 = vsel %vm9331, %v7228, %v7221
      %v9812 = vsel %vm9333, %v7235, %v9811
      %v9813 = vsel %vm9335, %v7242, %v9812
      %v9814 = vsel %vm9337, %v7249, %v9813
      %v9815 = vsel %vm9339, %v7256, %v9814
      %v9816 = vsel %vm9341, %v7263, %v9815
      %v9817 = vsel %vm9343, %v7270, %v9816
      %v9818 = vsel %vm9331, %v7284, %v7277
      %v9819 = vsel %vm9333, %v7291, %v9818
      %v9820 = vsel %vm9335, %v7298, %v9819
      %v9821 = vsel %vm9337, %v7305, %v9820
      %v9822 = vsel %vm9339, %v7312, %v9821
      %v9823 = vsel %vm9341, %v7319, %v9822
      %v9824 = vsel %vm9343, %v7326, %v9823
      %v9825 = vsel %vm9331, %v7340, %v7333
      %v9826 = vsel %vm9333, %v7347, %v9825
      %v9827 = vsel %vm9335, %v7354, %v9826
      %v9828 = vsel %vm9337, %v7361, %v9827
      %v9829 = vsel %vm9339, %v7368, %v9828
      %v9830 = vsel %vm9341, %v7375, %v9829
      %v9831 = vsel %vm9343, %v7382, %v9830
      %v9832 = vsel %vm9331, %v7396, %v7389
      %v9833 = vsel %vm9333, %v7403, %v9832
      %v9834 = vsel %vm9335, %v7410, %v9833
      %v9835 = vsel %vm9337, %v7417, %v9834
      %v9836 = vsel %vm9339, %v7424, %v9835
      %v9837 = vsel %vm9341, %v7431, %v9836
      %v9838 = vsel %vm9343, %v7438, %v9837
      %v9839 = vsel %vm9331, %v7452, %v7445
      %v9840 = vsel %vm9333, %v7459, %v9839
      %v9841 = vsel %vm9335, %v7466, %v9840
      %v9842 = vsel %vm9337, %v7473, %v9841
      %v9843 = vsel %vm9339, %v7480, %v9842
      %v9844 = vsel %vm9341, %v7487, %v9843
      %v9845 = vsel %vm9343, %v7494, %v9844
      %v9846 = vsel %vm9331, %v7508, %v7501
      %v9847 = vsel %vm9333, %v7515, %v9846
      %v9848 = vsel %vm9335, %v7522, %v9847
      %v9849 = vsel %vm9337, %v7529, %v9848
      %v9850 = vsel %vm9339, %v7536, %v9849
      %v9851 = vsel %vm9341, %v7543, %v9850
      %v9852 = vsel %vm9343, %v7550, %v9851
      %v9853 = vsel %vm9331, %v7564, %v7557
      %v9854 = vsel %vm9333, %v7571, %v9853
      %v9855 = vsel %vm9335, %v7578, %v9854
      %v9856 = vsel %vm9337, %v7585, %v9855
      %v9857 = vsel %vm9339, %v7592, %v9856
      %v9858 = vsel %vm9341, %v7599, %v9857
      %v9859 = vsel %vm9343, %v7606, %v9858
      %v9860 = vsel %vm9331, %v7620, %v7613
      %v9861 = vsel %vm9333, %v7627, %v9860
      %v9862 = vsel %vm9335, %v7634, %v9861
      %v9863 = vsel %vm9337, %v7641, %v9862
      %v9864 = vsel %vm9339, %v7648, %v9863
      %v9865 = vsel %vm9341, %v7655, %v9864
      %v9866 = vsel %vm9343, %v7662, %v9865
      %v9867 = vsel %vm2027, %v9761, 0
      %v9869 = vsel %vm2027, %v9768, 0
      %v9871 = vsel %vm2027, %v9775, 0
      %v9873 = vsel %vm2027, %v9782, 0
      %v9875 = vsel %vm2027, %v9789, 0
      %v9877 = vsel %vm2027, %v9796, 0
      %v9879 = vsel %vm2027, %v9803, 0
      %v9881 = vsel %vm2027, %v9810, 0
      %v9883 = vsel %vm2027, %v9817, 0
      %v9885 = vsel %vm2027, %v9824, 0
      %v9887 = vsel %vm2027, %v9831, 0
      %v9889 = vsel %vm2027, %v9838, 0
      %v9891 = vsel %vm2027, %v9845, 0
      %v9893 = vsel %vm2027, %v9852, 0
      %v9895 = vsel %vm2027, %v9859, 0
      %v9897 = vsel %vm2027, %v9866, 0
      %9899 = vmatprep.subr.mxu0 0.0
      %9900 = vmatpush1.msra.mxu0 %v9199
      %9901 = vmatprep.subr.mxu0 0.0
      %9902 = vmatpush1.msra.mxu0 %v9200
      %9903 = vmatprep.subr.mxu0 0.0
      %9904 = vmatpush1.msra.mxu0 0.0
      %9905 = vmatprep.subr.mxu0 0.0
      %9906 = vmatpush1.msra.mxu0 0.0
      %9907 = vmatprep.subr.mxu0 0.0
      %9908 = vmatpush1.msra.mxu0 0.0
      %9909 = vmatprep.subr.mxu0 0.0
      %9910 = vmatpush1.msra.mxu0 0.0
      %9911 = vmatprep.subr.mxu0 0.0
      %9912 = vmatpush1.msra.mxu0 0.0
      %9913 = vmatprep.subr.mxu0 0.0
      %9914 = vmatpush1.msra.mxu0 0.0
      %9915 = vmatprep.subr.mxu0 0.0
      %9916 = vmatpush1.msra.mxu0 0.0
      %9917 = vmatprep.subr.mxu0 0.0
      %9918 = vmatpush1.msra.mxu0 0.0
      %9919 = vmatprep.subr.mxu0 0.0
      %9920 = vmatpush1.msra.mxu0 0.0
      %9921 = vmatprep.subr.mxu0 0.0
      %9922 = vmatpush1.msra.mxu0 0.0
      %9923 = vmatprep.subr.mxu0 0.0
      %9924 = vmatpush1.msra.mxu0 0.0
      %9925 = vmatprep.subr.mxu0 0.0
      %9926 = vmatpush1.msra.mxu0 0.0
      %9927 = vmatprep.subr.mxu0 0.0
      %9928 = vmatpush1.msra.mxu0 0.0
      %9929 = vmatprep.subr.mxu0 0.0
      %9930 = vmatpush1.msra.mxu0 0.0
      %9931 = vmatprep.subr.mxu0 0.0
      %9932 = vmatpush1.msra.mxu0 0.0
      %9933 = vmatprep.subr.mxu0 0.0
      %9934 = vmatpush1.msra.mxu0 0.0
      %9935 = vmatprep.subr.mxu0 0.0
      %9936 = vmatpush1.msra.mxu0 0.0
      %9937 = vmatprep.subr.mxu0 0.0
      %9938 = vmatpush1.msra.mxu0 0.0
      %9939 = vmatprep.subr.mxu0 0.0
      %9940 = vmatpush1.msra.mxu0 0.0
      %9941 = vmatprep.subr.mxu0 0.0
      %9942 = vmatpush1.msra.mxu0 0.0
      %9943 = vmatprep.subr.mxu0 0.0
      %9944 = vmatpush1.msra.mxu0 0.0
      %9945 = vmatprep.subr.mxu0 0.0
      %9946 = vmatpush1.msra.mxu0 0.0
      %9947 = vmatprep.subr.mxu0 0.0
      %9948 = vmatpush1.msra.mxu0 0.0
      %9949 = vmatprep.subr.mxu0 0.0
      %9950 = vmatpush1.msra.mxu0 0.0
      %9951 = vmatprep.subr.mxu0 0.0
      %9952 = vmatpush1.msra.mxu0 0.0
      %9953 = vmatprep.subr.mxu0 0.0
      %9954 = vmatpush1.msra.mxu0 0.0
      %9955 = vmatprep.subr.mxu0 0.0
      %9956 = vmatpush1.msra.mxu0 0.0
      %9957 = vmatprep.subr.mxu0 0.0
      %9958 = vmatpush1.msra.mxu0 0.0
      %9959 = vmatprep.subr.mxu0 0.0
      %9960 = vmatpush1.msra.mxu0 0.0
      %9961 = vmatprep.subr.mxu0 0.0
      %9962 = vmatpush1.msra.mxu0 0.0
      %9963 = vmatprep.mubr.f32.mxu0 0.0
      %9964 = vmatmul.mubr.f32.gmra.mrb[0].mxu0 %v9867
      %v9965 = vpop.f32.mrb[0].mxu0
      %v9966 = vadd.f32 %v9549, %v9965
      %v9967 = vpop.f32.mrb[0].mxu0
      %9968 = vmatprep.mubr.f32.mxu0 0.0
      %9969 = vmatmul.mubr.f32.gmra.mrb[0].mxu0 %v9869
      %v9970 = vpop.f32.mrb[0].mxu0
      %v9971 = vadd.f32 %v9554, %v9970
      %v9972 = vpop.f32.mrb[0].mxu0
      %9973 = vmatprep.mubr.f32.mxu0 0.0
      %9974 = vmatmul.mubr.f32.gmra.mrb[0].mxu0 %v9871
      %v9975 = vpop.f32.mrb[0].mxu0
      %v9976 = vadd.f32 %v9559, %v9975
      %v9977 = vpop.f32.mrb[0].mxu0
      %9978 = vmatprep.mubr.f32.mxu0 0.0
      %9979 = vmatmul.mubr.f32.gmra.mrb[0].mxu0 %v9873
      %v9980 = vpop.f32.mrb[0].mxu0
      %v9981 = vadd.f32 %v9564, %v9980
      %v9982 = vpop.f32.mrb[0].mxu0
      %9983 = vmatprep.mubr.f32.mxu0 0.0
      %9984 = vmatmul.mubr.f32.gmra.mrb[0].mxu0 %v9875
      %v9985 = vpop.f32.mrb[0].mxu0
      %v9986 = vadd.f32 %v9569, %v9985
      %v9987 = vpop.f32.mrb[0].mxu0
      %9988 = vmatprep.mubr.f32.mxu0 0.0
      %9989 = vmatmul.mubr.f32.gmra.mrb[0].mxu0 %v9877
      %v9990 = vpop.f32.mrb[0].mxu0
      %v9991 = vadd.f32 %v9574, %v9990
      %v9992 = vpop.f32.mrb[0].mxu0
      %9993 = vmatprep.mubr.f32.mxu0 0.0
      %9994 = vmatmul.mubr.f32.gmra.mrb[0].mxu0 %v9879
      %v9995 = vpop.f32.mrb[0].mxu0
      %v9996 = vadd.f32 %v9579, %v9995
      %v9997 = vpop.f32.mrb[0].mxu0
      %9998 = vmatprep.mubr.f32.mxu0 0.0
      %9999 = vmatmul.mubr.f32.gmra.mrb[0].mxu0 %v9881
      %v10000 = vpop.f32.mrb[0].mxu0
      %v10001 = vadd.f32 %v9584, %v10000
      %v10002 = vpop.f32.mrb[0].mxu0
      %10003 = vmatprep.mubr.f32.mxu0 0.0
      %10004 = vmatmul.mubr.f32.gmra.mrb[0].mxu0 %v9883
      %v10005 = vpop.f32.mrb[0].mxu0
      %v10006 = vadd.f32 %v9589, %v10005
      %v10007 = vpop.f32.mrb[0].mxu0
      %10008 = vmatprep.mubr.f32.mxu0 0.0
      %10009 = vmatmul.mubr.f32.gmra.mrb[0].mxu0 %v9885
      %v10010 = vpop.f32.mrb[0].mxu0
      %v10011 = vadd.f32 %v9594, %v10010
      %v10012 = vpop.f32.mrb[0].mxu0
      %10013 = vmatprep.mubr.f32.mxu0 0.0
      %10014 = vmatmul.mubr.f32.gmra.mrb[0].mxu0 %v9887
      %v10015 = vpop.f32.mrb[0].mxu0
      %v10016 = vadd.f32 %v9599, %v10015
      %v10017 = vpop.f32.mrb[0].mxu0
      %10018 = vmatprep.mubr.f32.mxu0 0.0
      %10019 = vmatmul.mubr.f32.gmra.mrb[0].mxu0 %v9889
      %v10020 = vpop.f32.mrb[0].mxu0
      %v10021 = vadd.f32 %v9604, %v10020
      %v10022 = vpop.f32.mrb[0].mxu0
      %10023 = vmatprep.mubr.f32.mxu0 0.0
      %10024 = vmatmul.mubr.f32.gmra.mrb[0].mxu0 %v9891
      %v10025 = vpop.f32.mrb[0].mxu0
      %v10026 = vadd.f32 %v9609, %v10025
      %v10027 = vpop.f32.mrb[0].mxu0
      %10028 = vmatprep.mubr.f32.mxu0 0.0
      %10029 = vmatmul.mubr.f32.gmra.mrb[0].mxu0 %v9893
      %v10030 = vpop.f32.mrb[0].mxu0
      %v10031 = vadd.f32 %v9614, %v10030
      %v10032 = vpop.f32.mrb[0].mxu0
      %10033 = vmatprep.mubr.f32.mxu0 0.0
      %10034 = vmatmul.mubr.f32.gmra.mrb[0].mxu0 %v9895
      %v10035 = vpop.f32.mrb[0].mxu0
      %v10036 = vadd.f32 %v9619, %v10035
      %v10037 = vpop.f32.mrb[0].mxu0
      %10038 = vmatprep.mubr.f32.mxu0 0.0
      %10039 = vmatmul.mubr.f32.gmra.mrb[0].mxu0 %v9897
      %v10040 = vpop.f32.mrb[0].mxu0
      %v10041 = vadd.f32 %v9624, %v10040
      %v10042 = vpop.f32.mrb[0].mxu0
      %10043 = vdwg.mxu0
      %v10044 = vld [vmem:[%s10] sm:$0x1]
      %v10046 = vlaneseq
      %v10047 = vshrl.u32 %v10046, 7
      %v10048 = vsub.s32 0, %v10047
      %v10049 = vrot.slane %v10044, %v10048
      %v10051 = vadd.f32 %v9966, %v10049
      %v10052 = vadd.f32 %v9971, %v10049
      %v10053 = vadd.f32 %v9976, %v10049
      %v10054 = vadd.f32 %v9981, %v10049
      %v10055 = vadd.f32 %v9986, %v10049
      %v10056 = vadd.f32 %v9991, %v10049
      %v10057 = vadd.f32 %v9996, %v10049
      %v10058 = vadd.f32 %v10001, %v10049
      %v10059 = vadd.f32 %v10006, %v10049
      %v10060 = vadd.f32 %v10011, %v10049
      %v10061 = vadd.f32 %v10016, %v10049
      %v10062 = vadd.f32 %v10021, %v10049
      %v10063 = vadd.f32 %v10026, %v10049
      %v10064 = vadd.f32 %v10031, %v10049
      %v10065 = vadd.f32 %v10036, %v10049
      %v10066 = vadd.f32 %v10041, %v10049
      %v10067 = vmax.f32 %v10051, 0.0
      %v10068 = vmax.f32 %v10052, 0.0
      %v10069 = vmax.f32 %v10053, 0.0
      %v10070 = vmax.f32 %v10054, 0.0
      %v10071 = vmax.f32 %v10055, 0.0
      %v10072 = vmax.f32 %v10056, 0.0
      %v10073 = vmax.f32 %v10057, 0.0
      %v10074 = vmax.f32 %v10058, 0.0
      %v10075 = vmax.f32 %v10059, 0.0
      %v10076 = vmax.f32 %v10060, 0.0
      %v10077 = vmax.f32 %v10061, 0.0
      %v10078 = vmax.f32 %v10062, 0.0
      %v10079 = vmax.f32 %v10063, 0.0
      %v10080 = vmax.f32 %v10064, 0.0
      %v10081 = vmax.f32 %v10065, 0.0
      %v10082 = vmax.f32 %v10066, 0.0
      %v10083 = vld [vmem:[%s11] sm:$0xff]
      %v10084 = vld [vmem:[%s11 + $0x8] sm:$0xff]
      %v10085 = vld [vmem:[%s11 + $0x10] sm:$0xff]
      %v10086 = vld [vmem:[%s11 + $0x18] sm:$0xff]
      %v10087 = vld [vmem:[%s465] sm:$0xff]
      %v10088 = vld [vmem:[%s465 + $0x8] sm:$0xff]
      %v10089 = vld [vmem:[%s465 + $0x10] sm:$0xff]
      %v10090 = vld [vmem:[%s465 + $0x18] sm:$0xff]
      %v10091 = vld [vmem:[%s465 + $0x20] sm:$0xff]
      %v10092 = vld [vmem:[%s465 + $0x28] sm:$0xff]
      %v10093 = vld [vmem:[%s465 + $0x30] sm:$0xff]
      %v10094 = vld [vmem:[%s465 + $0x38] sm:$0xff]
      %v10095 = vld [vmem:[%s465 + $0x40] sm:$0xff]
      %v10096 = vld [vmem:[%s465 + $0x48] sm:$0xff]
      %v10097 = vld [vmem:[%s465 + $0x50] sm:$0xff]
      %v10098 = vld [vmem:[%s465 + $0x58] sm:$0xff]
      %v10099 = vld [vmem:[%s465 + $0x60] sm:$0xff]
      %v10100 = vld [vmem:[%s465 + $0x68] sm:$0xff]
      %v10101 = vld [vmem:[%s465 + $0x70] sm:$0xff]
      %v10102 = vld [vmem:[%s465 + $0x78] sm:$0xff]
      %v10103 = vld [vmem:[%s12] sm:$0xff]
      %vm10104 = vcmask 64512
      %v10106 = vsel %vm10104, %v10087, 0
      %v10109 = vsel %vm10104, %v10088, 0
      %v10112 = vsel %vm10104, %v10089, 0
      %v10115 = vsel %vm10104, %v10090, 0
      %v10118 = vsel %vm10104, %v10091, 0
      %v10121 = vsel %vm10104, %v10092, 0
      %v10124 = vsel %vm10104, %v10093, 0
      %v10127 = vsel %vm10104, %v10094, 0
      %v10130 = vsel %vm10104, %v10095, 0
      %v10133 = vsel %vm10104, %v10096, 0
      %v10136 = vsel %vm10104, %v10097, 0
      %v10139 = vsel %vm10104, %v10098, 0
      %v10142 = vsel %vm10104, %v10099, 0
      %v10145 = vsel %vm10104, %v10100, 0
      %v10148 = vsel %vm10104, %v10101, 0
      %v10151 = vsel %vm10104, %v10102, 0
      %10153 = vmatprep.subr.mxu0 0.0
      %10154 = vmatpush1.msra.mxu0 %v10103
      %10155 = vmatprep.subr.mxu0 0.0
      %10156 = vmatpush1.msra.mxu0 0.0
      %10157 = vmatprep.subr.mxu0 0.0
      %10158 = vmatpush1.msra.mxu0 0.0
      %10159 = vmatprep.subr.mxu0 0.0
      %10160 = vmatpush1.msra.mxu0 0.0
      %10161 = vmatprep.subr.mxu0 0.0
      %10162 = vmatpush1.msra.mxu0 0.0
      %10163 = vmatprep.subr.mxu0 0.0
      %10164 = vmatpush1.msra.mxu0 0.0
      %10165 = vmatprep.subr.mxu0 0.0
      %10166 = vmatpush1.msra.mxu0 0.0
      %10167 = vmatprep.subr.mxu0 0.0
      %10168 = vmatpush1.msra.mxu0 0.0
      %10169 = vmatprep.subr.mxu0 0.0
      %10170 = vmatpush1.msra.mxu0 0.0
      %10171 = vmatprep.subr.mxu0 0.0
      %10172 = vmatpush1.msra.mxu0 0.0
      %10173 = vmatprep.subr.mxu0 0.0
      %10174 = vmatpush1.msra.mxu0 0.0
      %10175 = vmatprep.subr.mxu0 0.0
      %10176 = vmatpush1.msra.mxu0 0.0
      %10177 = vmatprep.subr.mxu0 0.0
      %10178 = vmatpush1.msra.mxu0 0.0
      %10179 = vmatprep.subr.mxu0 0.0
      %10180 = vmatpush1.msra.mxu0 0.0
      %10181 = vmatprep.subr.mxu0 0.0
      %10182 = vmatpush1.msra.mxu0 0.0
      %10183 = vmatprep.subr.mxu0 0.0
      %10184 = vmatpush1.msra.mxu0 0.0
      %10185 = vmatprep.subr.mxu0 0.0
      %10186 = vmatpush1.msra.mxu0 0.0
      %10187 = vmatprep.subr.mxu0 0.0
      %10188 = vmatpush1.msra.mxu0 0.0
      %10189 = vmatprep.subr.mxu0 0.0
      %10190 = vmatpush1.msra.mxu0 0.0
      %10191 = vmatprep.subr.mxu0 0.0
      %10192 = vmatpush1.msra.mxu0 0.0
      %10193 = vmatprep.subr.mxu0 0.0
      %10194 = vmatpush1.msra.mxu0 0.0
      %10195 = vmatprep.subr.mxu0 0.0
      %10196 = vmatpush1.msra.mxu0 0.0
      %10197 = vmatprep.subr.mxu0 0.0
      %10198 = vmatpush1.msra.mxu0 0.0
      %10199 = vmatprep.subr.mxu0 0.0
      %10200 = vmatpush1.msra.mxu0 0.0
      %10201 = vmatprep.subr.mxu0 0.0
      %10202 = vmatpush1.msra.mxu0 0.0
      %10203 = vmatprep.subr.mxu0 0.0
      %10204 = vmatpush1.msra.mxu0 0.0
      %10205 = vmatprep.subr.mxu0 0.0
      %10206 = vmatpush1.msra.mxu0 0.0
      %10207 = vmatprep.subr.mxu0 0.0
      %10208 = vmatpush1.msra.mxu0 0.0
      %10209 = vmatprep.subr.mxu0 0.0
      %10210 = vmatpush1.msra.mxu0 0.0
      %10211 = vmatprep.subr.mxu0 0.0
      %10212 = vmatpush1.msra.mxu0 0.0
      %10213 = vmatprep.subr.mxu0 0.0
      %10214 = vmatpush1.msra.mxu0 0.0
      %10215 = vmatprep.subr.mxu0 0.0
      %10216 = vmatpush1.msra.mxu0 0.0
      %10217 = vmatprep.mubr.f32.mxu0 0.0
      %10218 = vmatmul.mubr.f32.gmra.mrb[0].mxu0 %v10106
      %v10219 = vpop.f32.mrb[0].mxu0
      %v10220 = vadd.f32 0.0, %v10219
      %v10221 = vpop.f32.mrb[0].mxu0
      %10222 = vmatprep.mubr.f32.mxu0 0.0
      %10223 = vmatmul.mubr.f32.gmra.mrb[0].mxu0 %v10109
      %v10224 = vpop.f32.mrb[0].mxu0
      %v10225 = vadd.f32 0.0, %v10224
      %v10226 = vpop.f32.mrb[0].mxu0
      %10227 = vmatprep.mubr.f32.mxu0 0.0
      %10228 = vmatmul.mubr.f32.gmra.mrb[0].mxu0 %v10112
      %v10229 = vpop.f32.mrb[0].mxu0
      %v10230 = vadd.f32 0.0, %v10229
      %v10231 = vpop.f32.mrb[0].mxu0
      %10232 = vmatprep.mubr.f32.mxu0 0.0
      %10233 = vmatmul.mubr.f32.gmra.mrb[0].mxu0 %v10115
      %v10234 = vpop.f32.mrb[0].mxu0
      %v10235 = vadd.f32 0.0, %v10234
      %v10236 = vpop.f32.mrb[0].mxu0
      %10237 = vmatprep.mubr.f32.mxu0 0.0
      %10238 = vmatmul.mubr.f32.gmra.mrb[0].mxu0 %v10118
      %v10239 = vpop.f32.mrb[0].mxu0
      %v10240 = vadd.f32 0.0, %v10239
      %v10241 = vpop.f32.mrb[0].mxu0
      %10242 = vmatprep.mubr.f32.mxu0 0.0
      %10243 = vmatmul.mubr.f32.gmra.mrb[0].mxu0 %v10121
      %v10244 = vpop.f32.mrb[0].mxu0
      %v10245 = vadd.f32 0.0, %v10244
      %v10246 = vpop.f32.mrb[0].mxu0
      %10247 = vmatprep.mubr.f32.mxu0 0.0
      %10248 = vmatmul.mubr.f32.gmra.mrb[0].mxu0 %v10124
      %v10249 = vpop.f32.mrb[0].mxu0
      %v10250 = vadd.f32 0.0, %v10249
      %v10251 = vpop.f32.mrb[0].mxu0
      %10252 = vmatprep.mubr.f32.mxu0 0.0
      %10253 = vmatmul.mubr.f32.gmra.mrb[0].mxu0 %v10127
      %v10254 = vpop.f32.mrb[0].mxu0
      %v10255 = vadd.f32 0.0, %v10254
      %v10256 = vpop.f32.mrb[0].mxu0
      %10257 = vmatprep.mubr.f32.mxu0 0.0
      %10258 = vmatmul.mubr.f32.gmra.mrb[0].mxu0 %v10130
      %v10259 = vpop.f32.mrb[0].mxu0
      %v10260 = vadd.f32 0.0, %v10259
      %v10261 = vpop.f32.mrb[0].mxu0
      %10262 = vmatprep.mubr.f32.mxu0 0.0
      %10263 = vmatmul.mubr.f32.gmra.mrb[0].mxu0 %v10133
      %v10264 = vpop.f32.mrb[0].mxu0
      %v10265 = vadd.f32 0.0, %v10264
      %v10266 = vpop.f32.mrb[0].mxu0
      %10267 = vmatprep.mubr.f32.mxu0 0.0
      %10268 = vmatmul.mubr.f32.gmra.mrb[0].mxu0 %v10136
      %v10269 = vpop.f32.mrb[0].mxu0
      %v10270 = vadd.f32 0.0, %v10269
      %v10271 = vpop.f32.mrb[0].mxu0
      %10272 = vmatprep.mubr.f32.mxu0 0.0
      %10273 = vmatmul.mubr.f32.gmra.mrb[0].mxu0 %v10139
      %v10274 = vpop.f32.mrb[0].mxu0
      %v10275 = vadd.f32 0.0, %v10274
      %v10276 = vpop.f32.mrb[0].mxu0
      %10277 = vmatprep.mubr.f32.mxu0 0.0
      %10278 = vmatmul.mubr.f32.gmra.mrb[0].mxu0 %v10142
      %v10279 = vpop.f32.mrb[0].mxu0
      %v10280 = vadd.f32 0.0, %v10279
      %v10281 = vpop.f32.mrb[0].mxu0
      %10282 = vmatprep.mubr.f32.mxu0 0.0
      %10283 = vmatmul.mubr.f32.gmra.mrb[0].mxu0 %v10145
      %v10284 = vpop.f32.mrb[0].mxu0
      %v10285 = vadd.f32 0.0, %v10284
      %v10286 = vpop.f32.mrb[0].mxu0
      %10287 = vmatprep.mubr.f32.mxu0 0.0
      %10288 = vmatmul.mubr.f32.gmra.mrb[0].mxu0 %v10148
      %v10289 = vpop.f32.mrb[0].mxu0
      %v10290 = vadd.f32 0.0, %v10289
      %v10291 = vpop.f32.mrb[0].mxu0
      %10292 = vmatprep.mubr.f32.mxu0 0.0
      %10293 = vmatmul.mubr.f32.gmra.mrb[0].mxu0 %v10151
      %v10294 = vpop.f32.mrb[0].mxu0
      %v10295 = vadd.f32 0.0, %v10294
      %v10296 = vpop.f32.mrb[0].mxu0
      %10297 = vdwg.mxu0
      %v10299 = vsel %vm4206, %v10067, 0
      %v10302 = vsel %vm4206, %v10068, 0
      %v10305 = vsel %vm4206, %v10069, 0
      %v10308 = vsel %vm4206, %v10070, 0
      %v10311 = vsel %vm4206, %v10071, 0
      %v10314 = vsel %vm4206, %v10072, 0
      %v10317 = vsel %vm4206, %v10073, 0
      %v10320 = vsel %vm4206, %v10074, 0
      %v10323 = vsel %vm4206, %v10075, 0
      %v10326 = vsel %vm4206, %v10076, 0
      %v10329 = vsel %vm4206, %v10077, 0
      %v10332 = vsel %vm4206, %v10078, 0
      %v10335 = vsel %vm4206, %v10079, 0
      %v10338 = vsel %vm4206, %v10080, 0
      %v10341 = vsel %vm4206, %v10081, 0
      %v10344 = vsel %vm4206, %v10082, 0
      %10346 = vmatprep.subr.mxu0 0.0
      %10347 = vmatpush1.msra.mxu0 %v10083
      %10348 = vmatprep.subr.mxu0 0.0
      %10349 = vmatpush1.msra.mxu0 %v10084
      %10350 = vmatprep.subr.mxu0 0.0
      %10351 = vmatpush1.msra.mxu0 %v10085
      %10352 = vmatprep.subr.mxu0 0.0
      %10353 = vmatpush1.msra.mxu0 %v10086
      %10354 = vmatprep.subr.mxu0 0.0
      %10355 = vmatpush1.msra.mxu0 0.0
      %10356 = vmatprep.subr.mxu0 0.0
      %10357 = vmatpush1.msra.mxu0 0.0
      %10358 = vmatprep.subr.mxu0 0.0
      %10359 = vmatpush1.msra.mxu0 0.0
      %10360 = vmatprep.subr.mxu0 0.0
      %10361 = vmatpush1.msra.mxu0 0.0
      %10362 = vmatprep.subr.mxu0 0.0
      %10363 = vmatpush1.msra.mxu0 0.0
      %10364 = vmatprep.subr.mxu0 0.0
      %10365 = vmatpush1.msra.mxu0 0.0
      %10366 = vmatprep.subr.mxu0 0.0
      %10367 = vmatpush1.msra.mxu0 0.0
      %10368 = vmatprep.subr.mxu0 0.0
      %10369 = vmatpush1.msra.mxu0 0.0
      %10370 = vmatprep.subr.mxu0 0.0
      %10371 = vmatpush1.msra.mxu0 0.0
      %10372 = vmatprep.subr.mxu0 0.0
      %10373 = vmatpush1.msra.mxu0 0.0
      %10374 = vmatprep.subr.mxu0 0.0
      %10375 = vmatpush1.msra.mxu0 0.0
      %10376 = vmatprep.subr.mxu0 0.0
      %10377 = vmatpush1.msra.mxu0 0.0
      %10378 = vmatprep.subr.mxu0 0.0
      %10379 = vmatpush1.msra.mxu0 0.0
      %10380 = vmatprep.subr.mxu0 0.0
      %10381 = vmatpush1.msra.mxu0 0.0
      %10382 = vmatprep.subr.mxu0 0.0
      %10383 = vmatpush1.msra.mxu0 0.0
      %10384 = vmatprep.subr.mxu0 0.0
      %10385 = vmatpush1.msra.mxu0 0.0
      %10386 = vmatprep.subr.mxu0 0.0
      %10387 = vmatpush1.msra.mxu0 0.0
      %10388 = vmatprep.subr.mxu0 0.0
      %10389 = vmatpush1.msra.mxu0 0.0
      %10390 = vmatprep.subr.mxu0 0.0
      %10391 = vmatpush1.msra.mxu0 0.0
      %10392 = vmatprep.subr.mxu0 0.0
      %10393 = vmatpush1.msra.mxu0 0.0
      %10394 = vmatprep.subr.mxu0 0.0
      %10395 = vmatpush1.msra.mxu0 0.0
      %10396 = vmatprep.subr.mxu0 0.0
      %10397 = vmatpush1.msra.mxu0 0.0
      %10398 = vmatprep.subr.mxu0 0.0
      %10399 = vmatpush1.msra.mxu0 0.0
      %10400 = vmatprep.subr.mxu0 0.0
      %10401 = vmatpush1.msra.mxu0 0.0
      %10402 = vmatprep.subr.mxu0 0.0
      %10403 = vmatpush1.msra.mxu0 0.0
      %10404 = vmatprep.subr.mxu0 0.0
      %10405 = vmatpush1.msra.mxu0 0.0
      %10406 = vmatprep.subr.mxu0 0.0
      %10407 = vmatpush1.msra.mxu0 0.0
      %10408 = vmatprep.subr.mxu0 0.0
      %10409 = vmatpush1.msra.mxu0 0.0
      %10410 = vmatprep.mubr.f32.mxu0 0.0
      %10411 = vmatmul.mubr.f32.gmra.mrb[0].mxu0 %v10299
      %v10412 = vpop.f32.mrb[0].mxu0
      %v10413 = vadd.f32 %v10220, %v10412
      %v10414 = vpop.f32.mrb[0].mxu0
      %10415 = vmatprep.mubr.f32.mxu0 0.0
      %10416 = vmatmul.mubr.f32.gmra.mrb[0].mxu0 %v10302
      %v10417 = vpop.f32.mrb[0].mxu0
      %v10418 = vadd.f32 %v10225, %v10417
      %v10419 = vpop.f32.mrb[0].mxu0
      %10420 = vmatprep.mubr.f32.mxu0 0.0
      %10421 = vmatmul.mubr.f32.gmra.mrb[0].mxu0 %v10305
      %v10422 = vpop.f32.mrb[0].mxu0
      %v10423 = vadd.f32 %v10230, %v10422
      %v10424 = vpop.f32.mrb[0].mxu0
      %10425 = vmatprep.mubr.f32.mxu0 0.0
      %10426 = vmatmul.mubr.f32.gmra.mrb[0].mxu0 %v10308
      %v10427 = vpop.f32.mrb[0].mxu0
      %v10428 = vadd.f32 %v10235, %v10427
      %v10429 = vpop.f32.mrb[0].mxu0
      %10430 = vmatprep.mubr.f32.mxu0 0.0
      %10431 = vmatmul.mubr.f32.gmra.mrb[0].mxu0 %v10311
      %v10432 = vpop.f32.mrb[0].mxu0
      %v10433 = vadd.f32 %v10240, %v10432
      %v10434 = vpop.f32.mrb[0].mxu0
      %10435 = vmatprep.mubr.f32.mxu0 0.0
      %10436 = vmatmul.mubr.f32.gmra.mrb[0].mxu0 %v10314
      %v10437 = vpop.f32.mrb[0].mxu0
      %v10438 = vadd.f32 %v10245, %v10437
      %v10439 = vpop.f32.mrb[0].mxu0
      %10440 = vmatprep.mubr.f32.mxu0 0.0
      %10441 = vmatmul.mubr.f32.gmra.mrb[0].mxu0 %v10317
      %v10442 = vpop.f32.mrb[0].mxu0
      %v10443 = vadd.f32 %v10250, %v10442
      %v10444 = vpop.f32.mrb[0].mxu0
      %10445 = vmatprep.mubr.f32.mxu0 0.0
      %10446 = vmatmul.mubr.f32.gmra.mrb[0].mxu0 %v10320
      %v10447 = vpop.f32.mrb[0].mxu0
      %v10448 = vadd.f32 %v10255, %v10447
      %v10449 = vpop.f32.mrb[0].mxu0
      %10450 = vmatprep.mubr.f32.mxu0 0.0
      %10451 = vmatmul.mubr.f32.gmra.mrb[0].mxu0 %v10323
      %v10452 = vpop.f32.mrb[0].mxu0
      %v10453 = vadd.f32 %v10260, %v10452
      %v10454 = vpop.f32.mrb[0].mxu0
      %10455 = vmatprep.mubr.f32.mxu0 0.0
      %10456 = vmatmul.mubr.f32.gmra.mrb[0].mxu0 %v10326
      %v10457 = vpop.f32.mrb[0].mxu0
      %v10458 = vadd.f32 %v10265, %v10457
      %v10459 = vpop.f32.mrb[0].mxu0
      %10460 = vmatprep.mubr.f32.mxu0 0.0
      %10461 = vmatmul.mubr.f32.gmra.mrb[0].mxu0 %v10329
      %v10462 = vpop.f32.mrb[0].mxu0
      %v10463 = vadd.f32 %v10270, %v10462
      %v10464 = vpop.f32.mrb[0].mxu0
      %10465 = vmatprep.mubr.f32.mxu0 0.0
      %10466 = vmatmul.mubr.f32.gmra.mrb[0].mxu0 %v10332
      %v10467 = vpop.f32.mrb[0].mxu0
      %v10468 = vadd.f32 %v10275, %v10467
      %v10469 = vpop.f32.mrb[0].mxu0
      %10470 = vmatprep.mubr.f32.mxu0 0.0
      %10471 = vmatmul.mubr.f32.gmra.mrb[0].mxu0 %v10335
      %v10472 = vpop.f32.mrb[0].mxu0
      %v10473 = vadd.f32 %v10280, %v10472
      %v10474 = vpop.f32.mrb[0].mxu0
      %10475 = vmatprep.mubr.f32.mxu0 0.0
      %10476 = vmatmul.mubr.f32.gmra.mrb[0].mxu0 %v10338
      %v10477 = vpop.f32.mrb[0].mxu0
      %v10478 = vadd.f32 %v10285, %v10477
      %v10479 = vpop.f32.mrb[0].mxu0
      %10480 = vmatprep.mubr.f32.mxu0 0.0
      %10481 = vmatmul.mubr.f32.gmra.mrb[0].mxu0 %v10341
      %v10482 = vpop.f32.mrb[0].mxu0
      %v10483 = vadd.f32 %v10290, %v10482
      %v10484 = vpop.f32.mrb[0].mxu0
      %10485 = vmatprep.mubr.f32.mxu0 0.0
      %10486 = vmatmul.mubr.f32.gmra.mrb[0].mxu0 %v10344
      %v10487 = vpop.f32.mrb[0].mxu0
      %v10488 = vadd.f32 %v10295, %v10487
      %v10489 = vpop.f32.mrb[0].mxu0
      %10490 = vdwg.mxu0
      %v10491 = vld [vmem:[%s13] sm:$0x1]
      %v10493 = vlaneseq
      %v10494 = vshrl.u32 %v10493, 7
      %v10495 = vsub.s32 0, %v10494
      %v10496 = vrot.slane %v10491, %v10495
      %v10498 = vadd.f32 %v10413, %v10496
      %v10499 = vadd.f32 %v10418, %v10496
      %v10500 = vadd.f32 %v10423, %v10496
      %v10501 = vadd.f32 %v10428, %v10496
      %v10502 = vadd.f32 %v10433, %v10496
      %v10503 = vadd.f32 %v10438, %v10496
      %v10504 = vadd.f32 %v10443, %v10496
      %v10505 = vadd.f32 %v10448, %v10496
      %v10506 = vadd.f32 %v10453, %v10496
      %v10507 = vadd.f32 %v10458, %v10496
      %v10508 = vadd.f32 %v10463, %v10496
      %v10509 = vadd.f32 %v10468, %v10496
      %v10510 = vadd.f32 %v10473, %v10496
      %v10511 = vadd.f32 %v10478, %v10496
      %v10512 = vadd.f32 %v10483, %v10496
      %v10513 = vadd.f32 %v10488, %v10496
      %vm10514 = vcmp.gt.f32.partialorder %v10498, 0.0
      %vm10515 = vcmp.gt.f32.partialorder %v10499, 0.0
      %vm10516 = vcmp.gt.f32.partialorder %v10500, 0.0
      %vm10517 = vcmp.gt.f32.partialorder %v10501, 0.0
      %vm10518 = vcmp.gt.f32.partialorder %v10502, 0.0
      %vm10519 = vcmp.gt.f32.partialorder %v10503, 0.0
      %vm10520 = vcmp.gt.f32.partialorder %v10504, 0.0
      %vm10521 = vcmp.gt.f32.partialorder %v10505, 0.0
      %vm10522 = vcmp.gt.f32.partialorder %v10506, 0.0
      %vm10523 = vcmp.gt.f32.partialorder %v10507, 0.0
      %vm10524 = vcmp.gt.f32.partialorder %v10508, 0.0
      %vm10525 = vcmp.gt.f32.partialorder %v10509, 0.0
      %vm10526 = vcmp.gt.f32.partialorder %v10510, 0.0
      %vm10527 = vcmp.gt.f32.partialorder %v10511, 0.0
      %vm10528 = vcmp.gt.f32.partialorder %v10512, 0.0
      %vm10529 = vcmp.gt.f32.partialorder %v10513, 0.0
      %v10530 = vmul.f32 %v10498, 0.2
      %v10531 = vmul.f32 %v10499, 0.2
      %v10532 = vmul.f32 %v10500, 0.2
      %v10533 = vmul.f32 %v10501, 0.2
      %v10534 = vmul.f32 %v10502, 0.2
      %v10535 = vmul.f32 %v10503, 0.2
      %v10536 = vmul.f32 %v10504, 0.2
      %v10537 = vmul.f32 %v10505, 0.2
      %v10538 = vmul.f32 %v10506, 0.2
      %v10539 = vmul.f32 %v10507, 0.2
      %v10540 = vmul.f32 %v10508, 0.2
      %v10541 = vmul.f32 %v10509, 0.2
      %v10542 = vmul.f32 %v10510, 0.2
      %v10543 = vmul.f32 %v10511, 0.2
      %v10544 = vmul.f32 %v10512, 0.2
      %v10545 = vmul.f32 %v10513, 0.2
      %v10546 = vsel %vm10514, %v10498, %v10530
      %v10547 = vsel %vm10515, %v10499, %v10531
      %v10548 = vsel %vm10516, %v10500, %v10532
      %v10549 = vsel %vm10517, %v10501, %v10533
      %v10550 = vsel %vm10518, %v10502, %v10534
      %v10551 = vsel %vm10519, %v10503, %v10535
      %v10552 = vsel %vm10520, %v10504, %v10536
      %v10553 = vsel %vm10521, %v10505, %v10537
      %v10554 = vsel %vm10522, %v10506, %v10538
      %v10555 = vsel %vm10523, %v10507, %v10539
      %v10556 = vsel %vm10524, %v10508, %v10540
      %v10557 = vsel %vm10525, %v10509, %v10541
      %v10558 = vsel %vm10526, %v10510, %v10542
      %v10559 = vsel %vm10527, %v10511, %v10543
      %v10560 = vsel %vm10528, %v10512, %v10544
      %v10561 = vsel %vm10529, %v10513, %v10545
      %10562 = vst.msk [vmem:[%s471] sm:$0xff] %vm4206, %v10546
      %10563 = vst.msk [vmem:[%s471 + $0x8] sm:$0xff] %vm4206, %v10547
      %10564 = vst.msk [vmem:[%s471 + $0x10] sm:$0xff] %vm4206, %v10548
      %10565 = vst.msk [vmem:[%s471 + $0x18] sm:$0xff] %vm4206, %v10549
      %10566 = vst.msk [vmem:[%s471 + $0x20] sm:$0xff] %vm4206, %v10550
      %10567 = vst.msk [vmem:[%s471 + $0x28] sm:$0xff] %vm4206, %v10551
      %10568 = vst.msk [vmem:[%s471 + $0x30] sm:$0xff] %vm4206, %v10552
      %10569 = vst.msk [vmem:[%s471 + $0x38] sm:$0xff] %vm4206, %v10553
      %10570 = vst.msk [vmem:[%s471 + $0x40] sm:$0xff] %vm4206, %v10554
      %10571 = vst.msk [vmem:[%s471 + $0x48] sm:$0xff] %vm4206, %v10555
      %10572 = vst.msk [vmem:[%s471 + $0x50] sm:$0xff] %vm4206, %v10556
      %10573 = vst.msk [vmem:[%s471 + $0x58] sm:$0xff] %vm4206, %v10557
      %10574 = vst.msk [vmem:[%s471 + $0x60] sm:$0xff] %vm4206, %v10558
      %10575 = vst.msk [vmem:[%s471 + $0x68] sm:$0xff] %vm4206, %v10559
      %10576 = vst.msk [vmem:[%s471 + $0x70] sm:$0xff] %vm4206, %v10560
      %10577 = vst.msk [vmem:[%s471 + $0x78] sm:$0xff] %vm4206, %v10561
      %s10578 = smul.u32 16, %s31
      %p10579 = scmp.lt.s32.totalorder %s10578, 31
      %s10580 = scalar_select %p10579, %s10578, 31
      %s10581 = smul.addr %s10580, 8
      %s10582 = scalar_lea.vmem %s14, %s10581
      // Predicated region
      $region80: #{dilated_res_block.3} parent=71 // pred_check
        %p10583 = pneg %p332
      $region81: #{dilated_res_block.3} parent=71 // pred_check_branch
        %10585 = sbr.rel (%p10583) target = $region83
      $region82: #{dilated_res_block.3} parent=71 // pred_region
        %s10586 = smul.u32 16, %s31
      $region83: #{dilated_res_block.3} parent=71 // pred_fallthru
        _
    $region72: #{dilated_res_block.3} parent=5 // pred_fallthru
      _
    %p10587 = scmp.le.s32.totalorder 2, %s26
    // Predicated region
    $region84: #{dilated_res_block.3} parent=5 // pred_check
      %p10588 = pneg %p10587
    $region85: #{dilated_res_block.3} parent=5 // pred_check_branch
      %10590 = sbr.rel (%p10588) target = $region87
    $region86: #{dilated_res_block.3} parent=5 // pred_region
      %s10591 = ssub.s32 %s26, 2
      // Predicated region
      $region88: #{dilated_res_block.3} parent=86 // pred_check
        %p10592 = pneg %p338
      $region89: #{dilated_res_block.3} parent=86 // pred_check_branch
        %10594 = sbr.rel (%p10592) target = $region91
      $region90: #{dilated_res_block.3} parent=86 // pred_region
        %s10595 = smul.u32 16, %s32
        %p10596 = scmp.lt.s32.totalorder %s10595, 31
        %s10597 = scalar_select %p10596, %s10595, 31
        %s10598 = smul.addr %s10597, 8
        %s10599 = scalar_lea.vmem %s14, %s10598
      $region91: #{dilated_res_block.3} parent=86 // pred_fallthru
        _
    $region87: #{dilated_res_block.3} parent=5 // pred_fallthru
      _
  $region6: #{dilated_res_block.3} parent=0 // loop_footer
    %s30 = sadd.s32 1, %s26
  $region7: #{dilated_res_block.3} parent=0 // loop_footer_branch
    %25 = sbr.rel target = $region3
  $region8: #{dilated_res_block.3} parent=0 // loop_exit
    _

</llo_original>
